<compile_context>
chip_gen: v7x
topology: tpu7x:2x2x1
jax: 0.10.0
libtpu: 0.0.40
codegen_flags: <defaults>
</compile_context>

<pallas_src>
import functools

import numpy as np

import jax
import jax.numpy as jnp
from jax import lax
from jax.experimental import pallas as pl
from jax.experimental.pallas import tpu as pltpu

BN_EPS = 1e-5


# ----------------------------------------------------------------------------
# Flat spatial layout helpers (wrapper-side, tiny XLA glue only at boundaries)
# ----------------------------------------------------------------------------
def _layout_dims(n, h, w):
    hp, wp = h + 2, w + 2
    per = hp * wp
    g = wp + 1                      # guard >= max |3x3 tap offset|
    npos = n * per
    return hp, wp, per, g, npos, npos + 2 * g


def _tap_offsets(wp):
    # Flat offset of tap (i, j) relative to the output position.
    return tuple((i - 1) * wp + (j - 1) for i in range(3) for j in range(3))


def pack_flat(x_cnhw):
    """(C, N, H, W) -> (C, Lg) bf16: spatial zero-pad 1, flatten, guard zones."""
    c, n, h, w = x_cnhw.shape
    _, _, _, g, npos, _ = _layout_dims(n, h, w)
    xp = jnp.pad(x_cnhw, ((0, 0), (0, 0), (1, 1), (1, 1)))
    flat = xp.reshape(c, npos)
    flat = jnp.pad(flat, ((0, 0), (g, g)))
    return flat.astype(jnp.bfloat16)


def padded_view(flat, n, h, w):
    """(C, Lg) -> (C, N, Hp, Wp) including the zero border."""
    c = flat.shape[0]
    hp, wp, _, g, npos, _ = _layout_dims(n, h, w)
    return flat[:, g:g + npos].reshape(c, n, hp, wp)


def unpack_flat(flat, n, h, w):
    """(C, Lg) -> (C, N, H, W) (valid positions only)."""
    return padded_view(flat, n, h, w)[:, :, 1:h + 1, 1:w + 1]


def make_mask(n, h, w):
    """(1, Lg) f32: 1.0 at valid spatial positions, 0.0 at pad/guard."""
    hp, wp, _, g, npos, lg = _layout_dims(n, h, w)
    m = np.zeros((n, hp, wp), np.float32)
    m[:, 1:h + 1, 1:w + 1] = 1.0
    flat = np.zeros((1, lg), np.float32)
    flat[0, g:g + npos] = m.reshape(-1)
    return jnp.asarray(flat)


# ----------------------------------------------------------------------------
# Fused [BN] [+ReLU] + 3x3 conv kernel (lane-dense, in-kernel tap accumulation)
# ----------------------------------------------------------------------------
def _norm_conv3x3_kernel(*refs, offs, g, npos, use_bn, use_relu, inv_count):
    x_ref, mask_ref, w_ref, b_ref = refs[:4]
    idx = 4
    if use_bn:
        gm_ref, bt_ref = refs[idx:idx + 2]
        idx += 2
    o_ref = refs[idx]
    idx += 1
    h_ref = refs[idx] if (use_bn or use_relu) else None

    mask = mask_ref[...]                               # (1, Lg)
    mc = mask_ref[:, g:g + npos]                       # (1, NP)

    if use_bn or use_relu:
        x = x_ref[...].astype(jnp.float32)
        if use_bn:
            # BatchNorm2d (training-mode batch statistics), pads excluded via mask.
            mean = jnp.sum(x * mask, axis=1, keepdims=True) * inv_count
            var = jnp.sum(((x - mean) * mask) ** 2, axis=1, keepdims=True) * inv_count
            x = (x - mean) * lax.rsqrt(var + BN_EPS) * gm_ref[...] + bt_ref[...]
        if use_relu:
            x = jnp.maximum(x, 0.0)
        h_ref[...] = (x * mask).astype(jnp.bfloat16)
        src = h_ref
    else:
        src = x_ref                                    # pads already zero

    cout = w_ref.shape[1]
    acc = jnp.zeros((cout, npos), jnp.float32)
    for t, d in enumerate(offs):                       # 9 shifted-slice matmuls
        acc += jnp.dot(w_ref[t], src[:, g + d:g + d + npos],
                       preferred_element_type=jnp.float32)
    outc = (acc + b_ref[...]) * mc
    o_ref[...] = jnp.zeros_like(o_ref)
    o_ref[:, g:g + npos] = outc.astype(o_ref.dtype)


def conv3x3(p, flat, mask, n, h, w, *, bn=None, relu=False,
            out_dtype=jnp.bfloat16):
    _, wp, _, g, npos, lg = _layout_dims(n, h, w)
    offs = _tap_offsets(wp)
    cin = flat.shape[0]
    cout = p["w"].shape[1]
    use_bn = bn is not None
    args = [flat, mask, p["w"], p["b"]]
    if use_bn:
        args += [bn["g"], bn["b"]]
    scratch = []
    if use_bn or relu:
        scratch.append(pltpu.VMEM((cin, lg), jnp.bfloat16))
    kernel = functools.partial(_norm_conv3x3_kernel, offs=offs, g=g, npos=npos,
                               use_bn=use_bn, use_relu=relu,
                               inv_count=1.0 / float(n * h * w))
    return pl.pallas_call(
        kernel,
        out_shape=jax.ShapeDtypeStruct((cout, lg), out_dtype),
        scratch_shapes=scratch,
    )(*args)


# ----------------------------------------------------------------------------
# Fully fused ResidualBlock kernel (norm1+relu+conv1+norm2+relu+conv2+skip)
# ----------------------------------------------------------------------------
def _resblock_kernel(*refs, offs, g, npos, use_bn, has_skip, inv_count):
    x_ref, mask_ref, w1_ref, b1_ref, w2_ref, b2_ref = refs[:6]
    idx = 6
    if use_bn:
        g1_ref, be1_ref, g2_ref, be2_ref = refs[idx:idx + 4]
        idx += 4
    if has_skip:
        wsk_ref, bsk_ref = refs[idx:idx + 2]
        idx += 2
    o_ref, h1_ref, h2_ref = refs[idx:idx + 3]

    mask = mask_ref[...]
    mc = mask_ref[:, g:g + npos]
    x = x_ref[...].astype(jnp.float32)

    # norm1 + ReLU (BatchNorm2d training-mode batch stats; pads excluded).
    if use_bn:
        mean = jnp.sum(x * mask, axis=1, keepdims=True) * inv_count
        var = jnp.sum(((x - mean) * mask) ** 2, axis=1, keepdims=True) * inv_count
        h = (x - mean) * lax.rsqrt(var + BN_EPS) * g1_ref[...] + be1_ref[...]
    else:
        h = x
    h1_ref[...] = (jnp.maximum(h, 0.0) * mask).astype(jnp.bfloat16)

    # conv1: 9 shifted-slice matmuls into a lane-dense (Cout, NP) accumulator.
    cout = w1_ref.shape[1]
    acc = jnp.zeros((cout, npos), jnp.float32)
    for t, d in enumerate(offs):
        acc += jnp.dot(w1_ref[t], h1_ref[:, g + d:g + d + npos],
                       preferred_element_type=jnp.float32)
    hmid = acc + b1_ref[...]

    # norm2 + ReLU.  dropout(p=0.0) and time embedding (time_emb_dim=None) are
    # identity in this configuration.
    if use_bn:
        mean2 = jnp.sum(hmid * mc, axis=1, keepdims=True) * inv_count
        var2 = jnp.sum(((hmid - mean2) * mc) ** 2, axis=1, keepdims=True) * inv_count
        hmid = (hmid - mean2) * lax.rsqrt(var2 + BN_EPS) * g2_ref[...] + be2_ref[...]
    hmid = jnp.maximum(hmid, 0.0) * mc

    h2_ref[...] = jnp.zeros_like(h2_ref)
    h2_ref[:, g:g + npos] = hmid.astype(jnp.bfloat16)

    # conv2
    acc2 = jnp.zeros((cout, npos), jnp.float32)
    for t, d in enumerate(offs):
        acc2 += jnp.dot(w2_ref[t], h2_ref[:, g + d:g + d + npos],
                        preferred_element_type=jnp.float32)
    acc2 = acc2 + b2_ref[...]

    # residual / skip (1x1 conv when channel counts differ), fused here.
    if has_skip:
        sk = jnp.dot(wsk_ref[...], x_ref[:, g:g + npos],
                     preferred_element_type=jnp.float32) + bsk_ref[...]
    else:
        sk = x_ref[:, g:g + npos].astype(jnp.float32)

    outc = (acc2 + sk) * mc
    o_ref[...] = jnp.zeros_like(o_ref)
    o_ref[:, g:g + npos] = outc.astype(o_ref.dtype)


def res_block(p, flat, mask, n, h, w):
    _, wp, _, g, npos, lg = _layout_dims(n, h, w)
    offs = _tap_offsets(wp)
    cin = flat.shape[0]
    cout = p["conv1"]["w"].shape[1]
    use_bn = "norm1" in p
    has_skip = "skip" in p
    args = [flat, mask, p["conv1"]["w"], p["conv1"]["b"],
            p["conv2"]["w"], p["conv2"]["b"]]
    if use_bn:
        args += [p["norm1"]["g"], p["norm1"]["b"],
                 p["norm2"]["g"], p["norm2"]["b"]]
    if has_skip:
        args += [p["skip"]["w"], p["skip"]["b"]]
    kernel = functools.partial(_resblock_kernel, offs=offs, g=g, npos=npos,
                               use_bn=use_bn, has_skip=has_skip,
                               inv_count=1.0 / float(n * h * w))
    out = pl.pallas_call(
        kernel,
        out_shape=jax.ShapeDtypeStruct((cout, lg), jnp.bfloat16),
        scratch_shapes=[pltpu.VMEM((cin, lg), jnp.bfloat16),
                        pltpu.VMEM((cout, lg), jnp.bfloat16)],
    )(*args)
    if "attn" in p:
        out = attention_block(p["attn"], out, n, h, w)
    return out


# ----------------------------------------------------------------------------
# Downsample: Conv2d(k=3, stride=2, pad=1).  The strided 9-tap gather is tiny
# (one conv in the whole net) and done in the wrapper; the matmul stays
# lane-dense (Cout on sublanes, N*Ho*Wo on lanes) in a single Pallas call.
# ----------------------------------------------------------------------------
def _dense_kernel(w_ref, x_ref, b_ref, o_ref):
    o_ref[...] = (jnp.dot(w_ref[...], x_ref[...],
                          preferred_element_type=jnp.float32)
                  + b_ref[...]).astype(o_ref.dtype)


def downsample(p, flat, n, h, w):
    ho = (h - 1) // 2 + 1
    wo = (w - 1) // 2 + 1
    xp = padded_view(flat, n, h, w)                        # (C, N, Hp, Wp) bf16
    c = xp.shape[0]
    taps = [xp[:, :, i:i + 2 * ho:2, j:j + 2 * wo:2]
            for i in range(3) for j in range(3)]
    patches = jnp.concatenate(taps, axis=0).reshape(9 * c, n * ho * wo)
    cout = p["w"].shape[0]
    out = pl.pallas_call(
        _dense_kernel,
        out_shape=jax.ShapeDtypeStruct((cout, n * ho * wo), jnp.bfloat16),
    )(p["w"], patches, p["b"])
    return pack_flat(out.reshape(cout, n, ho, wo)), ho, wo


# ----------------------------------------------------------------------------
# Fused attention block: qkv proj -> scores -> softmax -> PV -> out proj + x,
# one pallas_call, batch on a "parallel" grid (keeps both v7x TCs busy).
# K is pre-transposed in the wrapper so every dot is a plain contraction.
# ----------------------------------------------------------------------------
def _attn_kernel(hm_ref, ht_ref, res_ref, wq_ref, wk_ref, wv_ref, wo_ref,
                 bq_ref, bk_ref, bv_ref, bo_ref, o_ref, *, scale):
    # TODO(synk): flash-style KV tiling before scaling resolution; the whole
    # (HW, HW) score tile is VMEM-resident here (fine at these sizes).
    hm = hm_ref[...]                                    # (HW, C) bf16
    ht = ht_ref[...]                                    # (C, HW) bf16
    q = jnp.dot(hm, wq_ref[...], preferred_element_type=jnp.float32) + bq_ref[...]
    kt = jnp.dot(wk_ref[...], ht, preferred_element_type=jnp.float32) + bk_ref[...]
    v = jnp.dot(hm, wv_ref[...], preferred_element_type=jnp.float32) + bv_ref[...]
    s = jnp.dot(q.astype(jnp.bfloat16), kt.astype(jnp.bfloat16),
                preferred_element_type=jnp.float32) * scale
    s = s - jnp.max(s, axis=-1, keepdims=True)
    pw = jnp.exp(s)
    denom = jnp.sum(pw, axis=-1, keepdims=True)
    o = jnp.dot(pw.astype(jnp.bfloat16), v.astype(jnp.bfloat16),
                preferred_element_type=jnp.float32)
    o = o / denom
    y = jnp.dot(o.astype(jnp.bfloat16), wo_ref[...],
                preferred_element_type=jnp.float32) + bo_ref[...]
    o_ref[...] = (y + res_ref[...].astype(jnp.float32)).astype(o_ref.dtype)


def attention_block(p, flat, n, h, w):
    c = flat.shape[0]
    hw = h * w
    xv = unpack_flat(flat, n, h, w)                        # (C, N, H, W) bf16
    x_t = xv.reshape(c, n, hw).transpose(1, 0, 2)          # (N, C, HW)
    if "norm" in p:
        # Only reachable for norm='bn' attention levels (unused in this config);
        # plain-XLA batch stats are fine for this rare path.
        xm = x_t.astype(jnp.float32)
        mean = xm.mean(axis=(0, 2), keepdims=True)
        var = xm.var(axis=(0, 2), keepdims=True)
        hn_t = ((xm - mean) * lax.rsqrt(var + BN_EPS)
                * p["norm"]["g"].reshape(1, c, 1)
                + p["norm"]["b"].reshape(1, c, 1)).astype(jnp.bfloat16)
    else:
        hn_t = x_t
    hn_m = hn_t.transpose(0, 2, 1)                         # (N, HW, C)
    res_m = x_t.transpose(0, 2, 1)                         # residual is pre-norm x

    spec_m = pl.BlockSpec((None, hw, c), lambda i: (i, 0, 0))
    spec_t = pl.BlockSpec((None, c, hw), lambda i: (i, 0, 0))
    spec_w = pl.BlockSpec((c, c), lambda i: (0, 0))
    spec_br = pl.BlockSpec((1, c), lambda i: (0, 0))
    spec_bc = pl.BlockSpec((c, 1), lambda i: (0, 0))

    y = pl.pallas_call(
        functools.partial(_attn_kernel, scale=float(c) ** -0.5),
        out_shape=jax.ShapeDtypeStruct((n, hw, c), jnp.bfloat16),
        grid=(n,),
        in_specs=[spec_m, spec_t, spec_m, spec_w, spec_w, spec_w, spec_w,
                  spec_br, spec_bc, spec_br, spec_br],
        out_specs=spec_m,
        compiler_params=pltpu.CompilerParams(
            dimension_semantics=("parallel",)),
    )(hn_m, hn_t, res_m, p["wq"], p["wk"], p["wv"], p["wo"],
      p["bq"], p["bk"], p["bv"], p["bo"])

    y4 = y.transpose(2, 0, 1).reshape(c, n, h, w)
    return pack_flat(y4)


# ----------------------------------------------------------------------------
# Parameter init (deterministic, synthetic), weights pre-laid-out once.
# ----------------------------------------------------------------------------
def _conv3x3_init(key, cin, cout):
    w = jax.random.normal(key, (cout, cin, 3, 3), jnp.float32) * 0.05
    w_taps = jnp.transpose(w, (2, 3, 0, 1)).reshape(9, cout, cin)
    return {"w": w_taps.astype(jnp.bfloat16),
            "b": jnp.zeros((cout, 1), jnp.float32)}


def _conv1x1_init(key, cin, cout):
    w = jax.random.normal(key, (cout, cin), jnp.float32) * 0.05
    return {"w": w.astype(jnp.bfloat16), "b": jnp.zeros((cout, 1), jnp.float32)}


def _downsample_init(key, c):
    w = jax.random.normal(key, (c, c, 3, 3), jnp.float32) * 0.05
    wm = jnp.transpose(w, (0, 2, 3, 1)).reshape(c, 9 * c)  # tap-major K
    return {"w": wm.astype(jnp.bfloat16), "b": jnp.zeros((c, 1), jnp.float32)}


def _norm_init(c):
    return {"g": jnp.ones((c, 1), jnp.float32), "b": jnp.zeros((c, 1), jnp.float32)}


def _attn_init(key, c, norm_kind):
    k1, k2 = jax.random.split(key)
    wqkv = jax.random.normal(k1, (3 * c, c), jnp.float32) * 0.05
    wo = jax.random.normal(k2, (c, c), jnp.float32) * 0.05
    p = {"wq": wqkv[0:c].T.astype(jnp.bfloat16),
         "wk": wqkv[c:2 * c].astype(jnp.bfloat16),   # applied as k^T = Wk @ x^T
         "wv": wqkv[2 * c:3 * c].T.astype(jnp.bfloat16),
         "wo": wo.T.astype(jnp.bfloat16),
         "bq": jnp.zeros((1, c), jnp.float32),
         "bk": jnp.zeros((c, 1), jnp.float32),
         "bv": jnp.zeros((1, c), jnp.float32),
         "bo": jnp.zeros((1, c), jnp.float32)}
    if norm_kind == "bn":
        p["norm"] = _norm_init(c)
    return p


def _res_block_init(key, cin, cout, norm_kind, use_attention):
    ks = jax.random.split(key, 4)
    p = {"conv1": _conv3x3_init(ks[0], cin, cout),
         "conv2": _conv3x3_init(ks[1], cout, cout)}
    if norm_kind == "bn":
        p["norm1"] = _norm_init(cin)
        p["norm2"] = _norm_init(cout)
    if cin != cout:
        p["skip"] = _conv1x1_init(ks[2], cin, cout)
    if use_attention:
        p["attn"] = _attn_init(ks[3], cout, norm_kind)
    return p


def init_encoder_params(key, cfg):
    ks = iter(jax.random.split(key, 64))
    base = cfg["base_channel"]
    mults = (1,) + tuple(cfg["channel_multipliers"])
    num_res = len(cfg["channel_multipliers"])

    params = {"conv_in": _conv3x3_init(next(ks), cfg["in_channel"], base),
              "down": []}
    for i in range(num_res):
        block_in = base * mults[i]
        block_out = base * cfg["channel_multipliers"][i]
        blocks = []
        for _ in range(cfg["num_res_blocks"]):
            blocks.append(_res_block_init(next(ks), block_in, block_out,
                                          cfg["norm"],
                                          i in cfg["attention_resolutions"]))
            block_in = block_out
        level = {"blocks": blocks}
        if i != num_res - 1:
            level["downsample"] = _downsample_init(next(ks), block_out)
        params["down"].append(level)

    block_in = mults[-1] * base
    params["mid_block_1"] = _res_block_init(next(ks), block_in, block_in, None, True)
    params["mid_block_2"] = _res_block_init(next(ks), block_in, block_in, None, True)
    params["norm_out"] = _norm_init(block_in) if cfg["norm"] == "bn" else None
    out_ch = 2 * cfg["z_channels"] if cfg["double_z"] else cfg["z_channels"]
    params["conv_out"] = _conv3x3_init(next(ks), block_in, out_ch)
    return params


# ----------------------------------------------------------------------------
# Encoder forward (NCHW at the module boundary, lane-dense flat layout inside)
# ----------------------------------------------------------------------------
def encoder_forward(params, cfg, x, time_emb=None):
    # time_emb_dim=None in this config -> time-embedding path is a no-op.
    n, _, hcur, wcur = x.shape
    flat = pack_flat(jnp.transpose(x, (1, 0, 2, 3)))     # (Cin, Lg) bf16
    mask = make_mask(n, hcur, wcur)

    flat = conv3x3(params["conv_in"], flat, mask, n, hcur, wcur)

    num_res = len(cfg["channel_multipliers"])
    for i in range(num_res):
        level = params["down"][i]
        for blk in level["blocks"]:
            flat = res_block(blk, flat, mask, n, hcur, wcur)
        if i != num_res - 1:
            flat, hcur, wcur = downsample(level["downsample"], flat, n, hcur, wcur)
            mask = make_mask(n, hcur, wcur)

    flat = res_block(params["mid_block_1"], flat, mask, n, hcur, wcur)
    flat = res_block(params["mid_block_2"], flat, mask, n, hcur, wcur)

    # norm_out + conv_out fused into one call; final output stays f32.
    flat = conv3x3(params["conv_out"], flat, mask, n, hcur, wcur,
                   bn=params["norm_out"], relu=False, out_dtype=jnp.float32)

    out = unpack_flat(flat, n, hcur, wcur)               # (Cz, N, H, W) f32
    return jnp.transpose(out, (1, 0, 2, 3))              # NCHW


# ----------------------------------------------------------------------------
if __name__ == "__main__":
    cfg = dict(
        in_channel=3,
        base_channel=8,
        z_channels=4,
        channel_multipliers=(1, 2),
        num_res_blocks=1,
        norm="bn",
        num_groups=4,
        attention_resolutions=(),
        double_z=False,
    )

    key = jax.random.PRNGKey(0)
    pkey, xkey = jax.random.split(key)
    params = init_encoder_params(pkey, cfg)

    x = jax.random.normal(xkey, (2, cfg["in_channel"], 16, 16), jnp.float32)

    fwd = jax.jit(functools.partial(encoder_forward, params, cfg))
    out = jax.block_until_ready(fwd(x))

    # 16x16 -> one downsample -> 8x8; channels = z_channels = 4
    assert out.shape == (2, cfg["z_channels"], 8, 8), out.shape
    assert jnp.all(jnp.isfinite(out))
    print("KERNEL_OK")
</pallas_src>

<mosaic_0001>
module attributes {stable_mosaic.version = 11 : i64} {
  func.func @_norm_conv3x3_kernel(%arg0: memref<3x686xbf16, #tpu.memory_space<vmem>>, %arg1: memref<1x686xf32, #tpu.memory_space<vmem>>, %arg2: memref<9x8x3xbf16, #tpu.memory_space<vmem>>, %arg3: memref<8x1xf32, #tpu.memory_space<vmem>>, %arg4: memref<8x686xbf16, #tpu.memory_space<vmem>>) attributes {dimension_semantics = [], scalar_prefetch = 0 : i64, scratch_operands = 0 : i64, tpu.core_type = #tpu.core_type<tc>} {
    %c0 = arith.constant 0 : index
    %c19 = arith.constant 19 : index
    %0 = vector.load %arg1[%c0, %c19] : memref<1x686xf32, #tpu.memory_space<vmem>>, vector<1x648xf32>
    %cst = arith.constant 0.000000e+00 : f32
    %1 = vector.broadcast %cst : f32 to vector<8x648xf32>
    %c0_0 = arith.constant 0 : index
    %c0_1 = arith.constant 0 : index
    %c0_2 = arith.constant 0 : index
    %2 = vector.load %arg2[%c0_0, %c0_1, %c0_2] : memref<9x8x3xbf16, #tpu.memory_space<vmem>>, vector<1x8x3xbf16>
    %3 = vector.shape_cast %2 : vector<1x8x3xbf16> to vector<8x3xbf16>
    %c0_3 = arith.constant 0 : index
    %c0_4 = arith.constant 0 : index
    %4 = vector.load %arg0[%c0_3, %c0_4] : memref<3x686xbf16, #tpu.memory_space<vmem>>, vector<3x648xbf16>
    %cst_5 = arith.constant dense<0.000000e+00> : vector<8x648xf32>
    %5 = tpu.matmul %3, %4, %cst_5 {dimension_numbers = #tpu.dot_dimension_numbers<[1], [0], [0], [1], [0, 0, 1, 1], [], []>} : vector<8x3xbf16>, vector<3x648xbf16>, vector<8x648xf32> -> vector<8x648xf32>
    %6 = arith.addf %1, %5 : vector<8x648xf32>
    %c1 = arith.constant 1 : index
    %c0_6 = arith.constant 0 : index
    %c0_7 = arith.constant 0 : index
    %7 = vector.load %arg2[%c1, %c0_6, %c0_7] : memref<9x8x3xbf16, #tpu.memory_space<vmem>>, vector<1x8x3xbf16>
    %8 = vector.shape_cast %7 : vector<1x8x3xbf16> to vector<8x3xbf16>
    %c0_8 = arith.constant 0 : index
    %c1_9 = arith.constant 1 : index
    %9 = vector.load %arg0[%c0_8, %c1_9] : memref<3x686xbf16, #tpu.memory_space<vmem>>, vector<3x648xbf16>
    %cst_10 = arith.constant dense<0.000000e+00> : vector<8x648xf32>
    %10 = tpu.matmul %8, %9, %cst_10 {dimension_numbers = #tpu.dot_dimension_numbers<[1], [0], [0], [1], [0, 0, 1, 1], [], []>} : vector<8x3xbf16>, vector<3x648xbf16>, vector<8x648xf32> -> vector<8x648xf32>
    %11 = arith.addf %6, %10 : vector<8x648xf32>
    %c2 = arith.constant 2 : index
    %c0_11 = arith.constant 0 : index
    %c0_12 = arith.constant 0 : index
    %12 = vector.load %arg2[%c2, %c0_11, %c0_12] : memref<9x8x3xbf16, #tpu.memory_space<vmem>>, vector<1x8x3xbf16>
    %13 = vector.shape_cast %12 : vector<1x8x3xbf16> to vector<8x3xbf16>
    %c0_13 = arith.constant 0 : index
    %c2_14 = arith.constant 2 : index
    %14 = vector.load %arg0[%c0_13, %c2_14] : memref<3x686xbf16, #tpu.memory_space<vmem>>, vector<3x648xbf16>
    %cst_15 = arith.constant dense<0.000000e+00> : vector<8x648xf32>
    %15 = tpu.matmul %13, %14, %cst_15 {dimension_numbers = #tpu.dot_dimension_numbers<[1], [0], [0], [1], [0, 0, 1, 1], [], []>} : vector<8x3xbf16>, vector<3x648xbf16>, vector<8x648xf32> -> vector<8x648xf32>
    %16 = arith.addf %11, %15 : vector<8x648xf32>
    %c3 = arith.constant 3 : index
    %c0_16 = arith.constant 0 : index
    %c0_17 = arith.constant 0 : index
    %17 = vector.load %arg2[%c3, %c0_16, %c0_17] : memref<9x8x3xbf16, #tpu.memory_space<vmem>>, vector<1x8x3xbf16>
    %18 = vector.shape_cast %17 : vector<1x8x3xbf16> to vector<8x3xbf16>
    %c0_18 = arith.constant 0 : index
    %c18 = arith.constant 18 : index
    %19 = vector.load %arg0[%c0_18, %c18] : memref<3x686xbf16, #tpu.memory_space<vmem>>, vector<3x648xbf16>
    %cst_19 = arith.constant dense<0.000000e+00> : vector<8x648xf32>
    %20 = tpu.matmul %18, %19, %cst_19 {dimension_numbers = #tpu.dot_dimension_numbers<[1], [0], [0], [1], [0, 0, 1, 1], [], []>} : vector<8x3xbf16>, vector<3x648xbf16>, vector<8x648xf32> -> vector<8x648xf32>
    %21 = arith.addf %16, %20 : vector<8x648xf32>
    %c4 = arith.constant 4 : index
    %c0_20 = arith.constant 0 : index
    %c0_21 = arith.constant 0 : index
    %22 = vector.load %arg2[%c4, %c0_20, %c0_21] : memref<9x8x3xbf16, #tpu.memory_space<vmem>>, vector<1x8x3xbf16>
    %23 = vector.shape_cast %22 : vector<1x8x3xbf16> to vector<8x3xbf16>
    %c0_22 = arith.constant 0 : index
    %c19_23 = arith.constant 19 : index
    %24 = vector.load %arg0[%c0_22, %c19_23] : memref<3x686xbf16, #tpu.memory_space<vmem>>, vector<3x648xbf16>
    %cst_24 = arith.constant dense<0.000000e+00> : vector<8x648xf32>
    %25 = tpu.matmul %23, %24, %cst_24 {dimension_numbers = #tpu.dot_dimension_numbers<[1], [0], [0], [1], [0, 0, 1, 1], [], []>} : vector<8x3xbf16>, vector<3x648xbf16>, vector<8x648xf32> -> vector<8x648xf32>
    %26 = arith.addf %21, %25 : vector<8x648xf32>
    %c5 = arith.constant 5 : index
    %c0_25 = arith.constant 0 : index
    %c0_26 = arith.constant 0 : index
    %27 = vector.load %arg2[%c5, %c0_25, %c0_26] : memref<9x8x3xbf16, #tpu.memory_space<vmem>>, vector<1x8x3xbf16>
    %28 = vector.shape_cast %27 : vector<1x8x3xbf16> to vector<8x3xbf16>
    %c0_27 = arith.constant 0 : index
    %c20 = arith.constant 20 : index
    %29 = vector.load %arg0[%c0_27, %c20] : memref<3x686xbf16, #tpu.memory_space<vmem>>, vector<3x648xbf16>
    %cst_28 = arith.constant dense<0.000000e+00> : vector<8x648xf32>
    %30 = tpu.matmul %28, %29, %cst_28 {dimension_numbers = #tpu.dot_dimension_numbers<[1], [0], [0], [1], [0, 0, 1, 1], [], []>} : vector<8x3xbf16>, vector<3x648xbf16>, vector<8x648xf32> -> vector<8x648xf32>
    %31 = arith.addf %26, %30 : vector<8x648xf32>
    %c6 = arith.constant 6 : index
    %c0_29 = arith.constant 0 : index
    %c0_30 = arith.constant 0 : index
    %32 = vector.load %arg2[%c6, %c0_29, %c0_30] : memref<9x8x3xbf16, #tpu.memory_space<vmem>>, vector<1x8x3xbf16>
    %33 = vector.shape_cast %32 : vector<1x8x3xbf16> to vector<8x3xbf16>
    %c0_31 = arith.constant 0 : index
    %c36 = arith.constant 36 : index
    %34 = vector.load %arg0[%c0_31, %c36] : memref<3x686xbf16, #tpu.memory_space<vmem>>, vector<3x648xbf16>
    %cst_32 = arith.constant dense<0.000000e+00> : vector<8x648xf32>
    %35 = tpu.matmul %33, %34, %cst_32 {dimension_numbers = #tpu.dot_dimension_numbers<[1], [0], [0], [1], [0, 0, 1, 1], [], []>} : vector<8x3xbf16>, vector<3x648xbf16>, vector<8x648xf32> -> vector<8x648xf32>
    %36 = arith.addf %31, %35 : vector<8x648xf32>
    %c7 = arith.constant 7 : index
    %c0_33 = arith.constant 0 : index
    %c0_34 = arith.constant 0 : index
    %37 = vector.load %arg2[%c7, %c0_33, %c0_34] : memref<9x8x3xbf16, #tpu.memory_space<vmem>>, vector<1x8x3xbf16>
    %38 = vector.shape_cast %37 : vector<1x8x3xbf16> to vector<8x3xbf16>
    %c0_35 = arith.constant 0 : index
    %c37 = arith.constant 37 : index
    %39 = vector.load %arg0[%c0_35, %c37] : memref<3x686xbf16, #tpu.memory_space<vmem>>, vector<3x648xbf16>
    %cst_36 = arith.constant dense<0.000000e+00> : vector<8x648xf32>
    %40 = tpu.matmul %38, %39, %cst_36 {dimension_numbers = #tpu.dot_dimension_numbers<[1], [0], [0], [1], [0, 0, 1, 1], [], []>} : vector<8x3xbf16>, vector<3x648xbf16>, vector<8x648xf32> -> vector<8x648xf32>
    %41 = arith.addf %36, %40 : vector<8x648xf32>
    %c8 = arith.constant 8 : index
    %c0_37 = arith.constant 0 : index
    %c0_38 = arith.constant 0 : index
    %42 = vector.load %arg2[%c8, %c0_37, %c0_38] : memref<9x8x3xbf16, #tpu.memory_space<vmem>>, vector<1x8x3xbf16>
    %43 = vector.shape_cast %42 : vector<1x8x3xbf16> to vector<8x3xbf16>
    %c0_39 = arith.constant 0 : index
    %c38 = arith.constant 38 : index
    %44 = vector.load %arg0[%c0_39, %c38] : memref<3x686xbf16, #tpu.memory_space<vmem>>, vector<3x648xbf16>
    %cst_40 = arith.constant dense<0.000000e+00> : vector<8x648xf32>
    %45 = tpu.matmul %43, %44, %cst_40 {dimension_numbers = #tpu.dot_dimension_numbers<[1], [0], [0], [1], [0, 0, 1, 1], [], []>} : vector<8x3xbf16>, vector<3x648xbf16>, vector<8x648xf32> -> vector<8x648xf32>
    %46 = arith.addf %41, %45 : vector<8x648xf32>
    %c0_41 = arith.constant 0 : index
    %c0_42 = arith.constant 0 : index
    %47 = vector.load %arg3[%c0_41, %c0_42] : memref<8x1xf32, #tpu.memory_space<vmem>>, vector<8x1xf32>
    %48 = vector.broadcast %47 : vector<8x1xf32> to vector<8x648xf32>
    %49 = arith.addf %46, %48 : vector<8x648xf32>
    %50 = vector.broadcast %0 : vector<1x648xf32> to vector<8x648xf32>
    %51 = arith.mulf %49, %50 : vector<8x648xf32>
    %cst_43 = arith.constant 0.000000e+00 : bf16
    %52 = vector.broadcast %cst_43 : bf16 to vector<8x686xbf16>
    %c0_44 = arith.constant 0 : index
    %c0_45 = arith.constant 0 : index
    %53 = vector.load %arg4[%c0_44, %c0_45] : memref<8x686xbf16, #tpu.memory_space<vmem>>, vector<8x686xbf16>
    tpu.vector_store %arg4[%c0_44, %c0_45], %52 {strides = array<i32>} : memref<8x686xbf16, #tpu.memory_space<vmem>>, vector<8x686xbf16>,
    %54 = arith.truncf %51 : vector<8x648xf32> to vector<8x648xbf16>
    %c0_46 = arith.constant 0 : index
    %c19_47 = arith.constant 19 : index
    %55 = vector.load %arg4[%c0_46, %c19_47] : memref<8x686xbf16, #tpu.memory_space<vmem>>, vector<8x648xbf16>
    tpu.vector_store %arg4[%c0_46, %c19_47], %54 {strides = array<i32>} : memref<8x686xbf16, #tpu.memory_space<vmem>>, vector<8x648xbf16>,
    return
  }
}

module attributes {stable_mosaic.version = 11 : i64} {
  func.func @_resblock_kernel(%arg0: memref<8x686xbf16, #tpu.memory_space<vmem>>, %arg1: memref<1x686xf32, #tpu.memory_space<vmem>>, %arg2: memref<9x8x8xbf16, #tpu.memory_space<vmem>>, %arg3: memref<8x1xf32, #tpu.memory_space<vmem>>, %arg4: memref<9x8x8xbf16, #tpu.memory_space<vmem>>, %arg5: memref<8x1xf32, #tpu.memory_space<vmem>>, %arg6: memref<8x1xf32, #tpu.memory_space<vmem>>, %arg7: memref<8x1xf32, #tpu.memory_space<vmem>>, %arg8: memref<8x1xf32, #tpu.memory_space<vmem>>, %arg9: memref<8x1xf32, #tpu.memory_space<vmem>>, %arg10: memref<8x686xbf16, #tpu.memory_space<vmem>>, %arg11: memref<8x686xbf16, #tpu.memory_space<vmem>>, %arg12: memref<8x686xbf16, #tpu.memory_space<vmem>>) attributes {dimension_semantics = [], scalar_prefetch = 0 : i64, scratch_operands = 2 : i64, tpu.core_type = #tpu.core_type<tc>} {
    %c0 = arith.constant 0 : index
    %c0_0 = arith.constant 0 : index
    %0 = vector.load %arg1[%c0, %c0_0] : memref<1x686xf32, #tpu.memory_space<vmem>>, vector<1x686xf32>
    %c0_1 = arith.constant 0 : index
    %c19 = arith.constant 19 : index
    %1 = vector.load %arg1[%c0_1, %c19] : memref<1x686xf32, #tpu.memory_space<vmem>>, vector<1x648xf32>
    %c0_2 = arith.constant 0 : index
    %c0_3 = arith.constant 0 : index
    %2 = vector.load %arg0[%c0_2, %c0_3] : memref<8x686xbf16, #tpu.memory_space<vmem>>, vector<8x686xbf16>
    %3 = arith.extf %2 : vector<8x686xbf16> to vector<8x686xf32>
    %4 = vector.broadcast %0 : vector<1x686xf32> to vector<8x686xf32>
    %5 = arith.mulf %3, %4 : vector<8x686xf32>
    %cst = arith.constant dense<0.000000e+00> : vector<8xf32>
    %6 = vector.multi_reduction <add>, %5, %cst [1] : vector<8x686xf32> to vector<8xf32>
    %7 = vector.shape_cast %6 : vector<8xf32> to vector<8x1xf32>
    %cst_4 = arith.constant 0.001953125 : f32
    %8 = vector.broadcast %cst_4 : f32 to vector<8x1xf32>
    %9 = arith.mulf %7, %8 : vector<8x1xf32>
    %10 = vector.broadcast %9 : vector<8x1xf32> to vector<8x686xf32>
    %11 = arith.subf %3, %10 : vector<8x686xf32>
    %12 = vector.broadcast %0 : vector<1x686xf32> to vector<8x686xf32>
    %13 = arith.mulf %11, %12 : vector<8x686xf32>
    %14 = arith.mulf %13, %13 : vector<8x686xf32>
    %cst_5 = arith.constant dense<0.000000e+00> : vector<8xf32>
    %15 = vector.multi_reduction <add>, %14, %cst_5 [1] : vector<8x686xf32> to vector<8xf32>
    %16 = vector.shape_cast %15 : vector<8xf32> to vector<8x1xf32>
    %cst_6 = arith.constant 0.001953125 : f32
    %17 = vector.broadcast %cst_6 : f32 to vector<8x1xf32>
    %18 = arith.mulf %16, %17 : vector<8x1xf32>
    %19 = vector.broadcast %9 : vector<8x1xf32> to vector<8x686xf32>
    %20 = arith.subf %3, %19 : vector<8x686xf32>
    %cst_7 = arith.constant 9.99999974E-6 : f32
    %21 = vector.broadcast %cst_7 : f32 to vector<8x1xf32>
    %22 = arith.addf %18, %21 : vector<8x1xf32>
    %23 = math.rsqrt %22 : vector<8x1xf32>
    %24 = vector.broadcast %23 : vector<8x1xf32> to vector<8x686xf32>
    %25 = arith.mulf %20, %24 : vector<8x686xf32>
    %c0_8 = arith.constant 0 : index
    %c0_9 = arith.constant 0 : index
    %26 = vector.load %arg6[%c0_8, %c0_9] : memref<8x1xf32, #tpu.memory_space<vmem>>, vector<8x1xf32>
    %27 = vector.broadcast %26 : vector<8x1xf32> to vector<8x686xf32>
    %28 = arith.mulf %25, %27 : vector<8x686xf32>
    %c0_10 = arith.constant 0 : index
    %c0_11 = arith.constant 0 : index
    %29 = vector.load %arg7[%c0_10, %c0_11] : memref<8x1xf32, #tpu.memory_space<vmem>>, vector<8x1xf32>
    %30 = vector.broadcast %29 : vector<8x1xf32> to vector<8x686xf32>
    %31 = arith.addf %28, %30 : vector<8x686xf32>
    %cst_12 = arith.constant 0.000000e+00 : f32
    %32 = vector.broadcast %cst_12 : f32 to vector<8x686xf32>
    %33 = arith.maximumf %31, %32 : vector<8x686xf32>
    %34 = vector.broadcast %0 : vector<1x686xf32> to vector<8x686xf32>
    %35 = arith.mulf %33, %34 : vector<8x686xf32>
    %36 = arith.truncf %35 : vector<8x686xf32> to vector<8x686xbf16>
    %c0_13 = arith.constant 0 : index
    %c0_14 = arith.constant 0 : index
    %37 = vector.load %arg11[%c0_13, %c0_14] : memref<8x686xbf16, #tpu.memory_space<vmem>>, vector<8x686xbf16>
    tpu.vector_store %arg11[%c0_13, %c0_14], %36 {strides = array<i32>} : memref<8x686xbf16, #tpu.memory_space<vmem>>, vector<8x686xbf16>,
    %cst_15 = arith.constant 0.000000e+00 : f32
    %38 = vector.broadcast %cst_15 : f32 to vector<8x648xf32>
    %c0_16 = arith.constant 0 : index
    %c0_17 = arith.constant 0 : index
    %c0_18 = arith.constant 0 : index
    %39 = vector.load %arg2[%c0_16, %c0_17, %c0_18] : memref<9x8x8xbf16, #tpu.memory_space<vmem>>, vector<1x8x8xbf16>
    %40 = vector.shape_cast %39 : vector<1x8x8xbf16> to vector<8x8xbf16>
    %c0_19 = arith.constant 0 : index
    %c0_20 = arith.constant 0 : index
    %41 = vector.load %arg11[%c0_19, %c0_20] : memref<8x686xbf16, #tpu.memory_space<vmem>>, vector<8x648xbf16>
    %cst_21 = arith.constant dense<0.000000e+00> : vector<8x648xf32>
    %42 = tpu.matmul %40, %41, %cst_21 {dimension_numbers = #tpu.dot_dimension_numbers<[1], [0], [0], [1], [0, 0, 1, 1], [], []>} : vector<8x8xbf16>, vector<8x648xbf16>, vector<8x648xf32> -> vector<8x648xf32>
    %43 = arith.addf %38, %42 : vector<8x648xf32>
    %c1 = arith.constant 1 : index
    %c0_22 = arith.constant 0 : index
    %c0_23 = arith.constant 0 : index
    %44 = vector.load %arg2[%c1, %c0_22, %c0_23] : memref<9x8x8xbf16, #tpu.memory_space<vmem>>, vector<1x8x8xbf16>
    %45 = vector.shape_cast %44 : vector<1x8x8xbf16> to vector<8x8xbf16>
    %c0_24 = arith.constant 0 : index
    %c1_25 = arith.constant 1 : index
    %46 = vector.load %arg11[%c0_24, %c1_25] : memref<8x686xbf16, #tpu.memory_space<vmem>>, vector<8x648xbf16>
    %cst_26 = arith.constant dense<0.000000e+00> : vector<8x648xf32>
    %47 = tpu.matmul %45, %46, %cst_26 {dimension_numbers = #tpu.dot_dimension_numbers<[1], [0], [0], [1], [0, 0, 1, 1], [], []>} : vector<8x8xbf16>, vector<8x648xbf16>, vector<8x648xf32> -> vector<8x648xf32>
    %48 = arith.addf %43, %47 : vector<8x648xf32>
    %c2 = arith.constant 2 : index
    %c0_27 = arith.constant 0 : index
    %c0_28 = arith.constant 0 : index
    %49 = vector.load %arg2[%c2, %c0_27, %c0_28] : memref<9x8x8xbf16, #tpu.memory_space<vmem>>, vector<1x8x8xbf16>
    %50 = vector.shape_cast %49 : vector<1x8x8xbf16> to vector<8x8xbf16>
    %c0_29 = arith.constant 0 : index
    %c2_30 = arith.constant 2 : index
    %51 = vector.load %arg11[%c0_29, %c2_30] : memref<8x686xbf16, #tpu.memory_space<vmem>>, vector<8x648xbf16>
    %cst_31 = arith.constant dense<0.000000e+00> : vector<8x648xf32>
    %52 = tpu.matmul %50, %51, %cst_31 {dimension_numbers = #tpu.dot_dimension_numbers<[1], [0], [0], [1], [0, 0, 1, 1], [], []>} : vector<8x8xbf16>, vector<8x648xbf16>, vector<8x648xf32> -> vector<8x648xf32>
    %53 = arith.addf %48, %52 : vector<8x648xf32>
    %c3 = arith.constant 3 : index
    %c0_32 = arith.constant 0 : index
    %c0_33 = arith.constant 0 : index
    %54 = vector.load %arg2[%c3, %c0_32, %c0_33] : memref<9x8x8xbf16, #tpu.memory_space<vmem>>, vector<1x8x8xbf16>
    %55 = vector.shape_cast %54 : vector<1x8x8xbf16> to vector<8x8xbf16>
    %c0_34 = arith.constant 0 : index
    %c18 = arith.constant 18 : index
    %56 = vector.load %arg11[%c0_34, %c18] : memref<8x686xbf16, #tpu.memory_space<vmem>>, vector<8x648xbf16>
    %cst_35 = arith.constant dense<0.000000e+00> : vector<8x648xf32>
    %57 = tpu.matmul %55, %56, %cst_35 {dimension_numbers = #tpu.dot_dimension_numbers<[1], [0], [0], [1], [0, 0, 1, 1], [], []>} : vector<8x8xbf16>, vector<8x648xbf16>, vector<8x648xf32> -> vector<8x648xf32>
    %58 = arith.addf %53, %57 : vector<8x648xf32>
    %c4 = arith.constant 4 : index
    %c0_36 = arith.constant 0 : index
    %c0_37 = arith.constant 0 : index
    %59 = vector.load %arg2[%c4, %c0_36, %c0_37] : memref<9x8x8xbf16, #tpu.memory_space<vmem>>, vector<1x8x8xbf16>
    %60 = vector.shape_cast %59 : vector<1x8x8xbf16> to vector<8x8xbf16>
    %c0_38 = arith.constant 0 : index
    %c19_39 = arith.constant 19 : index
    %61 = vector.load %arg11[%c0_38, %c19_39] : memref<8x686xbf16, #tpu.memory_space<vmem>>, vector<8x648xbf16>
    %cst_40 = arith.constant dense<0.000000e+00> : vector<8x648xf32>
    %62 = tpu.matmul %60, %61, %cst_40 {dimension_numbers = #tpu.dot_dimension_numbers<[1], [0], [0], [1], [0, 0, 1, 1], [], []>} : vector<8x8xbf16>, vector<8x648xbf16>, vector<8x648xf32> -> vector<8x648xf32>
    %63 = arith.addf %58, %62 : vector<8x648xf32>
    %c5 = arith.constant 5 : index
    %c0_41 = arith.constant 0 : index
    %c0_42 = arith.constant 0 : index
    %64 = vector.load %arg2[%c5, %c0_41, %c0_42] : memref<9x8x8xbf16, #tpu.memory_space<vmem>>, vector<1x8x8xbf16>
    %65 = vector.shape_cast %64 : vector<1x8x8xbf16> to vector<8x8xbf16>
    %c0_43 = arith.constant 0 : index
    %c20 = arith.constant 20 : index
    %66 = vector.load %arg11[%c0_43, %c20] : memref<8x686xbf16, #tpu.memory_space<vmem>>, vector<8x648xbf16>
    %cst_44 = arith.constant dense<0.000000e+00> : vector<8x648xf32>
    %67 = tpu.matmul %65, %66, %cst_44 {dimension_numbers = #tpu.dot_dimension_numbers<[1], [0], [0], [1], [0, 0, 1, 1], [], []>} : vector<8x8xbf16>, vector<8x648xbf16>, vector<8x648xf32> -> vector<8x648xf32>
    %68 = arith.addf %63, %67 : vector<8x648xf32>
    %c6 = arith.constant 6 : index
    %c0_45 = arith.constant 0 : index
    %c0_46 = arith.constant 0 : index
    %69 = vector.load %arg2[%c6, %c0_45, %c0_46] : memref<9x8x8xbf16, #tpu.memory_space<vmem>>, vector<1x8x8xbf16>
    %70 = vector.shape_cast %69 : vector<1x8x8xbf16> to vector<8x8xbf16>
    %c0_47 = arith.constant 0 : index
    %c36 = arith.constant 36 : index
    %71 = vector.load %arg11[%c0_47, %c36] : memref<8x686xbf16, #tpu.memory_space<vmem>>, vector<8x648xbf16>
    %cst_48 = arith.constant dense<0.000000e+00> : vector<8x648xf32>
    %72 = tpu.matmul %70, %71, %cst_48 {dimension_numbers = #tpu.dot_dimension_numbers<[1], [0], [0], [1], [0, 0, 1, 1], [], []>} : vector<8x8xbf16>, vector<8x648xbf16>, vector<8x648xf32> -> vector<8x648xf32>
    %73 = arith.addf %68, %72 : vector<8x648xf32>
    %c7 = arith.constant 7 : index
    %c0_49 = arith.constant 0 : index
    %c0_50 = arith.constant 0 : index
    %74 = vector.load %arg2[%c7, %c0_49, %c0_50] : memref<9x8x8xbf16, #tpu.memory_space<vmem>>, vector<1x8x8xbf16>
    %75 = vector.shape_cast %74 : vector<1x8x8xbf16> to vector<8x8xbf16>
    %c0_51 = arith.constant 0 : index
    %c37 = arith.constant 37 : index
    %76 = vector.load %arg11[%c0_51, %c37] : memref<8x686xbf16, #tpu.memory_space<vmem>>, vector<8x648xbf16>
    %cst_52 = arith.constant dense<0.000000e+00> : vector<8x648xf32>
    %77 = tpu.matmul %75, %76, %cst_52 {dimension_numbers = #tpu.dot_dimension_numbers<[1], [0], [0], [1], [0, 0, 1, 1], [], []>} : vector<8x8xbf16>, vector<8x648xbf16>, vector<8x648xf32> -> vector<8x648xf32>
    %78 = arith.addf %73, %77 : vector<8x648xf32>
    %c8 = arith.constant 8 : index
    %c0_53 = arith.constant 0 : index
    %c0_54 = arith.constant 0 : index
    %79 = vector.load %arg2[%c8, %c0_53, %c0_54] : memref<9x8x8xbf16, #tpu.memory_space<vmem>>, vector<1x8x8xbf16>
    %80 = vector.shape_cast %79 : vector<1x8x8xbf16> to vector<8x8xbf16>
    %c0_55 = arith.constant 0 : index
    %c38 = arith.constant 38 : index
    %81 = vector.load %arg11[%c0_55, %c38] : memref<8x686xbf16, #tpu.memory_space<vmem>>, vector<8x648xbf16>
    %cst_56 = arith.constant dense<0.000000e+00> : vector<8x648xf32>
    %82 = tpu.matmul %80, %81, %cst_56 {dimension_numbers = #tpu.dot_dimension_numbers<[1], [0], [0], [1], [0, 0, 1, 1], [], []>} : vector<8x8xbf16>, vector<8x648xbf16>, vector<8x648xf32> -> vector<8x648xf32>
    %83 = arith.addf %78, %82 : vector<8x648xf32>
    %c0_57 = arith.constant 0 : index
    %c0_58 = arith.constant 0 : index
    %84 = vector.load %arg3[%c0_57, %c0_58] : memref<8x1xf32, #tpu.memory_space<vmem>>, vector<8x1xf32>
    %85 = vector.broadcast %84 : vector<8x1xf32> to vector<8x648xf32>
    %86 = arith.addf %83, %85 : vector<8x648xf32>
    %87 = vector.broadcast %1 : vector<1x648xf32> to vector<8x648xf32>
    %88 = arith.mulf %86, %87 : vector<8x648xf32>
    %cst_59 = arith.constant dense<0.000000e+00> : vector<8xf32>
    %89 = vector.multi_reduction <add>, %88, %cst_59 [1] : vector<8x648xf32> to vector<8xf32>
    %90 = vector.shape_cast %89 : vector<8xf32> to vector<8x1xf32>
    %cst_60 = arith.constant 0.001953125 : f32
    %91 = vector.broadcast %cst_60 : f32 to vector<8x1xf32>
    %92 = arith.mulf %90, %91 : vector<8x1xf32>
    %93 = vector.broadcast %92 : vector<8x1xf32> to vector<8x648xf32>
    %94 = arith.subf %86, %93 : vector<8x648xf32>
    %95 = vector.broadcast %1 : vector<1x648xf32> to vector<8x648xf32>
    %96 = arith.mulf %94, %95 : vector<8x648xf32>
    %97 = arith.mulf %96, %96 : vector<8x648xf32>
    %cst_61 = arith.constant dense<0.000000e+00> : vector<8xf32>
    %98 = vector.multi_reduction <add>, %97, %cst_61 [1] : vector<8x648xf32> to vector<8xf32>
    %99 = vector.shape_cast %98 : vector<8xf32> to vector<8x1xf32>
    %cst_62 = arith.constant 0.001953125 : f32
    %100 = vector.broadcast %cst_62 : f32 to vector<8x1xf32>
    %101 = arith.mulf %99, %100 : vector<8x1xf32>
    %102 = vector.broadcast %92 : vector<8x1xf32> to vector<8x648xf32>
    %103 = arith.subf %86, %102 : vector<8x648xf32>
    %cst_63 = arith.constant 9.99999974E-6 : f32
    %104 = vector.broadcast %cst_63 : f32 to vector<8x1xf32>
    %105 = arith.addf %101, %104 : vector<8x1xf32>
    %106 = math.rsqrt %105 : vector<8x1xf32>
    %107 = vector.broadcast %106 : vector<8x1xf32> to vector<8x648xf32>
    %108 = arith.mulf %103, %107 : vector<8x648xf32>
    %c0_64 = arith.constant 0 : index
    %c0_65 = arith.constant 0 : index
    %109 = vector.load %arg8[%c0_64, %c0_65] : memref<8x1xf32, #tpu.memory_space<vmem>>, vector<8x1xf32>
    %110 = vector.broadcast %109 : vector<8x1xf32> to vector<8x648xf32>
    %111 = arith.mulf %108, %110 : vector<8x648xf32>
    %c0_66 = arith.constant 0 : index
    %c0_67 = arith.constant 0 : index
    %112 = vector.load %arg9[%c0_66, %c0_67] : memref<8x1xf32, #tpu.memory_space<vmem>>, vector<8x1xf32>
    %113 = vector.broadcast %112 : vector<8x1xf32> to vector<8x648xf32>
    %114 = arith.addf %111, %113 : vector<8x648xf32>
    %cst_68 = arith.constant 0.000000e+00 : f32
    %115 = vector.broadcast %cst_68 : f32 to vector<8x648xf32>
    %116 = arith.maximumf %114, %115 : vector<8x648xf32>
    %117 = vector.broadcast %1 : vector<1x648xf32> to vector<8x648xf32>
    %118 = arith.mulf %116, %117 : vector<8x648xf32>
    %cst_69 = arith.constant 0.000000e+00 : bf16
    %119 = vector.broadcast %cst_69 : bf16 to vector<8x686xbf16>
    %c0_70 = arith.constant 0 : index
    %c0_71 = arith.constant 0 : index
    %120 = vector.load %arg12[%c0_70, %c0_71] : memref<8x686xbf16, #tpu.memory_space<vmem>>, vector<8x686xbf16>
    tpu.vector_store %arg12[%c0_70, %c0_71], %119 {strides = array<i32>} : memref<8x686xbf16, #tpu.memory_space<vmem>>, vector<8x686xbf16>,
    %121 = arith.truncf %118 : vector<8x648xf32> to vector<8x648xbf16>
    %c0_72 = arith.constant 0 : index
    %c19_73 = arith.constant 19 : index
    %122 = vector.load %arg12[%c0_72, %c19_73] : memref<8x686xbf16, #tpu.memory_space<vmem>>, vector<8x648xbf16>
    tpu.vector_store %arg12[%c0_72, %c19_73], %121 {strides = array<i32>} : memref<8x686xbf16, #tpu.memory_space<vmem>>, vector<8x648xbf16>,
    %cst_74 = arith.constant 0.000000e+00 : f32
    %123 = vector.broadcast %cst_74 : f32 to vector<8x648xf32>
    %c0_75 = arith.constant 0 : index
    %c0_76 = arith.constant 0 : index
    %c0_77 = arith.constant 0 : index
    %124 = vector.load %arg4[%c0_75, %c0_76, %c0_77] : memref<9x8x8xbf16, #tpu.memory_space<vmem>>, vector<1x8x8xbf16>
    %125 = vector.shape_cast %124 : vector<1x8x8xbf16> to vector<8x8xbf16>
    %c0_78 = arith.constant 0 : index
    %c0_79 = arith.constant 0 : index
    %126 = vector.load %arg12[%c0_78, %c0_79] : memref<8x686xbf16, #tpu.memory_space<vmem>>, vector<8x648xbf16>
    %cst_80 = arith.constant dense<0.000000e+00> : vector<8x648xf32>
    %127 = tpu.matmul %125, %126, %cst_80 {dimension_numbers = #tpu.dot_dimension_numbers<[1], [0], [0], [1], [0, 0, 1, 1], [], []>} : vector<8x8xbf16>, vector<8x648xbf16>, vector<8x648xf32> -> vector<8x648xf32>
    %128 = arith.addf %123, %127 : vector<8x648xf32>
    %c1_81 = arith.constant 1 : index
    %c0_82 = arith.constant 0 : index
    %c0_83 = arith.constant 0 : index
    %129 = vector.load %arg4[%c1_81, %c0_82, %c0_83] : memref<9x8x8xbf16, #tpu.memory_space<vmem>>, vector<1x8x8xbf16>
    %130 = vector.shape_cast %129 : vector<1x8x8xbf16> to vector<8x8xbf16>
    %c0_84 = arith.constant 0 : index
    %c1_85 = arith.constant 1 : index
    %131 = vector.load %arg12[%c0_84, %c1_85] : memref<8x686xbf16, #tpu.memory_space<vmem>>, vector<8x648xbf16>
    %cst_86 = arith.constant dense<0.000000e+00> : vector<8x648xf32>
    %132 = tpu.matmul %130, %131, %cst_86 {dimension_numbers = #tpu.dot_dimension_numbers<[1], [0], [0], [1], [0, 0, 1, 1], [], []>} : vector<8x8xbf16>, vector<8x648xbf16>, vector<8x648xf32> -> vector<8x648xf32>
    %133 = arith.addf %128, %132 : vector<8x648xf32>
    %c2_87 = arith.constant 2 : index
    %c0_88 = arith.constant 0 : index
    %c0_89 = arith.constant 0 : index
    %134 = vector.load %arg4[%c2_87, %c0_88, %c0_89] : memref<9x8x8xbf16, #tpu.memory_space<vmem>>, vector<1x8x8xbf16>
    %135 = vector.shape_cast %134 : vector<1x8x8xbf16> to vector<8x8xbf16>
    %c0_90 = arith.constant 0 : index
    %c2_91 = arith.constant 2 : index
    %136 = vector.load %arg12[%c0_90, %c2_91] : memref<8x686xbf16, #tpu.memory_space<vmem>>, vector<8x648xbf16>
    %cst_92 = arith.constant dense<0.000000e+00> : vector<8x648xf32>
    %137 = tpu.matmul %135, %136, %cst_92 {dimension_numbers = #tpu.dot_dimension_numbers<[1], [0], [0], [1], [0, 0, 1, 1], [], []>} : vector<8x8xbf16>, vector<8x648xbf16>, vector<8x648xf32> -> vector<8x648xf32>
    %138 = arith.addf %133, %137 : vector<8x648xf32>
    %c3_93 = arith.constant 3 : index
    %c0_94 = arith.constant 0 : index
    %c0_95 = arith.constant 0 : index
    %139 = vector.load %arg4[%c3_93, %c0_94, %c0_95] : memref<9x8x8xbf16, #tpu.memory_space<vmem>>, vector<1x8x8xbf16>
    %140 = vector.shape_cast %139 : vector<1x8x8xbf16> to vector<8x8xbf16>
    %c0_96 = arith.constant 0 : index
    %c18_97 = arith.constant 18 : index
    %141 = vector.load %arg12[%c0_96, %c18_97] : memref<8x686xbf16, #tpu.memory_space<vmem>>, vector<8x648xbf16>
    %cst_98 = arith.constant dense<0.000000e+00> : vector<8x648xf32>
    %142 = tpu.matmul %140, %141, %cst_98 {dimension_numbers = #tpu.dot_dimension_numbers<[1], [0], [0], [1], [0, 0, 1, 1], [], []>} : vector<8x8xbf16>, vector<8x648xbf16>, vector<8x648xf32> -> vector<8x648xf32>
    %143 = arith.addf %138, %142 : vector<8x648xf32>
    %c4_99 = arith.constant 4 : index
    %c0_100 = arith.constant 0 : index
    %c0_101 = arith.constant 0 : index
    %144 = vector.load %arg4[%c4_99, %c0_100, %c0_101] : memref<9x8x8xbf16, #tpu.memory_space<vmem>>, vector<1x8x8xbf16>
    %145 = vector.shape_cast %144 : vector<1x8x8xbf16> to vector<8x8xbf16>
    %c0_102 = arith.constant 0 : index
    %c19_103 = arith.constant 19 : index
    %146 = vector.load %arg12[%c0_102, %c19_103] : memref<8x686xbf16, #tpu.memory_space<vmem>>, vector<8x648xbf16>
    %cst_104 = arith.constant dense<0.000000e+00> : vector<8x648xf32>
    %147 = tpu.matmul %145, %146, %cst_104 {dimension_numbers = #tpu.dot_dimension_numbers<[1], [0], [0], [1], [0, 0, 1, 1], [], []>} : vector<8x8xbf16>, vector<8x648xbf16>, vector<8x648xf32> -> vector<8x648xf32>
    %148 = arith.addf %143, %147 : vector<8x648xf32>
    %c5_105 = arith.constant 5 : index
    %c0_106 = arith.constant 0 : index
    %c0_107 = arith.constant 0 : index
    %149 = vector.load %arg4[%c5_105, %c0_106, %c0_107] : memref<9x8x8xbf16, #tpu.memory_space<vmem>>, vector<1x8x8xbf16>
    %150 = vector.shape_cast %149 : vector<1x8x8xbf16> to vector<8x8xbf16>
    %c0_108 = arith.constant 0 : index
    %c20_109 = arith.constant 20 : index
    %151 = vector.load %arg12[%c0_108, %c20_109] : memref<8x686xbf16, #tpu.memory_space<vmem>>, vector<8x648xbf16>
    %cst_110 = arith.constant dense<0.000000e+00> : vector<8x648xf32>
    %152 = tpu.matmul %150, %151, %cst_110 {dimension_numbers = #tpu.dot_dimension_numbers<[1], [0], [0], [1], [0, 0, 1, 1], [], []>} : vector<8x8xbf16>, vector<8x648xbf16>, vector<8x648xf32> -> vector<8x648xf32>
    %153 = arith.addf %148, %152 : vector<8x648xf32>
    %c6_111 = arith.constant 6 : index
    %c0_112 = arith.constant 0 : index
    %c0_113 = arith.constant 0 : index
    %154 = vector.load %arg4[%c6_111, %c0_112, %c0_113] : memref<9x8x8xbf16, #tpu.memory_space<vmem>>, vector<1x8x8xbf16>
    %155 = vector.shape_cast %154 : vector<1x8x8xbf16> to vector<8x8xbf16>
    %c0_114 = arith.constant 0 : index
    %c36_115 = arith.constant 36 : index
    %156 = vector.load %arg12[%c0_114, %c36_115] : memref<8x686xbf16, #tpu.memory_space<vmem>>, vector<8x648xbf16>
    %cst_116 = arith.constant dense<0.000000e+00> : vector<8x648xf32>
    %157 = tpu.matmul %155, %156, %cst_116 {dimension_numbers = #tpu.dot_dimension_numbers<[1], [0], [0], [1], [0, 0, 1, 1], [], []>} : vector<8x8xbf16>, vector<8x648xbf16>, vector<8x648xf32> -> vector<8x648xf32>
    %158 = arith.addf %153, %157 : vector<8x648xf32>
    %c7_117 = arith.constant 7 : index
    %c0_118 = arith.constant 0 : index
    %c0_119 = arith.constant 0 : index
    %159 = vector.load %arg4[%c7_117, %c0_118, %c0_119] : memref<9x8x8xbf16, #tpu.memory_space<vmem>>, vector<1x8x8xbf16>
    %160 = vector.shape_cast %159 : vector<1x8x8xbf16> to vector<8x8xbf16>
    %c0_120 = arith.constant 0 : index
    %c37_121 = arith.constant 37 : index
    %161 = vector.load %arg12[%c0_120, %c37_121] : memref<8x686xbf16, #tpu.memory_space<vmem>>, vector<8x648xbf16>
    %cst_122 = arith.constant dense<0.000000e+00> : vector<8x648xf32>
    %162 = tpu.matmul %160, %161, %cst_122 {dimension_numbers = #tpu.dot_dimension_numbers<[1], [0], [0], [1], [0, 0, 1, 1], [], []>} : vector<8x8xbf16>, vector<8x648xbf16>, vector<8x648xf32> -> vector<8x648xf32>
    %163 = arith.addf %158, %162 : vector<8x648xf32>
    %c8_123 = arith.constant 8 : index
    %c0_124 = arith.constant 0 : index
    %c0_125 = arith.constant 0 : index
    %164 = vector.load %arg4[%c8_123, %c0_124, %c0_125] : memref<9x8x8xbf16, #tpu.memory_space<vmem>>, vector<1x8x8xbf16>
    %165 = vector.shape_cast %164 : vector<1x8x8xbf16> to vector<8x8xbf16>
    %c0_126 = arith.constant 0 : index
    %c38_127 = arith.constant 38 : index
    %166 = vector.load %arg12[%c0_126, %c38_127] : memref<8x686xbf16, #tpu.memory_space<vmem>>, vector<8x648xbf16>
    %cst_128 = arith.constant dense<0.000000e+00> : vector<8x648xf32>
    %167 = tpu.matmul %165, %166, %cst_128 {dimension_numbers = #tpu.dot_dimension_numbers<[1], [0], [0], [1], [0, 0, 1, 1], [], []>} : vector<8x8xbf16>, vector<8x648xbf16>, vector<8x648xf32> -> vector<8x648xf32>
    %168 = arith.addf %163, %167 : vector<8x648xf32>
    %c0_129 = arith.constant 0 : index
    %c0_130 = arith.constant 0 : index
    %169 = vector.load %arg5[%c0_129, %c0_130] : memref<8x1xf32, #tpu.memory_space<vmem>>, vector<8x1xf32>
    %170 = vector.broadcast %169 : vector<8x1xf32> to vector<8x648xf32>
    %171 = arith.addf %168, %170 : vector<8x648xf32>
    %c0_131 = arith.constant 0 : index
    %c19_132 = arith.constant 19 : index
    %172 = vector.load %arg0[%c0_131, %c19_132] : memref<8x686xbf16, #tpu.memory_space<vmem>>, vector<8x648xbf16>
    %173 = arith.extf %172 : vector<8x648xbf16> to vector<8x648xf32>
    %174 = arith.addf %171, %173 : vector<8x648xf32>
    %175 = vector.broadcast %1 : vector<1x648xf32> to vector<8x648xf32>
    %176 = arith.mulf %174, %175 : vector<8x648xf32>
    %cst_133 = arith.constant 0.000000e+00 : bf16
    %177 = vector.broadcast %cst_133 : bf16 to vector<8x686xbf16>
    %c0_134 = arith.constant 0 : index
    %c0_135 = arith.constant 0 : index
    %178 = vector.load %arg10[%c0_134, %c0_135] : memref<8x686xbf16, #tpu.memory_space<vmem>>, vector<8x686xbf16>
    tpu.vector_store %arg10[%c0_134, %c0_135], %177 {strides = array<i32>} : memref<8x686xbf16, #tpu.memory_space<vmem>>, vector<8x686xbf16>,
    %179 = arith.truncf %176 : vector<8x648xf32> to vector<8x648xbf16>
    %c0_136 = arith.constant 0 : index
    %c19_137 = arith.constant 19 : index
    %180 = vector.load %arg10[%c0_136, %c19_137] : memref<8x686xbf16, #tpu.memory_space<vmem>>, vector<8x648xbf16>
    tpu.vector_store %arg10[%c0_136, %c19_137], %179 {strides = array<i32>} : memref<8x686xbf16, #tpu.memory_space<vmem>>, vector<8x648xbf16>,
    return
  }
}

module attributes {stable_mosaic.version = 11 : i64} {
  func.func @_dense_kernel(%arg0: memref<8x72xbf16, #tpu.memory_space<vmem>>, %arg1: memref<72x128xbf16, #tpu.memory_space<vmem>>, %arg2: memref<8x1xf32, #tpu.memory_space<vmem>>, %arg3: memref<8x128xbf16, #tpu.memory_space<vmem>>) attributes {dimension_semantics = [], scalar_prefetch = 0 : i64, scratch_operands = 0 : i64, tpu.core_type = #tpu.core_type<tc>} {
    %c0 = arith.constant 0 : index
    %c0_0 = arith.constant 0 : index
    %0 = vector.load %arg0[%c0, %c0_0] : memref<8x72xbf16, #tpu.memory_space<vmem>>, vector<8x72xbf16>
    %c0_1 = arith.constant 0 : index
    %c0_2 = arith.constant 0 : index
    %1 = vector.load %arg1[%c0_1, %c0_2] : memref<72x128xbf16, #tpu.memory_space<vmem>>, vector<72x128xbf16>
    %cst = arith.constant dense<0.000000e+00> : vector<8x128xf32>
    %2 = tpu.matmul %0, %1, %cst {dimension_numbers = #tpu.dot_dimension_numbers<[1], [0], [0], [1], [0, 0, 1, 1], [], []>} : vector<8x72xbf16>, vector<72x128xbf16>, vector<8x128xf32> -> vector<8x128xf32>
    %c0_3 = arith.constant 0 : index
    %c0_4 = arith.constant 0 : index
    %3 = vector.load %arg2[%c0_3, %c0_4] : memref<8x1xf32, #tpu.memory_space<vmem>>, vector<8x1xf32>
    %4 = vector.broadcast %3 : vector<8x1xf32> to vector<8x128xf32>
    %5 = arith.addf %2, %4 : vector<8x128xf32>
    %6 = arith.truncf %5 : vector<8x128xf32> to vector<8x128xbf16>
    %c0_5 = arith.constant 0 : index
    %c0_6 = arith.constant 0 : index
    %7 = vector.load %arg3[%c0_5, %c0_6] : memref<8x128xbf16, #tpu.memory_space<vmem>>, vector<8x128xbf16>
    tpu.vector_store %arg3[%c0_5, %c0_6], %6 {strides = array<i32>} : memref<8x128xbf16, #tpu.memory_space<vmem>>, vector<8x128xbf16>,
    return
  }
}

module attributes {stable_mosaic.version = 11 : i64} {
  func.func @_resblock_kernel(%arg0: memref<8x222xbf16, #tpu.memory_space<vmem>>, %arg1: memref<1x222xf32, #tpu.memory_space<vmem>>, %arg2: memref<9x16x8xbf16, #tpu.memory_space<vmem>>, %arg3: memref<16x1xf32, #tpu.memory_space<vmem>>, %arg4: memref<9x16x16xbf16, #tpu.memory_space<vmem>>, %arg5: memref<16x1xf32, #tpu.memory_space<vmem>>, %arg6: memref<8x1xf32, #tpu.memory_space<vmem>>, %arg7: memref<8x1xf32, #tpu.memory_space<vmem>>, %arg8: memref<16x1xf32, #tpu.memory_space<vmem>>, %arg9: memref<16x1xf32, #tpu.memory_space<vmem>>, %arg10: memref<16x8xbf16, #tpu.memory_space<vmem>>, %arg11: memref<16x1xf32, #tpu.memory_space<vmem>>, %arg12: memref<16x222xbf16, #tpu.memory_space<vmem>>, %arg13: memref<8x222xbf16, #tpu.memory_space<vmem>>, %arg14: memref<16x222xbf16, #tpu.memory_space<vmem>>) attributes {dimension_semantics = [], scalar_prefetch = 0 : i64, scratch_operands = 2 : i64, tpu.core_type = #tpu.core_type<tc>} {
    %c0 = arith.constant 0 : index
    %c0_0 = arith.constant 0 : index
    %0 = vector.load %arg1[%c0, %c0_0] : memref<1x222xf32, #tpu.memory_space<vmem>>, vector<1x222xf32>
    %c0_1 = arith.constant 0 : index
    %c11 = arith.constant 11 : index
    %1 = vector.load %arg1[%c0_1, %c11] : memref<1x222xf32, #tpu.memory_space<vmem>>, vector<1x200xf32>
    %c0_2 = arith.constant 0 : index
    %c0_3 = arith.constant 0 : index
    %2 = vector.load %arg0[%c0_2, %c0_3] : memref<8x222xbf16, #tpu.memory_space<vmem>>, vector<8x222xbf16>
    %3 = arith.extf %2 : vector<8x222xbf16> to vector<8x222xf32>
    %4 = vector.broadcast %0 : vector<1x222xf32> to vector<8x222xf32>
    %5 = arith.mulf %3, %4 : vector<8x222xf32>
    %cst = arith.constant dense<0.000000e+00> : vector<8xf32>
    %6 = vector.multi_reduction <add>, %5, %cst [1] : vector<8x222xf32> to vector<8xf32>
    %7 = vector.shape_cast %6 : vector<8xf32> to vector<8x1xf32>
    %cst_4 = arith.constant 7.812500e-03 : f32
    %8 = vector.broadcast %cst_4 : f32 to vector<8x1xf32>
    %9 = arith.mulf %7, %8 : vector<8x1xf32>
    %10 = vector.broadcast %9 : vector<8x1xf32> to vector<8x222xf32>
    %11 = arith.subf %3, %10 : vector<8x222xf32>
    %12 = vector.broadcast %0 : vector<1x222xf32> to vector<8x222xf32>
    %13 = arith.mulf %11, %12 : vector<8x222xf32>
    %14 = arith.mulf %13, %13 : vector<8x222xf32>
    %cst_5 = arith.constant dense<0.000000e+00> : vector<8xf32>
    %15 = vector.multi_reduction <add>, %14, %cst_5 [1] : vector<8x222xf32> to vector<8xf32>
    %16 = vector.shape_cast %15 : vector<8xf32> to vector<8x1xf32>
    %cst_6 = arith.constant 7.812500e-03 : f32
    %17 = vector.broadcast %cst_6 : f32 to vector<8x1xf32>
    %18 = arith.mulf %16, %17 : vector<8x1xf32>
    %19 = vector.broadcast %9 : vector<8x1xf32> to vector<8x222xf32>
    %20 = arith.subf %3, %19 : vector<8x222xf32>
    %cst_7 = arith.constant 9.99999974E-6 : f32
    %21 = vector.broadcast %cst_7 : f32 to vector<8x1xf32>
    %22 = arith.addf %18, %21 : vector<8x1xf32>
    %23 = math.rsqrt %22 : vector<8x1xf32>
    %24 = vector.broadcast %23 : vector<8x1xf32> to vector<8x222xf32>
    %25 = arith.mulf %20, %24 : vector<8x222xf32>
    %c0_8 = arith.constant 0 : index
    %c0_9 = arith.constant 0 : index
    %26 = vector.load %arg6[%c0_8, %c0_9] : memref<8x1xf32, #tpu.memory_space<vmem>>, vector<8x1xf32>
    %27 = vector.broadcast %26 : vector<8x1xf32> to vector<8x222xf32>
    %28 = arith.mulf %25, %27 : vector<8x222xf32>
    %c0_10 = arith.constant 0 : index
    %c0_11 = arith.constant 0 : index
    %29 = vector.load %arg7[%c0_10, %c0_11] : memref<8x1xf32, #tpu.memory_space<vmem>>, vector<8x1xf32>
    %30 = vector.broadcast %29 : vector<8x1xf32> to vector<8x222xf32>
    %31 = arith.addf %28, %30 : vector<8x222xf32>
    %cst_12 = arith.constant 0.000000e+00 : f32
    %32 = vector.broadcast %cst_12 : f32 to vector<8x222xf32>
    %33 = arith.maximumf %31, %32 : vector<8x222xf32>
    %34 = vector.broadcast %0 : vector<1x222xf32> to vector<8x222xf32>
    %35 = arith.mulf %33, %34 : vector<8x222xf32>
    %36 = arith.truncf %35 : vector<8x222xf32> to vector<8x222xbf16>
    %c0_13 = arith.constant 0 : index
    %c0_14 = arith.constant 0 : index
    %37 = vector.load %arg13[%c0_13, %c0_14] : memref<8x222xbf16, #tpu.memory_space<vmem>>, vector<8x222xbf16>
    tpu.vector_store %arg13[%c0_13, %c0_14], %36 {strides = array<i32>} : memref<8x222xbf16, #tpu.memory_space<vmem>>, vector<8x222xbf16>,
    %cst_15 = arith.constant 0.000000e+00 : f32
    %38 = vector.broadcast %cst_15 : f32 to vector<16x200xf32>
    %c0_16 = arith.constant 0 : index
    %c0_17 = arith.constant 0 : index
    %c0_18 = arith.constant 0 : index
    %39 = vector.load %arg2[%c0_16, %c0_17, %c0_18] : memref<9x16x8xbf16, #tpu.memory_space<vmem>>, vector<1x16x8xbf16>
    %40 = vector.shape_cast %39 : vector<1x16x8xbf16> to vector<16x8xbf16>
    %c0_19 = arith.constant 0 : index
    %c0_20 = arith.constant 0 : index
    %41 = vector.load %arg13[%c0_19, %c0_20] : memref<8x222xbf16, #tpu.memory_space<vmem>>, vector<8x200xbf16>
    %cst_21 = arith.constant dense<0.000000e+00> : vector<16x200xf32>
    %42 = tpu.matmul %40, %41, %cst_21 {dimension_numbers = #tpu.dot_dimension_numbers<[1], [0], [0], [1], [0, 0, 1, 1], [], []>} : vector<16x8xbf16>, vector<8x200xbf16>, vector<16x200xf32> -> vector<16x200xf32>
    %43 = arith.addf %38, %42 : vector<16x200xf32>
    %c1 = arith.constant 1 : index
    %c0_22 = arith.constant 0 : index
    %c0_23 = arith.constant 0 : index
    %44 = vector.load %arg2[%c1, %c0_22, %c0_23] : memref<9x16x8xbf16, #tpu.memory_space<vmem>>, vector<1x16x8xbf16>
    %45 = vector.shape_cast %44 : vector<1x16x8xbf16> to vector<16x8xbf16>
    %c0_24 = arith.constant 0 : index
    %c1_25 = arith.constant 1 : index
    %46 = vector.load %arg13[%c0_24, %c1_25] : memref<8x222xbf16, #tpu.memory_space<vmem>>, vector<8x200xbf16>
    %cst_26 = arith.constant dense<0.000000e+00> : vector<16x200xf32>
    %47 = tpu.matmul %45, %46, %cst_26 {dimension_numbers = #tpu.dot_dimension_numbers<[1], [0], [0], [1], [0, 0, 1, 1], [], []>} : vector<16x8xbf16>, vector<8x200xbf16>, vector<16x200xf32> -> vector<16x200xf32>
    %48 = arith.addf %43, %47 : vector<16x200xf32>
    %c2 = arith.constant 2 : index
    %c0_27 = arith.constant 0 : index
    %c0_28 = arith.constant 0 : index
    %49 = vector.load %arg2[%c2, %c0_27, %c0_28] : memref<9x16x8xbf16, #tpu.memory_space<vmem>>, vector<1x16x8xbf16>
    %50 = vector.shape_cast %49 : vector<1x16x8xbf16> to vector<16x8xbf16>
    %c0_29 = arith.constant 0 : index
    %c2_30 = arith.constant 2 : index
    %51 = vector.load %arg13[%c0_29, %c2_30] : memref<8x222xbf16, #tpu.memory_space<vmem>>, vector<8x200xbf16>
    %cst_31 = arith.constant dense<0.000000e+00> : vector<16x200xf32>
    %52 = tpu.matmul %50, %51, %cst_31 {dimension_numbers = #tpu.dot_dimension_numbers<[1], [0], [0], [1], [0, 0, 1, 1], [], []>} : vector<16x8xbf16>, vector<8x200xbf16>, vector<16x200xf32> -> vector<16x200xf32>
    %53 = arith.addf %48, %52 : vector<16x200xf32>
    %c3 = arith.constant 3 : index
    %c0_32 = arith.constant 0 : index
    %c0_33 = arith.constant 0 : index
    %54 = vector.load %arg2[%c3, %c0_32, %c0_33] : memref<9x16x8xbf16, #tpu.memory_space<vmem>>, vector<1x16x8xbf16>
    %55 = vector.shape_cast %54 : vector<1x16x8xbf16> to vector<16x8xbf16>
    %c0_34 = arith.constant 0 : index
    %c10 = arith.constant 10 : index
    %56 = vector.load %arg13[%c0_34, %c10] : memref<8x222xbf16, #tpu.memory_space<vmem>>, vector<8x200xbf16>
    %cst_35 = arith.constant dense<0.000000e+00> : vector<16x200xf32>
    %57 = tpu.matmul %55, %56, %cst_35 {dimension_numbers = #tpu.dot_dimension_numbers<[1], [0], [0], [1], [0, 0, 1, 1], [], []>} : vector<16x8xbf16>, vector<8x200xbf16>, vector<16x200xf32> -> vector<16x200xf32>
    %58 = arith.addf %53, %57 : vector<16x200xf32>
    %c4 = arith.constant 4 : index
    %c0_36 = arith.constant 0 : index
    %c0_37 = arith.constant 0 : index
    %59 = vector.load %arg2[%c4, %c0_36, %c0_37] : memref<9x16x8xbf16, #tpu.memory_space<vmem>>, vector<1x16x8xbf16>
    %60 = vector.shape_cast %59 : vector<1x16x8xbf16> to vector<16x8xbf16>
    %c0_38 = arith.constant 0 : index
    %c11_39 = arith.constant 11 : index
    %61 = vector.load %arg13[%c0_38, %c11_39] : memref<8x222xbf16, #tpu.memory_space<vmem>>, vector<8x200xbf16>
    %cst_40 = arith.constant dense<0.000000e+00> : vector<16x200xf32>
    %62 = tpu.matmul %60, %61, %cst_40 {dimension_numbers = #tpu.dot_dimension_numbers<[1], [0], [0], [1], [0, 0, 1, 1], [], []>} : vector<16x8xbf16>, vector<8x200xbf16>, vector<16x200xf32> -> vector<16x200xf32>
    %63 = arith.addf %58, %62 : vector<16x200xf32>
    %c5 = arith.constant 5 : index
    %c0_41 = arith.constant 0 : index
    %c0_42 = arith.constant 0 : index
    %64 = vector.load %arg2[%c5, %c0_41, %c0_42] : memref<9x16x8xbf16, #tpu.memory_space<vmem>>, vector<1x16x8xbf16>
    %65 = vector.shape_cast %64 : vector<1x16x8xbf16> to vector<16x8xbf16>
    %c0_43 = arith.constant 0 : index
    %c12 = arith.constant 12 : index
    %66 = vector.load %arg13[%c0_43, %c12] : memref<8x222xbf16, #tpu.memory_space<vmem>>, vector<8x200xbf16>
    %cst_44 = arith.constant dense<0.000000e+00> : vector<16x200xf32>
    %67 = tpu.matmul %65, %66, %cst_44 {dimension_numbers = #tpu.dot_dimension_numbers<[1], [0], [0], [1], [0, 0, 1, 1], [], []>} : vector<16x8xbf16>, vector<8x200xbf16>, vector<16x200xf32> -> vector<16x200xf32>
    %68 = arith.addf %63, %67 : vector<16x200xf32>
    %c6 = arith.constant 6 : index
    %c0_45 = arith.constant 0 : index
    %c0_46 = arith.constant 0 : index
    %69 = vector.load %arg2[%c6, %c0_45, %c0_46] : memref<9x16x8xbf16, #tpu.memory_space<vmem>>, vector<1x16x8xbf16>
    %70 = vector.shape_cast %69 : vector<1x16x8xbf16> to vector<16x8xbf16>
    %c0_47 = arith.constant 0 : index
    %c20 = arith.constant 20 : index
    %71 = vector.load %arg13[%c0_47, %c20] : memref<8x222xbf16, #tpu.memory_space<vmem>>, vector<8x200xbf16>
    %cst_48 = arith.constant dense<0.000000e+00> : vector<16x200xf32>
    %72 = tpu.matmul %70, %71, %cst_48 {dimension_numbers = #tpu.dot_dimension_numbers<[1], [0], [0], [1], [0, 0, 1, 1], [], []>} : vector<16x8xbf16>, vector<8x200xbf16>, vector<16x200xf32> -> vector<16x200xf32>
    %73 = arith.addf %68, %72 : vector<16x200xf32>
    %c7 = arith.constant 7 : index
    %c0_49 = arith.constant 0 : index
    %c0_50 = arith.constant 0 : index
    %74 = vector.load %arg2[%c7, %c0_49, %c0_50] : memref<9x16x8xbf16, #tpu.memory_space<vmem>>, vector<1x16x8xbf16>
    %75 = vector.shape_cast %74 : vector<1x16x8xbf16> to vector<16x8xbf16>
    %c0_51 = arith.constant 0 : index
    %c21 = arith.constant 21 : index
    %76 = vector.load %arg13[%c0_51, %c21] : memref<8x222xbf16, #tpu.memory_space<vmem>>, vector<8x200xbf16>
    %cst_52 = arith.constant dense<0.000000e+00> : vector<16x200xf32>
    %77 = tpu.matmul %75, %76, %cst_52 {dimension_numbers = #tpu.dot_dimension_numbers<[1], [0], [0], [1], [0, 0, 1, 1], [], []>} : vector<16x8xbf16>, vector<8x200xbf16>, vector<16x200xf32> -> vector<16x200xf32>
    %78 = arith.addf %73, %77 : vector<16x200xf32>
    %c8 = arith.constant 8 : index
    %c0_53 = arith.constant 0 : index
    %c0_54 = arith.constant 0 : index
    %79 = vector.load %arg2[%c8, %c0_53, %c0_54] : memref<9x16x8xbf16, #tpu.memory_space<vmem>>, vector<1x16x8xbf16>
    %80 = vector.shape_cast %79 : vector<1x16x8xbf16> to vector<16x8xbf16>
    %c0_55 = arith.constant 0 : index
    %c22 = arith.constant 22 : index
    %81 = vector.load %arg13[%c0_55, %c22] : memref<8x222xbf16, #tpu.memory_space<vmem>>, vector<8x200xbf16>
    %cst_56 = arith.constant dense<0.000000e+00> : vector<16x200xf32>
    %82 = tpu.matmul %80, %81, %cst_56 {dimension_numbers = #tpu.dot_dimension_numbers<[1], [0], [0], [1], [0, 0, 1, 1], [], []>} : vector<16x8xbf16>, vector<8x200xbf16>, vector<16x200xf32> -> vector<16x200xf32>
    %83 = arith.addf %78, %82 : vector<16x200xf32>
    %c0_57 = arith.constant 0 : index
    %c0_58 = arith.constant 0 : index
    %84 = vector.load %arg3[%c0_57, %c0_58] : memref<16x1xf32, #tpu.memory_space<vmem>>, vector<16x1xf32>
    %85 = vector.broadcast %84 : vector<16x1xf32> to vector<16x200xf32>
    %86 = arith.addf %83, %85 : vector<16x200xf32>
    %87 = vector.broadcast %1 : vector<1x200xf32> to vector<16x200xf32>
    %88 = arith.mulf %86, %87 : vector<16x200xf32>
    %cst_59 = arith.constant dense<0.000000e+00> : vector<16xf32>
    %89 = vector.multi_reduction <add>, %88, %cst_59 [1] : vector<16x200xf32> to vector<16xf32>
    %90 = vector.shape_cast %89 : vector<16xf32> to vector<16x1xf32>
    %cst_60 = arith.constant 7.812500e-03 : f32
    %91 = vector.broadcast %cst_60 : f32 to vector<16x1xf32>
    %92 = arith.mulf %90, %91 : vector<16x1xf32>
    %93 = vector.broadcast %92 : vector<16x1xf32> to vector<16x200xf32>
    %94 = arith.subf %86, %93 : vector<16x200xf32>
    %95 = vector.broadcast %1 : vector<1x200xf32> to vector<16x200xf32>
    %96 = arith.mulf %94, %95 : vector<16x200xf32>
    %97 = arith.mulf %96, %96 : vector<16x200xf32>
    %cst_61 = arith.constant dense<0.000000e+00> : vector<16xf32>
    %98 = vector.multi_reduction <add>, %97, %cst_61 [1] : vector<16x200xf32> to vector<16xf32>
    %99 = vector.shape_cast %98 : vector<16xf32> to vector<16x1xf32>
    %cst_62 = arith.constant 7.812500e-03 : f32
    %100 = vector.broadcast %cst_62 : f32 to vector<16x1xf32>
    %101 = arith.mulf %99, %100 : vector<16x1xf32>
    %102 = vector.broadcast %92 : vector<16x1xf32> to vector<16x200xf32>
    %103 = arith.subf %86, %102 : vector<16x200xf32>
    %cst_63 = arith.constant 9.99999974E-6 : f32
    %104 = vector.broadcast %cst_63 : f32 to vector<16x1xf32>
    %105 = arith.addf %101, %104 : vector<16x1xf32>
    %106 = math.rsqrt %105 : vector<16x1xf32>
    %107 = vector.broadcast %106 : vector<16x1xf32> to vector<16x200xf32>
    %108 = arith.mulf %103, %107 : vector<16x200xf32>
    %c0_64 = arith.constant 0 : index
    %c0_65 = arith.constant 0 : index
    %109 = vector.load %arg8[%c0_64, %c0_65] : memref<16x1xf32, #tpu.memory_space<vmem>>, vector<16x1xf32>
    %110 = vector.broadcast %109 : vector<16x1xf32> to vector<16x200xf32>
    %111 = arith.mulf %108, %110 : vector<16x200xf32>
    %c0_66 = arith.constant 0 : index
    %c0_67 = arith.constant 0 : index
    %112 = vector.load %arg9[%c0_66, %c0_67] : memref<16x1xf32, #tpu.memory_space<vmem>>, vector<16x1xf32>
    %113 = vector.broadcast %112 : vector<16x1xf32> to vector<16x200xf32>
    %114 = arith.addf %111, %113 : vector<16x200xf32>
    %cst_68 = arith.constant 0.000000e+00 : f32
    %115 = vector.broadcast %cst_68 : f32 to vector<16x200xf32>
    %116 = arith.maximumf %114, %115 : vector<16x200xf32>
    %117 = vector.broadcast %1 : vector<1x200xf32> to vector<16x200xf32>
    %118 = arith.mulf %116, %117 : vector<16x200xf32>
    %cst_69 = arith.constant 0.000000e+00 : bf16
    %119 = vector.broadcast %cst_69 : bf16 to vector<16x222xbf16>
    %c0_70 = arith.constant 0 : index
    %c0_71 = arith.constant 0 : index
    %120 = vector.load %arg14[%c0_70, %c0_71] : memref<16x222xbf16, #tpu.memory_space<vmem>>, vector<16x222xbf16>
    tpu.vector_store %arg14[%c0_70, %c0_71], %119 {strides = array<i32>} : memref<16x222xbf16, #tpu.memory_space<vmem>>, vector<16x222xbf16>,
    %121 = arith.truncf %118 : vector<16x200xf32> to vector<16x200xbf16>
    %c0_72 = arith.constant 0 : index
    %c11_73 = arith.constant 11 : index
    %122 = vector.load %arg14[%c0_72, %c11_73] : memref<16x222xbf16, #tpu.memory_space<vmem>>, vector<16x200xbf16>
    tpu.vector_store %arg14[%c0_72, %c11_73], %121 {strides = array<i32>} : memref<16x222xbf16, #tpu.memory_space<vmem>>, vector<16x200xbf16>,
    %cst_74 = arith.constant 0.000000e+00 : f32
    %123 = vector.broadcast %cst_74 : f32 to vector<16x200xf32>
    %c0_75 = arith.constant 0 : index
    %c0_76 = arith.constant 0 : index
    %c0_77 = arith.constant 0 : index
    %124 = vector.load %arg4[%c0_75, %c0_76, %c0_77] : memref<9x16x16xbf16, #tpu.memory_space<vmem>>, vector<1x16x16xbf16>
    %125 = vector.shape_cast %124 : vector<1x16x16xbf16> to vector<16x16xbf16>
    %c0_78 = arith.constant 0 : index
    %c0_79 = arith.constant 0 : index
    %126 = vector.load %arg14[%c0_78, %c0_79] : memref<16x222xbf16, #tpu.memory_space<vmem>>, vector<16x200xbf16>
    %cst_80 = arith.constant dense<0.000000e+00> : vector<16x200xf32>
    %127 = tpu.matmul %125, %126, %cst_80 {dimension_numbers = #tpu.dot_dimension_numbers<[1], [0], [0], [1], [0, 0, 1, 1], [], []>} : vector<16x16xbf16>, vector<16x200xbf16>, vector<16x200xf32> -> vector<16x200xf32>
    %128 = arith.addf %123, %127 : vector<16x200xf32>
    %c1_81 = arith.constant 1 : index
    %c0_82 = arith.constant 0 : index
    %c0_83 = arith.constant 0 : index
    %129 = vector.load %arg4[%c1_81, %c0_82, %c0_83] : memref<9x16x16xbf16, #tpu.memory_space<vmem>>, vector<1x16x16xbf16>
    %130 = vector.shape_cast %129 : vector<1x16x16xbf16> to vector<16x16xbf16>
    %c0_84 = arith.constant 0 : index
    %c1_85 = arith.constant 1 : index
    %131 = vector.load %arg14[%c0_84, %c1_85] : memref<16x222xbf16, #tpu.memory_space<vmem>>, vector<16x200xbf16>
    %cst_86 = arith.constant dense<0.000000e+00> : vector<16x200xf32>
    %132 = tpu.matmul %130, %131, %cst_86 {dimension_numbers = #tpu.dot_dimension_numbers<[1], [0], [0], [1], [0, 0, 1, 1], [], []>} : vector<16x16xbf16>, vector<16x200xbf16>, vector<16x200xf32> -> vector<16x200xf32>
    %133 = arith.addf %128, %132 : vector<16x200xf32>
    %c2_87 = arith.constant 2 : index
    %c0_88 = arith.constant 0 : index
    %c0_89 = arith.constant 0 : index
    %134 = vector.load %arg4[%c2_87, %c0_88, %c0_89] : memref<9x16x16xbf16, #tpu.memory_space<vmem>>, vector<1x16x16xbf16>
    %135 = vector.shape_cast %134 : vector<1x16x16xbf16> to vector<16x16xbf16>
    %c0_90 = arith.constant 0 : index
    %c2_91 = arith.constant 2 : index
    %136 = vector.load %arg14[%c0_90, %c2_91] : memref<16x222xbf16, #tpu.memory_space<vmem>>, vector<16x200xbf16>
    %cst_92 = arith.constant dense<0.000000e+00> : vector<16x200xf32>
    %137 = tpu.matmul %135, %136, %cst_92 {dimension_numbers = #tpu.dot_dimension_numbers<[1], [0], [0], [1], [0, 0, 1, 1], [], []>} : vector<16x16xbf16>, vector<16x200xbf16>, vector<16x200xf32> -> vector<16x200xf32>
    %138 = arith.addf %133, %137 : vector<16x200xf32>
    %c3_93 = arith.constant 3 : index
    %c0_94 = arith.constant 0 : index
    %c0_95 = arith.constant 0 : index
    %139 = vector.load %arg4[%c3_93, %c0_94, %c0_95] : memref<9x16x16xbf16, #tpu.memory_space<vmem>>, vector<1x16x16xbf16>
    %140 = vector.shape_cast %139 : vector<1x16x16xbf16> to vector<16x16xbf16>
    %c0_96 = arith.constant 0 : index
    %c10_97 = arith.constant 10 : index
    %141 = vector.load %arg14[%c0_96, %c10_97] : memref<16x222xbf16, #tpu.memory_space<vmem>>, vector<16x200xbf16>
    %cst_98 = arith.constant dense<0.000000e+00> : vector<16x200xf32>
    %142 = tpu.matmul %140, %141, %cst_98 {dimension_numbers = #tpu.dot_dimension_numbers<[1], [0], [0], [1], [0, 0, 1, 1], [], []>} : vector<16x16xbf16>, vector<16x200xbf16>, vector<16x200xf32> -> vector<16x200xf32>
    %143 = arith.addf %138, %142 : vector<16x200xf32>
    %c4_99 = arith.constant 4 : index
    %c0_100 = arith.constant 0 : index
    %c0_101 = arith.constant 0 : index
    %144 = vector.load %arg4[%c4_99, %c0_100, %c0_101] : memref<9x16x16xbf16, #tpu.memory_space<vmem>>, vector<1x16x16xbf16>
    %145 = vector.shape_cast %144 : vector<1x16x16xbf16> to vector<16x16xbf16>
    %c0_102 = arith.constant 0 : index
    %c11_103 = arith.constant 11 : index
    %146 = vector.load %arg14[%c0_102, %c11_103] : memref<16x222xbf16, #tpu.memory_space<vmem>>, vector<16x200xbf16>
    %cst_104 = arith.constant dense<0.000000e+00> : vector<16x200xf32>
    %147 = tpu.matmul %145, %146, %cst_104 {dimension_numbers = #tpu.dot_dimension_numbers<[1], [0], [0], [1], [0, 0, 1, 1], [], []>} : vector<16x16xbf16>, vector<16x200xbf16>, vector<16x200xf32> -> vector<16x200xf32>
    %148 = arith.addf %143, %147 : vector<16x200xf32>
    %c5_105 = arith.constant 5 : index
    %c0_106 = arith.constant 0 : index
    %c0_107 = arith.constant 0 : index
    %149 = vector.load %arg4[%c5_105, %c0_106, %c0_107] : memref<9x16x16xbf16, #tpu.memory_space<vmem>>, vector<1x16x16xbf16>
    %150 = vector.shape_cast %149 : vector<1x16x16xbf16> to vector<16x16xbf16>
    %c0_108 = arith.constant 0 : index
    %c12_109 = arith.constant 12 : index
    %151 = vector.load %arg14[%c0_108, %c12_109] : memref<16x222xbf16, #tpu.memory_space<vmem>>, vector<16x200xbf16>
    %cst_110 = arith.constant dense<0.000000e+00> : vector<16x200xf32>
    %152 = tpu.matmul %150, %151, %cst_110 {dimension_numbers = #tpu.dot_dimension_numbers<[1], [0], [0], [1], [0, 0, 1, 1], [], []>} : vector<16x16xbf16>, vector<16x200xbf16>, vector<16x200xf32> -> vector<16x200xf32>
    %153 = arith.addf %148, %152 : vector<16x200xf32>
    %c6_111 = arith.constant 6 : index
    %c0_112 = arith.constant 0 : index
    %c0_113 = arith.constant 0 : index
    %154 = vector.load %arg4[%c6_111, %c0_112, %c0_113] : memref<9x16x16xbf16, #tpu.memory_space<vmem>>, vector<1x16x16xbf16>
    %155 = vector.shape_cast %154 : vector<1x16x16xbf16> to vector<16x16xbf16>
    %c0_114 = arith.constant 0 : index
    %c20_115 = arith.constant 20 : index
    %156 = vector.load %arg14[%c0_114, %c20_115] : memref<16x222xbf16, #tpu.memory_space<vmem>>, vector<16x200xbf16>
    %cst_116 = arith.constant dense<0.000000e+00> : vector<16x200xf32>
    %157 = tpu.matmul %155, %156, %cst_116 {dimension_numbers = #tpu.dot_dimension_numbers<[1], [0], [0], [1], [0, 0, 1, 1], [], []>} : vector<16x16xbf16>, vector<16x200xbf16>, vector<16x200xf32> -> vector<16x200xf32>
    %158 = arith.addf %153, %157 : vector<16x200xf32>
    %c7_117 = arith.constant 7 : index
    %c0_118 = arith.constant 0 : index
    %c0_119 = arith.constant 0 : index
    %159 = vector.load %arg4[%c7_117, %c0_118, %c0_119] : memref<9x16x16xbf16, #tpu.memory_space<vmem>>, vector<1x16x16xbf16>
    %160 = vector.shape_cast %159 : vector<1x16x16xbf16> to vector<16x16xbf16>
    %c0_120 = arith.constant 0 : index
    %c21_121 = arith.constant 21 : index
    %161 = vector.load %arg14[%c0_120, %c21_121] : memref<16x222xbf16, #tpu.memory_space<vmem>>, vector<16x200xbf16>
    %cst_122 = arith.constant dense<0.000000e+00> : vector<16x200xf32>
    %162 = tpu.matmul %160, %161, %cst_122 {dimension_numbers = #tpu.dot_dimension_numbers<[1], [0], [0], [1], [0, 0, 1, 1], [], []>} : vector<16x16xbf16>, vector<16x200xbf16>, vector<16x200xf32> -> vector<16x200xf32>
    %163 = arith.addf %158, %162 : vector<16x200xf32>
    %c8_123 = arith.constant 8 : index
    %c0_124 = arith.constant 0 : index
    %c0_125 = arith.constant 0 : index
    %164 = vector.load %arg4[%c8_123, %c0_124, %c0_125] : memref<9x16x16xbf16, #tpu.memory_space<vmem>>, vector<1x16x16xbf16>
    %165 = vector.shape_cast %164 : vector<1x16x16xbf16> to vector<16x16xbf16>
    %c0_126 = arith.constant 0 : index
    %c22_127 = arith.constant 22 : index
    %166 = vector.load %arg14[%c0_126, %c22_127] : memref<16x222xbf16, #tpu.memory_space<vmem>>, vector<16x200xbf16>
    %cst_128 = arith.constant dense<0.000000e+00> : vector<16x200xf32>
    %167 = tpu.matmul %165, %166, %cst_128 {dimension_numbers = #tpu.dot_dimension_numbers<[1], [0], [0], [1], [0, 0, 1, 1], [], []>} : vector<16x16xbf16>, vector<16x200xbf16>, vector<16x200xf32> -> vector<16x200xf32>
    %168 = arith.addf %163, %167 : vector<16x200xf32>
    %c0_129 = arith.constant 0 : index
    %c0_130 = arith.constant 0 : index
    %169 = vector.load %arg5[%c0_129, %c0_130] : memref<16x1xf32, #tpu.memory_space<vmem>>, vector<16x1xf32>
    %170 = vector.broadcast %169 : vector<16x1xf32> to vector<16x200xf32>
    %171 = arith.addf %168, %170 : vector<16x200xf32>
    %c0_131 = arith.constant 0 : index
    %c0_132 = arith.constant 0 : index
    %172 = vector.load %arg10[%c0_131, %c0_132] : memref<16x8xbf16, #tpu.memory_space<vmem>>, vector<16x8xbf16>
    %c0_133 = arith.constant 0 : index
    %c11_134 = arith.constant 11 : index
    %173 = vector.load %arg0[%c0_133, %c11_134] : memref<8x222xbf16, #tpu.memory_space<vmem>>, vector<8x200xbf16>
    %cst_135 = arith.constant dense<0.000000e+00> : vector<16x200xf32>
    %174 = tpu.matmul %172, %173, %cst_135 {dimension_numbers = #tpu.dot_dimension_numbers<[1], [0], [0], [1], [0, 0, 1, 1], [], []>} : vector<16x8xbf16>, vector<8x200xbf16>, vector<16x200xf32> -> vector<16x200xf32>
    %c0_136 = arith.constant 0 : index
    %c0_137 = arith.constant 0 : index
    %175 = vector.load %arg11[%c0_136, %c0_137] : memref<16x1xf32, #tpu.memory_space<vmem>>, vector<16x1xf32>
    %176 = vector.broadcast %175 : vector<16x1xf32> to vector<16x200xf32>
    %177 = arith.addf %174, %176 : vector<16x200xf32>
    %178 = arith.addf %171, %177 : vector<16x200xf32>
    %179 = vector.broadcast %1 : vector<1x200xf32> to vector<16x200xf32>
    %180 = arith.mulf %178, %179 : vector<16x200xf32>
    %cst_138 = arith.constant 0.000000e+00 : bf16
    %181 = vector.broadcast %cst_138 : bf16 to vector<16x222xbf16>
    %c0_139 = arith.constant 0 : index
    %c0_140 = arith.constant 0 : index
    %182 = vector.load %arg12[%c0_139, %c0_140] : memref<16x222xbf16, #tpu.memory_space<vmem>>, vector<16x222xbf16>
    tpu.vector_store %arg12[%c0_139, %c0_140], %181 {strides = array<i32>} : memref<16x222xbf16, #tpu.memory_space<vmem>>, vector<16x222xbf16>,
    %183 = arith.truncf %180 : vector<16x200xf32> to vector<16x200xbf16>
    %c0_141 = arith.constant 0 : index
    %c11_142 = arith.constant 11 : index
    %184 = vector.load %arg12[%c0_141, %c11_142] : memref<16x222xbf16, #tpu.memory_space<vmem>>, vector<16x200xbf16>
    tpu.vector_store %arg12[%c0_141, %c11_142], %183 {strides = array<i32>} : memref<16x222xbf16, #tpu.memory_space<vmem>>, vector<16x200xbf16>,
    return
  }
}

module attributes {stable_mosaic.version = 11 : i64} {
  func.func @_resblock_kernel(%arg0: memref<16x222xbf16, #tpu.memory_space<vmem>>, %arg1: memref<1x222xf32, #tpu.memory_space<vmem>>, %arg2: memref<9x16x16xbf16, #tpu.memory_space<vmem>>, %arg3: memref<16x1xf32, #tpu.memory_space<vmem>>, %arg4: memref<9x16x16xbf16, #tpu.memory_space<vmem>>, %arg5: memref<16x1xf32, #tpu.memory_space<vmem>>, %arg6: memref<16x222xbf16, #tpu.memory_space<vmem>>, %arg7: memref<16x222xbf16, #tpu.memory_space<vmem>>, %arg8: memref<16x222xbf16, #tpu.memory_space<vmem>>) attributes {dimension_semantics = [], scalar_prefetch = 0 : i64, scratch_operands = 2 : i64, tpu.core_type = #tpu.core_type<tc>} {
    %c0 = arith.constant 0 : index
    %c0_0 = arith.constant 0 : index
    %0 = vector.load %arg1[%c0, %c0_0] : memref<1x222xf32, #tpu.memory_space<vmem>>, vector<1x222xf32>
    %c0_1 = arith.constant 0 : index
    %c11 = arith.constant 11 : index
    %1 = vector.load %arg1[%c0_1, %c11] : memref<1x222xf32, #tpu.memory_space<vmem>>, vector<1x200xf32>
    %c0_2 = arith.constant 0 : index
    %c0_3 = arith.constant 0 : index
    %2 = vector.load %arg0[%c0_2, %c0_3] : memref<16x222xbf16, #tpu.memory_space<vmem>>, vector<16x222xbf16>
    %3 = arith.extf %2 : vector<16x222xbf16> to vector<16x222xf32>
    %cst = arith.constant 0.000000e+00 : f32
    %4 = vector.broadcast %cst : f32 to vector<16x222xf32>
    %5 = arith.maximumf %3, %4 : vector<16x222xf32>
    %6 = vector.broadcast %0 : vector<1x222xf32> to vector<16x222xf32>
    %7 = arith.mulf %5, %6 : vector<16x222xf32>
    %8 = arith.truncf %7 : vector<16x222xf32> to vector<16x222xbf16>
    %c0_4 = arith.constant 0 : index
    %c0_5 = arith.constant 0 : index
    %9 = vector.load %arg7[%c0_4, %c0_5] : memref<16x222xbf16, #tpu.memory_space<vmem>>, vector<16x222xbf16>
    tpu.vector_store %arg7[%c0_4, %c0_5], %8 {strides = array<i32>} : memref<16x222xbf16, #tpu.memory_space<vmem>>, vector<16x222xbf16>,
    %cst_6 = arith.constant 0.000000e+00 : f32
    %10 = vector.broadcast %cst_6 : f32 to vector<16x200xf32>
    %c0_7 = arith.constant 0 : index
    %c0_8 = arith.constant 0 : index
    %c0_9 = arith.constant 0 : index
    %11 = vector.load %arg2[%c0_7, %c0_8, %c0_9] : memref<9x16x16xbf16, #tpu.memory_space<vmem>>, vector<1x16x16xbf16>
    %12 = vector.shape_cast %11 : vector<1x16x16xbf16> to vector<16x16xbf16>
    %c0_10 = arith.constant 0 : index
    %c0_11 = arith.constant 0 : index
    %13 = vector.load %arg7[%c0_10, %c0_11] : memref<16x222xbf16, #tpu.memory_space<vmem>>, vector<16x200xbf16>
    %cst_12 = arith.constant dense<0.000000e+00> : vector<16x200xf32>
    %14 = tpu.matmul %12, %13, %cst_12 {dimension_numbers = #tpu.dot_dimension_numbers<[1], [0], [0], [1], [0, 0, 1, 1], [], []>} : vector<16x16xbf16>, vector<16x200xbf16>, vector<16x200xf32> -> vector<16x200xf32>
    %15 = arith.addf %10, %14 : vector<16x200xf32>
    %c1 = arith.constant 1 : index
    %c0_13 = arith.constant 0 : index
    %c0_14 = arith.constant 0 : index
    %16 = vector.load %arg2[%c1, %c0_13, %c0_14] : memref<9x16x16xbf16, #tpu.memory_space<vmem>>, vector<1x16x16xbf16>
    %17 = vector.shape_cast %16 : vector<1x16x16xbf16> to vector<16x16xbf16>
    %c0_15 = arith.constant 0 : index
    %c1_16 = arith.constant 1 : index
    %18 = vector.load %arg7[%c0_15, %c1_16] : memref<16x222xbf16, #tpu.memory_space<vmem>>, vector<16x200xbf16>
    %cst_17 = arith.constant dense<0.000000e+00> : vector<16x200xf32>
    %19 = tpu.matmul %17, %18, %cst_17 {dimension_numbers = #tpu.dot_dimension_numbers<[1], [0], [0], [1], [0, 0, 1, 1], [], []>} : vector<16x16xbf16>, vector<16x200xbf16>, vector<16x200xf32> -> vector<16x200xf32>
    %20 = arith.addf %15, %19 : vector<16x200xf32>
    %c2 = arith.constant 2 : index
    %c0_18 = arith.constant 0 : index
    %c0_19 = arith.constant 0 : index
    %21 = vector.load %arg2[%c2, %c0_18, %c0_19] : memref<9x16x16xbf16, #tpu.memory_space<vmem>>, vector<1x16x16xbf16>
    %22 = vector.shape_cast %21 : vector<1x16x16xbf16> to vector<16x16xbf16>
    %c0_20 = arith.constant 0 : index
    %c2_21 = arith.constant 2 : index
    %23 = vector.load %arg7[%c0_20, %c2_21] : memref<16x222xbf16, #tpu.memory_space<vmem>>, vector<16x200xbf16>
    %cst_22 = arith.constant dense<0.000000e+00> : vector<16x200xf32>
    %24 = tpu.matmul %22, %23, %cst_22 {dimension_numbers = #tpu.dot_dimension_numbers<[1], [0], [0], [1], [0, 0, 1, 1], [], []>} : vector<16x16xbf16>, vector<16x200xbf16>, vector<16x200xf32> -> vector<16x200xf32>
    %25 = arith.addf %20, %24 : vector<16x200xf32>
    %c3 = arith.constant 3 : index
    %c0_23 = arith.constant 0 : index
    %c0_24 = arith.constant 0 : index
    %26 = vector.load %arg2[%c3, %c0_23, %c0_24] : memref<9x16x16xbf16, #tpu.memory_space<vmem>>, vector<1x16x16xbf16>
    %27 = vector.shape_cast %26 : vector<1x16x16xbf16> to vector<16x16xbf16>
    %c0_25 = arith.constant 0 : index
    %c10 = arith.constant 10 : index
    %28 = vector.load %arg7[%c0_25, %c10] : memref<16x222xbf16, #tpu.memory_space<vmem>>, vector<16x200xbf16>
    %cst_26 = arith.constant dense<0.000000e+00> : vector<16x200xf32>
    %29 = tpu.matmul %27, %28, %cst_26 {dimension_numbers = #tpu.dot_dimension_numbers<[1], [0], [0], [1], [0, 0, 1, 1], [], []>} : vector<16x16xbf16>, vector<16x200xbf16>, vector<16x200xf32> -> vector<16x200xf32>
    %30 = arith.addf %25, %29 : vector<16x200xf32>
    %c4 = arith.constant 4 : index
    %c0_27 = arith.constant 0 : index
    %c0_28 = arith.constant 0 : index
    %31 = vector.load %arg2[%c4, %c0_27, %c0_28] : memref<9x16x16xbf16, #tpu.memory_space<vmem>>, vector<1x16x16xbf16>
    %32 = vector.shape_cast %31 : vector<1x16x16xbf16> to vector<16x16xbf16>
    %c0_29 = arith.constant 0 : index
    %c11_30 = arith.constant 11 : index
    %33 = vector.load %arg7[%c0_29, %c11_30] : memref<16x222xbf16, #tpu.memory_space<vmem>>, vector<16x200xbf16>
    %cst_31 = arith.constant dense<0.000000e+00> : vector<16x200xf32>
    %34 = tpu.matmul %32, %33, %cst_31 {dimension_numbers = #tpu.dot_dimension_numbers<[1], [0], [0], [1], [0, 0, 1, 1], [], []>} : vector<16x16xbf16>, vector<16x200xbf16>, vector<16x200xf32> -> vector<16x200xf32>
    %35 = arith.addf %30, %34 : vector<16x200xf32>
    %c5 = arith.constant 5 : index
    %c0_32 = arith.constant 0 : index
    %c0_33 = arith.constant 0 : index
    %36 = vector.load %arg2[%c5, %c0_32, %c0_33] : memref<9x16x16xbf16, #tpu.memory_space<vmem>>, vector<1x16x16xbf16>
    %37 = vector.shape_cast %36 : vector<1x16x16xbf16> to vector<16x16xbf16>
    %c0_34 = arith.constant 0 : index
    %c12 = arith.constant 12 : index
    %38 = vector.load %arg7[%c0_34, %c12] : memref<16x222xbf16, #tpu.memory_space<vmem>>, vector<16x200xbf16>
    %cst_35 = arith.constant dense<0.000000e+00> : vector<16x200xf32>
    %39 = tpu.matmul %37, %38, %cst_35 {dimension_numbers = #tpu.dot_dimension_numbers<[1], [0], [0], [1], [0, 0, 1, 1], [], []>} : vector<16x16xbf16>, vector<16x200xbf16>, vector<16x200xf32> -> vector<16x200xf32>
    %40 = arith.addf %35, %39 : vector<16x200xf32>
    %c6 = arith.constant 6 : index
    %c0_36 = arith.constant 0 : index
    %c0_37 = arith.constant 0 : index
    %41 = vector.load %arg2[%c6, %c0_36, %c0_37] : memref<9x16x16xbf16, #tpu.memory_space<vmem>>, vector<1x16x16xbf16>
    %42 = vector.shape_cast %41 : vector<1x16x16xbf16> to vector<16x16xbf16>
    %c0_38 = arith.constant 0 : index
    %c20 = arith.constant 20 : index
    %43 = vector.load %arg7[%c0_38, %c20] : memref<16x222xbf16, #tpu.memory_space<vmem>>, vector<16x200xbf16>
    %cst_39 = arith.constant dense<0.000000e+00> : vector<16x200xf32>
    %44 = tpu.matmul %42, %43, %cst_39 {dimension_numbers = #tpu.dot_dimension_numbers<[1], [0], [0], [1], [0, 0, 1, 1], [], []>} : vector<16x16xbf16>, vector<16x200xbf16>, vector<16x200xf32> -> vector<16x200xf32>
    %45 = arith.addf %40, %44 : vector<16x200xf32>
    %c7 = arith.constant 7 : index
    %c0_40 = arith.constant 0 : index
    %c0_41 = arith.constant 0 : index
    %46 = vector.load %arg2[%c7, %c0_40, %c0_41] : memref<9x16x16xbf16, #tpu.memory_space<vmem>>, vector<1x16x16xbf16>
    %47 = vector.shape_cast %46 : vector<1x16x16xbf16> to vector<16x16xbf16>
    %c0_42 = arith.constant 0 : index
    %c21 = arith.constant 21 : index
    %48 = vector.load %arg7[%c0_42, %c21] : memref<16x222xbf16, #tpu.memory_space<vmem>>, vector<16x200xbf16>
    %cst_43 = arith.constant dense<0.000000e+00> : vector<16x200xf32>
    %49 = tpu.matmul %47, %48, %cst_43 {dimension_numbers = #tpu.dot_dimension_numbers<[1], [0], [0], [1], [0, 0, 1, 1], [], []>} : vector<16x16xbf16>, vector<16x200xbf16>, vector<16x200xf32> -> vector<16x200xf32>
    %50 = arith.addf %45, %49 : vector<16x200xf32>
    %c8 = arith.constant 8 : index
    %c0_44 = arith.constant 0 : index
    %c0_45 = arith.constant 0 : index
    %51 = vector.load %arg2[%c8, %c0_44, %c0_45] : memref<9x16x16xbf16, #tpu.memory_space<vmem>>, vector<1x16x16xbf16>
    %52 = vector.shape_cast %51 : vector<1x16x16xbf16> to vector<16x16xbf16>
    %c0_46 = arith.constant 0 : index
    %c22 = arith.constant 22 : index
    %53 = vector.load %arg7[%c0_46, %c22] : memref<16x222xbf16, #tpu.memory_space<vmem>>, vector<16x200xbf16>
    %cst_47 = arith.constant dense<0.000000e+00> : vector<16x200xf32>
    %54 = tpu.matmul %52, %53, %cst_47 {dimension_numbers = #tpu.dot_dimension_numbers<[1], [0], [0], [1], [0, 0, 1, 1], [], []>} : vector<16x16xbf16>, vector<16x200xbf16>, vector<16x200xf32> -> vector<16x200xf32>
    %55 = arith.addf %50, %54 : vector<16x200xf32>
    %c0_48 = arith.constant 0 : index
    %c0_49 = arith.constant 0 : index
    %56 = vector.load %arg3[%c0_48, %c0_49] : memref<16x1xf32, #tpu.memory_space<vmem>>, vector<16x1xf32>
    %57 = vector.broadcast %56 : vector<16x1xf32> to vector<16x200xf32>
    %58 = arith.addf %55, %57 : vector<16x200xf32>
    %cst_50 = arith.constant 0.000000e+00 : f32
    %59 = vector.broadcast %cst_50 : f32 to vector<16x200xf32>
    %60 = arith.maximumf %58, %59 : vector<16x200xf32>
    %61 = vector.broadcast %1 : vector<1x200xf32> to vector<16x200xf32>
    %62 = arith.mulf %60, %61 : vector<16x200xf32>
    %cst_51 = arith.constant 0.000000e+00 : bf16
    %63 = vector.broadcast %cst_51 : bf16 to vector<16x222xbf16>
    %c0_52 = arith.constant 0 : index
    %c0_53 = arith.constant 0 : index
    %64 = vector.load %arg8[%c0_52, %c0_53] : memref<16x222xbf16, #tpu.memory_space<vmem>>, vector<16x222xbf16>
    tpu.vector_store %arg8[%c0_52, %c0_53], %63 {strides = array<i32>} : memref<16x222xbf16, #tpu.memory_space<vmem>>, vector<16x222xbf16>,
    %65 = arith.truncf %62 : vector<16x200xf32> to vector<16x200xbf16>
    %c0_54 = arith.constant 0 : index
    %c11_55 = arith.constant 11 : index
    %66 = vector.load %arg8[%c0_54, %c11_55] : memref<16x222xbf16, #tpu.memory_space<vmem>>, vector<16x200xbf16>
    tpu.vector_store %arg8[%c0_54, %c11_55], %65 {strides = array<i32>} : memref<16x222xbf16, #tpu.memory_space<vmem>>, vector<16x200xbf16>,
    %cst_56 = arith.constant 0.000000e+00 : f32
    %67 = vector.broadcast %cst_56 : f32 to vector<16x200xf32>
    %c0_57 = arith.constant 0 : index
    %c0_58 = arith.constant 0 : index
    %c0_59 = arith.constant 0 : index
    %68 = vector.load %arg4[%c0_57, %c0_58, %c0_59] : memref<9x16x16xbf16, #tpu.memory_space<vmem>>, vector<1x16x16xbf16>
    %69 = vector.shape_cast %68 : vector<1x16x16xbf16> to vector<16x16xbf16>
    %c0_60 = arith.constant 0 : index
    %c0_61 = arith.constant 0 : index
    %70 = vector.load %arg8[%c0_60, %c0_61] : memref<16x222xbf16, #tpu.memory_space<vmem>>, vector<16x200xbf16>
    %cst_62 = arith.constant dense<0.000000e+00> : vector<16x200xf32>
    %71 = tpu.matmul %69, %70, %cst_62 {dimension_numbers = #tpu.dot_dimension_numbers<[1], [0], [0], [1], [0, 0, 1, 1], [], []>} : vector<16x16xbf16>, vector<16x200xbf16>, vector<16x200xf32> -> vector<16x200xf32>
    %72 = arith.addf %67, %71 : vector<16x200xf32>
    %c1_63 = arith.constant 1 : index
    %c0_64 = arith.constant 0 : index
    %c0_65 = arith.constant 0 : index
    %73 = vector.load %arg4[%c1_63, %c0_64, %c0_65] : memref<9x16x16xbf16, #tpu.memory_space<vmem>>, vector<1x16x16xbf16>
    %74 = vector.shape_cast %73 : vector<1x16x16xbf16> to vector<16x16xbf16>
    %c0_66 = arith.constant 0 : index
    %c1_67 = arith.constant 1 : index
    %75 = vector.load %arg8[%c0_66, %c1_67] : memref<16x222xbf16, #tpu.memory_space<vmem>>, vector<16x200xbf16>
    %cst_68 = arith.constant dense<0.000000e+00> : vector<16x200xf32>
    %76 = tpu.matmul %74, %75, %cst_68 {dimension_numbers = #tpu.dot_dimension_numbers<[1], [0], [0], [1], [0, 0, 1, 1], [], []>} : vector<16x16xbf16>, vector<16x200xbf16>, vector<16x200xf32> -> vector<16x200xf32>
    %77 = arith.addf %72, %76 : vector<16x200xf32>
    %c2_69 = arith.constant 2 : index
    %c0_70 = arith.constant 0 : index
    %c0_71 = arith.constant 0 : index
    %78 = vector.load %arg4[%c2_69, %c0_70, %c0_71] : memref<9x16x16xbf16, #tpu.memory_space<vmem>>, vector<1x16x16xbf16>
    %79 = vector.shape_cast %78 : vector<1x16x16xbf16> to vector<16x16xbf16>
    %c0_72 = arith.constant 0 : index
    %c2_73 = arith.constant 2 : index
    %80 = vector.load %arg8[%c0_72, %c2_73] : memref<16x222xbf16, #tpu.memory_space<vmem>>, vector<16x200xbf16>
    %cst_74 = arith.constant dense<0.000000e+00> : vector<16x200xf32>
    %81 = tpu.matmul %79, %80, %cst_74 {dimension_numbers = #tpu.dot_dimension_numbers<[1], [0], [0], [1], [0, 0, 1, 1], [], []>} : vector<16x16xbf16>, vector<16x200xbf16>, vector<16x200xf32> -> vector<16x200xf32>
    %82 = arith.addf %77, %81 : vector<16x200xf32>
    %c3_75 = arith.constant 3 : index
    %c0_76 = arith.constant 0 : index
    %c0_77 = arith.constant 0 : index
    %83 = vector.load %arg4[%c3_75, %c0_76, %c0_77] : memref<9x16x16xbf16, #tpu.memory_space<vmem>>, vector<1x16x16xbf16>
    %84 = vector.shape_cast %83 : vector<1x16x16xbf16> to vector<16x16xbf16>
    %c0_78 = arith.constant 0 : index
    %c10_79 = arith.constant 10 : index
    %85 = vector.load %arg8[%c0_78, %c10_79] : memref<16x222xbf16, #tpu.memory_space<vmem>>, vector<16x200xbf16>
    %cst_80 = arith.constant dense<0.000000e+00> : vector<16x200xf32>
    %86 = tpu.matmul %84, %85, %cst_80 {dimension_numbers = #tpu.dot_dimension_numbers<[1], [0], [0], [1], [0, 0, 1, 1], [], []>} : vector<16x16xbf16>, vector<16x200xbf16>, vector<16x200xf32> -> vector<16x200xf32>
    %87 = arith.addf %82, %86 : vector<16x200xf32>
    %c4_81 = arith.constant 4 : index
    %c0_82 = arith.constant 0 : index
    %c0_83 = arith.constant 0 : index
    %88 = vector.load %arg4[%c4_81, %c0_82, %c0_83] : memref<9x16x16xbf16, #tpu.memory_space<vmem>>, vector<1x16x16xbf16>
    %89 = vector.shape_cast %88 : vector<1x16x16xbf16> to vector<16x16xbf16>
    %c0_84 = arith.constant 0 : index
    %c11_85 = arith.constant 11 : index
    %90 = vector.load %arg8[%c0_84, %c11_85] : memref<16x222xbf16, #tpu.memory_space<vmem>>, vector<16x200xbf16>
    %cst_86 = arith.constant dense<0.000000e+00> : vector<16x200xf32>
    %91 = tpu.matmul %89, %90, %cst_86 {dimension_numbers = #tpu.dot_dimension_numbers<[1], [0], [0], [1], [0, 0, 1, 1], [], []>} : vector<16x16xbf16>, vector<16x200xbf16>, vector<16x200xf32> -> vector<16x200xf32>
    %92 = arith.addf %87, %91 : vector<16x200xf32>
    %c5_87 = arith.constant 5 : index
    %c0_88 = arith.constant 0 : index
    %c0_89 = arith.constant 0 : index
    %93 = vector.load %arg4[%c5_87, %c0_88, %c0_89] : memref<9x16x16xbf16, #tpu.memory_space<vmem>>, vector<1x16x16xbf16>
    %94 = vector.shape_cast %93 : vector<1x16x16xbf16> to vector<16x16xbf16>
    %c0_90 = arith.constant 0 : index
    %c12_91 = arith.constant 12 : index
    %95 = vector.load %arg8[%c0_90, %c12_91] : memref<16x222xbf16, #tpu.memory_space<vmem>>, vector<16x200xbf16>
    %cst_92 = arith.constant dense<0.000000e+00> : vector<16x200xf32>
    %96 = tpu.matmul %94, %95, %cst_92 {dimension_numbers = #tpu.dot_dimension_numbers<[1], [0], [0], [1], [0, 0, 1, 1], [], []>} : vector<16x16xbf16>, vector<16x200xbf16>, vector<16x200xf32> -> vector<16x200xf32>
    %97 = arith.addf %92, %96 : vector<16x200xf32>
    %c6_93 = arith.constant 6 : index
    %c0_94 = arith.constant 0 : index
    %c0_95 = arith.constant 0 : index
    %98 = vector.load %arg4[%c6_93, %c0_94, %c0_95] : memref<9x16x16xbf16, #tpu.memory_space<vmem>>, vector<1x16x16xbf16>
    %99 = vector.shape_cast %98 : vector<1x16x16xbf16> to vector<16x16xbf16>
    %c0_96 = arith.constant 0 : index
    %c20_97 = arith.constant 20 : index
    %100 = vector.load %arg8[%c0_96, %c20_97] : memref<16x222xbf16, #tpu.memory_space<vmem>>, vector<16x200xbf16>
    %cst_98 = arith.constant dense<0.000000e+00> : vector<16x200xf32>
    %101 = tpu.matmul %99, %100, %cst_98 {dimension_numbers = #tpu.dot_dimension_numbers<[1], [0], [0], [1], [0, 0, 1, 1], [], []>} : vector<16x16xbf16>, vector<16x200xbf16>, vector<16x200xf32> -> vector<16x200xf32>
    %102 = arith.addf %97, %101 : vector<16x200xf32>
    %c7_99 = arith.constant 7 : index
    %c0_100 = arith.constant 0 : index
    %c0_101 = arith.constant 0 : index
    %103 = vector.load %arg4[%c7_99, %c0_100, %c0_101] : memref<9x16x16xbf16, #tpu.memory_space<vmem>>, vector<1x16x16xbf16>
    %104 = vector.shape_cast %103 : vector<1x16x16xbf16> to vector<16x16xbf16>
    %c0_102 = arith.constant 0 : index
    %c21_103 = arith.constant 21 : index
    %105 = vector.load %arg8[%c0_102, %c21_103] : memref<16x222xbf16, #tpu.memory_space<vmem>>, vector<16x200xbf16>
    %cst_104 = arith.constant dense<0.000000e+00> : vector<16x200xf32>
    %106 = tpu.matmul %104, %105, %cst_104 {dimension_numbers = #tpu.dot_dimension_numbers<[1], [0], [0], [1], [0, 0, 1, 1], [], []>} : vector<16x16xbf16>, vector<16x200xbf16>, vector<16x200xf32> -> vector<16x200xf32>
    %107 = arith.addf %102, %106 : vector<16x200xf32>
    %c8_105 = arith.constant 8 : index
    %c0_106 = arith.constant 0 : index
    %c0_107 = arith.constant 0 : index
    %108 = vector.load %arg4[%c8_105, %c0_106, %c0_107] : memref<9x16x16xbf16, #tpu.memory_space<vmem>>, vector<1x16x16xbf16>
    %109 = vector.shape_cast %108 : vector<1x16x16xbf16> to vector<16x16xbf16>
    %c0_108 = arith.constant 0 : index
    %c22_109 = arith.constant 22 : index
    %110 = vector.load %arg8[%c0_108, %c22_109] : memref<16x222xbf16, #tpu.memory_space<vmem>>, vector<16x200xbf16>
    %cst_110 = arith.constant dense<0.000000e+00> : vector<16x200xf32>
    %111 = tpu.matmul %109, %110, %cst_110 {dimension_numbers = #tpu.dot_dimension_numbers<[1], [0], [0], [1], [0, 0, 1, 1], [], []>} : vector<16x16xbf16>, vector<16x200xbf16>, vector<16x200xf32> -> vector<16x200xf32>
    %112 = arith.addf %107, %111 : vector<16x200xf32>
    %c0_111 = arith.constant 0 : index
    %c0_112 = arith.constant 0 : index
    %113 = vector.load %arg5[%c0_111, %c0_112] : memref<16x1xf32, #tpu.memory_space<vmem>>, vector<16x1xf32>
    %114 = vector.broadcast %113 : vector<16x1xf32> to vector<16x200xf32>
    %115 = arith.addf %112, %114 : vector<16x200xf32>
    %c0_113 = arith.constant 0 : index
    %c11_114 = arith.constant 11 : index
    %116 = vector.load %arg0[%c0_113, %c11_114] : memref<16x222xbf16, #tpu.memory_space<vmem>>, vector<16x200xbf16>
    %117 = arith.extf %116 : vector<16x200xbf16> to vector<16x200xf32>
    %118 = arith.addf %115, %117 : vector<16x200xf32>
    %119 = vector.broadcast %1 : vector<1x200xf32> to vector<16x200xf32>
    %120 = arith.mulf %118, %119 : vector<16x200xf32>
    %cst_115 = arith.constant 0.000000e+00 : bf16
    %121 = vector.broadcast %cst_115 : bf16 to vector<16x222xbf16>
    %c0_116 = arith.constant 0 : index
    %c0_117 = arith.constant 0 : index
    %122 = vector.load %arg6[%c0_116, %c0_117] : memref<16x222xbf16, #tpu.memory_space<vmem>>, vector<16x222xbf16>
    tpu.vector_store %arg6[%c0_116, %c0_117], %121 {strides = array<i32>} : memref<16x222xbf16, #tpu.memory_space<vmem>>, vector<16x222xbf16>,
    %123 = arith.truncf %120 : vector<16x200xf32> to vector<16x200xbf16>
    %c0_118 = arith.constant 0 : index
    %c11_119 = arith.constant 11 : index
    %124 = vector.load %arg6[%c0_118, %c11_119] : memref<16x222xbf16, #tpu.memory_space<vmem>>, vector<16x200xbf16>
    tpu.vector_store %arg6[%c0_118, %c11_119], %123 {strides = array<i32>} : memref<16x222xbf16, #tpu.memory_space<vmem>>, vector<16x200xbf16>,
    return
  }
}

module attributes {stable_mosaic.version = 11 : i64} {
  func.func @_attn_kernel(%arg0: i32, %arg1: memref<1x64x16xbf16, #tpu.memory_space<vmem>>, %arg2: memref<1x16x64xbf16, #tpu.memory_space<vmem>>, %arg3: memref<1x64x16xbf16, #tpu.memory_space<vmem>>, %arg4: memref<16x16xbf16, #tpu.memory_space<vmem>>, %arg5: memref<16x16xbf16, #tpu.memory_space<vmem>>, %arg6: memref<16x16xbf16, #tpu.memory_space<vmem>>, %arg7: memref<16x16xbf16, #tpu.memory_space<vmem>>, %arg8: memref<1x16xf32, #tpu.memory_space<vmem>>, %arg9: memref<16x1xf32, #tpu.memory_space<vmem>>, %arg10: memref<1x16xf32, #tpu.memory_space<vmem>>, %arg11: memref<1x16xf32, #tpu.memory_space<vmem>>, %arg12: memref<1x64x16xbf16, #tpu.memory_space<vmem>>) attributes {dimension_semantics = [#tpu.dimension_semantics<parallel>], iteration_bounds = array<i64: 2>, scalar_prefetch = 0 : i64, scratch_operands = 0 : i64, tpu.core_type = #tpu.core_type<tc>, window_params = [{transform_indices = @transform_0, window_bounds = array<i64: 1, 64, 16>}, {transform_indices = @transform_1, window_bounds = array<i64: 1, 16, 64>}, {transform_indices = @transform_2, window_bounds = array<i64: 1, 64, 16>}, {pipeline_mode = #tpu.pipeline_mode<synchronous>, transform_indices = @transform_3, window_bounds = array<i64: 16, 16>}, {pipeline_mode = #tpu.pipeline_mode<synchronous>, transform_indices = @transform_4, window_bounds = array<i64: 16, 16>}, {pipeline_mode = #tpu.pipeline_mode<synchronous>, transform_indices = @transform_5, window_bounds = array<i64: 16, 16>}, {pipeline_mode = #tpu.pipeline_mode<synchronous>, transform_indices = @transform_6, window_bounds = array<i64: 16, 16>}, {pipeline_mode = #tpu.pipeline_mode<synchronous>, transform_indices = @transform_7, window_bounds = array<i64: 1, 16>}, {pipeline_mode = #tpu.pipeline_mode<synchronous>, transform_indices = @transform_8, window_bounds = array<i64: 16, 1>}, {pipeline_mode = #tpu.pipeline_mode<synchronous>, transform_indices = @transform_9, window_bounds = array<i64: 1, 16>}, {pipeline_mode = #tpu.pipeline_mode<synchronous>, transform_indices = @transform_10, window_bounds = array<i64: 1, 16>}, {transform_indices = @transform_11, window_bounds = array<i64: 1, 64, 16>}]} {
    %c0 = arith.constant 0 : index
    %c0_0 = arith.constant 0 : index
    %c0_1 = arith.constant 0 : index
    %0 = vector.load %arg1[%c0, %c0_0, %c0_1] : memref<1x64x16xbf16, #tpu.memory_space<vmem>>, vector<1x64x16xbf16>
    %1 = vector.shape_cast %0 : vector<1x64x16xbf16> to vector<64x16xbf16>
    %c0_2 = arith.constant 0 : index
    %c0_3 = arith.constant 0 : index
    %c0_4 = arith.constant 0 : index
    %2 = vector.load %arg2[%c0_2, %c0_3, %c0_4] : memref<1x16x64xbf16, #tpu.memory_space<vmem>>, vector<1x16x64xbf16>
    %3 = vector.shape_cast %2 : vector<1x16x64xbf16> to vector<16x64xbf16>
    %c0_5 = arith.constant 0 : index
    %c0_6 = arith.constant 0 : index
    %4 = vector.load %arg4[%c0_5, %c0_6] : memref<16x16xbf16, #tpu.memory_space<vmem>>, vector<16x16xbf16>
    %cst = arith.constant dense<0.000000e+00> : vector<64x16xf32>
    %5 = tpu.matmul %1, %4, %cst {dimension_numbers = #tpu.dot_dimension_numbers<[1], [0], [0], [1], [0, 0, 1, 1], [], []>} : vector<64x16xbf16>, vector<16x16xbf16>, vector<64x16xf32> -> vector<64x16xf32>
    %c0_7 = arith.constant 0 : index
    %c0_8 = arith.constant 0 : index
    %6 = vector.load %arg8[%c0_7, %c0_8] : memref<1x16xf32, #tpu.memory_space<vmem>>, vector<1x16xf32>
    %7 = vector.broadcast %6 : vector<1x16xf32> to vector<64x16xf32>
    %8 = arith.addf %5, %7 : vector<64x16xf32>
    %c0_9 = arith.constant 0 : index
    %c0_10 = arith.constant 0 : index
    %9 = vector.load %arg5[%c0_9, %c0_10] : memref<16x16xbf16, #tpu.memory_space<vmem>>, vector<16x16xbf16>
    %cst_11 = arith.constant dense<0.000000e+00> : vector<16x64xf32>
    %10 = tpu.matmul %9, %3, %cst_11 {dimension_numbers = #tpu.dot_dimension_numbers<[1], [0], [0], [1], [0, 0, 1, 1], [], []>} : vector<16x16xbf16>, vector<16x64xbf16>, vector<16x64xf32> -> vector<16x64xf32>
    %c0_12 = arith.constant 0 : index
    %c0_13 = arith.constant 0 : index
    %11 = vector.load %arg9[%c0_12, %c0_13] : memref<16x1xf32, #tpu.memory_space<vmem>>, vector<16x1xf32>
    %12 = vector.broadcast %11 : vector<16x1xf32> to vector<16x64xf32>
    %13 = arith.addf %10, %12 : vector<16x64xf32>
    %c0_14 = arith.constant 0 : index
    %c0_15 = arith.constant 0 : index
    %14 = vector.load %arg6[%c0_14, %c0_15] : memref<16x16xbf16, #tpu.memory_space<vmem>>, vector<16x16xbf16>
    %cst_16 = arith.constant dense<0.000000e+00> : vector<64x16xf32>
    %15 = tpu.matmul %1, %14, %cst_16 {dimension_numbers = #tpu.dot_dimension_numbers<[1], [0], [0], [1], [0, 0, 1, 1], [], []>} : vector<64x16xbf16>, vector<16x16xbf16>, vector<64x16xf32> -> vector<64x16xf32>
    %c0_17 = arith.constant 0 : index
    %c0_18 = arith.constant 0 : index
    %16 = vector.load %arg10[%c0_17, %c0_18] : memref<1x16xf32, #tpu.memory_space<vmem>>, vector<1x16xf32>
    %17 = vector.broadcast %16 : vector<1x16xf32> to vector<64x16xf32>
    %18 = arith.addf %15, %17 : vector<64x16xf32>
    %19 = arith.truncf %8 : vector<64x16xf32> to vector<64x16xbf16>
    %20 = arith.truncf %13 : vector<16x64xf32> to vector<16x64xbf16>
    %cst_19 = arith.constant dense<0.000000e+00> : vector<64x64xf32>
    %21 = tpu.matmul %19, %20, %cst_19 {dimension_numbers = #tpu.dot_dimension_numbers<[1], [0], [0], [1], [0, 0, 1, 1], [], []>} : vector<64x16xbf16>, vector<16x64xbf16>, vector<64x64xf32> -> vector<64x64xf32>
    %cst_20 = arith.constant 2.500000e-01 : f32
    %22 = vector.broadcast %cst_20 : f32 to vector<64x64xf32>
    %23 = arith.mulf %21, %22 : vector<64x64xf32>
    %cst_21 = arith.constant dense<0xFF800000> : vector<64xf32>
    %24 = vector.multi_reduction <maximumf>, %23, %cst_21 [1] : vector<64x64xf32> to vector<64xf32>
    %25 = vector.shape_cast %24 : vector<64xf32> to vector<64x1xf32>
    %26 = vector.broadcast %25 : vector<64x1xf32> to vector<64x64xf32>
    %27 = arith.subf %23, %26 : vector<64x64xf32>
    %28 = math.exp %27 : vector<64x64xf32>
    %cst_22 = arith.constant dense<0.000000e+00> : vector<64xf32>
    %29 = vector.multi_reduction <add>, %28, %cst_22 [1] : vector<64x64xf32> to vector<64xf32>
    %30 = vector.shape_cast %29 : vector<64xf32> to vector<64x1xf32>
    %31 = arith.truncf %28 : vector<64x64xf32> to vector<64x64xbf16>
    %32 = arith.truncf %18 : vector<64x16xf32> to vector<64x16xbf16>
    %cst_23 = arith.constant dense<0.000000e+00> : vector<64x16xf32>
    %33 = tpu.matmul %31, %32, %cst_23 {dimension_numbers = #tpu.dot_dimension_numbers<[1], [0], [0], [1], [0, 0, 1, 1], [], []>} : vector<64x64xbf16>, vector<64x16xbf16>, vector<64x16xf32> -> vector<64x16xf32>
    %34 = vector.broadcast %30 : vector<64x1xf32> to vector<64x16xf32>
    %35 = arith.divf %33, %34 : vector<64x16xf32>
    %36 = arith.truncf %35 : vector<64x16xf32> to vector<64x16xbf16>
    %c0_24 = arith.constant 0 : index
    %c0_25 = arith.constant 0 : index
    %37 = vector.load %arg7[%c0_24, %c0_25] : memref<16x16xbf16, #tpu.memory_space<vmem>>, vector<16x16xbf16>
    %cst_26 = arith.constant dense<0.000000e+00> : vector<64x16xf32>
    %38 = tpu.matmul %36, %37, %cst_26 {dimension_numbers = #tpu.dot_dimension_numbers<[1], [0], [0], [1], [0, 0, 1, 1], [], []>} : vector<64x16xbf16>, vector<16x16xbf16>, vector<64x16xf32> -> vector<64x16xf32>
    %c0_27 = arith.constant 0 : index
    %c0_28 = arith.constant 0 : index
    %39 = vector.load %arg11[%c0_27, %c0_28] : memref<1x16xf32, #tpu.memory_space<vmem>>, vector<1x16xf32>
    %40 = vector.broadcast %39 : vector<1x16xf32> to vector<64x16xf32>
    %41 = arith.addf %38, %40 : vector<64x16xf32>
    %c0_29 = arith.constant 0 : index
    %c0_30 = arith.constant 0 : index
    %c0_31 = arith.constant 0 : index
    %42 = vector.load %arg3[%c0_29, %c0_30, %c0_31] : memref<1x64x16xbf16, #tpu.memory_space<vmem>>, vector<1x64x16xbf16>
    %43 = vector.shape_cast %42 : vector<1x64x16xbf16> to vector<64x16xbf16>
    %44 = arith.extf %43 : vector<64x16xbf16> to vector<64x16xf32>
    %45 = arith.addf %41, %44 : vector<64x16xf32>
    %46 = arith.truncf %45 : vector<64x16xf32> to vector<64x16xbf16>
    %c0_32 = arith.constant 0 : index
    %c0_33 = arith.constant 0 : index
    %c0_34 = arith.constant 0 : index
    %47 = vector.load %arg12[%c0_32, %c0_33, %c0_34] : memref<1x64x16xbf16, #tpu.memory_space<vmem>>, vector<1x64x16xbf16>
    %48 = vector.shape_cast %47 : vector<1x64x16xbf16> to vector<64x16xbf16>
    %49 = vector.shape_cast %46 : vector<64x16xbf16> to vector<1x64x16xbf16>
    tpu.vector_store %arg12[%c0_32, %c0_33, %c0_34], %49 {strides = array<i32>} : memref<1x64x16xbf16, #tpu.memory_space<vmem>>, vector<1x64x16xbf16>,
    return
  }
  func.func @transform_0(%arg0: i32) -> (i32, i32, i32) {
    %c0_i32 = arith.constant 0 : i32
    %c0_i32_0 = arith.constant 0 : i32
    %c0_i32_1 = arith.constant 0 : i32
    return %arg0, %c0_i32, %c0_i32_0 : i32, i32, i32
  }
  func.func @transform_1(%arg0: i32) -> (i32, i32, i32) {
    %c0_i32 = arith.constant 0 : i32
    %c0_i32_0 = arith.constant 0 : i32
    %c0_i32_1 = arith.constant 0 : i32
    return %arg0, %c0_i32, %c0_i32_0 : i32, i32, i32
  }
  func.func @transform_2(%arg0: i32) -> (i32, i32, i32) {
    %c0_i32 = arith.constant 0 : i32
    %c0_i32_0 = arith.constant 0 : i32
    %c0_i32_1 = arith.constant 0 : i32
    return %arg0, %c0_i32, %c0_i32_0 : i32, i32, i32
  }
  func.func @transform_3(%arg0: i32) -> (i32, i32) {
    %c0_i32 = arith.constant 0 : i32
    %c0_i32_0 = arith.constant 0 : i32
    %c0_i32_1 = arith.constant 0 : i32
    return %c0_i32, %c0_i32_0 : i32, i32
  }
  func.func @transform_4(%arg0: i32) -> (i32, i32) {
    %c0_i32 = arith.constant 0 : i32
    %c0_i32_0 = arith.constant 0 : i32
    %c0_i32_1 = arith.constant 0 : i32
    return %c0_i32, %c0_i32_0 : i32, i32
  }
  func.func @transform_5(%arg0: i32) -> (i32, i32) {
    %c0_i32 = arith.constant 0 : i32
    %c0_i32_0 = arith.constant 0 : i32
    %c0_i32_1 = arith.constant 0 : i32
    return %c0_i32, %c0_i32_0 : i32, i32
  }
  func.func @transform_6(%arg0: i32) -> (i32, i32) {
    %c0_i32 = arith.constant 0 : i32
    %c0_i32_0 = arith.constant 0 : i32
    %c0_i32_1 = arith.constant 0 : i32
    return %c0_i32, %c0_i32_0 : i32, i32
  }
  func.func @transform_7(%arg0: i32) -> (i32, i32) {
    %c0_i32 = arith.constant 0 : i32
    %c0_i32_0 = arith.constant 0 : i32
    %c0_i32_1 = arith.constant 0 : i32
    return %c0_i32, %c0_i32_0 : i32, i32
  }
  func.func @transform_8(%arg0: i32) -> (i32, i32) {
    %c0_i32 = arith.constant 0 : i32
    %c0_i32_0 = arith.constant 0 : i32
    %c0_i32_1 = arith.constant 0 : i32
    return %c0_i32, %c0_i32_0 : i32, i32
  }
  func.func @transform_9(%arg0: i32) -> (i32, i32) {
    %c0_i32 = arith.constant 0 : i32
    %c0_i32_0 = arith.constant 0 : i32
    %c0_i32_1 = arith.constant 0 : i32
    return %c0_i32, %c0_i32_0 : i32, i32
  }
  func.func @transform_10(%arg0: i32) -> (i32, i32) {
    %c0_i32 = arith.constant 0 : i32
    %c0_i32_0 = arith.constant 0 : i32
    %c0_i32_1 = arith.constant 0 : i32
    return %c0_i32, %c0_i32_0 : i32, i32
  }
  func.func @transform_11(%arg0: i32) -> (i32, i32, i32) {
    %c0_i32 = arith.constant 0 : i32
    %c0_i32_0 = arith.constant 0 : i32
    %c0_i32_1 = arith.constant 0 : i32
    return %arg0, %c0_i32, %c0_i32_0 : i32, i32, i32
  }
}

module attributes {stable_mosaic.version = 11 : i64} {
  func.func @_norm_conv3x3_kernel(%arg0: memref<16x222xbf16, #tpu.memory_space<vmem>>, %arg1: memref<1x222xf32, #tpu.memory_space<vmem>>, %arg2: memref<9x4x16xbf16, #tpu.memory_space<vmem>>, %arg3: memref<4x1xf32, #tpu.memory_space<vmem>>, %arg4: memref<16x1xf32, #tpu.memory_space<vmem>>, %arg5: memref<16x1xf32, #tpu.memory_space<vmem>>, %arg6: memref<4x222xf32, #tpu.memory_space<vmem>>, %arg7: memref<16x222xbf16, #tpu.memory_space<vmem>>) attributes {dimension_semantics = [], scalar_prefetch = 0 : i64, scratch_operands = 1 : i64, tpu.core_type = #tpu.core_type<tc>} {
    %c0 = arith.constant 0 : index
    %c0_0 = arith.constant 0 : index
    %0 = vector.load %arg1[%c0, %c0_0] : memref<1x222xf32, #tpu.memory_space<vmem>>, vector<1x222xf32>
    %c0_1 = arith.constant 0 : index
    %c11 = arith.constant 11 : index
    %1 = vector.load %arg1[%c0_1, %c11] : memref<1x222xf32, #tpu.memory_space<vmem>>, vector<1x200xf32>
    %c0_2 = arith.constant 0 : index
    %c0_3 = arith.constant 0 : index
    %2 = vector.load %arg0[%c0_2, %c0_3] : memref<16x222xbf16, #tpu.memory_space<vmem>>, vector<16x222xbf16>
    %3 = arith.extf %2 : vector<16x222xbf16> to vector<16x222xf32>
    %4 = vector.broadcast %0 : vector<1x222xf32> to vector<16x222xf32>
    %5 = arith.mulf %3, %4 : vector<16x222xf32>
    %cst = arith.constant dense<0.000000e+00> : vector<16xf32>
    %6 = vector.multi_reduction <add>, %5, %cst [1] : vector<16x222xf32> to vector<16xf32>
    %7 = vector.shape_cast %6 : vector<16xf32> to vector<16x1xf32>
    %cst_4 = arith.constant 7.812500e-03 : f32
    %8 = vector.broadcast %cst_4 : f32 to vector<16x1xf32>
    %9 = arith.mulf %7, %8 : vector<16x1xf32>
    %10 = vector.broadcast %9 : vector<16x1xf32> to vector<16x222xf32>
    %11 = arith.subf %3, %10 : vector<16x222xf32>
    %12 = vector.broadcast %0 : vector<1x222xf32> to vector<16x222xf32>
    %13 = arith.mulf %11, %12 : vector<16x222xf32>
    %14 = arith.mulf %13, %13 : vector<16x222xf32>
    %cst_5 = arith.constant dense<0.000000e+00> : vector<16xf32>
    %15 = vector.multi_reduction <add>, %14, %cst_5 [1] : vector<16x222xf32> to vector<16xf32>
    %16 = vector.shape_cast %15 : vector<16xf32> to vector<16x1xf32>
    %cst_6 = arith.constant 7.812500e-03 : f32
    %17 = vector.broadcast %cst_6 : f32 to vector<16x1xf32>
    %18 = arith.mulf %16, %17 : vector<16x1xf32>
    %19 = vector.broadcast %9 : vector<16x1xf32> to vector<16x222xf32>
    %20 = arith.subf %3, %19 : vector<16x222xf32>
    %cst_7 = arith.constant 9.99999974E-6 : f32
    %21 = vector.broadcast %cst_7 : f32 to vector<16x1xf32>
    %22 = arith.addf %18, %21 : vector<16x1xf32>
    %23 = math.rsqrt %22 : vector<16x1xf32>
    %24 = vector.broadcast %23 : vector<16x1xf32> to vector<16x222xf32>
    %25 = arith.mulf %20, %24 : vector<16x222xf32>
    %c0_8 = arith.constant 0 : index
    %c0_9 = arith.constant 0 : index
    %26 = vector.load %arg4[%c0_8, %c0_9] : memref<16x1xf32, #tpu.memory_space<vmem>>, vector<16x1xf32>
    %27 = vector.broadcast %26 : vector<16x1xf32> to vector<16x222xf32>
    %28 = arith.mulf %25, %27 : vector<16x222xf32>
    %c0_10 = arith.constant 0 : index
    %c0_11 = arith.constant 0 : index
    %29 = vector.load %arg5[%c0_10, %c0_11] : memref<16x1xf32, #tpu.memory_space<vmem>>, vector<16x1xf32>
    %30 = vector.broadcast %29 : vector<16x1xf32> to vector<16x222xf32>
    %31 = arith.addf %28, %30 : vector<16x222xf32>
    %32 = vector.broadcast %0 : vector<1x222xf32> to vector<16x222xf32>
    %33 = arith.mulf %31, %32 : vector<16x222xf32>
    %34 = arith.truncf %33 : vector<16x222xf32> to vector<16x222xbf16>
    %c0_12 = arith.constant 0 : index
    %c0_13 = arith.constant 0 : index
    %35 = vector.load %arg7[%c0_12, %c0_13] : memref<16x222xbf16, #tpu.memory_space<vmem>>, vector<16x222xbf16>
    tpu.vector_store %arg7[%c0_12, %c0_13], %34 {strides = array<i32>} : memref<16x222xbf16, #tpu.memory_space<vmem>>, vector<16x222xbf16>,
    %cst_14 = arith.constant 0.000000e+00 : f32
    %36 = vector.broadcast %cst_14 : f32 to vector<4x200xf32>
    %c0_15 = arith.constant 0 : index
    %c0_16 = arith.constant 0 : index
    %c0_17 = arith.constant 0 : index
    %37 = vector.load %arg2[%c0_15, %c0_16, %c0_17] : memref<9x4x16xbf16, #tpu.memory_space<vmem>>, vector<1x4x16xbf16>
    %38 = vector.shape_cast %37 : vector<1x4x16xbf16> to vector<4x16xbf16>
    %c0_18 = arith.constant 0 : index
    %c0_19 = arith.constant 0 : index
    %39 = vector.load %arg7[%c0_18, %c0_19] : memref<16x222xbf16, #tpu.memory_space<vmem>>, vector<16x200xbf16>
    %cst_20 = arith.constant dense<0.000000e+00> : vector<4x200xf32>
    %40 = tpu.matmul %38, %39, %cst_20 {dimension_numbers = #tpu.dot_dimension_numbers<[1], [0], [0], [1], [0, 0, 1, 1], [], []>} : vector<4x16xbf16>, vector<16x200xbf16>, vector<4x200xf32> -> vector<4x200xf32>
    %41 = arith.addf %36, %40 : vector<4x200xf32>
    %c1 = arith.constant 1 : index
    %c0_21 = arith.constant 0 : index
    %c0_22 = arith.constant 0 : index
    %42 = vector.load %arg2[%c1, %c0_21, %c0_22] : memref<9x4x16xbf16, #tpu.memory_space<vmem>>, vector<1x4x16xbf16>
    %43 = vector.shape_cast %42 : vector<1x4x16xbf16> to vector<4x16xbf16>
    %c0_23 = arith.constant 0 : index
    %c1_24 = arith.constant 1 : index
    %44 = vector.load %arg7[%c0_23, %c1_24] : memref<16x222xbf16, #tpu.memory_space<vmem>>, vector<16x200xbf16>
    %cst_25 = arith.constant dense<0.000000e+00> : vector<4x200xf32>
    %45 = tpu.matmul %43, %44, %cst_25 {dimension_numbers = #tpu.dot_dimension_numbers<[1], [0], [0], [1], [0, 0, 1, 1], [], []>} : vector<4x16xbf16>, vector<16x200xbf16>, vector<4x200xf32> -> vector<4x200xf32>
    %46 = arith.addf %41, %45 : vector<4x200xf32>
    %c2 = arith.constant 2 : index
    %c0_26 = arith.constant 0 : index
    %c0_27 = arith.constant 0 : index
    %47 = vector.load %arg2[%c2, %c0_26, %c0_27] : memref<9x4x16xbf16, #tpu.memory_space<vmem>>, vector<1x4x16xbf16>
    %48 = vector.shape_cast %47 : vector<1x4x16xbf16> to vector<4x16xbf16>
    %c0_28 = arith.constant 0 : index
    %c2_29 = arith.constant 2 : index
    %49 = vector.load %arg7[%c0_28, %c2_29] : memref<16x222xbf16, #tpu.memory_space<vmem>>, vector<16x200xbf16>
    %cst_30 = arith.constant dense<0.000000e+00> : vector<4x200xf32>
    %50 = tpu.matmul %48, %49, %cst_30 {dimension_numbers = #tpu.dot_dimension_numbers<[1], [0], [0], [1], [0, 0, 1, 1], [], []>} : vector<4x16xbf16>, vector<16x200xbf16>, vector<4x200xf32> -> vector<4x200xf32>
    %51 = arith.addf %46, %50 : vector<4x200xf32>
    %c3 = arith.constant 3 : index
    %c0_31 = arith.constant 0 : index
    %c0_32 = arith.constant 0 : index
    %52 = vector.load %arg2[%c3, %c0_31, %c0_32] : memref<9x4x16xbf16, #tpu.memory_space<vmem>>, vector<1x4x16xbf16>
    %53 = vector.shape_cast %52 : vector<1x4x16xbf16> to vector<4x16xbf16>
    %c0_33 = arith.constant 0 : index
    %c10 = arith.constant 10 : index
    %54 = vector.load %arg7[%c0_33, %c10] : memref<16x222xbf16, #tpu.memory_space<vmem>>, vector<16x200xbf16>
    %cst_34 = arith.constant dense<0.000000e+00> : vector<4x200xf32>
    %55 = tpu.matmul %53, %54, %cst_34 {dimension_numbers = #tpu.dot_dimension_numbers<[1], [0], [0], [1], [0, 0, 1, 1], [], []>} : vector<4x16xbf16>, vector<16x200xbf16>, vector<4x200xf32> -> vector<4x200xf32>
    %56 = arith.addf %51, %55 : vector<4x200xf32>
    %c4 = arith.constant 4 : index
    %c0_35 = arith.constant 0 : index
    %c0_36 = arith.constant 0 : index
    %57 = vector.load %arg2[%c4, %c0_35, %c0_36] : memref<9x4x16xbf16, #tpu.memory_space<vmem>>, vector<1x4x16xbf16>
    %58 = vector.shape_cast %57 : vector<1x4x16xbf16> to vector<4x16xbf16>
    %c0_37 = arith.constant 0 : index
    %c11_38 = arith.constant 11 : index
    %59 = vector.load %arg7[%c0_37, %c11_38] : memref<16x222xbf16, #tpu.memory_space<vmem>>, vector<16x200xbf16>
    %cst_39 = arith.constant dense<0.000000e+00> : vector<4x200xf32>
    %60 = tpu.matmul %58, %59, %cst_39 {dimension_numbers = #tpu.dot_dimension_numbers<[1], [0], [0], [1], [0, 0, 1, 1], [], []>} : vector<4x16xbf16>, vector<16x200xbf16>, vector<4x200xf32> -> vector<4x200xf32>
    %61 = arith.addf %56, %60 : vector<4x200xf32>
    %c5 = arith.constant 5 : index
    %c0_40 = arith.constant 0 : index
    %c0_41 = arith.constant 0 : index
    %62 = vector.load %arg2[%c5, %c0_40, %c0_41] : memref<9x4x16xbf16, #tpu.memory_space<vmem>>, vector<1x4x16xbf16>
    %63 = vector.shape_cast %62 : vector<1x4x16xbf16> to vector<4x16xbf16>
    %c0_42 = arith.constant 0 : index
    %c12 = arith.constant 12 : index
    %64 = vector.load %arg7[%c0_42, %c12] : memref<16x222xbf16, #tpu.memory_space<vmem>>, vector<16x200xbf16>
    %cst_43 = arith.constant dense<0.000000e+00> : vector<4x200xf32>
    %65 = tpu.matmul %63, %64, %cst_43 {dimension_numbers = #tpu.dot_dimension_numbers<[1], [0], [0], [1], [0, 0, 1, 1], [], []>} : vector<4x16xbf16>, vector<16x200xbf16>, vector<4x200xf32> -> vector<4x200xf32>
    %66 = arith.addf %61, %65 : vector<4x200xf32>
    %c6 = arith.constant 6 : index
    %c0_44 = arith.constant 0 : index
    %c0_45 = arith.constant 0 : index
    %67 = vector.load %arg2[%c6, %c0_44, %c0_45] : memref<9x4x16xbf16, #tpu.memory_space<vmem>>, vector<1x4x16xbf16>
    %68 = vector.shape_cast %67 : vector<1x4x16xbf16> to vector<4x16xbf16>
    %c0_46 = arith.constant 0 : index
    %c20 = arith.constant 20 : index
    %69 = vector.load %arg7[%c0_46, %c20] : memref<16x222xbf16, #tpu.memory_space<vmem>>, vector<16x200xbf16>
    %cst_47 = arith.constant dense<0.000000e+00> : vector<4x200xf32>
    %70 = tpu.matmul %68, %69, %cst_47 {dimension_numbers = #tpu.dot_dimension_numbers<[1], [0], [0], [1], [0, 0, 1, 1], [], []>} : vector<4x16xbf16>, vector<16x200xbf16>, vector<4x200xf32> -> vector<4x200xf32>
    %71 = arith.addf %66, %70 : vector<4x200xf32>
    %c7 = arith.constant 7 : index
    %c0_48 = arith.constant 0 : index
    %c0_49 = arith.constant 0 : index
    %72 = vector.load %arg2[%c7, %c0_48, %c0_49] : memref<9x4x16xbf16, #tpu.memory_space<vmem>>, vector<1x4x16xbf16>
    %73 = vector.shape_cast %72 : vector<1x4x16xbf16> to vector<4x16xbf16>
    %c0_50 = arith.constant 0 : index
    %c21 = arith.constant 21 : index
    %74 = vector.load %arg7[%c0_50, %c21] : memref<16x222xbf16, #tpu.memory_space<vmem>>, vector<16x200xbf16>
    %cst_51 = arith.constant dense<0.000000e+00> : vector<4x200xf32>
    %75 = tpu.matmul %73, %74, %cst_51 {dimension_numbers = #tpu.dot_dimension_numbers<[1], [0], [0], [1], [0, 0, 1, 1], [], []>} : vector<4x16xbf16>, vector<16x200xbf16>, vector<4x200xf32> -> vector<4x200xf32>
    %76 = arith.addf %71, %75 : vector<4x200xf32>
    %c8 = arith.constant 8 : index
    %c0_52 = arith.constant 0 : index
    %c0_53 = arith.constant 0 : index
    %77 = vector.load %arg2[%c8, %c0_52, %c0_53] : memref<9x4x16xbf16, #tpu.memory_space<vmem>>, vector<1x4x16xbf16>
    %78 = vector.shape_cast %77 : vector<1x4x16xbf16> to vector<4x16xbf16>
    %c0_54 = arith.constant 0 : index
    %c22 = arith.constant 22 : index
    %79 = vector.load %arg7[%c0_54, %c22] : memref<16x222xbf16, #tpu.memory_space<vmem>>, vector<16x200xbf16>
    %cst_55 = arith.constant dense<0.000000e+00> : vector<4x200xf32>
    %80 = tpu.matmul %78, %79, %cst_55 {dimension_numbers = #tpu.dot_dimension_numbers<[1], [0], [0], [1], [0, 0, 1, 1], [], []>} : vector<4x16xbf16>, vector<16x200xbf16>, vector<4x200xf32> -> vector<4x200xf32>
    %81 = arith.addf %76, %80 : vector<4x200xf32>
    %c0_56 = arith.constant 0 : index
    %c0_57 = arith.constant 0 : index
    %82 = vector.load %arg3[%c0_56, %c0_57] : memref<4x1xf32, #tpu.memory_space<vmem>>, vector<4x1xf32>
    %83 = vector.broadcast %82 : vector<4x1xf32> to vector<4x200xf32>
    %84 = arith.addf %81, %83 : vector<4x200xf32>
    %85 = vector.broadcast %1 : vector<1x200xf32> to vector<4x200xf32>
    %86 = arith.mulf %84, %85 : vector<4x200xf32>
    %cst_58 = arith.constant 0.000000e+00 : f32
    %87 = vector.broadcast %cst_58 : f32 to vector<4x222xf32>
    %c0_59 = arith.constant 0 : index
    %c0_60 = arith.constant 0 : index
    %88 = vector.load %arg6[%c0_59, %c0_60] : memref<4x222xf32, #tpu.memory_space<vmem>>, vector<4x222xf32>
    tpu.vector_store %arg6[%c0_59, %c0_60], %87 {strides = array<i32>} : memref<4x222xf32, #tpu.memory_space<vmem>>, vector<4x222xf32>,
    %c0_61 = arith.constant 0 : index
    %c11_62 = arith.constant 11 : index
    %89 = vector.load %arg6[%c0_61, %c11_62] : memref<4x222xf32, #tpu.memory_space<vmem>>, vector<4x200xf32>
    tpu.vector_store %arg6[%c0_61, %c11_62], %86 {strides = array<i32>} : memref<4x222xf32, #tpu.memory_space<vmem>>, vector<4x200xf32>,
    return
  }
}

</mosaic_0001>

<llo_original>
// kernel: encoder_forward.9
$region0: #{encoder_forward.9}
  #allocation0 [shape = 'u32[]', space=smem, size = 0x4, offset = 0x4, fixed_abs, tag = 'smem constant byte address 0x4 - core index']
  #allocation1 [shape = 'u32[144,128]{1,0:T(1,128)}', space=vmem, size = 0x12000, scoped, tag = 'internal scratch']
  %s0 = inlined_call_operand.vmem [shape: bf16[3,686], index: 0, kind: input, shape index: {}]
  %s1 = inlined_call_operand.vmem [shape: f32[1,686], index: 1, kind: input, shape index: {}]
  %s2 = inlined_call_operand.vmem [shape: bf16[9,8,3], index: 2, kind: input, shape index: {}]
  %s3 = inlined_call_operand.vmem [shape: f32[8,1], index: 3, kind: input, shape index: {}]
  %s4 = inlined_call_operand.vmem [shape: bf16[8,686], index: 4, kind: output, shape index: {}]
  %s5 = sld [smem:[#allocation0]]
  $region26: #{encoder_forward.9} parent=0
    _
  %s7 = ssub.s32 1, %s5
  %s8 = scalar_select 0, %s7, %s5
  // Predicated region
  $region2: #{encoder_forward.9} parent=0 // pred_check
    _
  $region3: #{encoder_forward.9} parent=0 // pred_check_branch
    %10 = sbr.rel (0) target = $region5
  $region4: #{encoder_forward.9} parent=0 // pred_region
    _
  $region5: #{encoder_forward.9} parent=0 // pred_fallthru
    _
  // Predicated region
  $region6: #{encoder_forward.9} parent=0 // pred_check
    _
  $region7: #{encoder_forward.9} parent=0 // pred_check_branch
    %12 = sbr.rel (0) target = $region9
  $region8: #{encoder_forward.9} parent=0 // pred_region
    _
  $region9: #{encoder_forward.9} parent=0 // pred_fallthru
    _
  // Predicated region
  $region10: #{encoder_forward.9} parent=0 // pred_check
    _
  $region11: #{encoder_forward.9} parent=0 // pred_check_branch
    %14 = sbr.rel (0) target = $region13
  $region12: #{encoder_forward.9} parent=0 // pred_region
    _
  $region13: #{encoder_forward.9} parent=0 // pred_fallthru
    _
  // Predicated region
  $region14: #{encoder_forward.9} parent=0 // pred_check
    _
  $region15: #{encoder_forward.9} parent=0 // pred_check_branch
    %16 = sbr.rel (0) target = $region17
  $region16: #{encoder_forward.9} parent=0 // pred_region
    _
  $region17: #{encoder_forward.9} parent=0 // pred_fallthru
    _
  %v18 = vld [vmem:[%s1] sm:$0x3f]
  %v19 = vld [vmem:[%s2] sm:$0xf]
  %v20 = vld [vmem:[%s0] sm:$0xff]
  %v21 = vld [vmem:[%s0 + $0x8] sm:$0xf]
  %s22 = scalar_lea.vmem %s2, 4
  %v23 = vld [vmem:[%s22] sm:$0xf]
  %v26 = vcombine.high %v20, %v20
  %v28 = vunpack.c.l.s4 1983009808
  %v29 = vunpack.c.0.s8 %v28
  %v30 = vlaneseq
  %v31 = vshrl.u32 %v30, 7
  %v32 = vsub.s32 %v29, %v31
  %v33 = vrot.slane %v20, %v32
  %v35 = vunpack.c.l.s4 1983009808
  %v36 = vunpack.c.0.s8 %v35
  %v37 = vlaneseq
  %v38 = vshrl.u32 %v37, 7
  %v39 = vsub.s32 %v36, %v38
  %v40 = vrot.slane %v26, %v39
  %v41 = vcombine.high %v33, %v33
  %v42 = vcombine.high %v40, %v40
  %v44 = vunpack.c.l.s4 1983009808
  %v45 = vunpack.c.0.s8 %v44
  %v46 = vlaneseq
  %v47 = vshrl.u32 %v46, 7
  %v48 = vsub.s32 %v45, %v47
  %v49 = vrot.slane %v21, %v48
  %v50 = vcombine.high %v49, %v49
  %51 = vrot.lane.b32.xlu0 %v33, 127
  %v52 = vpop.permute.xlu0 %51
  %53 = vrot.lane.b32.xlu0 %v41, 127
  %v54 = vpop.permute.xlu0 %53
  %55 = vrot.lane.b32.xlu0 %v40, 127
  %v56 = vpop.permute.xlu0 %55
  %57 = vrot.lane.b32.xlu0 %v42, 127
  %v58 = vpop.permute.xlu0 %57
  %59 = vrot.lane.b32.xlu0 %v49, 127
  %v60 = vpop.permute.xlu0 %59
  %61 = vrot.lane.b32.xlu0 %v50, 127
  %v62 = vpop.permute.xlu0 %61
  %vm63 = vcmask 1039360
  %v64 = vsel %vm63, %v52, %v54
  %v65 = vsel %vm63, %v54, %v56
  %v66 = vsel %vm63, %v56, %v58
  %v67 = vsel %vm63, %v58, %v60
  %v68 = vsel %vm63, %v60, %v62
  %vm69 = vcmask 23552
  %v71 = vsel %vm69, %v23, 0
  %vm73 = vcmask 1040384
  %vm74 = vcmask 1041408
  %v75 = vsel %vm73, 4294967295, 65535
  %v76 = vsel %vm74, %v75, 0
  %v78 = vand.u32 %v64, %v76
  %v81 = vand.u32 %v65, %v76
  %v84 = vand.u32 %v66, %v76
  %v87 = vand.u32 %v67, %v76
  %v90 = vand.u32 %v68, %v76
  %v93 = vand.u32 %v62, %v76
  %95 = vmatprep.subr.bf16.mxu0 %v81
  %96 = vmatpush1.bf16.msra.mxu0 %v78
  %97 = vmatprep.subr.bf16.mxu0 0
  %98 = vmatpush1.bf16.msra.mxu0 0
  %99 = vmatprep.subr.bf16.mxu0 0
  %100 = vmatpush1.bf16.msra.mxu0 0
  %101 = vmatprep.subr.bf16.mxu0 0
  %102 = vmatpush1.bf16.msra.mxu0 0
  %103 = vmatprep.subr.bf16.mxu0 0
  %104 = vmatpush1.bf16.msra.mxu0 0
  %105 = vmatprep.subr.bf16.mxu0 0
  %106 = vmatpush1.bf16.msra.mxu0 0
  %107 = vmatprep.subr.bf16.mxu0 0
  %108 = vmatpush1.bf16.msra.mxu0 0
  %109 = vmatprep.subr.bf16.mxu0 0
  %110 = vmatpush1.bf16.msra.mxu0 0
  %111 = vmatprep.subr.bf16.mxu0 0
  %112 = vmatpush1.bf16.msra.mxu0 0
  %113 = vmatprep.subr.bf16.mxu0 0
  %114 = vmatpush1.bf16.msra.mxu0 0
  %115 = vmatprep.subr.bf16.mxu0 0
  %116 = vmatpush1.bf16.msra.mxu0 0
  %117 = vmatprep.subr.bf16.mxu0 0
  %118 = vmatpush1.bf16.msra.mxu0 0
  %119 = vmatprep.subr.bf16.mxu0 0
  %120 = vmatpush1.bf16.msra.mxu0 0
  %121 = vmatprep.subr.bf16.mxu0 0
  %122 = vmatpush1.bf16.msra.mxu0 0
  %123 = vmatprep.subr.bf16.mxu0 0
  %124 = vmatpush1.bf16.msra.mxu0 0
  %125 = vmatprep.subr.bf16.mxu0 0
  %126 = vmatpush1.bf16.msra.mxu0 0
  %127 = vmatprep.mubr.bf16.mxu0 0
  %128 = vmatmul.mubr.bf16.gmra.mrb[0].mxu0 %v71
  %v129 = vpop.f32.mrb[0].mxu0
  %v130 = vadd.f32 0.0, %v129
  %v131 = vpop.f32.mrb[0].mxu0
  %v132 = vadd.f32 0.0, %v131
  %v133 = vpop.f32.mrb[0].mxu0
  %v134 = vpop.f32.mrb[0].mxu0
  %135 = vdwg.mxu0
  %136 = vmatprep.subr.bf16.mxu0 %v87
  %137 = vmatpush1.bf16.msra.mxu0 %v84
  %138 = vmatprep.subr.bf16.mxu0 0
  %139 = vmatpush1.bf16.msra.mxu0 0
  %140 = vmatprep.subr.bf16.mxu0 0
  %141 = vmatpush1.bf16.msra.mxu0 0
  %142 = vmatprep.subr.bf16.mxu0 0
  %143 = vmatpush1.bf16.msra.mxu0 0
  %144 = vmatprep.subr.bf16.mxu0 0
  %145 = vmatpush1.bf16.msra.mxu0 0
  %146 = vmatprep.subr.bf16.mxu0 0
  %147 = vmatpush1.bf16.msra.mxu0 0
  %148 = vmatprep.subr.bf16.mxu0 0
  %149 = vmatpush1.bf16.msra.mxu0 0
  %150 = vmatprep.subr.bf16.mxu0 0
  %151 = vmatpush1.bf16.msra.mxu0 0
  %152 = vmatprep.subr.bf16.mxu0 0
  %153 = vmatpush1.bf16.msra.mxu0 0
  %154 = vmatprep.subr.bf16.mxu0 0
  %155 = vmatpush1.bf16.msra.mxu0 0
  %156 = vmatprep.subr.bf16.mxu0 0
  %157 = vmatpush1.bf16.msra.mxu0 0
  %158 = vmatprep.subr.bf16.mxu0 0
  %159 = vmatpush1.bf16.msra.mxu0 0
  %160 = vmatprep.subr.bf16.mxu0 0
  %161 = vmatpush1.bf16.msra.mxu0 0
  %162 = vmatprep.subr.bf16.mxu0 0
  %163 = vmatpush1.bf16.msra.mxu0 0
  %164 = vmatprep.subr.bf16.mxu0 0
  %165 = vmatpush1.bf16.msra.mxu0 0
  %166 = vmatprep.subr.bf16.mxu0 0
  %167 = vmatpush1.bf16.msra.mxu0 0
  %168 = vmatprep.mubr.bf16.mxu0 0
  %169 = vmatmul.mubr.bf16.gmra.mrb[0].mxu0 %v71
  %v170 = vpop.f32.mrb[0].mxu0
  %v171 = vadd.f32 0.0, %v170
  %v172 = vpop.f32.mrb[0].mxu0
  %v173 = vadd.f32 0.0, %v172
  %v174 = vpop.f32.mrb[0].mxu0
  %v175 = vpop.f32.mrb[0].mxu0
  %176 = vdwg.mxu0
  %177 = vmatprep.subr.bf16.mxu0 %v93
  %178 = vmatpush1.bf16.msra.mxu0 %v90
  %179 = vmatprep.subr.bf16.mxu0 0
  %180 = vmatpush1.bf16.msra.mxu0 0
  %181 = vmatprep.subr.bf16.mxu0 0
  %182 = vmatpush1.bf16.msra.mxu0 0
  %183 = vmatprep.subr.bf16.mxu0 0
  %184 = vmatpush1.bf16.msra.mxu0 0
  %185 = vmatprep.subr.bf16.mxu0 0
  %186 = vmatpush1.bf16.msra.mxu0 0
  %187 = vmatprep.subr.bf16.mxu0 0
  %188 = vmatpush1.bf16.msra.mxu0 0
  %189 = vmatprep.subr.bf16.mxu0 0
  %190 = vmatpush1.bf16.msra.mxu0 0
  %191 = vmatprep.subr.bf16.mxu0 0
  %192 = vmatpush1.bf16.msra.mxu0 0
  %193 = vmatprep.subr.bf16.mxu0 0
  %194 = vmatpush1.bf16.msra.mxu0 0
  %195 = vmatprep.subr.bf16.mxu0 0
  %196 = vmatpush1.bf16.msra.mxu0 0
  %197 = vmatprep.subr.bf16.mxu0 0
  %198 = vmatpush1.bf16.msra.mxu0 0
  %199 = vmatprep.subr.bf16.mxu0 0
  %200 = vmatpush1.bf16.msra.mxu0 0
  %201 = vmatprep.subr.bf16.mxu0 0
  %202 = vmatpush1.bf16.msra.mxu0 0
  %203 = vmatprep.subr.bf16.mxu0 0
  %204 = vmatpush1.bf16.msra.mxu0 0
  %205 = vmatprep.subr.bf16.mxu0 0
  %206 = vmatpush1.bf16.msra.mxu0 0
  %207 = vmatprep.subr.bf16.mxu0 0
  %208 = vmatpush1.bf16.msra.mxu0 0
  %209 = vmatprep.mubr.bf16.mxu0 0
  %210 = vmatmul.mubr.bf16.gmra.mrb[0].mxu0 %v71
  %v211 = vpop.f32.mrb[0].mxu0
  %v212 = vadd.f32 0.0, %v211
  %v213 = vpop.f32.mrb[0].mxu0
  %v214 = vadd.f32 0.0, %v213
  %v215 = vpop.f32.mrb[0].mxu0
  %v216 = vpop.f32.mrb[0].mxu0
  %217 = vdwg.mxu0
  %v219 = vsel %vm69, %v19, 0
  %v222 = vand.u32 %v33, %v76
  %v225 = vand.u32 %v41, %v76
  %v228 = vand.u32 %v40, %v76
  %v231 = vand.u32 %v42, %v76
  %v234 = vand.u32 %v49, %v76
  %v237 = vand.u32 %v50, %v76
  %239 = vmatprep.subr.bf16.mxu0 %v225
  %240 = vmatpush1.bf16.msra.mxu0 %v222
  %241 = vmatprep.subr.bf16.mxu0 0
  %242 = vmatpush1.bf16.msra.mxu0 0
  %243 = vmatprep.subr.bf16.mxu0 0
  %244 = vmatpush1.bf16.msra.mxu0 0
  %245 = vmatprep.subr.bf16.mxu0 0
  %246 = vmatpush1.bf16.msra.mxu0 0
  %247 = vmatprep.subr.bf16.mxu0 0
  %248 = vmatpush1.bf16.msra.mxu0 0
  %249 = vmatprep.subr.bf16.mxu0 0
  %250 = vmatpush1.bf16.msra.mxu0 0
  %251 = vmatprep.subr.bf16.mxu0 0
  %252 = vmatpush1.bf16.msra.mxu0 0
  %253 = vmatprep.subr.bf16.mxu0 0
  %254 = vmatpush1.bf16.msra.mxu0 0
  %255 = vmatprep.subr.bf16.mxu0 0
  %256 = vmatpush1.bf16.msra.mxu0 0
  %257 = vmatprep.subr.bf16.mxu0 0
  %258 = vmatpush1.bf16.msra.mxu0 0
  %259 = vmatprep.subr.bf16.mxu0 0
  %260 = vmatpush1.bf16.msra.mxu0 0
  %261 = vmatprep.subr.bf16.mxu0 0
  %262 = vmatpush1.bf16.msra.mxu0 0
  %263 = vmatprep.subr.bf16.mxu0 0
  %264 = vmatpush1.bf16.msra.mxu0 0
  %265 = vmatprep.subr.bf16.mxu0 0
  %266 = vmatpush1.bf16.msra.mxu0 0
  %267 = vmatprep.subr.bf16.mxu0 0
  %268 = vmatpush1.bf16.msra.mxu0 0
  %269 = vmatprep.subr.bf16.mxu0 0
  %270 = vmatpush1.bf16.msra.mxu0 0
  %271 = vmatprep.mubr.bf16.mxu0 0
  %272 = vmatmul.mubr.bf16.gmra.mrb[0].mxu0 %v219
  %v273 = vpop.f32.mrb[0].mxu0
  %v274 = vadd.f32 %v130, %v273
  %v275 = vpop.f32.mrb[0].mxu0
  %v276 = vadd.f32 %v132, %v275
  %v277 = vpop.f32.mrb[0].mxu0
  %v278 = vpop.f32.mrb[0].mxu0
  %279 = vdwg.mxu0
  %280 = vmatprep.subr.bf16.mxu0 %v231
  %281 = vmatpush1.bf16.msra.mxu0 %v228
  %282 = vmatprep.subr.bf16.mxu0 0
  %283 = vmatpush1.bf16.msra.mxu0 0
  %284 = vmatprep.subr.bf16.mxu0 0
  %285 = vmatpush1.bf16.msra.mxu0 0
  %286 = vmatprep.subr.bf16.mxu0 0
  %287 = vmatpush1.bf16.msra.mxu0 0
  %288 = vmatprep.subr.bf16.mxu0 0
  %289 = vmatpush1.bf16.msra.mxu0 0
  %290 = vmatprep.subr.bf16.mxu0 0
  %291 = vmatpush1.bf16.msra.mxu0 0
  %292 = vmatprep.subr.bf16.mxu0 0
  %293 = vmatpush1.bf16.msra.mxu0 0
  %294 = vmatprep.subr.bf16.mxu0 0
  %295 = vmatpush1.bf16.msra.mxu0 0
  %296 = vmatprep.subr.bf16.mxu0 0
  %297 = vmatpush1.bf16.msra.mxu0 0
  %298 = vmatprep.subr.bf16.mxu0 0
  %299 = vmatpush1.bf16.msra.mxu0 0
  %300 = vmatprep.subr.bf16.mxu0 0
  %301 = vmatpush1.bf16.msra.mxu0 0
  %302 = vmatprep.subr.bf16.mxu0 0
  %303 = vmatpush1.bf16.msra.mxu0 0
  %304 = vmatprep.subr.bf16.mxu0 0
  %305 = vmatpush1.bf16.msra.mxu0 0
  %306 = vmatprep.subr.bf16.mxu0 0
  %307 = vmatpush1.bf16.msra.mxu0 0
  %308 = vmatprep.subr.bf16.mxu0 0
  %309 = vmatpush1.bf16.msra.mxu0 0
  %310 = vmatprep.subr.bf16.mxu0 0
  %311 = vmatpush1.bf16.msra.mxu0 0
  %312 = vmatprep.mubr.bf16.mxu0 0
  %313 = vmatmul.mubr.bf16.gmra.mrb[0].mxu0 %v219
  %v314 = vpop.f32.mrb[0].mxu0
  %v315 = vadd.f32 %v171, %v314
  %v316 = vpop.f32.mrb[0].mxu0
  %v317 = vadd.f32 %v173, %v316
  %v318 = vpop.f32.mrb[0].mxu0
  %v319 = vpop.f32.mrb[0].mxu0
  %320 = vdwg.mxu0
  %321 = vmatprep.subr.bf16.mxu0 %v237
  %322 = vmatpush1.bf16.msra.mxu0 %v234
  %323 = vmatprep.subr.bf16.mxu0 0
  %324 = vmatpush1.bf16.msra.mxu0 0
  %325 = vmatprep.subr.bf16.mxu0 0
  %326 = vmatpush1.bf16.msra.mxu0 0
  %327 = vmatprep.subr.bf16.mxu0 0
  %328 = vmatpush1.bf16.msra.mxu0 0
  %329 = vmatprep.subr.bf16.mxu0 0
  %330 = vmatpush1.bf16.msra.mxu0 0
  %331 = vmatprep.subr.bf16.mxu0 0
  %332 = vmatpush1.bf16.msra.mxu0 0
  %333 = vmatprep.subr.bf16.mxu0 0
  %334 = vmatpush1.bf16.msra.mxu0 0
  %335 = vmatprep.subr.bf16.mxu0 0
  %336 = vmatpush1.bf16.msra.mxu0 0
  %337 = vmatprep.subr.bf16.mxu0 0
  %338 = vmatpush1.bf16.msra.mxu0 0
  %339 = vmatprep.subr.bf16.mxu0 0
  %340 = vmatpush1.bf16.msra.mxu0 0
  %341 = vmatprep.subr.bf16.mxu0 0
  %342 = vmatpush1.bf16.msra.mxu0 0
  %343 = vmatprep.subr.bf16.mxu0 0
  %344 = vmatpush1.bf16.msra.mxu0 0
  %345 = vmatprep.subr.bf16.mxu0 0
  %346 = vmatpush1.bf16.msra.mxu0 0
  %347 = vmatprep.subr.bf16.mxu0 0
  %348 = vmatpush1.bf16.msra.mxu0 0
  %349 = vmatprep.subr.bf16.mxu0 0
  %350 = vmatpush1.bf16.msra.mxu0 0
  %351 = vmatprep.subr.bf16.mxu0 0
  %352 = vmatpush1.bf16.msra.mxu0 0
  %353 = vmatprep.mubr.bf16.mxu0 0
  %354 = vmatmul.mubr.bf16.gmra.mrb[0].mxu0 %v219
  %v355 = vpop.f32.mrb[0].mxu0
  %v356 = vadd.f32 %v212, %v355
  %v357 = vpop.f32.mrb[0].mxu0
  %v358 = vadd.f32 %v214, %v357
  %v359 = vpop.f32.mrb[0].mxu0
  %v360 = vpop.f32.mrb[0].mxu0
  %361 = vdwg.mxu0
  %s362 = scalar_lea.vmem %s2, 8
  %v363 = vld [vmem:[%s362] sm:$0xf]
  %v364 = vld [vmem:[%s0] sm:$0xff]
  %v365 = vld [vmem:[%s0 + $0x8] sm:$0xf]
  %v368 = vcombine.high %v364, %v364
  %v370 = vunpack.c.l.s4 1983009808
  %v371 = vunpack.c.0.s8 %v370
  %v372 = vlaneseq
  %v373 = vshrl.u32 %v372, 7
  %v374 = vsub.s32 %v371, %v373
  %v375 = vrot.slane %v364, %v374
  %v377 = vunpack.c.l.s4 1983009808
  %v378 = vunpack.c.0.s8 %v377
  %v379 = vlaneseq
  %v380 = vshrl.u32 %v379, 7
  %v381 = vsub.s32 %v378, %v380
  %v382 = vrot.slane %v368, %v381
  %v383 = vcombine.high %v375, %v375
  %v384 = vcombine.high %v382, %v382
  %v386 = vunpack.c.l.s4 1983009808
  %v387 = vunpack.c.0.s8 %v386
  %v388 = vlaneseq
  %v389 = vshrl.u32 %v388, 7
  %v390 = vsub.s32 %v387, %v389
  %v391 = vrot.slane %v365, %v390
  %v392 = vcombine.high %v391, %v391
  %393 = vrot.lane.b32.xlu0 %v375, 126
  %v394 = vpop.permute.xlu0 %393
  %395 = vrot.lane.b32.xlu0 %v383, 126
  %v396 = vpop.permute.xlu0 %395
  %397 = vrot.lane.b32.xlu0 %v382, 126
  %v398 = vpop.permute.xlu0 %397
  %399 = vrot.lane.b32.xlu0 %v384, 126
  %v400 = vpop.permute.xlu0 %399
  %401 = vrot.lane.b32.xlu0 %v391, 126
  %v402 = vpop.permute.xlu0 %401
  %403 = vrot.lane.b32.xlu0 %v392, 126
  %v404 = vpop.permute.xlu0 %403
  %vm405 = vcmask 1031168
  %v406 = vsel %vm405, %v394, %v396
  %v407 = vsel %vm405, %v396, %v398
  %v408 = vsel %vm405, %v398, %v400
  %v409 = vsel %vm405, %v400, %v402
  %v410 = vsel %vm405, %v402, %v404
  %v412 = vsel %vm69, %v363, 0
  %v415 = vand.u32 %v406, %v76
  %v418 = vand.u32 %v407, %v76
  %v421 = vand.u32 %v408, %v76
  %v424 = vand.u32 %v409, %v76
  %v427 = vand.u32 %v410, %v76
  %v430 = vand.u32 %v404, %v76
  %432 = vmatprep.subr.bf16.mxu0 %v418
  %433 = vmatpush1.bf16.msra.mxu0 %v415
  %434 = vmatprep.subr.bf16.mxu0 0
  %435 = vmatpush1.bf16.msra.mxu0 0
  %436 = vmatprep.subr.bf16.mxu0 0
  %437 = vmatpush1.bf16.msra.mxu0 0
  %438 = vmatprep.subr.bf16.mxu0 0
  %439 = vmatpush1.bf16.msra.mxu0 0
  %440 = vmatprep.subr.bf16.mxu0 0
  %441 = vmatpush1.bf16.msra.mxu0 0
  %442 = vmatprep.subr.bf16.mxu0 0
  %443 = vmatpush1.bf16.msra.mxu0 0
  %444 = vmatprep.subr.bf16.mxu0 0
  %445 = vmatpush1.bf16.msra.mxu0 0
  %446 = vmatprep.subr.bf16.mxu0 0
  %447 = vmatpush1.bf16.msra.mxu0 0
  %448 = vmatprep.subr.bf16.mxu0 0
  %449 = vmatpush1.bf16.msra.mxu0 0
  %450 = vmatprep.subr.bf16.mxu0 0
  %451 = vmatpush1.bf16.msra.mxu0 0
  %452 = vmatprep.subr.bf16.mxu0 0
  %453 = vmatpush1.bf16.msra.mxu0 0
  %454 = vmatprep.subr.bf16.mxu0 0
  %455 = vmatpush1.bf16.msra.mxu0 0
  %456 = vmatprep.subr.bf16.mxu0 0
  %457 = vmatpush1.bf16.msra.mxu0 0
  %458 = vmatprep.subr.bf16.mxu0 0
  %459 = vmatpush1.bf16.msra.mxu0 0
  %460 = vmatprep.subr.bf16.mxu0 0
  %461 = vmatpush1.bf16.msra.mxu0 0
  %462 = vmatprep.subr.bf16.mxu0 0
  %463 = vmatpush1.bf16.msra.mxu0 0
  %464 = vmatprep.mubr.bf16.mxu0 0
  %465 = vmatmul.mubr.bf16.gmra.mrb[0].mxu0 %v412
  %v466 = vpop.f32.mrb[0].mxu0
  %v467 = vadd.f32 0.0, %v466
  %v468 = vpop.f32.mrb[0].mxu0
  %v469 = vadd.f32 0.0, %v468
  %v470 = vpop.f32.mrb[0].mxu0
  %v471 = vpop.f32.mrb[0].mxu0
  %472 = vdwg.mxu0
  %473 = vmatprep.subr.bf16.mxu0 %v424
  %474 = vmatpush1.bf16.msra.mxu0 %v421
  %475 = vmatprep.subr.bf16.mxu0 0
  %476 = vmatpush1.bf16.msra.mxu0 0
  %477 = vmatprep.subr.bf16.mxu0 0
  %478 = vmatpush1.bf16.msra.mxu0 0
  %479 = vmatprep.subr.bf16.mxu0 0
  %480 = vmatpush1.bf16.msra.mxu0 0
  %481 = vmatprep.subr.bf16.mxu0 0
  %482 = vmatpush1.bf16.msra.mxu0 0
  %483 = vmatprep.subr.bf16.mxu0 0
  %484 = vmatpush1.bf16.msra.mxu0 0
  %485 = vmatprep.subr.bf16.mxu0 0
  %486 = vmatpush1.bf16.msra.mxu0 0
  %487 = vmatprep.subr.bf16.mxu0 0
  %488 = vmatpush1.bf16.msra.mxu0 0
  %489 = vmatprep.subr.bf16.mxu0 0
  %490 = vmatpush1.bf16.msra.mxu0 0
  %491 = vmatprep.subr.bf16.mxu0 0
  %492 = vmatpush1.bf16.msra.mxu0 0
  %493 = vmatprep.subr.bf16.mxu0 0
  %494 = vmatpush1.bf16.msra.mxu0 0
  %495 = vmatprep.subr.bf16.mxu0 0
  %496 = vmatpush1.bf16.msra.mxu0 0
  %497 = vmatprep.subr.bf16.mxu0 0
  %498 = vmatpush1.bf16.msra.mxu0 0
  %499 = vmatprep.subr.bf16.mxu0 0
  %500 = vmatpush1.bf16.msra.mxu0 0
  %501 = vmatprep.subr.bf16.mxu0 0
  %502 = vmatpush1.bf16.msra.mxu0 0
  %503 = vmatprep.subr.bf16.mxu0 0
  %504 = vmatpush1.bf16.msra.mxu0 0
  %505 = vmatprep.mubr.bf16.mxu0 0
  %506 = vmatmul.mubr.bf16.gmra.mrb[0].mxu0 %v412
  %v507 = vpop.f32.mrb[0].mxu0
  %v508 = vadd.f32 0.0, %v507
  %v509 = vpop.f32.mrb[0].mxu0
  %v510 = vadd.f32 0.0, %v509
  %v511 = vpop.f32.mrb[0].mxu0
  %v512 = vpop.f32.mrb[0].mxu0
  %513 = vdwg.mxu0
  %514 = vmatprep.subr.bf16.mxu0 %v430
  %515 = vmatpush1.bf16.msra.mxu0 %v427
  %516 = vmatprep.subr.bf16.mxu0 0
  %517 = vmatpush1.bf16.msra.mxu0 0
  %518 = vmatprep.subr.bf16.mxu0 0
  %519 = vmatpush1.bf16.msra.mxu0 0
  %520 = vmatprep.subr.bf16.mxu0 0
  %521 = vmatpush1.bf16.msra.mxu0 0
  %522 = vmatprep.subr.bf16.mxu0 0
  %523 = vmatpush1.bf16.msra.mxu0 0
  %524 = vmatprep.subr.bf16.mxu0 0
  %525 = vmatpush1.bf16.msra.mxu0 0
  %526 = vmatprep.subr.bf16.mxu0 0
  %527 = vmatpush1.bf16.msra.mxu0 0
  %528 = vmatprep.subr.bf16.mxu0 0
  %529 = vmatpush1.bf16.msra.mxu0 0
  %530 = vmatprep.subr.bf16.mxu0 0
  %531 = vmatpush1.bf16.msra.mxu0 0
  %532 = vmatprep.subr.bf16.mxu0 0
  %533 = vmatpush1.bf16.msra.mxu0 0
  %534 = vmatprep.subr.bf16.mxu0 0
  %535 = vmatpush1.bf16.msra.mxu0 0
  %536 = vmatprep.subr.bf16.mxu0 0
  %537 = vmatpush1.bf16.msra.mxu0 0
  %538 = vmatprep.subr.bf16.mxu0 0
  %539 = vmatpush1.bf16.msra.mxu0 0
  %540 = vmatprep.subr.bf16.mxu0 0
  %541 = vmatpush1.bf16.msra.mxu0 0
  %542 = vmatprep.subr.bf16.mxu0 0
  %543 = vmatpush1.bf16.msra.mxu0 0
  %544 = vmatprep.subr.bf16.mxu0 0
  %545 = vmatpush1.bf16.msra.mxu0 0
  %546 = vmatprep.mubr.bf16.mxu0 0
  %547 = vmatmul.mubr.bf16.gmra.mrb[0].mxu0 %v412
  %v548 = vpop.f32.mrb[0].mxu0
  %v549 = vadd.f32 0.0, %v548
  %v550 = vpop.f32.mrb[0].mxu0
  %v551 = vadd.f32 0.0, %v550
  %v552 = vpop.f32.mrb[0].mxu0
  %v553 = vpop.f32.mrb[0].mxu0
  %554 = vdwg.mxu0
  %v555 = vadd.f32 %v274, %v467
  %v556 = vadd.f32 %v276, %v469
  %v557 = vadd.f32 %v315, %v508
  %v558 = vadd.f32 %v317, %v510
  %v559 = vadd.f32 %v356, %v549
  %v560 = vadd.f32 %v358, %v551
  %s561 = scalar_lea.vmem %s2, 12
  %v562 = vld [vmem:[%s561] sm:$0xf]
  %v563 = vld [vmem:[%s0] sm:$0xff]
  %v564 = vld [vmem:[%s0 + $0x8] sm:$0xf]
  %v567 = vcombine.high %v563, %v563
  %v569 = vunpack.c.l.s4 1983009808
  %v570 = vunpack.c.0.s8 %v569
  %v571 = vlaneseq
  %v572 = vshrl.u32 %v571, 7
  %v573 = vsub.s32 %v570, %v572
  %v574 = vrot.slane %v563, %v573
  %v576 = vunpack.c.l.s4 1983009808
  %v577 = vunpack.c.0.s8 %v576
  %v578 = vlaneseq
  %v579 = vshrl.u32 %v578, 7
  %v580 = vsub.s32 %v577, %v579
  %v581 = vrot.slane %v567, %v580
  %v582 = vcombine.high %v574, %v574
  %v583 = vcombine.high %v581, %v581
  %v585 = vunpack.c.l.s4 1983009808
  %v586 = vunpack.c.0.s8 %v585
  %v587 = vlaneseq
  %v588 = vshrl.u32 %v587, 7
  %v589 = vsub.s32 %v586, %v588
  %v590 = vrot.slane %v564, %v589
  %v591 = vcombine.high %v590, %v590
  %592 = vrot.lane.b32.xlu0 %v574, 110
  %v593 = vpop.permute.xlu0 %592
  %594 = vrot.lane.b32.xlu0 %v582, 110
  %v595 = vpop.permute.xlu0 %594
  %596 = vrot.lane.b32.xlu0 %v581, 110
  %v597 = vpop.permute.xlu0 %596
  %598 = vrot.lane.b32.xlu0 %v583, 110
  %v599 = vpop.permute.xlu0 %598
  %600 = vrot.lane.b32.xlu0 %v590, 110
  %v601 = vpop.permute.xlu0 %600
  %602 = vrot.lane.b32.xlu0 %v591, 110
  %v603 = vpop.permute.xlu0 %602
  %vm604 = vcmask 900096
  %v605 = vsel %vm604, %v593, %v595
  %v606 = vsel %vm604, %v595, %v597
  %v607 = vsel %vm604, %v597, %v599
  %v608 = vsel %vm604, %v599, %v601
  %v609 = vsel %vm604, %v601, %v603
  %v611 = vsel %vm69, %v562, 0
  %v614 = vand.u32 %v605, %v76
  %v617 = vand.u32 %v606, %v76
  %v620 = vand.u32 %v607, %v76
  %v623 = vand.u32 %v608, %v76
  %v626 = vand.u32 %v609, %v76
  %v629 = vand.u32 %v603, %v76
  %631 = vmatprep.subr.bf16.mxu0 %v617
  %632 = vmatpush1.bf16.msra.mxu0 %v614
  %633 = vmatprep.subr.bf16.mxu0 0
  %634 = vmatpush1.bf16.msra.mxu0 0
  %635 = vmatprep.subr.bf16.mxu0 0
  %636 = vmatpush1.bf16.msra.mxu0 0
  %637 = vmatprep.subr.bf16.mxu0 0
  %638 = vmatpush1.bf16.msra.mxu0 0
  %639 = vmatprep.subr.bf16.mxu0 0
  %640 = vmatpush1.bf16.msra.mxu0 0
  %641 = vmatprep.subr.bf16.mxu0 0
  %642 = vmatpush1.bf16.msra.mxu0 0
  %643 = vmatprep.subr.bf16.mxu0 0
  %644 = vmatpush1.bf16.msra.mxu0 0
  %645 = vmatprep.subr.bf16.mxu0 0
  %646 = vmatpush1.bf16.msra.mxu0 0
  %647 = vmatprep.subr.bf16.mxu0 0
  %648 = vmatpush1.bf16.msra.mxu0 0
  %649 = vmatprep.subr.bf16.mxu0 0
  %650 = vmatpush1.bf16.msra.mxu0 0
  %651 = vmatprep.subr.bf16.mxu0 0
  %652 = vmatpush1.bf16.msra.mxu0 0
  %653 = vmatprep.subr.bf16.mxu0 0
  %654 = vmatpush1.bf16.msra.mxu0 0
  %655 = vmatprep.subr.bf16.mxu0 0
  %656 = vmatpush1.bf16.msra.mxu0 0
  %657 = vmatprep.subr.bf16.mxu0 0
  %658 = vmatpush1.bf16.msra.mxu0 0
  %659 = vmatprep.subr.bf16.mxu0 0
  %660 = vmatpush1.bf16.msra.mxu0 0
  %661 = vmatprep.subr.bf16.mxu0 0
  %662 = vmatpush1.bf16.msra.mxu0 0
  %663 = vmatprep.mubr.bf16.mxu0 0
  %664 = vmatmul.mubr.bf16.gmra.mrb[0].mxu0 %v611
  %v665 = vpop.f32.mrb[0].mxu0
  %v666 = vadd.f32 0.0, %v665
  %v667 = vpop.f32.mrb[0].mxu0
  %v668 = vadd.f32 0.0, %v667
  %v669 = vpop.f32.mrb[0].mxu0
  %v670 = vpop.f32.mrb[0].mxu0
  %671 = vdwg.mxu0
  %672 = vmatprep.subr.bf16.mxu0 %v623
  %673 = vmatpush1.bf16.msra.mxu0 %v620
  %674 = vmatprep.subr.bf16.mxu0 0
  %675 = vmatpush1.bf16.msra.mxu0 0
  %676 = vmatprep.subr.bf16.mxu0 0
  %677 = vmatpush1.bf16.msra.mxu0 0
  %678 = vmatprep.subr.bf16.mxu0 0
  %679 = vmatpush1.bf16.msra.mxu0 0
  %680 = vmatprep.subr.bf16.mxu0 0
  %681 = vmatpush1.bf16.msra.mxu0 0
  %682 = vmatprep.subr.bf16.mxu0 0
  %683 = vmatpush1.bf16.msra.mxu0 0
  %684 = vmatprep.subr.bf16.mxu0 0
  %685 = vmatpush1.bf16.msra.mxu0 0
  %686 = vmatprep.subr.bf16.mxu0 0
  %687 = vmatpush1.bf16.msra.mxu0 0
  %688 = vmatprep.subr.bf16.mxu0 0
  %689 = vmatpush1.bf16.msra.mxu0 0
  %690 = vmatprep.subr.bf16.mxu0 0
  %691 = vmatpush1.bf16.msra.mxu0 0
  %692 = vmatprep.subr.bf16.mxu0 0
  %693 = vmatpush1.bf16.msra.mxu0 0
  %694 = vmatprep.subr.bf16.mxu0 0
  %695 = vmatpush1.bf16.msra.mxu0 0
  %696 = vmatprep.subr.bf16.mxu0 0
  %697 = vmatpush1.bf16.msra.mxu0 0
  %698 = vmatprep.subr.bf16.mxu0 0
  %699 = vmatpush1.bf16.msra.mxu0 0
  %700 = vmatprep.subr.bf16.mxu0 0
  %701 = vmatpush1.bf16.msra.mxu0 0
  %702 = vmatprep.subr.bf16.mxu0 0
  %703 = vmatpush1.bf16.msra.mxu0 0
  %704 = vmatprep.mubr.bf16.mxu0 0
  %705 = vmatmul.mubr.bf16.gmra.mrb[0].mxu0 %v611
  %v706 = vpop.f32.mrb[0].mxu0
  %v707 = vadd.f32 0.0, %v706
  %v708 = vpop.f32.mrb[0].mxu0
  %v709 = vadd.f32 0.0, %v708
  %v710 = vpop.f32.mrb[0].mxu0
  %v711 = vpop.f32.mrb[0].mxu0
  %712 = vdwg.mxu0
  %713 = vmatprep.subr.bf16.mxu0 %v629
  %714 = vmatpush1.bf16.msra.mxu0 %v626
  %715 = vmatprep.subr.bf16.mxu0 0
  %716 = vmatpush1.bf16.msra.mxu0 0
  %717 = vmatprep.subr.bf16.mxu0 0
  %718 = vmatpush1.bf16.msra.mxu0 0
  %719 = vmatprep.subr.bf16.mxu0 0
  %720 = vmatpush1.bf16.msra.mxu0 0
  %721 = vmatprep.subr.bf16.mxu0 0
  %722 = vmatpush1.bf16.msra.mxu0 0
  %723 = vmatprep.subr.bf16.mxu0 0
  %724 = vmatpush1.bf16.msra.mxu0 0
  %725 = vmatprep.subr.bf16.mxu0 0
  %726 = vmatpush1.bf16.msra.mxu0 0
  %727 = vmatprep.subr.bf16.mxu0 0
  %728 = vmatpush1.bf16.msra.mxu0 0
  %729 = vmatprep.subr.bf16.mxu0 0
  %730 = vmatpush1.bf16.msra.mxu0 0
  %731 = vmatprep.subr.bf16.mxu0 0
  %732 = vmatpush1.bf16.msra.mxu0 0
  %733 = vmatprep.subr.bf16.mxu0 0
  %734 = vmatpush1.bf16.msra.mxu0 0
  %735 = vmatprep.subr.bf16.mxu0 0
  %736 = vmatpush1.bf16.msra.mxu0 0
  %737 = vmatprep.subr.bf16.mxu0 0
  %738 = vmatpush1.bf16.msra.mxu0 0
  %739 = vmatprep.subr.bf16.mxu0 0
  %740 = vmatpush1.bf16.msra.mxu0 0
  %741 = vmatprep.subr.bf16.mxu0 0
  %742 = vmatpush1.bf16.msra.mxu0 0
  %743 = vmatprep.subr.bf16.mxu0 0
  %744 = vmatpush1.bf16.msra.mxu0 0
  %745 = vmatprep.mubr.bf16.mxu0 0
  %746 = vmatmul.mubr.bf16.gmra.mrb[0].mxu0 %v611
  %v747 = vpop.f32.mrb[0].mxu0
  %v748 = vadd.f32 0.0, %v747
  %v749 = vpop.f32.mrb[0].mxu0
  %v750 = vadd.f32 0.0, %v749
  %v751 = vpop.f32.mrb[0].mxu0
  %v752 = vpop.f32.mrb[0].mxu0
  %753 = vdwg.mxu0
  %v754 = vadd.f32 %v555, %v666
  %v755 = vadd.f32 %v556, %v668
  %v756 = vadd.f32 %v557, %v707
  %v757 = vadd.f32 %v558, %v709
  %v758 = vadd.f32 %v559, %v748
  %v759 = vadd.f32 %v560, %v750
  %s760 = scalar_lea.vmem %s2, 16
  %v761 = vld [vmem:[%s760] sm:$0xf]
  %v762 = vld [vmem:[%s0] sm:$0xff]
  %v763 = vld [vmem:[%s0 + $0x8] sm:$0xf]
  %v766 = vcombine.high %v762, %v762
  %v768 = vunpack.c.l.s4 1983009808
  %v769 = vunpack.c.0.s8 %v768
  %v770 = vlaneseq
  %v771 = vshrl.u32 %v770, 7
  %v772 = vsub.s32 %v769, %v771
  %v773 = vrot.slane %v762, %v772
  %v775 = vunpack.c.l.s4 1983009808
  %v776 = vunpack.c.0.s8 %v775
  %v777 = vlaneseq
  %v778 = vshrl.u32 %v777, 7
  %v779 = vsub.s32 %v776, %v778
  %v780 = vrot.slane %v766, %v779
  %v781 = vcombine.high %v773, %v773
  %v782 = vcombine.high %v780, %v780
  %v784 = vunpack.c.l.s4 1983009808
  %v785 = vunpack.c.0.s8 %v784
  %v786 = vlaneseq
  %v787 = vshrl.u32 %v786, 7
  %v788 = vsub.s32 %v785, %v787
  %v789 = vrot.slane %v763, %v788
  %v790 = vcombine.high %v789, %v789
  %791 = vrot.lane.b32.xlu0 %v773, 109
  %v792 = vpop.permute.xlu0 %791
  %793 = vrot.lane.b32.xlu0 %v781, 109
  %v794 = vpop.permute.xlu0 %793
  %795 = vrot.lane.b32.xlu0 %v780, 109
  %v796 = vpop.permute.xlu0 %795
  %797 = vrot.lane.b32.xlu0 %v782, 109
  %v798 = vpop.permute.xlu0 %797
  %799 = vrot.lane.b32.xlu0 %v789, 109
  %v800 = vpop.permute.xlu0 %799
  %801 = vrot.lane.b32.xlu0 %v790, 109
  %v802 = vpop.permute.xlu0 %801
  %vm803 = vcmask 891904
  %v804 = vsel %vm803, %v792, %v794
  %v805 = vsel %vm803, %v794, %v796
  %v806 = vsel %vm803, %v796, %v798
  %v807 = vsel %vm803, %v798, %v800
  %v808 = vsel %vm803, %v800, %v802
  %v810 = vsel %vm69, %v761, 0
  %v813 = vand.u32 %v804, %v76
  %v816 = vand.u32 %v805, %v76
  %v819 = vand.u32 %v806, %v76
  %v822 = vand.u32 %v807, %v76
  %v825 = vand.u32 %v808, %v76
  %v828 = vand.u32 %v802, %v76
  %830 = vmatprep.subr.bf16.mxu0 %v816
  %831 = vmatpush1.bf16.msra.mxu0 %v813
  %832 = vmatprep.subr.bf16.mxu0 0
  %833 = vmatpush1.bf16.msra.mxu0 0
  %834 = vmatprep.subr.bf16.mxu0 0
  %835 = vmatpush1.bf16.msra.mxu0 0
  %836 = vmatprep.subr.bf16.mxu0 0
  %837 = vmatpush1.bf16.msra.mxu0 0
  %838 = vmatprep.subr.bf16.mxu0 0
  %839 = vmatpush1.bf16.msra.mxu0 0
  %840 = vmatprep.subr.bf16.mxu0 0
  %841 = vmatpush1.bf16.msra.mxu0 0
  %842 = vmatprep.subr.bf16.mxu0 0
  %843 = vmatpush1.bf16.msra.mxu0 0
  %844 = vmatprep.subr.bf16.mxu0 0
  %845 = vmatpush1.bf16.msra.mxu0 0
  %846 = vmatprep.subr.bf16.mxu0 0
  %847 = vmatpush1.bf16.msra.mxu0 0
  %848 = vmatprep.subr.bf16.mxu0 0
  %849 = vmatpush1.bf16.msra.mxu0 0
  %850 = vmatprep.subr.bf16.mxu0 0
  %851 = vmatpush1.bf16.msra.mxu0 0
  %852 = vmatprep.subr.bf16.mxu0 0
  %853 = vmatpush1.bf16.msra.mxu0 0
  %854 = vmatprep.subr.bf16.mxu0 0
  %855 = vmatpush1.bf16.msra.mxu0 0
  %856 = vmatprep.subr.bf16.mxu0 0
  %857 = vmatpush1.bf16.msra.mxu0 0
  %858 = vmatprep.subr.bf16.mxu0 0
  %859 = vmatpush1.bf16.msra.mxu0 0
  %860 = vmatprep.subr.bf16.mxu0 0
  %861 = vmatpush1.bf16.msra.mxu0 0
  %862 = vmatprep.mubr.bf16.mxu0 0
  %863 = vmatmul.mubr.bf16.gmra.mrb[0].mxu0 %v810
  %v864 = vpop.f32.mrb[0].mxu0
  %v865 = vadd.f32 0.0, %v864
  %v866 = vpop.f32.mrb[0].mxu0
  %v867 = vadd.f32 0.0, %v866
  %v868 = vpop.f32.mrb[0].mxu0
  %v869 = vpop.f32.mrb[0].mxu0
  %870 = vdwg.mxu0
  %871 = vmatprep.subr.bf16.mxu0 %v822
  %872 = vmatpush1.bf16.msra.mxu0 %v819
  %873 = vmatprep.subr.bf16.mxu0 0
  %874 = vmatpush1.bf16.msra.mxu0 0
  %875 = vmatprep.subr.bf16.mxu0 0
  %876 = vmatpush1.bf16.msra.mxu0 0
  %877 = vmatprep.subr.bf16.mxu0 0
  %878 = vmatpush1.bf16.msra.mxu0 0
  %879 = vmatprep.subr.bf16.mxu0 0
  %880 = vmatpush1.bf16.msra.mxu0 0
  %881 = vmatprep.subr.bf16.mxu0 0
  %882 = vmatpush1.bf16.msra.mxu0 0
  %883 = vmatprep.subr.bf16.mxu0 0
  %884 = vmatpush1.bf16.msra.mxu0 0
  %885 = vmatprep.subr.bf16.mxu0 0
  %886 = vmatpush1.bf16.msra.mxu0 0
  %887 = vmatprep.subr.bf16.mxu0 0
  %888 = vmatpush1.bf16.msra.mxu0 0
  %889 = vmatprep.subr.bf16.mxu0 0
  %890 = vmatpush1.bf16.msra.mxu0 0
  %891 = vmatprep.subr.bf16.mxu0 0
  %892 = vmatpush1.bf16.msra.mxu0 0
  %893 = vmatprep.subr.bf16.mxu0 0
  %894 = vmatpush1.bf16.msra.mxu0 0
  %895 = vmatprep.subr.bf16.mxu0 0
  %896 = vmatpush1.bf16.msra.mxu0 0
  %897 = vmatprep.subr.bf16.mxu0 0
  %898 = vmatpush1.bf16.msra.mxu0 0
  %899 = vmatprep.subr.bf16.mxu0 0
  %900 = vmatpush1.bf16.msra.mxu0 0
  %901 = vmatprep.subr.bf16.mxu0 0
  %902 = vmatpush1.bf16.msra.mxu0 0
  %903 = vmatprep.mubr.bf16.mxu0 0
  %904 = vmatmul.mubr.bf16.gmra.mrb[0].mxu0 %v810
  %v905 = vpop.f32.mrb[0].mxu0
  %v906 = vadd.f32 0.0, %v905
  %v907 = vpop.f32.mrb[0].mxu0
  %v908 = vadd.f32 0.0, %v907
  %v909 = vpop.f32.mrb[0].mxu0
  %v910 = vpop.f32.mrb[0].mxu0
  %911 = vdwg.mxu0
  %912 = vmatprep.subr.bf16.mxu0 %v828
  %913 = vmatpush1.bf16.msra.mxu0 %v825
  %914 = vmatprep.subr.bf16.mxu0 0
  %915 = vmatpush1.bf16.msra.mxu0 0
  %916 = vmatprep.subr.bf16.mxu0 0
  %917 = vmatpush1.bf16.msra.mxu0 0
  %918 = vmatprep.subr.bf16.mxu0 0
  %919 = vmatpush1.bf16.msra.mxu0 0
  %920 = vmatprep.subr.bf16.mxu0 0
  %921 = vmatpush1.bf16.msra.mxu0 0
  %922 = vmatprep.subr.bf16.mxu0 0
  %923 = vmatpush1.bf16.msra.mxu0 0
  %924 = vmatprep.subr.bf16.mxu0 0
  %925 = vmatpush1.bf16.msra.mxu0 0
  %926 = vmatprep.subr.bf16.mxu0 0
  %927 = vmatpush1.bf16.msra.mxu0 0
  %928 = vmatprep.subr.bf16.mxu0 0
  %929 = vmatpush1.bf16.msra.mxu0 0
  %930 = vmatprep.subr.bf16.mxu0 0
  %931 = vmatpush1.bf16.msra.mxu0 0
  %932 = vmatprep.subr.bf16.mxu0 0
  %933 = vmatpush1.bf16.msra.mxu0 0
  %934 = vmatprep.subr.bf16.mxu0 0
  %935 = vmatpush1.bf16.msra.mxu0 0
  %936 = vmatprep.subr.bf16.mxu0 0
  %937 = vmatpush1.bf16.msra.mxu0 0
  %938 = vmatprep.subr.bf16.mxu0 0
  %939 = vmatpush1.bf16.msra.mxu0 0
  %940 = vmatprep.subr.bf16.mxu0 0
  %941 = vmatpush1.bf16.msra.mxu0 0
  %942 = vmatprep.subr.bf16.mxu0 0
  %943 = vmatpush1.bf16.msra.mxu0 0
  %944 = vmatprep.mubr.bf16.mxu0 0
  %945 = vmatmul.mubr.bf16.gmra.mrb[0].mxu0 %v810
  %v946 = vpop.f32.mrb[0].mxu0
  %v947 = vadd.f32 0.0, %v946
  %v948 = vpop.f32.mrb[0].mxu0
  %v949 = vadd.f32 0.0, %v948
  %v950 = vpop.f32.mrb[0].mxu0
  %v951 = vpop.f32.mrb[0].mxu0
  %952 = vdwg.mxu0
  %v953 = vadd.f32 %v754, %v865
  %v954 = vadd.f32 %v755, %v867
  %v955 = vadd.f32 %v756, %v906
  %v956 = vadd.f32 %v757, %v908
  %v957 = vadd.f32 %v758, %v947
  %v958 = vadd.f32 %v759, %v949
  %s959 = scalar_lea.vmem %s2, 20
  %v960 = vld [vmem:[%s959] sm:$0xf]
  %v961 = vld [vmem:[%s0] sm:$0xff]
  %v962 = vld [vmem:[%s0 + $0x8] sm:$0xf]
  %v965 = vcombine.high %v961, %v961
  %v967 = vunpack.c.l.s4 1983009808
  %v968 = vunpack.c.0.s8 %v967
  %v969 = vlaneseq
  %v970 = vshrl.u32 %v969, 7
  %v971 = vsub.s32 %v968, %v970
  %v972 = vrot.slane %v961, %v971
  %v974 = vunpack.c.l.s4 1983009808
  %v975 = vunpack.c.0.s8 %v974
  %v976 = vlaneseq
  %v977 = vshrl.u32 %v976, 7
  %v978 = vsub.s32 %v975, %v977
  %v979 = vrot.slane %v965, %v978
  %v980 = vcombine.high %v972, %v972
  %v981 = vcombine.high %v979, %v979
  %v983 = vunpack.c.l.s4 1983009808
  %v984 = vunpack.c.0.s8 %v983
  %v985 = vlaneseq
  %v986 = vshrl.u32 %v985, 7
  %v987 = vsub.s32 %v984, %v986
  %v988 = vrot.slane %v962, %v987
  %v989 = vcombine.high %v988, %v988
  %990 = vrot.lane.b32.xlu0 %v972, 108
  %v991 = vpop.permute.xlu0 %990
  %992 = vrot.lane.b32.xlu0 %v980, 108
  %v993 = vpop.permute.xlu0 %992
  %994 = vrot.lane.b32.xlu0 %v979, 108
  %v995 = vpop.permute.xlu0 %994
  %996 = vrot.lane.b32.xlu0 %v981, 108
  %v997 = vpop.permute.xlu0 %996
  %998 = vrot.lane.b32.xlu0 %v988, 108
  %v999 = vpop.permute.xlu0 %998
  %1000 = vrot.lane.b32.xlu0 %v989, 108
  %v1001 = vpop.permute.xlu0 %1000
  %vm1002 = vcmask 883712
  %v1003 = vsel %vm1002, %v991, %v993
  %v1004 = vsel %vm1002, %v993, %v995
  %v1005 = vsel %vm1002, %v995, %v997
  %v1006 = vsel %vm1002, %v997, %v999
  %v1007 = vsel %vm1002, %v999, %v1001
  %v1009 = vsel %vm69, %v960, 0
  %v1012 = vand.u32 %v1003, %v76
  %v1015 = vand.u32 %v1004, %v76
  %v1018 = vand.u32 %v1005, %v76
  %v1021 = vand.u32 %v1006, %v76
  %v1024 = vand.u32 %v1007, %v76
  %v1027 = vand.u32 %v1001, %v76
  %1029 = vmatprep.subr.bf16.mxu0 %v1015
  %1030 = vmatpush1.bf16.msra.mxu0 %v1012
  %1031 = vmatprep.subr.bf16.mxu0 0
  %1032 = vmatpush1.bf16.msra.mxu0 0
  %1033 = vmatprep.subr.bf16.mxu0 0
  %1034 = vmatpush1.bf16.msra.mxu0 0
  %1035 = vmatprep.subr.bf16.mxu0 0
  %1036 = vmatpush1.bf16.msra.mxu0 0
  %1037 = vmatprep.subr.bf16.mxu0 0
  %1038 = vmatpush1.bf16.msra.mxu0 0
  %1039 = vmatprep.subr.bf16.mxu0 0
  %1040 = vmatpush1.bf16.msra.mxu0 0
  %1041 = vmatprep.subr.bf16.mxu0 0
  %1042 = vmatpush1.bf16.msra.mxu0 0
  %1043 = vmatprep.subr.bf16.mxu0 0
  %1044 = vmatpush1.bf16.msra.mxu0 0
  %1045 = vmatprep.subr.bf16.mxu0 0
  %1046 = vmatpush1.bf16.msra.mxu0 0
  %1047 = vmatprep.subr.bf16.mxu0 0
  %1048 = vmatpush1.bf16.msra.mxu0 0
  %1049 = vmatprep.subr.bf16.mxu0 0
  %1050 = vmatpush1.bf16.msra.mxu0 0
  %1051 = vmatprep.subr.bf16.mxu0 0
  %1052 = vmatpush1.bf16.msra.mxu0 0
  %1053 = vmatprep.subr.bf16.mxu0 0
  %1054 = vmatpush1.bf16.msra.mxu0 0
  %1055 = vmatprep.subr.bf16.mxu0 0
  %1056 = vmatpush1.bf16.msra.mxu0 0
  %1057 = vmatprep.subr.bf16.mxu0 0
  %1058 = vmatpush1.bf16.msra.mxu0 0
  %1059 = vmatprep.subr.bf16.mxu0 0
  %1060 = vmatpush1.bf16.msra.mxu0 0
  %1061 = vmatprep.mubr.bf16.mxu0 0
  %1062 = vmatmul.mubr.bf16.gmra.mrb[0].mxu0 %v1009
  %v1063 = vpop.f32.mrb[0].mxu0
  %v1064 = vadd.f32 0.0, %v1063
  %v1065 = vpop.f32.mrb[0].mxu0
  %v1066 = vadd.f32 0.0, %v1065
  %v1067 = vpop.f32.mrb[0].mxu0
  %v1068 = vpop.f32.mrb[0].mxu0
  %1069 = vdwg.mxu0
  %1070 = vmatprep.subr.bf16.mxu0 %v1021
  %1071 = vmatpush1.bf16.msra.mxu0 %v1018
  %1072 = vmatprep.subr.bf16.mxu0 0
  %1073 = vmatpush1.bf16.msra.mxu0 0
  %1074 = vmatprep.subr.bf16.mxu0 0
  %1075 = vmatpush1.bf16.msra.mxu0 0
  %1076 = vmatprep.subr.bf16.mxu0 0
  %1077 = vmatpush1.bf16.msra.mxu0 0
  %1078 = vmatprep.subr.bf16.mxu0 0
  %1079 = vmatpush1.bf16.msra.mxu0 0
  %1080 = vmatprep.subr.bf16.mxu0 0
  %1081 = vmatpush1.bf16.msra.mxu0 0
  %1082 = vmatprep.subr.bf16.mxu0 0
  %1083 = vmatpush1.bf16.msra.mxu0 0
  %1084 = vmatprep.subr.bf16.mxu0 0
  %1085 = vmatpush1.bf16.msra.mxu0 0
  %1086 = vmatprep.subr.bf16.mxu0 0
  %1087 = vmatpush1.bf16.msra.mxu0 0
  %1088 = vmatprep.subr.bf16.mxu0 0
  %1089 = vmatpush1.bf16.msra.mxu0 0
  %1090 = vmatprep.subr.bf16.mxu0 0
  %1091 = vmatpush1.bf16.msra.mxu0 0
  %1092 = vmatprep.subr.bf16.mxu0 0
  %1093 = vmatpush1.bf16.msra.mxu0 0
  %1094 = vmatprep.subr.bf16.mxu0 0
  %1095 = vmatpush1.bf16.msra.mxu0 0
  %1096 = vmatprep.subr.bf16.mxu0 0
  %1097 = vmatpush1.bf16.msra.mxu0 0
  %1098 = vmatprep.subr.bf16.mxu0 0
  %1099 = vmatpush1.bf16.msra.mxu0 0
  %1100 = vmatprep.subr.bf16.mxu0 0
  %1101 = vmatpush1.bf16.msra.mxu0 0
  %1102 = vmatprep.mubr.bf16.mxu0 0
  %1103 = vmatmul.mubr.bf16.gmra.mrb[0].mxu0 %v1009
  %v1104 = vpop.f32.mrb[0].mxu0
  %v1105 = vadd.f32 0.0, %v1104
  %v1106 = vpop.f32.mrb[0].mxu0
  %v1107 = vadd.f32 0.0, %v1106
  %v1108 = vpop.f32.mrb[0].mxu0
  %v1109 = vpop.f32.mrb[0].mxu0
  %1110 = vdwg.mxu0
  %1111 = vmatprep.subr.bf16.mxu0 %v1027
  %1112 = vmatpush1.bf16.msra.mxu0 %v1024
  %1113 = vmatprep.subr.bf16.mxu0 0
  %1114 = vmatpush1.bf16.msra.mxu0 0
  %1115 = vmatprep.subr.bf16.mxu0 0
  %1116 = vmatpush1.bf16.msra.mxu0 0
  %1117 = vmatprep.subr.bf16.mxu0 0
  %1118 = vmatpush1.bf16.msra.mxu0 0
  %1119 = vmatprep.subr.bf16.mxu0 0
  %1120 = vmatpush1.bf16.msra.mxu0 0
  %1121 = vmatprep.subr.bf16.mxu0 0
  %1122 = vmatpush1.bf16.msra.mxu0 0
  %1123 = vmatprep.subr.bf16.mxu0 0
  %1124 = vmatpush1.bf16.msra.mxu0 0
  %1125 = vmatprep.subr.bf16.mxu0 0
  %1126 = vmatpush1.bf16.msra.mxu0 0
  %1127 = vmatprep.subr.bf16.mxu0 0
  %1128 = vmatpush1.bf16.msra.mxu0 0
  %1129 = vmatprep.subr.bf16.mxu0 0
  %1130 = vmatpush1.bf16.msra.mxu0 0
  %1131 = vmatprep.subr.bf16.mxu0 0
  %1132 = vmatpush1.bf16.msra.mxu0 0
  %1133 = vmatprep.subr.bf16.mxu0 0
  %1134 = vmatpush1.bf16.msra.mxu0 0
  %1135 = vmatprep.subr.bf16.mxu0 0
  %1136 = vmatpush1.bf16.msra.mxu0 0
  %1137 = vmatprep.subr.bf16.mxu0 0
  %1138 = vmatpush1.bf16.msra.mxu0 0
  %1139 = vmatprep.subr.bf16.mxu0 0
  %1140 = vmatpush1.bf16.msra.mxu0 0
  %1141 = vmatprep.subr.bf16.mxu0 0
  %1142 = vmatpush1.bf16.msra.mxu0 0
  %1143 = vmatprep.mubr.bf16.mxu0 0
  %1144 = vmatmul.mubr.bf16.gmra.mrb[0].mxu0 %v1009
  %v1145 = vpop.f32.mrb[0].mxu0
  %v1146 = vadd.f32 0.0, %v1145
  %v1147 = vpop.f32.mrb[0].mxu0
  %v1148 = vadd.f32 0.0, %v1147
  %v1149 = vpop.f32.mrb[0].mxu0
  %v1150 = vpop.f32.mrb[0].mxu0
  %1151 = vdwg.mxu0
  %v1152 = vadd.f32 %v953, %v1064
  %v1153 = vadd.f32 %v954, %v1066
  %v1154 = vadd.f32 %v955, %v1105
  %v1155 = vadd.f32 %v956, %v1107
  %v1156 = vadd.f32 %v957, %v1146
  %v1157 = vadd.f32 %v958, %v1148
  %s1158 = scalar_lea.vmem %s2, 24
  %v1159 = vld [vmem:[%s1158] sm:$0xf]
  %v1160 = vld [vmem:[%s0] sm:$0xff]
  %v1161 = vld [vmem:[%s0 + $0x8] sm:$0xf]
  %v1164 = vcombine.high %v1160, %v1160
  %v1166 = vunpack.c.l.s4 1983009808
  %v1167 = vunpack.c.0.s8 %v1166
  %v1168 = vlaneseq
  %v1169 = vshrl.u32 %v1168, 7
  %v1170 = vsub.s32 %v1167, %v1169
  %v1171 = vrot.slane %v1160, %v1170
  %v1173 = vunpack.c.l.s4 1983009808
  %v1174 = vunpack.c.0.s8 %v1173
  %v1175 = vlaneseq
  %v1176 = vshrl.u32 %v1175, 7
  %v1177 = vsub.s32 %v1174, %v1176
  %v1178 = vrot.slane %v1164, %v1177
  %v1179 = vcombine.high %v1171, %v1171
  %v1180 = vcombine.high %v1178, %v1178
  %v1182 = vunpack.c.l.s4 1983009808
  %v1183 = vunpack.c.0.s8 %v1182
  %v1184 = vlaneseq
  %v1185 = vshrl.u32 %v1184, 7
  %v1186 = vsub.s32 %v1183, %v1185
  %v1187 = vrot.slane %v1161, %v1186
  %v1188 = vcombine.high %v1187, %v1187
  %1189 = vrot.lane.b32.xlu0 %v1171, 92
  %v1190 = vpop.permute.xlu0 %1189
  %1191 = vrot.lane.b32.xlu0 %v1179, 92
  %v1192 = vpop.permute.xlu0 %1191
  %1193 = vrot.lane.b32.xlu0 %v1178, 92
  %v1194 = vpop.permute.xlu0 %1193
  %1195 = vrot.lane.b32.xlu0 %v1180, 92
  %v1196 = vpop.permute.xlu0 %1195
  %1197 = vrot.lane.b32.xlu0 %v1187, 92
  %v1198 = vpop.permute.xlu0 %1197
  %1199 = vrot.lane.b32.xlu0 %v1188, 92
  %v1200 = vpop.permute.xlu0 %1199
  %vm1201 = vcmask 752640
  %v1202 = vsel %vm1201, %v1190, %v1192
  %v1203 = vsel %vm1201, %v1192, %v1194
  %v1204 = vsel %vm1201, %v1194, %v1196
  %v1205 = vsel %vm1201, %v1196, %v1198
  %v1206 = vsel %vm1201, %v1198, %v1200
  %v1208 = vsel %vm69, %v1159, 0
  %v1211 = vand.u32 %v1202, %v76
  %v1214 = vand.u32 %v1203, %v76
  %v1217 = vand.u32 %v1204, %v76
  %v1220 = vand.u32 %v1205, %v76
  %v1223 = vand.u32 %v1206, %v76
  %v1226 = vand.u32 %v1200, %v76
  %1228 = vmatprep.subr.bf16.mxu0 %v1214
  %1229 = vmatpush1.bf16.msra.mxu0 %v1211
  %1230 = vmatprep.subr.bf16.mxu0 0
  %1231 = vmatpush1.bf16.msra.mxu0 0
  %1232 = vmatprep.subr.bf16.mxu0 0
  %1233 = vmatpush1.bf16.msra.mxu0 0
  %1234 = vmatprep.subr.bf16.mxu0 0
  %1235 = vmatpush1.bf16.msra.mxu0 0
  %1236 = vmatprep.subr.bf16.mxu0 0
  %1237 = vmatpush1.bf16.msra.mxu0 0
  %1238 = vmatprep.subr.bf16.mxu0 0
  %1239 = vmatpush1.bf16.msra.mxu0 0
  %1240 = vmatprep.subr.bf16.mxu0 0
  %1241 = vmatpush1.bf16.msra.mxu0 0
  %1242 = vmatprep.subr.bf16.mxu0 0
  %1243 = vmatpush1.bf16.msra.mxu0 0
  %1244 = vmatprep.subr.bf16.mxu0 0
  %1245 = vmatpush1.bf16.msra.mxu0 0
  %1246 = vmatprep.subr.bf16.mxu0 0
  %1247 = vmatpush1.bf16.msra.mxu0 0
  %1248 = vmatprep.subr.bf16.mxu0 0
  %1249 = vmatpush1.bf16.msra.mxu0 0
  %1250 = vmatprep.subr.bf16.mxu0 0
  %1251 = vmatpush1.bf16.msra.mxu0 0
  %1252 = vmatprep.subr.bf16.mxu0 0
  %1253 = vmatpush1.bf16.msra.mxu0 0
  %1254 = vmatprep.subr.bf16.mxu0 0
  %1255 = vmatpush1.bf16.msra.mxu0 0
  %1256 = vmatprep.subr.bf16.mxu0 0
  %1257 = vmatpush1.bf16.msra.mxu0 0
  %1258 = vmatprep.subr.bf16.mxu0 0
  %1259 = vmatpush1.bf16.msra.mxu0 0
  %1260 = vmatprep.mubr.bf16.mxu0 0
  %1261 = vmatmul.mubr.bf16.gmra.mrb[0].mxu0 %v1208
  %v1262 = vpop.f32.mrb[0].mxu0
  %v1263 = vadd.f32 0.0, %v1262
  %v1264 = vpop.f32.mrb[0].mxu0
  %v1265 = vadd.f32 0.0, %v1264
  %v1266 = vpop.f32.mrb[0].mxu0
  %v1267 = vpop.f32.mrb[0].mxu0
  %1268 = vdwg.mxu0
  %1269 = vmatprep.subr.bf16.mxu0 %v1220
  %1270 = vmatpush1.bf16.msra.mxu0 %v1217
  %1271 = vmatprep.subr.bf16.mxu0 0
  %1272 = vmatpush1.bf16.msra.mxu0 0
  %1273 = vmatprep.subr.bf16.mxu0 0
  %1274 = vmatpush1.bf16.msra.mxu0 0
  %1275 = vmatprep.subr.bf16.mxu0 0
  %1276 = vmatpush1.bf16.msra.mxu0 0
  %1277 = vmatprep.subr.bf16.mxu0 0
  %1278 = vmatpush1.bf16.msra.mxu0 0
  %1279 = vmatprep.subr.bf16.mxu0 0
  %1280 = vmatpush1.bf16.msra.mxu0 0
  %1281 = vmatprep.subr.bf16.mxu0 0
  %1282 = vmatpush1.bf16.msra.mxu0 0
  %1283 = vmatprep.subr.bf16.mxu0 0
  %1284 = vmatpush1.bf16.msra.mxu0 0
  %1285 = vmatprep.subr.bf16.mxu0 0
  %1286 = vmatpush1.bf16.msra.mxu0 0
  %1287 = vmatprep.subr.bf16.mxu0 0
  %1288 = vmatpush1.bf16.msra.mxu0 0
  %1289 = vmatprep.subr.bf16.mxu0 0
  %1290 = vmatpush1.bf16.msra.mxu0 0
  %1291 = vmatprep.subr.bf16.mxu0 0
  %1292 = vmatpush1.bf16.msra.mxu0 0
  %1293 = vmatprep.subr.bf16.mxu0 0
  %1294 = vmatpush1.bf16.msra.mxu0 0
  %1295 = vmatprep.subr.bf16.mxu0 0
  %1296 = vmatpush1.bf16.msra.mxu0 0
  %1297 = vmatprep.subr.bf16.mxu0 0
  %1298 = vmatpush1.bf16.msra.mxu0 0
  %1299 = vmatprep.subr.bf16.mxu0 0
  %1300 = vmatpush1.bf16.msra.mxu0 0
  %1301 = vmatprep.mubr.bf16.mxu0 0
  %1302 = vmatmul.mubr.bf16.gmra.mrb[0].mxu0 %v1208
  %v1303 = vpop.f32.mrb[0].mxu0
  %v1304 = vadd.f32 0.0, %v1303
  %v1305 = vpop.f32.mrb[0].mxu0
  %v1306 = vadd.f32 0.0, %v1305
  %v1307 = vpop.f32.mrb[0].mxu0
  %v1308 = vpop.f32.mrb[0].mxu0
  %1309 = vdwg.mxu0
  %1310 = vmatprep.subr.bf16.mxu0 %v1226
  %1311 = vmatpush1.bf16.msra.mxu0 %v1223
  %1312 = vmatprep.subr.bf16.mxu0 0
  %1313 = vmatpush1.bf16.msra.mxu0 0
  %1314 = vmatprep.subr.bf16.mxu0 0
  %1315 = vmatpush1.bf16.msra.mxu0 0
  %1316 = vmatprep.subr.bf16.mxu0 0
  %1317 = vmatpush1.bf16.msra.mxu0 0
  %1318 = vmatprep.subr.bf16.mxu0 0
  %1319 = vmatpush1.bf16.msra.mxu0 0
  %1320 = vmatprep.subr.bf16.mxu0 0
  %1321 = vmatpush1.bf16.msra.mxu0 0
  %1322 = vmatprep.subr.bf16.mxu0 0
  %1323 = vmatpush1.bf16.msra.mxu0 0
  %1324 = vmatprep.subr.bf16.mxu0 0
  %1325 = vmatpush1.bf16.msra.mxu0 0
  %1326 = vmatprep.subr.bf16.mxu0 0
  %1327 = vmatpush1.bf16.msra.mxu0 0
  %1328 = vmatprep.subr.bf16.mxu0 0
  %1329 = vmatpush1.bf16.msra.mxu0 0
  %1330 = vmatprep.subr.bf16.mxu0 0
  %1331 = vmatpush1.bf16.msra.mxu0 0
  %1332 = vmatprep.subr.bf16.mxu0 0
  %1333 = vmatpush1.bf16.msra.mxu0 0
  %1334 = vmatprep.subr.bf16.mxu0 0
  %1335 = vmatpush1.bf16.msra.mxu0 0
  %1336 = vmatprep.subr.bf16.mxu0 0
  %1337 = vmatpush1.bf16.msra.mxu0 0
  %1338 = vmatprep.subr.bf16.mxu0 0
  %1339 = vmatpush1.bf16.msra.mxu0 0
  %1340 = vmatprep.subr.bf16.mxu0 0
  %1341 = vmatpush1.bf16.msra.mxu0 0
  %1342 = vmatprep.mubr.bf16.mxu0 0
  %1343 = vmatmul.mubr.bf16.gmra.mrb[0].mxu0 %v1208
  %v1344 = vpop.f32.mrb[0].mxu0
  %v1345 = vadd.f32 0.0, %v1344
  %v1346 = vpop.f32.mrb[0].mxu0
  %v1347 = vadd.f32 0.0, %v1346
  %v1348 = vpop.f32.mrb[0].mxu0
  %v1349 = vpop.f32.mrb[0].mxu0
  %1350 = vdwg.mxu0
  %v1351 = vadd.f32 %v1152, %v1263
  %v1352 = vadd.f32 %v1153, %v1265
  %v1353 = vadd.f32 %v1154, %v1304
  %v1354 = vadd.f32 %v1155, %v1306
  %v1355 = vadd.f32 %v1156, %v1345
  %v1356 = vadd.f32 %v1157, %v1347
  %s1357 = scalar_lea.vmem %s2, 28
  %v1358 = vld [vmem:[%s1357] sm:$0xf]
  %v1359 = vld [vmem:[%s0] sm:$0xff]
  %v1360 = vld [vmem:[%s0 + $0x8] sm:$0xf]
  %v1363 = vcombine.high %v1359, %v1359
  %v1365 = vunpack.c.l.s4 1983009808
  %v1366 = vunpack.c.0.s8 %v1365
  %v1367 = vlaneseq
  %v1368 = vshrl.u32 %v1367, 7
  %v1369 = vsub.s32 %v1366, %v1368
  %v1370 = vrot.slane %v1359, %v1369
  %v1372 = vunpack.c.l.s4 1983009808
  %v1373 = vunpack.c.0.s8 %v1372
  %v1374 = vlaneseq
  %v1375 = vshrl.u32 %v1374, 7
  %v1376 = vsub.s32 %v1373, %v1375
  %v1377 = vrot.slane %v1363, %v1376
  %v1378 = vcombine.high %v1370, %v1370
  %v1379 = vcombine.high %v1377, %v1377
  %v1381 = vunpack.c.l.s4 1983009808
  %v1382 = vunpack.c.0.s8 %v1381
  %v1383 = vlaneseq
  %v1384 = vshrl.u32 %v1383, 7
  %v1385 = vsub.s32 %v1382, %v1384
  %v1386 = vrot.slane %v1360, %v1385
  %v1387 = vcombine.high %v1386, %v1386
  %1388 = vrot.lane.b32.xlu0 %v1370, 91
  %v1389 = vpop.permute.xlu0 %1388
  %1390 = vrot.lane.b32.xlu0 %v1378, 91
  %v1391 = vpop.permute.xlu0 %1390
  %1392 = vrot.lane.b32.xlu0 %v1377, 91
  %v1393 = vpop.permute.xlu0 %1392
  %1394 = vrot.lane.b32.xlu0 %v1379, 91
  %v1395 = vpop.permute.xlu0 %1394
  %1396 = vrot.lane.b32.xlu0 %v1386, 91
  %v1397 = vpop.permute.xlu0 %1396
  %1398 = vrot.lane.b32.xlu0 %v1387, 91
  %v1399 = vpop.permute.xlu0 %1398
  %vm1400 = vcmask 744448
  %v1401 = vsel %vm1400, %v1389, %v1391
  %v1402 = vsel %vm1400, %v1391, %v1393
  %v1403 = vsel %vm1400, %v1393, %v1395
  %v1404 = vsel %vm1400, %v1395, %v1397
  %v1405 = vsel %vm1400, %v1397, %v1399
  %v1407 = vsel %vm69, %v1358, 0
  %v1410 = vand.u32 %v1401, %v76
  %v1413 = vand.u32 %v1402, %v76
  %v1416 = vand.u32 %v1403, %v76
  %v1419 = vand.u32 %v1404, %v76
  %v1422 = vand.u32 %v1405, %v76
  %v1425 = vand.u32 %v1399, %v76
  %1427 = vmatprep.subr.bf16.mxu0 %v1413
  %1428 = vmatpush1.bf16.msra.mxu0 %v1410
  %1429 = vmatprep.subr.bf16.mxu0 0
  %1430 = vmatpush1.bf16.msra.mxu0 0
  %1431 = vmatprep.subr.bf16.mxu0 0
  %1432 = vmatpush1.bf16.msra.mxu0 0
  %1433 = vmatprep.subr.bf16.mxu0 0
  %1434 = vmatpush1.bf16.msra.mxu0 0
  %1435 = vmatprep.subr.bf16.mxu0 0
  %1436 = vmatpush1.bf16.msra.mxu0 0
  %1437 = vmatprep.subr.bf16.mxu0 0
  %1438 = vmatpush1.bf16.msra.mxu0 0
  %1439 = vmatprep.subr.bf16.mxu0 0
  %1440 = vmatpush1.bf16.msra.mxu0 0
  %1441 = vmatprep.subr.bf16.mxu0 0
  %1442 = vmatpush1.bf16.msra.mxu0 0
  %1443 = vmatprep.subr.bf16.mxu0 0
  %1444 = vmatpush1.bf16.msra.mxu0 0
  %1445 = vmatprep.subr.bf16.mxu0 0
  %1446 = vmatpush1.bf16.msra.mxu0 0
  %1447 = vmatprep.subr.bf16.mxu0 0
  %1448 = vmatpush1.bf16.msra.mxu0 0
  %1449 = vmatprep.subr.bf16.mxu0 0
  %1450 = vmatpush1.bf16.msra.mxu0 0
  %1451 = vmatprep.subr.bf16.mxu0 0
  %1452 = vmatpush1.bf16.msra.mxu0 0
  %1453 = vmatprep.subr.bf16.mxu0 0
  %1454 = vmatpush1.bf16.msra.mxu0 0
  %1455 = vmatprep.subr.bf16.mxu0 0
  %1456 = vmatpush1.bf16.msra.mxu0 0
  %1457 = vmatprep.subr.bf16.mxu0 0
  %1458 = vmatpush1.bf16.msra.mxu0 0
  %1459 = vmatprep.mubr.bf16.mxu0 0
  %1460 = vmatmul.mubr.bf16.gmra.mrb[0].mxu0 %v1407
  %v1461 = vpop.f32.mrb[0].mxu0
  %v1462 = vadd.f32 0.0, %v1461
  %v1463 = vpop.f32.mrb[0].mxu0
  %v1464 = vadd.f32 0.0, %v1463
  %v1465 = vpop.f32.mrb[0].mxu0
  %v1466 = vpop.f32.mrb[0].mxu0
  %1467 = vdwg.mxu0
  %1468 = vmatprep.subr.bf16.mxu0 %v1419
  %1469 = vmatpush1.bf16.msra.mxu0 %v1416
  %1470 = vmatprep.subr.bf16.mxu0 0
  %1471 = vmatpush1.bf16.msra.mxu0 0
  %1472 = vmatprep.subr.bf16.mxu0 0
  %1473 = vmatpush1.bf16.msra.mxu0 0
  %1474 = vmatprep.subr.bf16.mxu0 0
  %1475 = vmatpush1.bf16.msra.mxu0 0
  %1476 = vmatprep.subr.bf16.mxu0 0
  %1477 = vmatpush1.bf16.msra.mxu0 0
  %1478 = vmatprep.subr.bf16.mxu0 0
  %1479 = vmatpush1.bf16.msra.mxu0 0
  %1480 = vmatprep.subr.bf16.mxu0 0
  %1481 = vmatpush1.bf16.msra.mxu0 0
  %1482 = vmatprep.subr.bf16.mxu0 0
  %1483 = vmatpush1.bf16.msra.mxu0 0
  %1484 = vmatprep.subr.bf16.mxu0 0
  %1485 = vmatpush1.bf16.msra.mxu0 0
  %1486 = vmatprep.subr.bf16.mxu0 0
  %1487 = vmatpush1.bf16.msra.mxu0 0
  %1488 = vmatprep.subr.bf16.mxu0 0
  %1489 = vmatpush1.bf16.msra.mxu0 0
  %1490 = vmatprep.subr.bf16.mxu0 0
  %1491 = vmatpush1.bf16.msra.mxu0 0
  %1492 = vmatprep.subr.bf16.mxu0 0
  %1493 = vmatpush1.bf16.msra.mxu0 0
  %1494 = vmatprep.subr.bf16.mxu0 0
  %1495 = vmatpush1.bf16.msra.mxu0 0
  %1496 = vmatprep.subr.bf16.mxu0 0
  %1497 = vmatpush1.bf16.msra.mxu0 0
  %1498 = vmatprep.subr.bf16.mxu0 0
  %1499 = vmatpush1.bf16.msra.mxu0 0
  %1500 = vmatprep.mubr.bf16.mxu0 0
  %1501 = vmatmul.mubr.bf16.gmra.mrb[0].mxu0 %v1407
  %v1502 = vpop.f32.mrb[0].mxu0
  %v1503 = vadd.f32 0.0, %v1502
  %v1504 = vpop.f32.mrb[0].mxu0
  %v1505 = vadd.f32 0.0, %v1504
  %v1506 = vpop.f32.mrb[0].mxu0
  %v1507 = vpop.f32.mrb[0].mxu0
  %1508 = vdwg.mxu0
  %1509 = vmatprep.subr.bf16.mxu0 %v1425
  %1510 = vmatpush1.bf16.msra.mxu0 %v1422
  %1511 = vmatprep.subr.bf16.mxu0 0
  %1512 = vmatpush1.bf16.msra.mxu0 0
  %1513 = vmatprep.subr.bf16.mxu0 0
  %1514 = vmatpush1.bf16.msra.mxu0 0
  %1515 = vmatprep.subr.bf16.mxu0 0
  %1516 = vmatpush1.bf16.msra.mxu0 0
  %1517 = vmatprep.subr.bf16.mxu0 0
  %1518 = vmatpush1.bf16.msra.mxu0 0
  %1519 = vmatprep.subr.bf16.mxu0 0
  %1520 = vmatpush1.bf16.msra.mxu0 0
  %1521 = vmatprep.subr.bf16.mxu0 0
  %1522 = vmatpush1.bf16.msra.mxu0 0
  %1523 = vmatprep.subr.bf16.mxu0 0
  %1524 = vmatpush1.bf16.msra.mxu0 0
  %1525 = vmatprep.subr.bf16.mxu0 0
  %1526 = vmatpush1.bf16.msra.mxu0 0
  %1527 = vmatprep.subr.bf16.mxu0 0
  %1528 = vmatpush1.bf16.msra.mxu0 0
  %1529 = vmatprep.subr.bf16.mxu0 0
  %1530 = vmatpush1.bf16.msra.mxu0 0
  %1531 = vmatprep.subr.bf16.mxu0 0
  %1532 = vmatpush1.bf16.msra.mxu0 0
  %1533 = vmatprep.subr.bf16.mxu0 0
  %1534 = vmatpush1.bf16.msra.mxu0 0
  %1535 = vmatprep.subr.bf16.mxu0 0
  %1536 = vmatpush1.bf16.msra.mxu0 0
  %1537 = vmatprep.subr.bf16.mxu0 0
  %1538 = vmatpush1.bf16.msra.mxu0 0
  %1539 = vmatprep.subr.bf16.mxu0 0
  %1540 = vmatpush1.bf16.msra.mxu0 0
  %1541 = vmatprep.mubr.bf16.mxu0 0
  %1542 = vmatmul.mubr.bf16.gmra.mrb[0].mxu0 %v1407
  %v1543 = vpop.f32.mrb[0].mxu0
  %v1544 = vadd.f32 0.0, %v1543
  %v1545 = vpop.f32.mrb[0].mxu0
  %v1546 = vadd.f32 0.0, %v1545
  %v1547 = vpop.f32.mrb[0].mxu0
  %v1548 = vpop.f32.mrb[0].mxu0
  %1549 = vdwg.mxu0
  %v1550 = vadd.f32 %v1351, %v1462
  %v1551 = vadd.f32 %v1352, %v1464
  %v1552 = vadd.f32 %v1353, %v1503
  %v1553 = vadd.f32 %v1354, %v1505
  %v1554 = vadd.f32 %v1355, %v1544
  %v1555 = vadd.f32 %v1356, %v1546
  %s1556 = scalar_lea.vmem %s2, 32
  %v1557 = vld [vmem:[%s1556] sm:$0xf]
  %v1558 = vld [vmem:[%s0] sm:$0xff]
  %v1559 = vld [vmem:[%s0 + $0x8] sm:$0xf]
  %v1562 = vcombine.high %v1558, %v1558
  %v1564 = vunpack.c.l.s4 1983009808
  %v1565 = vunpack.c.0.s8 %v1564
  %v1566 = vlaneseq
  %v1567 = vshrl.u32 %v1566, 7
  %v1568 = vsub.s32 %v1565, %v1567
  %v1569 = vrot.slane %v1558, %v1568
  %v1571 = vunpack.c.l.s4 1983009808
  %v1572 = vunpack.c.0.s8 %v1571
  %v1573 = vlaneseq
  %v1574 = vshrl.u32 %v1573, 7
  %v1575 = vsub.s32 %v1572, %v1574
  %v1576 = vrot.slane %v1562, %v1575
  %v1577 = vcombine.high %v1569, %v1569
  %v1578 = vcombine.high %v1576, %v1576
  %v1580 = vunpack.c.l.s4 1983009808
  %v1581 = vunpack.c.0.s8 %v1580
  %v1582 = vlaneseq
  %v1583 = vshrl.u32 %v1582, 7
  %v1584 = vsub.s32 %v1581, %v1583
  %v1585 = vrot.slane %v1559, %v1584
  %v1586 = vcombine.high %v1585, %v1585
  %1587 = vrot.lane.b32.xlu0 %v1569, 90
  %v1588 = vpop.permute.xlu0 %1587
  %1589 = vrot.lane.b32.xlu0 %v1577, 90
  %v1590 = vpop.permute.xlu0 %1589
  %1591 = vrot.lane.b32.xlu0 %v1576, 90
  %v1592 = vpop.permute.xlu0 %1591
  %1593 = vrot.lane.b32.xlu0 %v1578, 90
  %v1594 = vpop.permute.xlu0 %1593
  %1595 = vrot.lane.b32.xlu0 %v1585, 90
  %v1596 = vpop.permute.xlu0 %1595
  %1597 = vrot.lane.b32.xlu0 %v1586, 90
  %v1598 = vpop.permute.xlu0 %1597
  %vm1599 = vcmask 736256
  %v1600 = vsel %vm1599, %v1588, %v1590
  %v1601 = vsel %vm1599, %v1590, %v1592
  %v1602 = vsel %vm1599, %v1592, %v1594
  %v1603 = vsel %vm1599, %v1594, %v1596
  %v1604 = vsel %vm1599, %v1596, %v1598
  %v1606 = vsel %vm69, %v1557, 0
  %v1609 = vand.u32 %v1600, %v76
  %v1612 = vand.u32 %v1601, %v76
  %v1615 = vand.u32 %v1602, %v76
  %v1618 = vand.u32 %v1603, %v76
  %v1621 = vand.u32 %v1604, %v76
  %v1624 = vand.u32 %v1598, %v76
  %1626 = vmatprep.subr.bf16.mxu0 %v1612
  %1627 = vmatpush1.bf16.msra.mxu0 %v1609
  %1628 = vmatprep.subr.bf16.mxu0 0
  %1629 = vmatpush1.bf16.msra.mxu0 0
  %1630 = vmatprep.subr.bf16.mxu0 0
  %1631 = vmatpush1.bf16.msra.mxu0 0
  %1632 = vmatprep.subr.bf16.mxu0 0
  %1633 = vmatpush1.bf16.msra.mxu0 0
  %1634 = vmatprep.subr.bf16.mxu0 0
  %1635 = vmatpush1.bf16.msra.mxu0 0
  %1636 = vmatprep.subr.bf16.mxu0 0
  %1637 = vmatpush1.bf16.msra.mxu0 0
  %1638 = vmatprep.subr.bf16.mxu0 0
  %1639 = vmatpush1.bf16.msra.mxu0 0
  %1640 = vmatprep.subr.bf16.mxu0 0
  %1641 = vmatpush1.bf16.msra.mxu0 0
  %1642 = vmatprep.subr.bf16.mxu0 0
  %1643 = vmatpush1.bf16.msra.mxu0 0
  %1644 = vmatprep.subr.bf16.mxu0 0
  %1645 = vmatpush1.bf16.msra.mxu0 0
  %1646 = vmatprep.subr.bf16.mxu0 0
  %1647 = vmatpush1.bf16.msra.mxu0 0
  %1648 = vmatprep.subr.bf16.mxu0 0
  %1649 = vmatpush1.bf16.msra.mxu0 0
  %1650 = vmatprep.subr.bf16.mxu0 0
  %1651 = vmatpush1.bf16.msra.mxu0 0
  %1652 = vmatprep.subr.bf16.mxu0 0
  %1653 = vmatpush1.bf16.msra.mxu0 0
  %1654 = vmatprep.subr.bf16.mxu0 0
  %1655 = vmatpush1.bf16.msra.mxu0 0
  %1656 = vmatprep.subr.bf16.mxu0 0
  %1657 = vmatpush1.bf16.msra.mxu0 0
  %1658 = vmatprep.mubr.bf16.mxu0 0
  %1659 = vmatmul.mubr.bf16.gmra.mrb[0].mxu0 %v1606
  %v1660 = vpop.f32.mrb[0].mxu0
  %v1661 = vadd.f32 0.0, %v1660
  %v1662 = vpop.f32.mrb[0].mxu0
  %v1663 = vadd.f32 0.0, %v1662
  %v1664 = vpop.f32.mrb[0].mxu0
  %v1665 = vpop.f32.mrb[0].mxu0
  %1666 = vdwg.mxu0
  %1667 = vmatprep.subr.bf16.mxu0 %v1618
  %1668 = vmatpush1.bf16.msra.mxu0 %v1615
  %1669 = vmatprep.subr.bf16.mxu0 0
  %1670 = vmatpush1.bf16.msra.mxu0 0
  %1671 = vmatprep.subr.bf16.mxu0 0
  %1672 = vmatpush1.bf16.msra.mxu0 0
  %1673 = vmatprep.subr.bf16.mxu0 0
  %1674 = vmatpush1.bf16.msra.mxu0 0
  %1675 = vmatprep.subr.bf16.mxu0 0
  %1676 = vmatpush1.bf16.msra.mxu0 0
  %1677 = vmatprep.subr.bf16.mxu0 0
  %1678 = vmatpush1.bf16.msra.mxu0 0
  %1679 = vmatprep.subr.bf16.mxu0 0
  %1680 = vmatpush1.bf16.msra.mxu0 0
  %1681 = vmatprep.subr.bf16.mxu0 0
  %1682 = vmatpush1.bf16.msra.mxu0 0
  %1683 = vmatprep.subr.bf16.mxu0 0
  %1684 = vmatpush1.bf16.msra.mxu0 0
  %1685 = vmatprep.subr.bf16.mxu0 0
  %1686 = vmatpush1.bf16.msra.mxu0 0
  %1687 = vmatprep.subr.bf16.mxu0 0
  %1688 = vmatpush1.bf16.msra.mxu0 0
  %1689 = vmatprep.subr.bf16.mxu0 0
  %1690 = vmatpush1.bf16.msra.mxu0 0
  %1691 = vmatprep.subr.bf16.mxu0 0
  %1692 = vmatpush1.bf16.msra.mxu0 0
  %1693 = vmatprep.subr.bf16.mxu0 0
  %1694 = vmatpush1.bf16.msra.mxu0 0
  %1695 = vmatprep.subr.bf16.mxu0 0
  %1696 = vmatpush1.bf16.msra.mxu0 0
  %1697 = vmatprep.subr.bf16.mxu0 0
  %1698 = vmatpush1.bf16.msra.mxu0 0
  %1699 = vmatprep.mubr.bf16.mxu0 0
  %1700 = vmatmul.mubr.bf16.gmra.mrb[0].mxu0 %v1606
  %v1701 = vpop.f32.mrb[0].mxu0
  %v1702 = vadd.f32 0.0, %v1701
  %v1703 = vpop.f32.mrb[0].mxu0
  %v1704 = vadd.f32 0.0, %v1703
  %v1705 = vpop.f32.mrb[0].mxu0
  %v1706 = vpop.f32.mrb[0].mxu0
  %1707 = vdwg.mxu0
  %1708 = vmatprep.subr.bf16.mxu0 %v1624
  %1709 = vmatpush1.bf16.msra.mxu0 %v1621
  %1710 = vmatprep.subr.bf16.mxu0 0
  %1711 = vmatpush1.bf16.msra.mxu0 0
  %1712 = vmatprep.subr.bf16.mxu0 0
  %1713 = vmatpush1.bf16.msra.mxu0 0
  %1714 = vmatprep.subr.bf16.mxu0 0
  %1715 = vmatpush1.bf16.msra.mxu0 0
  %1716 = vmatprep.subr.bf16.mxu0 0
  %1717 = vmatpush1.bf16.msra.mxu0 0
  %1718 = vmatprep.subr.bf16.mxu0 0
  %1719 = vmatpush1.bf16.msra.mxu0 0
  %1720 = vmatprep.subr.bf16.mxu0 0
  %1721 = vmatpush1.bf16.msra.mxu0 0
  %1722 = vmatprep.subr.bf16.mxu0 0
  %1723 = vmatpush1.bf16.msra.mxu0 0
  %1724 = vmatprep.subr.bf16.mxu0 0
  %1725 = vmatpush1.bf16.msra.mxu0 0
  %1726 = vmatprep.subr.bf16.mxu0 0
  %1727 = vmatpush1.bf16.msra.mxu0 0
  %1728 = vmatprep.subr.bf16.mxu0 0
  %1729 = vmatpush1.bf16.msra.mxu0 0
  %1730 = vmatprep.subr.bf16.mxu0 0
  %1731 = vmatpush1.bf16.msra.mxu0 0
  %1732 = vmatprep.subr.bf16.mxu0 0
  %1733 = vmatpush1.bf16.msra.mxu0 0
  %1734 = vmatprep.subr.bf16.mxu0 0
  %1735 = vmatpush1.bf16.msra.mxu0 0
  %1736 = vmatprep.subr.bf16.mxu0 0
  %1737 = vmatpush1.bf16.msra.mxu0 0
  %1738 = vmatprep.subr.bf16.mxu0 0
  %1739 = vmatpush1.bf16.msra.mxu0 0
  %1740 = vmatprep.mubr.bf16.mxu0 0
  %1741 = vmatmul.mubr.bf16.gmra.mrb[0].mxu0 %v1606
  %v1742 = vpop.f32.mrb[0].mxu0
  %v1743 = vadd.f32 0.0, %v1742
  %v1744 = vpop.f32.mrb[0].mxu0
  %v1745 = vadd.f32 0.0, %v1744
  %v1746 = vpop.f32.mrb[0].mxu0
  %v1747 = vpop.f32.mrb[0].mxu0
  %1748 = vdwg.mxu0
  %v1749 = vadd.f32 %v1550, %v1661
  %v1750 = vadd.f32 %v1551, %v1663
  %v1751 = vadd.f32 %v1552, %v1702
  %v1752 = vadd.f32 %v1553, %v1704
  %v1753 = vadd.f32 %v1554, %v1743
  %v1754 = vadd.f32 %v1555, %v1745
  %v1755 = vld [vmem:[%s3] sm:$0xff]
  %1757 = vset.pattern.permute.xlu0 0
  %1758 = vperm.xlu0 %1757, %v1755
  %v1759 = vpop.permute.xlu0 %1758
  %v1761 = vadd.f32 %v1749, %v1759
  %v1762 = vadd.f32 %v1750, %v1759
  %v1763 = vadd.f32 %v1751, %v1759
  %v1764 = vadd.f32 %v1752, %v1759
  %v1765 = vadd.f32 %v1753, %v1759
  %v1766 = vadd.f32 %v1754, %v1759
  %v1768 = vlaneseq
  %v1769 = vshrl.u32 %v1768, 7
  %v1770 = vsub.s32 0, %v1769
  %v1771 = vrot.slane %v18, %v1770
  %v1772 = vlaneseq
  %v1773 = vshrl.u32 %v1772, 7
  %v1774 = vsub.s32 1, %v1773
  %v1775 = vrot.slane %v18, %v1774
  %v1776 = vlaneseq
  %v1777 = vshrl.u32 %v1776, 7
  %v1778 = vsub.s32 2, %v1777
  %v1779 = vrot.slane %v18, %v1778
  %v1780 = vlaneseq
  %v1781 = vshrl.u32 %v1780, 7
  %v1782 = vsub.s32 3, %v1781
  %v1783 = vrot.slane %v18, %v1782
  %v1784 = vlaneseq
  %v1785 = vshrl.u32 %v1784, 7
  %v1786 = vsub.s32 4, %v1785
  %v1787 = vrot.slane %v18, %v1786
  %v1788 = vlaneseq
  %v1789 = vshrl.u32 %v1788, 7
  %v1790 = vsub.s32 5, %v1789
  %v1791 = vrot.slane %v18, %v1790
  %1792 = vrot.lane.b32.xlu0 %v1771, 109
  %v1793 = vpop.permute.xlu0 %1792
  %1794 = vrot.lane.b32.xlu0 %v1775, 109
  %v1795 = vpop.permute.xlu0 %1794
  %1796 = vrot.lane.b32.xlu0 %v1779, 109
  %v1797 = vpop.permute.xlu0 %1796
  %1798 = vrot.lane.b32.xlu0 %v1783, 109
  %v1799 = vpop.permute.xlu0 %1798
  %1800 = vrot.lane.b32.xlu0 %v1787, 109
  %v1801 = vpop.permute.xlu0 %1800
  %1802 = vrot.lane.b32.xlu0 %v1791, 109
  %v1803 = vpop.permute.xlu0 %1802
  %vm1804 = vcmask 891904
  %v1805 = vsel %vm1804, %v1793, %v1795
  %v1806 = vsel %vm1804, %v1795, %v1797
  %v1807 = vsel %vm1804, %v1797, %v1799
  %v1808 = vsel %vm1804, %v1799, %v1801
  %v1809 = vsel %vm1804, %v1801, %v1803
  %v1816 = vmul.f32 %v1761, %v1805
  %v1817 = vmul.f32 %v1762, %v1806
  %v1818 = vmul.f32 %v1763, %v1807
  %v1819 = vmul.f32 %v1764, %v1808
  %v1820 = vmul.f32 %v1765, %v1809
  %v1821 = vmul.f32 %v1766, %v1803
  %1822 = vst [vmem:[%s4] sm:$0xff] 0
  %1823 = vst [vmem:[%s4 + $0x8] sm:$0xff] 0
  %vm1824 = vcmask 1043456
  %vm1825 = vcmask 375812
  %vm1826 = vmor %vm1825, %vm1824
  %1827 = vst.msk [vmem:[%s4 + $0x10] sm:$0xff] %vm1826, 0
  %v1828 = vpack.c.bf16 %v1816, %v1816
  %v1829 = vpack.c.bf16 %v1817, %v1817
  %v1830 = vpack.c.bf16 %v1818, %v1818
  %v1831 = vpack.c.bf16 %v1819, %v1819
  %v1832 = vpack.c.bf16 %v1820, %v1820
  %v1833 = vpack.c.bf16 %v1821, %v1821
  %v1840 = vunpack.c.l.b16 %v1828
  %v1841 = vunpack.c.l.b16 %v1829
  %v1842 = vunpack.c.l.b16 %v1830
  %v1843 = vunpack.c.l.b16 %v1831
  %v1844 = vunpack.c.l.b16 %v1832
  %v1845 = vunpack.c.l.b16 %v1833
  %v1846 = vpack.c.b16 %v1841, %v1840
  %v1847 = vpack.c.b16 %v1843, %v1842
  %v1848 = vpack.c.b16 %v1845, %v1844
  %1849 = vrot.lane.b32.xlu0 %v1846, 19
  %v1850 = vpop.permute.xlu0 %1849
  %1851 = vrot.lane.b32.xlu0 %v1847, 19
  %v1852 = vpop.permute.xlu0 %1851
  %1853 = vrot.lane.b32.xlu0 %v1848, 19
  %v1854 = vpop.permute.xlu0 %1853
  %v1855 = vrot.slane %v1850, 4
  %v1856 = vrot.slane %v1852, 4
  %v1857 = vrot.slane %v1854, 4
  %vm1858 = vcmask 154624
  %v1859 = vsel %vm1858, %v1855, %v1850
  %vm1860 = vcmask 1043456
  %v1861 = vsel %vm1860, %v1855, %v1856
  %v1862 = vsel %vm1858, %v1861, %v1852
  %v1863 = vsel %vm1860, %v1856, %v1857
  %v1864 = vsel %vm1858, %v1863, %v1854
  %vm1868 = vcmask 1043608
  %vm1869 = vcmask 1047556
  %vm1870 = vmor %vm1869, %vm1868
  %1871 = vst.msk [vmem:[%s4] sm:$0xff] %vm1870, %v1859
  %1872 = vst [vmem:[%s4 + $0x8] sm:$0xff] %v1862
  %vm1873 = vcmask 220164
  %vm1874 = vmor %vm1873, %vm1824
  %1875 = vst.msk [vmem:[%s4 + $0x10] sm:$0xff] %vm1874, %v1864
  // Predicated region
  $region18: #{encoder_forward.9} parent=0 // pred_check
    _
  $region19: #{encoder_forward.9} parent=0 // pred_check_branch
    %1877 = sbr.rel (0) target = $region21
  $region20: #{encoder_forward.9} parent=0 // pred_region
    _
  $region21: #{encoder_forward.9} parent=0 // pred_fallthru
    _
  // Predicated region
  $region22: #{encoder_forward.9} parent=0 // pred_check
    _
  $region23: #{encoder_forward.9} parent=0 // pred_check_branch
    %1879 = sbr.rel (0) target = $region25
  $region24: #{encoder_forward.9} parent=0 // pred_region
    _
  $region25: #{encoder_forward.9} parent=0 // pred_fallthru
    _

// kernel: encoder_forward.11
$region0: #{encoder_forward.11}
  #allocation0 [shape = 'u32[]', space=smem, size = 0x4, offset = 0x4, fixed_abs, tag = 'smem constant byte address 0x4 - core index']
  #allocation1 [shape = 'u32[144,128]{1,0:T(1,128)}', space=vmem, size = 0x12000, scoped, tag = 'internal scratch']
  %s0 = inlined_call_operand.vmem [shape: bf16[8,72], index: 0, kind: input, shape index: {}]
  %s1 = inlined_call_operand.vmem [shape: bf16[72,128], index: 1, kind: input, shape index: {}]
  %s2 = inlined_call_operand.vmem [shape: f32[8,1], index: 2, kind: input, shape index: {}]
  %s3 = inlined_call_operand.vmem [shape: bf16[8,128], index: 3, kind: output, shape index: {}]
  %s4 = sld [smem:[#allocation0]]
  $region22: #{encoder_forward.11} parent=0
    _
  %s6 = ssub.s32 1, %s4
  %s7 = scalar_select 0, %s6, %s4
  // Predicated region
  $region2: #{encoder_forward.11} parent=0 // pred_check
    _
  $region3: #{encoder_forward.11} parent=0 // pred_check_branch
    %9 = sbr.rel (0) target = $region5
  $region4: #{encoder_forward.11} parent=0 // pred_region
    _
  $region5: #{encoder_forward.11} parent=0 // pred_fallthru
    _
  // Predicated region
  $region6: #{encoder_forward.11} parent=0 // pred_check
    _
  $region7: #{encoder_forward.11} parent=0 // pred_check_branch
    %11 = sbr.rel (0) target = $region9
  $region8: #{encoder_forward.11} parent=0 // pred_region
    _
  $region9: #{encoder_forward.11} parent=0 // pred_fallthru
    _
  // Predicated region
  $region10: #{encoder_forward.11} parent=0 // pred_check
    _
  $region11: #{encoder_forward.11} parent=0 // pred_check_branch
    %13 = sbr.rel (0) target = $region13
  $region12: #{encoder_forward.11} parent=0 // pred_region
    _
  $region13: #{encoder_forward.11} parent=0 // pred_fallthru
    _
  %v15 = vld [vmem:[%s0] sm:$0xf]
  %v16 = vld [vmem:[%s1] sm:$0xf]
  %v17 = vld [vmem:[%s1 + $0x4] sm:$0xf]
  %v18 = vld [vmem:[%s1 + $0x8] sm:$0xf]
  %v19 = vld [vmem:[%s1 + $0xc] sm:$0xf]
  %v20 = vld [vmem:[%s1 + $0x10] sm:$0xf]
  %v21 = vld [vmem:[%s1 + $0x14] sm:$0xf]
  %v22 = vld [vmem:[%s1 + $0x18] sm:$0xf]
  %v23 = vld [vmem:[%s1 + $0x1c] sm:$0xf]
  %v24 = vld [vmem:[%s1 + $0x20] sm:$0xf]
  %v25 = vld [vmem:[%s2] sm:$0xff]
  %27 = vset.pattern.permute.xlu0 0
  %28 = vperm.xlu0 %27, %v25
  %v29 = vpop.permute.xlu0 %28
  %v40 = vunpack.c.l.b16 %v16
  %v41 = vunpack.c.l.b16 %v17
  %v42 = vunpack.c.l.b16 %v18
  %v43 = vunpack.c.l.b16 %v19
  %v44 = vunpack.c.l.b16 %v20
  %v45 = vunpack.c.l.b16 %v21
  %v46 = vunpack.c.l.b16 %v22
  %v47 = vunpack.c.l.b16 %v23
  %v48 = vunpack.c.l.b16 %v24
  %v49 = vpack.c.b16 %v41, %v40
  %v50 = vpack.c.b16 %v43, %v42
  %v51 = vpack.c.b16 %v45, %v44
  %v52 = vpack.c.b16 %v47, %v46
  %v53 = vpack.c.b16 %v48, %v48
  %vm58 = vcmask 588800
  %v60 = vsel %vm58, %v15, 0
  %vm62 = vcmask 1043456
  %v64 = vsel %vm62, %v53, 0
  %66 = vmatprep.subr.bf16.mxu0 0
  %67 = vmatpush1.bf16.msra.mxu0 %v49
  %68 = vmatprep.subr.bf16.mxu0 0
  %69 = vmatpush1.bf16.msra.mxu0 %v50
  %70 = vmatprep.subr.bf16.mxu0 0
  %71 = vmatpush1.bf16.msra.mxu0 %v51
  %72 = vmatprep.subr.bf16.mxu0 0
  %73 = vmatpush1.bf16.msra.mxu0 %v52
  %74 = vmatprep.subr.bf16.mxu0 0
  %75 = vmatpush1.bf16.msra.mxu0 %v64
  %76 = vmatprep.subr.bf16.mxu0 0
  %77 = vmatpush1.bf16.msra.mxu0 0
  %78 = vmatprep.subr.bf16.mxu0 0
  %79 = vmatpush1.bf16.msra.mxu0 0
  %80 = vmatprep.subr.bf16.mxu0 0
  %81 = vmatpush1.bf16.msra.mxu0 0
  %82 = vmatprep.subr.bf16.mxu0 0
  %83 = vmatpush1.bf16.msra.mxu0 0
  %84 = vmatprep.subr.bf16.mxu0 0
  %85 = vmatpush1.bf16.msra.mxu0 0
  %86 = vmatprep.subr.bf16.mxu0 0
  %87 = vmatpush1.bf16.msra.mxu0 0
  %88 = vmatprep.subr.bf16.mxu0 0
  %89 = vmatpush1.bf16.msra.mxu0 0
  %90 = vmatprep.subr.bf16.mxu0 0
  %91 = vmatpush1.bf16.msra.mxu0 0
  %92 = vmatprep.subr.bf16.mxu0 0
  %93 = vmatpush1.bf16.msra.mxu0 0
  %94 = vmatprep.subr.bf16.mxu0 0
  %95 = vmatpush1.bf16.msra.mxu0 0
  %96 = vmatprep.subr.bf16.mxu0 0
  %97 = vmatpush1.bf16.msra.mxu0 0
  %98 = vmatprep.mubr.bf16.mxu0 0
  %99 = vmatmul.mubr.bf16.gmra.mrb[0].mxu0 %v60
  %v100 = vpop.f32.mrb[0].mxu0
  %v101 = vadd.f32 %v29, %v100
  %v102 = vpop.f32.mrb[0].mxu0
  %v103 = vpop.f32.mrb[0].mxu0
  %v104 = vpop.f32.mrb[0].mxu0
  %105 = vdwg.mxu0
  %v106 = vpack.c.bf16 %v101, %v101
  %107 = vst [vmem:[%s3] sm:$0xf] %v106
  // Predicated region
  $region14: #{encoder_forward.11} parent=0 // pred_check
    _
  $region15: #{encoder_forward.11} parent=0 // pred_check_branch
    %109 = sbr.rel (0) target = $region17
  $region16: #{encoder_forward.11} parent=0 // pred_region
    _
  $region17: #{encoder_forward.11} parent=0 // pred_fallthru
    _
  // Predicated region
  $region18: #{encoder_forward.11} parent=0 // pred_check
    _
  $region19: #{encoder_forward.11} parent=0 // pred_check_branch
    %111 = sbr.rel (0) target = $region21
  $region20: #{encoder_forward.11} parent=0 // pred_region
    _
  $region21: #{encoder_forward.11} parent=0 // pred_fallthru
    _

// kernel: encoder_forward.10
$region0: #{encoder_forward.10}
  #allocation0 [shape = 'u32[]', space=smem, size = 0x4, offset = 0x4, fixed_abs, tag = 'smem constant byte address 0x4 - core index']
  #allocation1 [shape = 'u32[144,128]{1,0:T(1,128)}', space=vmem, size = 0x12000, scoped, tag = 'internal scratch']
  #allocation2 [shape = 'bf16[8,686]{1,0:T(8,128)(2,1)}', space=vmem, size = 0x3000, scoped, tag = 'scratch operand']
  #allocation3 [shape = 'bf16[8,686]{1,0:T(8,128)(2,1)}', space=vmem, size = 0x3000, scoped, tag = 'scratch operand']
  %s0 = inlined_call_operand.vmem [shape: bf16[8,686], index: 0, kind: input, shape index: {}]
  %s1 = inlined_call_operand.vmem [shape: f32[1,686], index: 1, kind: input, shape index: {}]
  %s2 = inlined_call_operand.vmem [shape: bf16[9,8,8], index: 2, kind: input, shape index: {}]
  %s3 = inlined_call_operand.vmem [shape: f32[8,1], index: 3, kind: input, shape index: {}, may-alias: {3,5,7,9}]
  %s4 = inlined_call_operand.vmem [shape: bf16[9,8,8], index: 4, kind: input, shape index: {}]
  %s5 = inlined_call_operand.vmem [shape: f32[8,1], index: 5, kind: input, shape index: {}, may-alias: {3,5,7,9}]
  %s6 = inlined_call_operand.vmem [shape: f32[8,1], index: 6, kind: input, shape index: {}, may-alias: {6,8}]
  %s7 = inlined_call_operand.vmem [shape: f32[8,1], index: 7, kind: input, shape index: {}, may-alias: {3,5,7,9}]
  %s8 = inlined_call_operand.vmem [shape: f32[8,1], index: 8, kind: input, shape index: {}, may-alias: {6,8}]
  %s9 = inlined_call_operand.vmem [shape: f32[8,1], index: 9, kind: input, shape index: {}, may-alias: {3,5,7,9}]
  %s10 = inlined_call_operand.vmem [shape: bf16[8,686], index: 10, kind: output, shape index: {}]
  %s11 = sld [smem:[#allocation0]]
  $region50: #{encoder_forward.10} parent=0
    _
  %s13 = ssub.s32 1, %s11
  %s14 = scalar_select 0, %s13, %s11
  // Predicated region
  $region2: #{encoder_forward.10} parent=0 // pred_check
    _
  $region3: #{encoder_forward.10} parent=0 // pred_check_branch
    %16 = sbr.rel (0) target = $region5
  $region4: #{encoder_forward.10} parent=0 // pred_region
    _
  $region5: #{encoder_forward.10} parent=0 // pred_fallthru
    _
  // Predicated region
  $region6: #{encoder_forward.10} parent=0 // pred_check
    _
  $region7: #{encoder_forward.10} parent=0 // pred_check_branch
    %18 = sbr.rel (0) target = $region9
  $region8: #{encoder_forward.10} parent=0 // pred_region
    _
  $region9: #{encoder_forward.10} parent=0 // pred_fallthru
    _
  // Predicated region
  $region10: #{encoder_forward.10} parent=0 // pred_check
    _
  $region11: #{encoder_forward.10} parent=0 // pred_check_branch
    %20 = sbr.rel (0) target = $region13
  $region12: #{encoder_forward.10} parent=0 // pred_region
    _
  $region13: #{encoder_forward.10} parent=0 // pred_fallthru
    _
  // Predicated region
  $region14: #{encoder_forward.10} parent=0 // pred_check
    _
  $region15: #{encoder_forward.10} parent=0 // pred_check_branch
    %22 = sbr.rel (0) target = $region17
  $region16: #{encoder_forward.10} parent=0 // pred_region
    _
  $region17: #{encoder_forward.10} parent=0 // pred_fallthru
    _
  // Predicated region
  $region18: #{encoder_forward.10} parent=0 // pred_check
    _
  $region19: #{encoder_forward.10} parent=0 // pred_check_branch
    %24 = sbr.rel (0) target = $region21
  $region20: #{encoder_forward.10} parent=0 // pred_region
    _
  $region21: #{encoder_forward.10} parent=0 // pred_fallthru
    _
  // Predicated region
  $region22: #{encoder_forward.10} parent=0 // pred_check
    _
  $region23: #{encoder_forward.10} parent=0 // pred_check_branch
    %26 = sbr.rel (0) target = $region25
  $region24: #{encoder_forward.10} parent=0 // pred_region
    _
  $region25: #{encoder_forward.10} parent=0 // pred_fallthru
    _
  // Predicated region
  $region26: #{encoder_forward.10} parent=0 // pred_check
    _
  $region27: #{encoder_forward.10} parent=0 // pred_check_branch
    %28 = sbr.rel (0) target = $region29
  $region28: #{encoder_forward.10} parent=0 // pred_region
    _
  $region29: #{encoder_forward.10} parent=0 // pred_fallthru
    _
  // Predicated region
  $region30: #{encoder_forward.10} parent=0 // pred_check
    _
  $region31: #{encoder_forward.10} parent=0 // pred_check_branch
    %30 = sbr.rel (0) target = $region33
  $region32: #{encoder_forward.10} parent=0 // pred_region
    _
  $region33: #{encoder_forward.10} parent=0 // pred_fallthru
    _
  // Predicated region
  $region34: #{encoder_forward.10} parent=0 // pred_check
    _
  $region35: #{encoder_forward.10} parent=0 // pred_check_branch
    %32 = sbr.rel (0) target = $region37
  $region36: #{encoder_forward.10} parent=0 // pred_region
    _
  $region37: #{encoder_forward.10} parent=0 // pred_fallthru
    _
  // Predicated region
  $region38: #{encoder_forward.10} parent=0 // pred_check
    _
  $region39: #{encoder_forward.10} parent=0 // pred_check_branch
    %34 = sbr.rel (0) target = $region41
  $region40: #{encoder_forward.10} parent=0 // pred_region
    _
  $region41: #{encoder_forward.10} parent=0 // pred_fallthru
    _
  %v36 = vld [vmem:[%s1] sm:$0x3f]
  %v37 = vld [vmem:[%s0] sm:$0xff]
  %v38 = vld [vmem:[%s0 + $0x8] sm:$0xff]
  %v39 = vld [vmem:[%s0 + $0x10] sm:$0xff]
  %v40 = vunpack.c.l.bf16 %v37
  %v41 = vunpack.c.h.bf16 %v37
  %v42 = vunpack.c.l.bf16 %v38
  %v43 = vunpack.c.h.bf16 %v38
  %v44 = vunpack.c.l.bf16 %v39
  %v45 = vunpack.c.h.bf16 %v39
  %v47 = vlaneseq
  %v48 = vshrl.u32 %v47, 7
  %v49 = vsub.s32 0, %v48
  %v50 = vrot.slane %v36, %v49
  %v51 = vlaneseq
  %v52 = vshrl.u32 %v51, 7
  %v53 = vsub.s32 1, %v52
  %v54 = vrot.slane %v36, %v53
  %v55 = vlaneseq
  %v56 = vshrl.u32 %v55, 7
  %v57 = vsub.s32 2, %v56
  %v58 = vrot.slane %v36, %v57
  %v59 = vlaneseq
  %v60 = vshrl.u32 %v59, 7
  %v61 = vsub.s32 3, %v60
  %v62 = vrot.slane %v36, %v61
  %v63 = vlaneseq
  %v64 = vshrl.u32 %v63, 7
  %v65 = vsub.s32 4, %v64
  %v66 = vrot.slane %v36, %v65
  %v67 = vlaneseq
  %v68 = vshrl.u32 %v67, 7
  %v69 = vsub.s32 5, %v68
  %v70 = vrot.slane %v36, %v69
  %v77 = vmul.f32 %v40, %v50
  %v78 = vmul.f32 %v41, %v54
  %v79 = vmul.f32 %v42, %v58
  %v80 = vmul.f32 %v43, %v62
  %v81 = vmul.f32 %v44, %v66
  %v82 = vmul.f32 %v45, %v70
  %v83 = vadd.f32 %v77, %v78
  %v84 = vadd.f32 %v83, %v79
  %v85 = vadd.f32 %v84, %v80
  %v86 = vadd.f32 %v85, %v81
  %vm87 = vcmask 375808
  %v88 = vsel %vm87, %v82, 0.0
  %v89 = vadd.f32 %v86, %v88
  %90 = vadd.xlane.f32.xlu0 %v89
  %v91 = vpop.xlane.xlu0 %90
  %v92 = vmul.f32 %v91, 0.001953125
  %v93 = vsub.f32 %v40, %v92
  %v94 = vsub.f32 %v41, %v92
  %v95 = vsub.f32 %v42, %v92
  %v96 = vsub.f32 %v43, %v92
  %v97 = vsub.f32 %v44, %v92
  %v98 = vsub.f32 %v45, %v92
  %v99 = vmul.f32 %v93, %v50
  %v100 = vmul.f32 %v94, %v54
  %v101 = vmul.f32 %v95, %v58
  %v102 = vmul.f32 %v96, %v62
  %v103 = vmul.f32 %v97, %v66
  %v104 = vmul.f32 %v98, %v70
  %v105 = vmul.f32 %v99, %v99
  %v106 = vmul.f32 %v100, %v100
  %v107 = vmul.f32 %v101, %v101
  %v108 = vmul.f32 %v102, %v102
  %v109 = vmul.f32 %v103, %v103
  %v110 = vmul.f32 %v104, %v104
  %v111 = vadd.f32 %v105, %v106
  %v112 = vadd.f32 %v111, %v107
  %v113 = vadd.f32 %v112, %v108
  %v114 = vadd.f32 %v113, %v109
  %v115 = vsel %vm87, %v110, 0.0
  %v116 = vadd.f32 %v114, %v115
  %117 = vadd.xlane.f32.xlu0 %v116
  %v118 = vpop.xlane.xlu0 %117
  %v119 = vmul.f32 %v118, 0.001953125
  %v120 = vadd.f32 %v119, 1e-05
  %v121 = vrsqrt.pop %v120
  %v122 = vmul.f32 %v93, %v121
  %v123 = vmul.f32 %v94, %v121
  %v124 = vmul.f32 %v95, %v121
  %v125 = vmul.f32 %v96, %v121
  %v126 = vmul.f32 %v97, %v121
  %v127 = vmul.f32 %v98, %v121
  %v128 = vld [vmem:[%s6] sm:$0xff]
  %130 = vset.pattern.permute.xlu0 0
  %131 = vperm.xlu0 %130, %v128
  %v132 = vpop.permute.xlu0 %131
  %v134 = vmul.f32 %v122, %v132
  %v135 = vmul.f32 %v123, %v132
  %v136 = vmul.f32 %v124, %v132
  %v137 = vmul.f32 %v125, %v132
  %v138 = vmul.f32 %v126, %v132
  %v139 = vmul.f32 %v127, %v132
  %v140 = vld [vmem:[%s7] sm:$0xff]
  %142 = vset.pattern.permute.xlu0 0
  %143 = vperm.xlu0 %142, %v140
  %v144 = vpop.permute.xlu0 %143
  %v146 = vadd.f32 %v134, %v144
  %v147 = vadd.f32 %v135, %v144
  %v148 = vadd.f32 %v136, %v144
  %v149 = vadd.f32 %v137, %v144
  %v150 = vadd.f32 %v138, %v144
  %v151 = vadd.f32 %v139, %v144
  %v152 = vmax.f32 %v146, 0.0
  %v153 = vmax.f32 %v147, 0.0
  %v154 = vmax.f32 %v148, 0.0
  %v155 = vmax.f32 %v149, 0.0
  %v156 = vmax.f32 %v150, 0.0
  %v157 = vmax.f32 %v151, 0.0
  %v158 = vmul.f32 %v152, %v50
  %v159 = vmul.f32 %v153, %v54
  %v160 = vmul.f32 %v154, %v58
  %v161 = vmul.f32 %v155, %v62
  %v162 = vmul.f32 %v156, %v66
  %v163 = vmul.f32 %v157, %v70
  %v164 = vpack.c.bf16 %v158, %v158
  %v165 = vpack.c.bf16 %v159, %v159
  %v166 = vpack.c.bf16 %v160, %v160
  %v167 = vpack.c.bf16 %v161, %v161
  %v168 = vpack.c.bf16 %v162, %v162
  %v169 = vpack.c.bf16 %v163, %v163
  %v176 = vunpack.c.l.b16 %v164
  %v177 = vunpack.c.l.b16 %v165
  %v178 = vunpack.c.l.b16 %v166
  %v179 = vunpack.c.l.b16 %v167
  %v180 = vunpack.c.l.b16 %v168
  %v181 = vunpack.c.l.b16 %v169
  %v182 = vpack.c.b16 %v177, %v176
  %v183 = vpack.c.b16 %v179, %v178
  %v184 = vpack.c.b16 %v181, %v180
  %188 = vst [vmem:[#allocation2] sm:$0xff] %v182
  %189 = vst [vmem:[#allocation2 + $0x8] sm:$0xff] %v183
  %vm190 = vcmask 1043456
  %vm191 = vcmask 375812
  %vm192 = vmor %vm191, %vm190
  %193 = vst.msk [vmem:[#allocation2 + $0x10] sm:$0xff] %vm192, %v184
  %v194 = vld [vmem:[%s2] sm:$0xf]
  %v195 = vld [vmem:[#allocation2] sm:$0xff]
  %v196 = vld [vmem:[#allocation2 + $0x8] sm:$0xff]
  %v197 = vld [vmem:[#allocation2 + $0x10] sm:$0xff]
  %s198 = scalar_lea.vmem %s2, 4
  %v199 = vld [vmem:[%s198] sm:$0xf]
  %v203 = vunpack.c.l.b16 %v195
  %v204 = vunpack.c.h.b16 %v195
  %v205 = vunpack.c.l.b16 %v196
  %v206 = vunpack.c.h.b16 %v196
  %v207 = vunpack.c.l.b16 %v197
  %v208 = vunpack.c.h.b16 %v197
  %v209 = vpack.c.b16 %v203, %v203
  %v210 = vpack.c.b16 %v204, %v204
  %v211 = vpack.c.b16 %v205, %v205
  %v212 = vpack.c.b16 %v206, %v206
  %v213 = vpack.c.b16 %v207, %v207
  %v214 = vpack.c.b16 %v208, %v208
  %215 = vrot.lane.b32.xlu0 %v209, 127
  %v216 = vpop.permute.xlu0 %215
  %217 = vrot.lane.b32.xlu0 %v210, 127
  %v218 = vpop.permute.xlu0 %217
  %219 = vrot.lane.b32.xlu0 %v211, 127
  %v220 = vpop.permute.xlu0 %219
  %221 = vrot.lane.b32.xlu0 %v212, 127
  %v222 = vpop.permute.xlu0 %221
  %223 = vrot.lane.b32.xlu0 %v213, 127
  %v224 = vpop.permute.xlu0 %223
  %225 = vrot.lane.b32.xlu0 %v214, 127
  %v226 = vpop.permute.xlu0 %225
  %vm227 = vcmask 1039360
  %v228 = vsel %vm227, %v216, %v218
  %v229 = vsel %vm227, %v218, %v220
  %v230 = vsel %vm227, %v220, %v222
  %v231 = vsel %vm227, %v222, %v224
  %v232 = vsel %vm227, %v224, %v226
  %vm233 = vcmask 64512
  %v235 = vsel %vm233, %v199, 0
  %v238 = vsel %vm190, %v228, 0
  %v241 = vsel %vm190, %v229, 0
  %v244 = vsel %vm190, %v230, 0
  %v247 = vsel %vm190, %v231, 0
  %v250 = vsel %vm190, %v232, 0
  %v253 = vsel %vm190, %v226, 0
  %255 = vmatprep.subr.bf16.mxu0 %v241
  %256 = vmatpush1.bf16.msra.mxu0 %v238
  %257 = vmatprep.subr.bf16.mxu0 0
  %258 = vmatpush1.bf16.msra.mxu0 0
  %259 = vmatprep.subr.bf16.mxu0 0
  %260 = vmatpush1.bf16.msra.mxu0 0
  %261 = vmatprep.subr.bf16.mxu0 0
  %262 = vmatpush1.bf16.msra.mxu0 0
  %263 = vmatprep.subr.bf16.mxu0 0
  %264 = vmatpush1.bf16.msra.mxu0 0
  %265 = vmatprep.subr.bf16.mxu0 0
  %266 = vmatpush1.bf16.msra.mxu0 0
  %267 = vmatprep.subr.bf16.mxu0 0
  %268 = vmatpush1.bf16.msra.mxu0 0
  %269 = vmatprep.subr.bf16.mxu0 0
  %270 = vmatpush1.bf16.msra.mxu0 0
  %271 = vmatprep.subr.bf16.mxu0 0
  %272 = vmatpush1.bf16.msra.mxu0 0
  %273 = vmatprep.subr.bf16.mxu0 0
  %274 = vmatpush1.bf16.msra.mxu0 0
  %275 = vmatprep.subr.bf16.mxu0 0
  %276 = vmatpush1.bf16.msra.mxu0 0
  %277 = vmatprep.subr.bf16.mxu0 0
  %278 = vmatpush1.bf16.msra.mxu0 0
  %279 = vmatprep.subr.bf16.mxu0 0
  %280 = vmatpush1.bf16.msra.mxu0 0
  %281 = vmatprep.subr.bf16.mxu0 0
  %282 = vmatpush1.bf16.msra.mxu0 0
  %283 = vmatprep.subr.bf16.mxu0 0
  %284 = vmatpush1.bf16.msra.mxu0 0
  %285 = vmatprep.subr.bf16.mxu0 0
  %286 = vmatpush1.bf16.msra.mxu0 0
  %287 = vmatprep.mubr.bf16.mxu0 0
  %288 = vmatmul.mubr.bf16.gmra.mrb[0].mxu0 %v235
  %v289 = vpop.f32.mrb[0].mxu0
  %v290 = vadd.f32 0.0, %v289
  %v291 = vpop.f32.mrb[0].mxu0
  %v292 = vadd.f32 0.0, %v291
  %v293 = vpop.f32.mrb[0].mxu0
  %v294 = vpop.f32.mrb[0].mxu0
  %295 = vdwg.mxu0
  %296 = vmatprep.subr.bf16.mxu0 %v247
  %297 = vmatpush1.bf16.msra.mxu0 %v244
  %298 = vmatprep.subr.bf16.mxu0 0
  %299 = vmatpush1.bf16.msra.mxu0 0
  %300 = vmatprep.subr.bf16.mxu0 0
  %301 = vmatpush1.bf16.msra.mxu0 0
  %302 = vmatprep.subr.bf16.mxu0 0
  %303 = vmatpush1.bf16.msra.mxu0 0
  %304 = vmatprep.subr.bf16.mxu0 0
  %305 = vmatpush1.bf16.msra.mxu0 0
  %306 = vmatprep.subr.bf16.mxu0 0
  %307 = vmatpush1.bf16.msra.mxu0 0
  %308 = vmatprep.subr.bf16.mxu0 0
  %309 = vmatpush1.bf16.msra.mxu0 0
  %310 = vmatprep.subr.bf16.mxu0 0
  %311 = vmatpush1.bf16.msra.mxu0 0
  %312 = vmatprep.subr.bf16.mxu0 0
  %313 = vmatpush1.bf16.msra.mxu0 0
  %314 = vmatprep.subr.bf16.mxu0 0
  %315 = vmatpush1.bf16.msra.mxu0 0
  %316 = vmatprep.subr.bf16.mxu0 0
  %317 = vmatpush1.bf16.msra.mxu0 0
  %318 = vmatprep.subr.bf16.mxu0 0
  %319 = vmatpush1.bf16.msra.mxu0 0
  %320 = vmatprep.subr.bf16.mxu0 0
  %321 = vmatpush1.bf16.msra.mxu0 0
  %322 = vmatprep.subr.bf16.mxu0 0
  %323 = vmatpush1.bf16.msra.mxu0 0
  %324 = vmatprep.subr.bf16.mxu0 0
  %325 = vmatpush1.bf16.msra.mxu0 0
  %326 = vmatprep.subr.bf16.mxu0 0
  %327 = vmatpush1.bf16.msra.mxu0 0
  %328 = vmatprep.mubr.bf16.mxu0 0
  %329 = vmatmul.mubr.bf16.gmra.mrb[0].mxu0 %v235
  %v330 = vpop.f32.mrb[0].mxu0
  %v331 = vadd.f32 0.0, %v330
  %v332 = vpop.f32.mrb[0].mxu0
  %v333 = vadd.f32 0.0, %v332
  %v334 = vpop.f32.mrb[0].mxu0
  %v335 = vpop.f32.mrb[0].mxu0
  %336 = vdwg.mxu0
  %337 = vmatprep.subr.bf16.mxu0 %v253
  %338 = vmatpush1.bf16.msra.mxu0 %v250
  %339 = vmatprep.subr.bf16.mxu0 0
  %340 = vmatpush1.bf16.msra.mxu0 0
  %341 = vmatprep.subr.bf16.mxu0 0
  %342 = vmatpush1.bf16.msra.mxu0 0
  %343 = vmatprep.subr.bf16.mxu0 0
  %344 = vmatpush1.bf16.msra.mxu0 0
  %345 = vmatprep.subr.bf16.mxu0 0
  %346 = vmatpush1.bf16.msra.mxu0 0
  %347 = vmatprep.subr.bf16.mxu0 0
  %348 = vmatpush1.bf16.msra.mxu0 0
  %349 = vmatprep.subr.bf16.mxu0 0
  %350 = vmatpush1.bf16.msra.mxu0 0
  %351 = vmatprep.subr.bf16.mxu0 0
  %352 = vmatpush1.bf16.msra.mxu0 0
  %353 = vmatprep.subr.bf16.mxu0 0
  %354 = vmatpush1.bf16.msra.mxu0 0
  %355 = vmatprep.subr.bf16.mxu0 0
  %356 = vmatpush1.bf16.msra.mxu0 0
  %357 = vmatprep.subr.bf16.mxu0 0
  %358 = vmatpush1.bf16.msra.mxu0 0
  %359 = vmatprep.subr.bf16.mxu0 0
  %360 = vmatpush1.bf16.msra.mxu0 0
  %361 = vmatprep.subr.bf16.mxu0 0
  %362 = vmatpush1.bf16.msra.mxu0 0
  %363 = vmatprep.subr.bf16.mxu0 0
  %364 = vmatpush1.bf16.msra.mxu0 0
  %365 = vmatprep.subr.bf16.mxu0 0
  %366 = vmatpush1.bf16.msra.mxu0 0
  %367 = vmatprep.subr.bf16.mxu0 0
  %368 = vmatpush1.bf16.msra.mxu0 0
  %369 = vmatprep.mubr.bf16.mxu0 0
  %370 = vmatmul.mubr.bf16.gmra.mrb[0].mxu0 %v235
  %v371 = vpop.f32.mrb[0].mxu0
  %v372 = vadd.f32 0.0, %v371
  %v373 = vpop.f32.mrb[0].mxu0
  %v374 = vadd.f32 0.0, %v373
  %v375 = vpop.f32.mrb[0].mxu0
  %v376 = vpop.f32.mrb[0].mxu0
  %377 = vdwg.mxu0
  %v379 = vsel %vm233, %v194, 0
  %v382 = vsel %vm190, %v209, 0
  %v385 = vsel %vm190, %v210, 0
  %v388 = vsel %vm190, %v211, 0
  %v391 = vsel %vm190, %v212, 0
  %v394 = vsel %vm190, %v213, 0
  %v397 = vsel %vm190, %v214, 0
  %399 = vmatprep.subr.bf16.mxu0 %v385
  %400 = vmatpush1.bf16.msra.mxu0 %v382
  %401 = vmatprep.subr.bf16.mxu0 0
  %402 = vmatpush1.bf16.msra.mxu0 0
  %403 = vmatprep.subr.bf16.mxu0 0
  %404 = vmatpush1.bf16.msra.mxu0 0
  %405 = vmatprep.subr.bf16.mxu0 0
  %406 = vmatpush1.bf16.msra.mxu0 0
  %407 = vmatprep.subr.bf16.mxu0 0
  %408 = vmatpush1.bf16.msra.mxu0 0
  %409 = vmatprep.subr.bf16.mxu0 0
  %410 = vmatpush1.bf16.msra.mxu0 0
  %411 = vmatprep.subr.bf16.mxu0 0
  %412 = vmatpush1.bf16.msra.mxu0 0
  %413 = vmatprep.subr.bf16.mxu0 0
  %414 = vmatpush1.bf16.msra.mxu0 0
  %415 = vmatprep.subr.bf16.mxu0 0
  %416 = vmatpush1.bf16.msra.mxu0 0
  %417 = vmatprep.subr.bf16.mxu0 0
  %418 = vmatpush1.bf16.msra.mxu0 0
  %419 = vmatprep.subr.bf16.mxu0 0
  %420 = vmatpush1.bf16.msra.mxu0 0
  %421 = vmatprep.subr.bf16.mxu0 0
  %422 = vmatpush1.bf16.msra.mxu0 0
  %423 = vmatprep.subr.bf16.mxu0 0
  %424 = vmatpush1.bf16.msra.mxu0 0
  %425 = vmatprep.subr.bf16.mxu0 0
  %426 = vmatpush1.bf16.msra.mxu0 0
  %427 = vmatprep.subr.bf16.mxu0 0
  %428 = vmatpush1.bf16.msra.mxu0 0
  %429 = vmatprep.subr.bf16.mxu0 0
  %430 = vmatpush1.bf16.msra.mxu0 0
  %431 = vmatprep.mubr.bf16.mxu0 0
  %432 = vmatmul.mubr.bf16.gmra.mrb[0].mxu0 %v379
  %v433 = vpop.f32.mrb[0].mxu0
  %v434 = vadd.f32 %v290, %v433
  %v435 = vpop.f32.mrb[0].mxu0
  %v436 = vadd.f32 %v292, %v435
  %v437 = vpop.f32.mrb[0].mxu0
  %v438 = vpop.f32.mrb[0].mxu0
  %439 = vdwg.mxu0
  %440 = vmatprep.subr.bf16.mxu0 %v391
  %441 = vmatpush1.bf16.msra.mxu0 %v388
  %442 = vmatprep.subr.bf16.mxu0 0
  %443 = vmatpush1.bf16.msra.mxu0 0
  %444 = vmatprep.subr.bf16.mxu0 0
  %445 = vmatpush1.bf16.msra.mxu0 0
  %446 = vmatprep.subr.bf16.mxu0 0
  %447 = vmatpush1.bf16.msra.mxu0 0
  %448 = vmatprep.subr.bf16.mxu0 0
  %449 = vmatpush1.bf16.msra.mxu0 0
  %450 = vmatprep.subr.bf16.mxu0 0
  %451 = vmatpush1.bf16.msra.mxu0 0
  %452 = vmatprep.subr.bf16.mxu0 0
  %453 = vmatpush1.bf16.msra.mxu0 0
  %454 = vmatprep.subr.bf16.mxu0 0
  %455 = vmatpush1.bf16.msra.mxu0 0
  %456 = vmatprep.subr.bf16.mxu0 0
  %457 = vmatpush1.bf16.msra.mxu0 0
  %458 = vmatprep.subr.bf16.mxu0 0
  %459 = vmatpush1.bf16.msra.mxu0 0
  %460 = vmatprep.subr.bf16.mxu0 0
  %461 = vmatpush1.bf16.msra.mxu0 0
  %462 = vmatprep.subr.bf16.mxu0 0
  %463 = vmatpush1.bf16.msra.mxu0 0
  %464 = vmatprep.subr.bf16.mxu0 0
  %465 = vmatpush1.bf16.msra.mxu0 0
  %466 = vmatprep.subr.bf16.mxu0 0
  %467 = vmatpush1.bf16.msra.mxu0 0
  %468 = vmatprep.subr.bf16.mxu0 0
  %469 = vmatpush1.bf16.msra.mxu0 0
  %470 = vmatprep.subr.bf16.mxu0 0
  %471 = vmatpush1.bf16.msra.mxu0 0
  %472 = vmatprep.mubr.bf16.mxu0 0
  %473 = vmatmul.mubr.bf16.gmra.mrb[0].mxu0 %v379
  %v474 = vpop.f32.mrb[0].mxu0
  %v475 = vadd.f32 %v331, %v474
  %v476 = vpop.f32.mrb[0].mxu0
  %v477 = vadd.f32 %v333, %v476
  %v478 = vpop.f32.mrb[0].mxu0
  %v479 = vpop.f32.mrb[0].mxu0
  %480 = vdwg.mxu0
  %481 = vmatprep.subr.bf16.mxu0 %v397
  %482 = vmatpush1.bf16.msra.mxu0 %v394
  %483 = vmatprep.subr.bf16.mxu0 0
  %484 = vmatpush1.bf16.msra.mxu0 0
  %485 = vmatprep.subr.bf16.mxu0 0
  %486 = vmatpush1.bf16.msra.mxu0 0
  %487 = vmatprep.subr.bf16.mxu0 0
  %488 = vmatpush1.bf16.msra.mxu0 0
  %489 = vmatprep.subr.bf16.mxu0 0
  %490 = vmatpush1.bf16.msra.mxu0 0
  %491 = vmatprep.subr.bf16.mxu0 0
  %492 = vmatpush1.bf16.msra.mxu0 0
  %493 = vmatprep.subr.bf16.mxu0 0
  %494 = vmatpush1.bf16.msra.mxu0 0
  %495 = vmatprep.subr.bf16.mxu0 0
  %496 = vmatpush1.bf16.msra.mxu0 0
  %497 = vmatprep.subr.bf16.mxu0 0
  %498 = vmatpush1.bf16.msra.mxu0 0
  %499 = vmatprep.subr.bf16.mxu0 0
  %500 = vmatpush1.bf16.msra.mxu0 0
  %501 = vmatprep.subr.bf16.mxu0 0
  %502 = vmatpush1.bf16.msra.mxu0 0
  %503 = vmatprep.subr.bf16.mxu0 0
  %504 = vmatpush1.bf16.msra.mxu0 0
  %505 = vmatprep.subr.bf16.mxu0 0
  %506 = vmatpush1.bf16.msra.mxu0 0
  %507 = vmatprep.subr.bf16.mxu0 0
  %508 = vmatpush1.bf16.msra.mxu0 0
  %509 = vmatprep.subr.bf16.mxu0 0
  %510 = vmatpush1.bf16.msra.mxu0 0
  %511 = vmatprep.subr.bf16.mxu0 0
  %512 = vmatpush1.bf16.msra.mxu0 0
  %513 = vmatprep.mubr.bf16.mxu0 0
  %514 = vmatmul.mubr.bf16.gmra.mrb[0].mxu0 %v379
  %v515 = vpop.f32.mrb[0].mxu0
  %v516 = vadd.f32 %v372, %v515
  %v517 = vpop.f32.mrb[0].mxu0
  %v518 = vadd.f32 %v374, %v517
  %v519 = vpop.f32.mrb[0].mxu0
  %v520 = vpop.f32.mrb[0].mxu0
  %521 = vdwg.mxu0
  %s522 = scalar_lea.vmem %s2, 8
  %v523 = vld [vmem:[%s522] sm:$0xf]
  %524 = vrot.lane.b32.xlu0 %v209, 126
  %v525 = vpop.permute.xlu0 %524
  %526 = vrot.lane.b32.xlu0 %v210, 126
  %v527 = vpop.permute.xlu0 %526
  %528 = vrot.lane.b32.xlu0 %v211, 126
  %v529 = vpop.permute.xlu0 %528
  %530 = vrot.lane.b32.xlu0 %v212, 126
  %v531 = vpop.permute.xlu0 %530
  %532 = vrot.lane.b32.xlu0 %v213, 126
  %v533 = vpop.permute.xlu0 %532
  %534 = vrot.lane.b32.xlu0 %v214, 126
  %v535 = vpop.permute.xlu0 %534
  %vm536 = vcmask 1031168
  %v537 = vsel %vm536, %v525, %v527
  %v538 = vsel %vm536, %v527, %v529
  %v539 = vsel %vm536, %v529, %v531
  %v540 = vsel %vm536, %v531, %v533
  %v541 = vsel %vm536, %v533, %v535
  %v543 = vsel %vm233, %v523, 0
  %v546 = vsel %vm190, %v537, 0
  %v549 = vsel %vm190, %v538, 0
  %v552 = vsel %vm190, %v539, 0
  %v555 = vsel %vm190, %v540, 0
  %v558 = vsel %vm190, %v541, 0
  %v561 = vsel %vm190, %v535, 0
  %563 = vmatprep.subr.bf16.mxu0 %v549
  %564 = vmatpush1.bf16.msra.mxu0 %v546
  %565 = vmatprep.subr.bf16.mxu0 0
  %566 = vmatpush1.bf16.msra.mxu0 0
  %567 = vmatprep.subr.bf16.mxu0 0
  %568 = vmatpush1.bf16.msra.mxu0 0
  %569 = vmatprep.subr.bf16.mxu0 0
  %570 = vmatpush1.bf16.msra.mxu0 0
  %571 = vmatprep.subr.bf16.mxu0 0
  %572 = vmatpush1.bf16.msra.mxu0 0
  %573 = vmatprep.subr.bf16.mxu0 0
  %574 = vmatpush1.bf16.msra.mxu0 0
  %575 = vmatprep.subr.bf16.mxu0 0
  %576 = vmatpush1.bf16.msra.mxu0 0
  %577 = vmatprep.subr.bf16.mxu0 0
  %578 = vmatpush1.bf16.msra.mxu0 0
  %579 = vmatprep.subr.bf16.mxu0 0
  %580 = vmatpush1.bf16.msra.mxu0 0
  %581 = vmatprep.subr.bf16.mxu0 0
  %582 = vmatpush1.bf16.msra.mxu0 0
  %583 = vmatprep.subr.bf16.mxu0 0
  %584 = vmatpush1.bf16.msra.mxu0 0
  %585 = vmatprep.subr.bf16.mxu0 0
  %586 = vmatpush1.bf16.msra.mxu0 0
  %587 = vmatprep.subr.bf16.mxu0 0
  %588 = vmatpush1.bf16.msra.mxu0 0
  %589 = vmatprep.subr.bf16.mxu0 0
  %590 = vmatpush1.bf16.msra.mxu0 0
  %591 = vmatprep.subr.bf16.mxu0 0
  %592 = vmatpush1.bf16.msra.mxu0 0
  %593 = vmatprep.subr.bf16.mxu0 0
  %594 = vmatpush1.bf16.msra.mxu0 0
  %595 = vmatprep.mubr.bf16.mxu0 0
  %596 = vmatmul.mubr.bf16.gmra.mrb[0].mxu0 %v543
  %v597 = vpop.f32.mrb[0].mxu0
  %v598 = vadd.f32 0.0, %v597
  %v599 = vpop.f32.mrb[0].mxu0
  %v600 = vadd.f32 0.0, %v599
  %v601 = vpop.f32.mrb[0].mxu0
  %v602 = vpop.f32.mrb[0].mxu0
  %603 = vdwg.mxu0
  %604 = vmatprep.subr.bf16.mxu0 %v555
  %605 = vmatpush1.bf16.msra.mxu0 %v552
  %606 = vmatprep.subr.bf16.mxu0 0
  %607 = vmatpush1.bf16.msra.mxu0 0
  %608 = vmatprep.subr.bf16.mxu0 0
  %609 = vmatpush1.bf16.msra.mxu0 0
  %610 = vmatprep.subr.bf16.mxu0 0
  %611 = vmatpush1.bf16.msra.mxu0 0
  %612 = vmatprep.subr.bf16.mxu0 0
  %613 = vmatpush1.bf16.msra.mxu0 0
  %614 = vmatprep.subr.bf16.mxu0 0
  %615 = vmatpush1.bf16.msra.mxu0 0
  %616 = vmatprep.subr.bf16.mxu0 0
  %617 = vmatpush1.bf16.msra.mxu0 0
  %618 = vmatprep.subr.bf16.mxu0 0
  %619 = vmatpush1.bf16.msra.mxu0 0
  %620 = vmatprep.subr.bf16.mxu0 0
  %621 = vmatpush1.bf16.msra.mxu0 0
  %622 = vmatprep.subr.bf16.mxu0 0
  %623 = vmatpush1.bf16.msra.mxu0 0
  %624 = vmatprep.subr.bf16.mxu0 0
  %625 = vmatpush1.bf16.msra.mxu0 0
  %626 = vmatprep.subr.bf16.mxu0 0
  %627 = vmatpush1.bf16.msra.mxu0 0
  %628 = vmatprep.subr.bf16.mxu0 0
  %629 = vmatpush1.bf16.msra.mxu0 0
  %630 = vmatprep.subr.bf16.mxu0 0
  %631 = vmatpush1.bf16.msra.mxu0 0
  %632 = vmatprep.subr.bf16.mxu0 0
  %633 = vmatpush1.bf16.msra.mxu0 0
  %634 = vmatprep.subr.bf16.mxu0 0
  %635 = vmatpush1.bf16.msra.mxu0 0
  %636 = vmatprep.mubr.bf16.mxu0 0
  %637 = vmatmul.mubr.bf16.gmra.mrb[0].mxu0 %v543
  %v638 = vpop.f32.mrb[0].mxu0
  %v639 = vadd.f32 0.0, %v638
  %v640 = vpop.f32.mrb[0].mxu0
  %v641 = vadd.f32 0.0, %v640
  %v642 = vpop.f32.mrb[0].mxu0
  %v643 = vpop.f32.mrb[0].mxu0
  %644 = vdwg.mxu0
  %645 = vmatprep.subr.bf16.mxu0 %v561
  %646 = vmatpush1.bf16.msra.mxu0 %v558
  %647 = vmatprep.subr.bf16.mxu0 0
  %648 = vmatpush1.bf16.msra.mxu0 0
  %649 = vmatprep.subr.bf16.mxu0 0
  %650 = vmatpush1.bf16.msra.mxu0 0
  %651 = vmatprep.subr.bf16.mxu0 0
  %652 = vmatpush1.bf16.msra.mxu0 0
  %653 = vmatprep.subr.bf16.mxu0 0
  %654 = vmatpush1.bf16.msra.mxu0 0
  %655 = vmatprep.subr.bf16.mxu0 0
  %656 = vmatpush1.bf16.msra.mxu0 0
  %657 = vmatprep.subr.bf16.mxu0 0
  %658 = vmatpush1.bf16.msra.mxu0 0
  %659 = vmatprep.subr.bf16.mxu0 0
  %660 = vmatpush1.bf16.msra.mxu0 0
  %661 = vmatprep.subr.bf16.mxu0 0
  %662 = vmatpush1.bf16.msra.mxu0 0
  %663 = vmatprep.subr.bf16.mxu0 0
  %664 = vmatpush1.bf16.msra.mxu0 0
  %665 = vmatprep.subr.bf16.mxu0 0
  %666 = vmatpush1.bf16.msra.mxu0 0
  %667 = vmatprep.subr.bf16.mxu0 0
  %668 = vmatpush1.bf16.msra.mxu0 0
  %669 = vmatprep.subr.bf16.mxu0 0
  %670 = vmatpush1.bf16.msra.mxu0 0
  %671 = vmatprep.subr.bf16.mxu0 0
  %672 = vmatpush1.bf16.msra.mxu0 0
  %673 = vmatprep.subr.bf16.mxu0 0
  %674 = vmatpush1.bf16.msra.mxu0 0
  %675 = vmatprep.subr.bf16.mxu0 0
  %676 = vmatpush1.bf16.msra.mxu0 0
  %677 = vmatprep.mubr.bf16.mxu0 0
  %678 = vmatmul.mubr.bf16.gmra.mrb[0].mxu0 %v543
  %v679 = vpop.f32.mrb[0].mxu0
  %v680 = vadd.f32 0.0, %v679
  %v681 = vpop.f32.mrb[0].mxu0
  %v682 = vadd.f32 0.0, %v681
  %v683 = vpop.f32.mrb[0].mxu0
  %v684 = vpop.f32.mrb[0].mxu0
  %685 = vdwg.mxu0
  %v686 = vadd.f32 %v434, %v598
  %v687 = vadd.f32 %v436, %v600
  %v688 = vadd.f32 %v475, %v639
  %v689 = vadd.f32 %v477, %v641
  %v690 = vadd.f32 %v516, %v680
  %v691 = vadd.f32 %v518, %v682
  %s692 = scalar_lea.vmem %s2, 12
  %v693 = vld [vmem:[%s692] sm:$0xf]
  %694 = vrot.lane.b32.xlu0 %v209, 110
  %v695 = vpop.permute.xlu0 %694
  %696 = vrot.lane.b32.xlu0 %v210, 110
  %v697 = vpop.permute.xlu0 %696
  %698 = vrot.lane.b32.xlu0 %v211, 110
  %v699 = vpop.permute.xlu0 %698
  %700 = vrot.lane.b32.xlu0 %v212, 110
  %v701 = vpop.permute.xlu0 %700
  %702 = vrot.lane.b32.xlu0 %v213, 110
  %v703 = vpop.permute.xlu0 %702
  %704 = vrot.lane.b32.xlu0 %v214, 110
  %v705 = vpop.permute.xlu0 %704
  %vm706 = vcmask 900096
  %v707 = vsel %vm706, %v695, %v697
  %v708 = vsel %vm706, %v697, %v699
  %v709 = vsel %vm706, %v699, %v701
  %v710 = vsel %vm706, %v701, %v703
  %v711 = vsel %vm706, %v703, %v705
  %v713 = vsel %vm233, %v693, 0
  %v716 = vsel %vm190, %v707, 0
  %v719 = vsel %vm190, %v708, 0
  %v722 = vsel %vm190, %v709, 0
  %v725 = vsel %vm190, %v710, 0
  %v728 = vsel %vm190, %v711, 0
  %v731 = vsel %vm190, %v705, 0
  %733 = vmatprep.subr.bf16.mxu0 %v719
  %734 = vmatpush1.bf16.msra.mxu0 %v716
  %735 = vmatprep.subr.bf16.mxu0 0
  %736 = vmatpush1.bf16.msra.mxu0 0
  %737 = vmatprep.subr.bf16.mxu0 0
  %738 = vmatpush1.bf16.msra.mxu0 0
  %739 = vmatprep.subr.bf16.mxu0 0
  %740 = vmatpush1.bf16.msra.mxu0 0
  %741 = vmatprep.subr.bf16.mxu0 0
  %742 = vmatpush1.bf16.msra.mxu0 0
  %743 = vmatprep.subr.bf16.mxu0 0
  %744 = vmatpush1.bf16.msra.mxu0 0
  %745 = vmatprep.subr.bf16.mxu0 0
  %746 = vmatpush1.bf16.msra.mxu0 0
  %747 = vmatprep.subr.bf16.mxu0 0
  %748 = vmatpush1.bf16.msra.mxu0 0
  %749 = vmatprep.subr.bf16.mxu0 0
  %750 = vmatpush1.bf16.msra.mxu0 0
  %751 = vmatprep.subr.bf16.mxu0 0
  %752 = vmatpush1.bf16.msra.mxu0 0
  %753 = vmatprep.subr.bf16.mxu0 0
  %754 = vmatpush1.bf16.msra.mxu0 0
  %755 = vmatprep.subr.bf16.mxu0 0
  %756 = vmatpush1.bf16.msra.mxu0 0
  %757 = vmatprep.subr.bf16.mxu0 0
  %758 = vmatpush1.bf16.msra.mxu0 0
  %759 = vmatprep.subr.bf16.mxu0 0
  %760 = vmatpush1.bf16.msra.mxu0 0
  %761 = vmatprep.subr.bf16.mxu0 0
  %762 = vmatpush1.bf16.msra.mxu0 0
  %763 = vmatprep.subr.bf16.mxu0 0
  %764 = vmatpush1.bf16.msra.mxu0 0
  %765 = vmatprep.mubr.bf16.mxu0 0
  %766 = vmatmul.mubr.bf16.gmra.mrb[0].mxu0 %v713
  %v767 = vpop.f32.mrb[0].mxu0
  %v768 = vadd.f32 0.0, %v767
  %v769 = vpop.f32.mrb[0].mxu0
  %v770 = vadd.f32 0.0, %v769
  %v771 = vpop.f32.mrb[0].mxu0
  %v772 = vpop.f32.mrb[0].mxu0
  %773 = vdwg.mxu0
  %774 = vmatprep.subr.bf16.mxu0 %v725
  %775 = vmatpush1.bf16.msra.mxu0 %v722
  %776 = vmatprep.subr.bf16.mxu0 0
  %777 = vmatpush1.bf16.msra.mxu0 0
  %778 = vmatprep.subr.bf16.mxu0 0
  %779 = vmatpush1.bf16.msra.mxu0 0
  %780 = vmatprep.subr.bf16.mxu0 0
  %781 = vmatpush1.bf16.msra.mxu0 0
  %782 = vmatprep.subr.bf16.mxu0 0
  %783 = vmatpush1.bf16.msra.mxu0 0
  %784 = vmatprep.subr.bf16.mxu0 0
  %785 = vmatpush1.bf16.msra.mxu0 0
  %786 = vmatprep.subr.bf16.mxu0 0
  %787 = vmatpush1.bf16.msra.mxu0 0
  %788 = vmatprep.subr.bf16.mxu0 0
  %789 = vmatpush1.bf16.msra.mxu0 0
  %790 = vmatprep.subr.bf16.mxu0 0
  %791 = vmatpush1.bf16.msra.mxu0 0
  %792 = vmatprep.subr.bf16.mxu0 0
  %793 = vmatpush1.bf16.msra.mxu0 0
  %794 = vmatprep.subr.bf16.mxu0 0
  %795 = vmatpush1.bf16.msra.mxu0 0
  %796 = vmatprep.subr.bf16.mxu0 0
  %797 = vmatpush1.bf16.msra.mxu0 0
  %798 = vmatprep.subr.bf16.mxu0 0
  %799 = vmatpush1.bf16.msra.mxu0 0
  %800 = vmatprep.subr.bf16.mxu0 0
  %801 = vmatpush1.bf16.msra.mxu0 0
  %802 = vmatprep.subr.bf16.mxu0 0
  %803 = vmatpush1.bf16.msra.mxu0 0
  %804 = vmatprep.subr.bf16.mxu0 0
  %805 = vmatpush1.bf16.msra.mxu0 0
  %806 = vmatprep.mubr.bf16.mxu0 0
  %807 = vmatmul.mubr.bf16.gmra.mrb[0].mxu0 %v713
  %v808 = vpop.f32.mrb[0].mxu0
  %v809 = vadd.f32 0.0, %v808
  %v810 = vpop.f32.mrb[0].mxu0
  %v811 = vadd.f32 0.0, %v810
  %v812 = vpop.f32.mrb[0].mxu0
  %v813 = vpop.f32.mrb[0].mxu0
  %814 = vdwg.mxu0
  %815 = vmatprep.subr.bf16.mxu0 %v731
  %816 = vmatpush1.bf16.msra.mxu0 %v728
  %817 = vmatprep.subr.bf16.mxu0 0
  %818 = vmatpush1.bf16.msra.mxu0 0
  %819 = vmatprep.subr.bf16.mxu0 0
  %820 = vmatpush1.bf16.msra.mxu0 0
  %821 = vmatprep.subr.bf16.mxu0 0
  %822 = vmatpush1.bf16.msra.mxu0 0
  %823 = vmatprep.subr.bf16.mxu0 0
  %824 = vmatpush1.bf16.msra.mxu0 0
  %825 = vmatprep.subr.bf16.mxu0 0
  %826 = vmatpush1.bf16.msra.mxu0 0
  %827 = vmatprep.subr.bf16.mxu0 0
  %828 = vmatpush1.bf16.msra.mxu0 0
  %829 = vmatprep.subr.bf16.mxu0 0
  %830 = vmatpush1.bf16.msra.mxu0 0
  %831 = vmatprep.subr.bf16.mxu0 0
  %832 = vmatpush1.bf16.msra.mxu0 0
  %833 = vmatprep.subr.bf16.mxu0 0
  %834 = vmatpush1.bf16.msra.mxu0 0
  %835 = vmatprep.subr.bf16.mxu0 0
  %836 = vmatpush1.bf16.msra.mxu0 0
  %837 = vmatprep.subr.bf16.mxu0 0
  %838 = vmatpush1.bf16.msra.mxu0 0
  %839 = vmatprep.subr.bf16.mxu0 0
  %840 = vmatpush1.bf16.msra.mxu0 0
  %841 = vmatprep.subr.bf16.mxu0 0
  %842 = vmatpush1.bf16.msra.mxu0 0
  %843 = vmatprep.subr.bf16.mxu0 0
  %844 = vmatpush1.bf16.msra.mxu0 0
  %845 = vmatprep.subr.bf16.mxu0 0
  %846 = vmatpush1.bf16.msra.mxu0 0
  %847 = vmatprep.mubr.bf16.mxu0 0
  %848 = vmatmul.mubr.bf16.gmra.mrb[0].mxu0 %v713
  %v849 = vpop.f32.mrb[0].mxu0
  %v850 = vadd.f32 0.0, %v849
  %v851 = vpop.f32.mrb[0].mxu0
  %v852 = vadd.f32 0.0, %v851
  %v853 = vpop.f32.mrb[0].mxu0
  %v854 = vpop.f32.mrb[0].mxu0
  %855 = vdwg.mxu0
  %v856 = vadd.f32 %v686, %v768
  %v857 = vadd.f32 %v687, %v770
  %v858 = vadd.f32 %v688, %v809
  %v859 = vadd.f32 %v689, %v811
  %v860 = vadd.f32 %v690, %v850
  %v861 = vadd.f32 %v691, %v852
  %s862 = scalar_lea.vmem %s2, 16
  %v863 = vld [vmem:[%s862] sm:$0xf]
  %864 = vrot.lane.b32.xlu0 %v209, 109
  %v865 = vpop.permute.xlu0 %864
  %866 = vrot.lane.b32.xlu0 %v210, 109
  %v867 = vpop.permute.xlu0 %866
  %868 = vrot.lane.b32.xlu0 %v211, 109
  %v869 = vpop.permute.xlu0 %868
  %870 = vrot.lane.b32.xlu0 %v212, 109
  %v871 = vpop.permute.xlu0 %870
  %872 = vrot.lane.b32.xlu0 %v213, 109
  %v873 = vpop.permute.xlu0 %872
  %874 = vrot.lane.b32.xlu0 %v214, 109
  %v875 = vpop.permute.xlu0 %874
  %vm876 = vcmask 891904
  %v877 = vsel %vm876, %v865, %v867
  %v878 = vsel %vm876, %v867, %v869
  %v879 = vsel %vm876, %v869, %v871
  %v880 = vsel %vm876, %v871, %v873
  %v881 = vsel %vm876, %v873, %v875
  %v883 = vsel %vm233, %v863, 0
  %v886 = vsel %vm190, %v877, 0
  %v889 = vsel %vm190, %v878, 0
  %v892 = vsel %vm190, %v879, 0
  %v895 = vsel %vm190, %v880, 0
  %v898 = vsel %vm190, %v881, 0
  %v901 = vsel %vm190, %v875, 0
  %903 = vmatprep.subr.bf16.mxu0 %v889
  %904 = vmatpush1.bf16.msra.mxu0 %v886
  %905 = vmatprep.subr.bf16.mxu0 0
  %906 = vmatpush1.bf16.msra.mxu0 0
  %907 = vmatprep.subr.bf16.mxu0 0
  %908 = vmatpush1.bf16.msra.mxu0 0
  %909 = vmatprep.subr.bf16.mxu0 0
  %910 = vmatpush1.bf16.msra.mxu0 0
  %911 = vmatprep.subr.bf16.mxu0 0
  %912 = vmatpush1.bf16.msra.mxu0 0
  %913 = vmatprep.subr.bf16.mxu0 0
  %914 = vmatpush1.bf16.msra.mxu0 0
  %915 = vmatprep.subr.bf16.mxu0 0
  %916 = vmatpush1.bf16.msra.mxu0 0
  %917 = vmatprep.subr.bf16.mxu0 0
  %918 = vmatpush1.bf16.msra.mxu0 0
  %919 = vmatprep.subr.bf16.mxu0 0
  %920 = vmatpush1.bf16.msra.mxu0 0
  %921 = vmatprep.subr.bf16.mxu0 0
  %922 = vmatpush1.bf16.msra.mxu0 0
  %923 = vmatprep.subr.bf16.mxu0 0
  %924 = vmatpush1.bf16.msra.mxu0 0
  %925 = vmatprep.subr.bf16.mxu0 0
  %926 = vmatpush1.bf16.msra.mxu0 0
  %927 = vmatprep.subr.bf16.mxu0 0
  %928 = vmatpush1.bf16.msra.mxu0 0
  %929 = vmatprep.subr.bf16.mxu0 0
  %930 = vmatpush1.bf16.msra.mxu0 0
  %931 = vmatprep.subr.bf16.mxu0 0
  %932 = vmatpush1.bf16.msra.mxu0 0
  %933 = vmatprep.subr.bf16.mxu0 0
  %934 = vmatpush1.bf16.msra.mxu0 0
  %935 = vmatprep.mubr.bf16.mxu0 0
  %936 = vmatmul.mubr.bf16.gmra.mrb[0].mxu0 %v883
  %v937 = vpop.f32.mrb[0].mxu0
  %v938 = vadd.f32 0.0, %v937
  %v939 = vpop.f32.mrb[0].mxu0
  %v940 = vadd.f32 0.0, %v939
  %v941 = vpop.f32.mrb[0].mxu0
  %v942 = vpop.f32.mrb[0].mxu0
  %943 = vdwg.mxu0
  %944 = vmatprep.subr.bf16.mxu0 %v895
  %945 = vmatpush1.bf16.msra.mxu0 %v892
  %946 = vmatprep.subr.bf16.mxu0 0
  %947 = vmatpush1.bf16.msra.mxu0 0
  %948 = vmatprep.subr.bf16.mxu0 0
  %949 = vmatpush1.bf16.msra.mxu0 0
  %950 = vmatprep.subr.bf16.mxu0 0
  %951 = vmatpush1.bf16.msra.mxu0 0
  %952 = vmatprep.subr.bf16.mxu0 0
  %953 = vmatpush1.bf16.msra.mxu0 0
  %954 = vmatprep.subr.bf16.mxu0 0
  %955 = vmatpush1.bf16.msra.mxu0 0
  %956 = vmatprep.subr.bf16.mxu0 0
  %957 = vmatpush1.bf16.msra.mxu0 0
  %958 = vmatprep.subr.bf16.mxu0 0
  %959 = vmatpush1.bf16.msra.mxu0 0
  %960 = vmatprep.subr.bf16.mxu0 0
  %961 = vmatpush1.bf16.msra.mxu0 0
  %962 = vmatprep.subr.bf16.mxu0 0
  %963 = vmatpush1.bf16.msra.mxu0 0
  %964 = vmatprep.subr.bf16.mxu0 0
  %965 = vmatpush1.bf16.msra.mxu0 0
  %966 = vmatprep.subr.bf16.mxu0 0
  %967 = vmatpush1.bf16.msra.mxu0 0
  %968 = vmatprep.subr.bf16.mxu0 0
  %969 = vmatpush1.bf16.msra.mxu0 0
  %970 = vmatprep.subr.bf16.mxu0 0
  %971 = vmatpush1.bf16.msra.mxu0 0
  %972 = vmatprep.subr.bf16.mxu0 0
  %973 = vmatpush1.bf16.msra.mxu0 0
  %974 = vmatprep.subr.bf16.mxu0 0
  %975 = vmatpush1.bf16.msra.mxu0 0
  %976 = vmatprep.mubr.bf16.mxu0 0
  %977 = vmatmul.mubr.bf16.gmra.mrb[0].mxu0 %v883
  %v978 = vpop.f32.mrb[0].mxu0
  %v979 = vadd.f32 0.0, %v978
  %v980 = vpop.f32.mrb[0].mxu0
  %v981 = vadd.f32 0.0, %v980
  %v982 = vpop.f32.mrb[0].mxu0
  %v983 = vpop.f32.mrb[0].mxu0
  %984 = vdwg.mxu0
  %985 = vmatprep.subr.bf16.mxu0 %v901
  %986 = vmatpush1.bf16.msra.mxu0 %v898
  %987 = vmatprep.subr.bf16.mxu0 0
  %988 = vmatpush1.bf16.msra.mxu0 0
  %989 = vmatprep.subr.bf16.mxu0 0
  %990 = vmatpush1.bf16.msra.mxu0 0
  %991 = vmatprep.subr.bf16.mxu0 0
  %992 = vmatpush1.bf16.msra.mxu0 0
  %993 = vmatprep.subr.bf16.mxu0 0
  %994 = vmatpush1.bf16.msra.mxu0 0
  %995 = vmatprep.subr.bf16.mxu0 0
  %996 = vmatpush1.bf16.msra.mxu0 0
  %997 = vmatprep.subr.bf16.mxu0 0
  %998 = vmatpush1.bf16.msra.mxu0 0
  %999 = vmatprep.subr.bf16.mxu0 0
  %1000 = vmatpush1.bf16.msra.mxu0 0
  %1001 = vmatprep.subr.bf16.mxu0 0
  %1002 = vmatpush1.bf16.msra.mxu0 0
  %1003 = vmatprep.subr.bf16.mxu0 0
  %1004 = vmatpush1.bf16.msra.mxu0 0
  %1005 = vmatprep.subr.bf16.mxu0 0
  %1006 = vmatpush1.bf16.msra.mxu0 0
  %1007 = vmatprep.subr.bf16.mxu0 0
  %1008 = vmatpush1.bf16.msra.mxu0 0
  %1009 = vmatprep.subr.bf16.mxu0 0
  %1010 = vmatpush1.bf16.msra.mxu0 0
  %1011 = vmatprep.subr.bf16.mxu0 0
  %1012 = vmatpush1.bf16.msra.mxu0 0
  %1013 = vmatprep.subr.bf16.mxu0 0
  %1014 = vmatpush1.bf16.msra.mxu0 0
  %1015 = vmatprep.subr.bf16.mxu0 0
  %1016 = vmatpush1.bf16.msra.mxu0 0
  %1017 = vmatprep.mubr.bf16.mxu0 0
  %1018 = vmatmul.mubr.bf16.gmra.mrb[0].mxu0 %v883
  %v1019 = vpop.f32.mrb[0].mxu0
  %v1020 = vadd.f32 0.0, %v1019
  %v1021 = vpop.f32.mrb[0].mxu0
  %v1022 = vadd.f32 0.0, %v1021
  %v1023 = vpop.f32.mrb[0].mxu0
  %v1024 = vpop.f32.mrb[0].mxu0
  %1025 = vdwg.mxu0
  %v1026 = vadd.f32 %v856, %v938
  %v1027 = vadd.f32 %v857, %v940
  %v1028 = vadd.f32 %v858, %v979
  %v1029 = vadd.f32 %v859, %v981
  %v1030 = vadd.f32 %v860, %v1020
  %v1031 = vadd.f32 %v861, %v1022
  %s1032 = scalar_lea.vmem %s2, 20
  %v1033 = vld [vmem:[%s1032] sm:$0xf]
  %1034 = vrot.lane.b32.xlu0 %v209, 108
  %v1035 = vpop.permute.xlu0 %1034
  %1036 = vrot.lane.b32.xlu0 %v210, 108
  %v1037 = vpop.permute.xlu0 %1036
  %1038 = vrot.lane.b32.xlu0 %v211, 108
  %v1039 = vpop.permute.xlu0 %1038
  %1040 = vrot.lane.b32.xlu0 %v212, 108
  %v1041 = vpop.permute.xlu0 %1040
  %1042 = vrot.lane.b32.xlu0 %v213, 108
  %v1043 = vpop.permute.xlu0 %1042
  %1044 = vrot.lane.b32.xlu0 %v214, 108
  %v1045 = vpop.permute.xlu0 %1044
  %vm1046 = vcmask 883712
  %v1047 = vsel %vm1046, %v1035, %v1037
  %v1048 = vsel %vm1046, %v1037, %v1039
  %v1049 = vsel %vm1046, %v1039, %v1041
  %v1050 = vsel %vm1046, %v1041, %v1043
  %v1051 = vsel %vm1046, %v1043, %v1045
  %v1053 = vsel %vm233, %v1033, 0
  %v1056 = vsel %vm190, %v1047, 0
  %v1059 = vsel %vm190, %v1048, 0
  %v1062 = vsel %vm190, %v1049, 0
  %v1065 = vsel %vm190, %v1050, 0
  %v1068 = vsel %vm190, %v1051, 0
  %v1071 = vsel %vm190, %v1045, 0
  %1073 = vmatprep.subr.bf16.mxu0 %v1059
  %1074 = vmatpush1.bf16.msra.mxu0 %v1056
  %1075 = vmatprep.subr.bf16.mxu0 0
  %1076 = vmatpush1.bf16.msra.mxu0 0
  %1077 = vmatprep.subr.bf16.mxu0 0
  %1078 = vmatpush1.bf16.msra.mxu0 0
  %1079 = vmatprep.subr.bf16.mxu0 0
  %1080 = vmatpush1.bf16.msra.mxu0 0
  %1081 = vmatprep.subr.bf16.mxu0 0
  %1082 = vmatpush1.bf16.msra.mxu0 0
  %1083 = vmatprep.subr.bf16.mxu0 0
  %1084 = vmatpush1.bf16.msra.mxu0 0
  %1085 = vmatprep.subr.bf16.mxu0 0
  %1086 = vmatpush1.bf16.msra.mxu0 0
  %1087 = vmatprep.subr.bf16.mxu0 0
  %1088 = vmatpush1.bf16.msra.mxu0 0
  %1089 = vmatprep.subr.bf16.mxu0 0
  %1090 = vmatpush1.bf16.msra.mxu0 0
  %1091 = vmatprep.subr.bf16.mxu0 0
  %1092 = vmatpush1.bf16.msra.mxu0 0
  %1093 = vmatprep.subr.bf16.mxu0 0
  %1094 = vmatpush1.bf16.msra.mxu0 0
  %1095 = vmatprep.subr.bf16.mxu0 0
  %1096 = vmatpush1.bf16.msra.mxu0 0
  %1097 = vmatprep.subr.bf16.mxu0 0
  %1098 = vmatpush1.bf16.msra.mxu0 0
  %1099 = vmatprep.subr.bf16.mxu0 0
  %1100 = vmatpush1.bf16.msra.mxu0 0
  %1101 = vmatprep.subr.bf16.mxu0 0
  %1102 = vmatpush1.bf16.msra.mxu0 0
  %1103 = vmatprep.subr.bf16.mxu0 0
  %1104 = vmatpush1.bf16.msra.mxu0 0
  %1105 = vmatprep.mubr.bf16.mxu0 0
  %1106 = vmatmul.mubr.bf16.gmra.mrb[0].mxu0 %v1053
  %v1107 = vpop.f32.mrb[0].mxu0
  %v1108 = vadd.f32 0.0, %v1107
  %v1109 = vpop.f32.mrb[0].mxu0
  %v1110 = vadd.f32 0.0, %v1109
  %v1111 = vpop.f32.mrb[0].mxu0
  %v1112 = vpop.f32.mrb[0].mxu0
  %1113 = vdwg.mxu0
  %1114 = vmatprep.subr.bf16.mxu0 %v1065
  %1115 = vmatpush1.bf16.msra.mxu0 %v1062
  %1116 = vmatprep.subr.bf16.mxu0 0
  %1117 = vmatpush1.bf16.msra.mxu0 0
  %1118 = vmatprep.subr.bf16.mxu0 0
  %1119 = vmatpush1.bf16.msra.mxu0 0
  %1120 = vmatprep.subr.bf16.mxu0 0
  %1121 = vmatpush1.bf16.msra.mxu0 0
  %1122 = vmatprep.subr.bf16.mxu0 0
  %1123 = vmatpush1.bf16.msra.mxu0 0
  %1124 = vmatprep.subr.bf16.mxu0 0
  %1125 = vmatpush1.bf16.msra.mxu0 0
  %1126 = vmatprep.subr.bf16.mxu0 0
  %1127 = vmatpush1.bf16.msra.mxu0 0
  %1128 = vmatprep.subr.bf16.mxu0 0
  %1129 = vmatpush1.bf16.msra.mxu0 0
  %1130 = vmatprep.subr.bf16.mxu0 0
  %1131 = vmatpush1.bf16.msra.mxu0 0
  %1132 = vmatprep.subr.bf16.mxu0 0
  %1133 = vmatpush1.bf16.msra.mxu0 0
  %1134 = vmatprep.subr.bf16.mxu0 0
  %1135 = vmatpush1.bf16.msra.mxu0 0
  %1136 = vmatprep.subr.bf16.mxu0 0
  %1137 = vmatpush1.bf16.msra.mxu0 0
  %1138 = vmatprep.subr.bf16.mxu0 0
  %1139 = vmatpush1.bf16.msra.mxu0 0
  %1140 = vmatprep.subr.bf16.mxu0 0
  %1141 = vmatpush1.bf16.msra.mxu0 0
  %1142 = vmatprep.subr.bf16.mxu0 0
  %1143 = vmatpush1.bf16.msra.mxu0 0
  %1144 = vmatprep.subr.bf16.mxu0 0
  %1145 = vmatpush1.bf16.msra.mxu0 0
  %1146 = vmatprep.mubr.bf16.mxu0 0
  %1147 = vmatmul.mubr.bf16.gmra.mrb[0].mxu0 %v1053
  %v1148 = vpop.f32.mrb[0].mxu0
  %v1149 = vadd.f32 0.0, %v1148
  %v1150 = vpop.f32.mrb[0].mxu0
  %v1151 = vadd.f32 0.0, %v1150
  %v1152 = vpop.f32.mrb[0].mxu0
  %v1153 = vpop.f32.mrb[0].mxu0
  %1154 = vdwg.mxu0
  %1155 = vmatprep.subr.bf16.mxu0 %v1071
  %1156 = vmatpush1.bf16.msra.mxu0 %v1068
  %1157 = vmatprep.subr.bf16.mxu0 0
  %1158 = vmatpush1.bf16.msra.mxu0 0
  %1159 = vmatprep.subr.bf16.mxu0 0
  %1160 = vmatpush1.bf16.msra.mxu0 0
  %1161 = vmatprep.subr.bf16.mxu0 0
  %1162 = vmatpush1.bf16.msra.mxu0 0
  %1163 = vmatprep.subr.bf16.mxu0 0
  %1164 = vmatpush1.bf16.msra.mxu0 0
  %1165 = vmatprep.subr.bf16.mxu0 0
  %1166 = vmatpush1.bf16.msra.mxu0 0
  %1167 = vmatprep.subr.bf16.mxu0 0
  %1168 = vmatpush1.bf16.msra.mxu0 0
  %1169 = vmatprep.subr.bf16.mxu0 0
  %1170 = vmatpush1.bf16.msra.mxu0 0
  %1171 = vmatprep.subr.bf16.mxu0 0
  %1172 = vmatpush1.bf16.msra.mxu0 0
  %1173 = vmatprep.subr.bf16.mxu0 0
  %1174 = vmatpush1.bf16.msra.mxu0 0
  %1175 = vmatprep.subr.bf16.mxu0 0
  %1176 = vmatpush1.bf16.msra.mxu0 0
  %1177 = vmatprep.subr.bf16.mxu0 0
  %1178 = vmatpush1.bf16.msra.mxu0 0
  %1179 = vmatprep.subr.bf16.mxu0 0
  %1180 = vmatpush1.bf16.msra.mxu0 0
  %1181 = vmatprep.subr.bf16.mxu0 0
  %1182 = vmatpush1.bf16.msra.mxu0 0
  %1183 = vmatprep.subr.bf16.mxu0 0
  %1184 = vmatpush1.bf16.msra.mxu0 0
  %1185 = vmatprep.subr.bf16.mxu0 0
  %1186 = vmatpush1.bf16.msra.mxu0 0
  %1187 = vmatprep.mubr.bf16.mxu0 0
  %1188 = vmatmul.mubr.bf16.gmra.mrb[0].mxu0 %v1053
  %v1189 = vpop.f32.mrb[0].mxu0
  %v1190 = vadd.f32 0.0, %v1189
  %v1191 = vpop.f32.mrb[0].mxu0
  %v1192 = vadd.f32 0.0, %v1191
  %v1193 = vpop.f32.mrb[0].mxu0
  %v1194 = vpop.f32.mrb[0].mxu0
  %1195 = vdwg.mxu0
  %v1196 = vadd.f32 %v1026, %v1108
  %v1197 = vadd.f32 %v1027, %v1110
  %v1198 = vadd.f32 %v1028, %v1149
  %v1199 = vadd.f32 %v1029, %v1151
  %v1200 = vadd.f32 %v1030, %v1190
  %v1201 = vadd.f32 %v1031, %v1192
  %s1202 = scalar_lea.vmem %s2, 24
  %v1203 = vld [vmem:[%s1202] sm:$0xf]
  %1204 = vrot.lane.b32.xlu0 %v209, 92
  %v1205 = vpop.permute.xlu0 %1204
  %1206 = vrot.lane.b32.xlu0 %v210, 92
  %v1207 = vpop.permute.xlu0 %1206
  %1208 = vrot.lane.b32.xlu0 %v211, 92
  %v1209 = vpop.permute.xlu0 %1208
  %1210 = vrot.lane.b32.xlu0 %v212, 92
  %v1211 = vpop.permute.xlu0 %1210
  %1212 = vrot.lane.b32.xlu0 %v213, 92
  %v1213 = vpop.permute.xlu0 %1212
  %1214 = vrot.lane.b32.xlu0 %v214, 92
  %v1215 = vpop.permute.xlu0 %1214
  %vm1216 = vcmask 752640
  %v1217 = vsel %vm1216, %v1205, %v1207
  %v1218 = vsel %vm1216, %v1207, %v1209
  %v1219 = vsel %vm1216, %v1209, %v1211
  %v1220 = vsel %vm1216, %v1211, %v1213
  %v1221 = vsel %vm1216, %v1213, %v1215
  %v1223 = vsel %vm233, %v1203, 0
  %v1226 = vsel %vm190, %v1217, 0
  %v1229 = vsel %vm190, %v1218, 0
  %v1232 = vsel %vm190, %v1219, 0
  %v1235 = vsel %vm190, %v1220, 0
  %v1238 = vsel %vm190, %v1221, 0
  %v1241 = vsel %vm190, %v1215, 0
  %1243 = vmatprep.subr.bf16.mxu0 %v1229
  %1244 = vmatpush1.bf16.msra.mxu0 %v1226
  %1245 = vmatprep.subr.bf16.mxu0 0
  %1246 = vmatpush1.bf16.msra.mxu0 0
  %1247 = vmatprep.subr.bf16.mxu0 0
  %1248 = vmatpush1.bf16.msra.mxu0 0
  %1249 = vmatprep.subr.bf16.mxu0 0
  %1250 = vmatpush1.bf16.msra.mxu0 0
  %1251 = vmatprep.subr.bf16.mxu0 0
  %1252 = vmatpush1.bf16.msra.mxu0 0
  %1253 = vmatprep.subr.bf16.mxu0 0
  %1254 = vmatpush1.bf16.msra.mxu0 0
  %1255 = vmatprep.subr.bf16.mxu0 0
  %1256 = vmatpush1.bf16.msra.mxu0 0
  %1257 = vmatprep.subr.bf16.mxu0 0
  %1258 = vmatpush1.bf16.msra.mxu0 0
  %1259 = vmatprep.subr.bf16.mxu0 0
  %1260 = vmatpush1.bf16.msra.mxu0 0
  %1261 = vmatprep.subr.bf16.mxu0 0
  %1262 = vmatpush1.bf16.msra.mxu0 0
  %1263 = vmatprep.subr.bf16.mxu0 0
  %1264 = vmatpush1.bf16.msra.mxu0 0
  %1265 = vmatprep.subr.bf16.mxu0 0
  %1266 = vmatpush1.bf16.msra.mxu0 0
  %1267 = vmatprep.subr.bf16.mxu0 0
  %1268 = vmatpush1.bf16.msra.mxu0 0
  %1269 = vmatprep.subr.bf16.mxu0 0
  %1270 = vmatpush1.bf16.msra.mxu0 0
  %1271 = vmatprep.subr.bf16.mxu0 0
  %1272 = vmatpush1.bf16.msra.mxu0 0
  %1273 = vmatprep.subr.bf16.mxu0 0
  %1274 = vmatpush1.bf16.msra.mxu0 0
  %1275 = vmatprep.mubr.bf16.mxu0 0
  %1276 = vmatmul.mubr.bf16.gmra.mrb[0].mxu0 %v1223
  %v1277 = vpop.f32.mrb[0].mxu0
  %v1278 = vadd.f32 0.0, %v1277
  %v1279 = vpop.f32.mrb[0].mxu0
  %v1280 = vadd.f32 0.0, %v1279
  %v1281 = vpop.f32.mrb[0].mxu0
  %v1282 = vpop.f32.mrb[0].mxu0
  %1283 = vdwg.mxu0
  %1284 = vmatprep.subr.bf16.mxu0 %v1235
  %1285 = vmatpush1.bf16.msra.mxu0 %v1232
  %1286 = vmatprep.subr.bf16.mxu0 0
  %1287 = vmatpush1.bf16.msra.mxu0 0
  %1288 = vmatprep.subr.bf16.mxu0 0
  %1289 = vmatpush1.bf16.msra.mxu0 0
  %1290 = vmatprep.subr.bf16.mxu0 0
  %1291 = vmatpush1.bf16.msra.mxu0 0
  %1292 = vmatprep.subr.bf16.mxu0 0
  %1293 = vmatpush1.bf16.msra.mxu0 0
  %1294 = vmatprep.subr.bf16.mxu0 0
  %1295 = vmatpush1.bf16.msra.mxu0 0
  %1296 = vmatprep.subr.bf16.mxu0 0
  %1297 = vmatpush1.bf16.msra.mxu0 0
  %1298 = vmatprep.subr.bf16.mxu0 0
  %1299 = vmatpush1.bf16.msra.mxu0 0
  %1300 = vmatprep.subr.bf16.mxu0 0
  %1301 = vmatpush1.bf16.msra.mxu0 0
  %1302 = vmatprep.subr.bf16.mxu0 0
  %1303 = vmatpush1.bf16.msra.mxu0 0
  %1304 = vmatprep.subr.bf16.mxu0 0
  %1305 = vmatpush1.bf16.msra.mxu0 0
  %1306 = vmatprep.subr.bf16.mxu0 0
  %1307 = vmatpush1.bf16.msra.mxu0 0
  %1308 = vmatprep.subr.bf16.mxu0 0
  %1309 = vmatpush1.bf16.msra.mxu0 0
  %1310 = vmatprep.subr.bf16.mxu0 0
  %1311 = vmatpush1.bf16.msra.mxu0 0
  %1312 = vmatprep.subr.bf16.mxu0 0
  %1313 = vmatpush1.bf16.msra.mxu0 0
  %1314 = vmatprep.subr.bf16.mxu0 0
  %1315 = vmatpush1.bf16.msra.mxu0 0
  %1316 = vmatprep.mubr.bf16.mxu0 0
  %1317 = vmatmul.mubr.bf16.gmra.mrb[0].mxu0 %v1223
  %v1318 = vpop.f32.mrb[0].mxu0
  %v1319 = vadd.f32 0.0, %v1318
  %v1320 = vpop.f32.mrb[0].mxu0
  %v1321 = vadd.f32 0.0, %v1320
  %v1322 = vpop.f32.mrb[0].mxu0
  %v1323 = vpop.f32.mrb[0].mxu0
  %1324 = vdwg.mxu0
  %1325 = vmatprep.subr.bf16.mxu0 %v1241
  %1326 = vmatpush1.bf16.msra.mxu0 %v1238
  %1327 = vmatprep.subr.bf16.mxu0 0
  %1328 = vmatpush1.bf16.msra.mxu0 0
  %1329 = vmatprep.subr.bf16.mxu0 0
  %1330 = vmatpush1.bf16.msra.mxu0 0
  %1331 = vmatprep.subr.bf16.mxu0 0
  %1332 = vmatpush1.bf16.msra.mxu0 0
  %1333 = vmatprep.subr.bf16.mxu0 0
  %1334 = vmatpush1.bf16.msra.mxu0 0
  %1335 = vmatprep.subr.bf16.mxu0 0
  %1336 = vmatpush1.bf16.msra.mxu0 0
  %1337 = vmatprep.subr.bf16.mxu0 0
  %1338 = vmatpush1.bf16.msra.mxu0 0
  %1339 = vmatprep.subr.bf16.mxu0 0
  %1340 = vmatpush1.bf16.msra.mxu0 0
  %1341 = vmatprep.subr.bf16.mxu0 0
  %1342 = vmatpush1.bf16.msra.mxu0 0
  %1343 = vmatprep.subr.bf16.mxu0 0
  %1344 = vmatpush1.bf16.msra.mxu0 0
  %1345 = vmatprep.subr.bf16.mxu0 0
  %1346 = vmatpush1.bf16.msra.mxu0 0
  %1347 = vmatprep.subr.bf16.mxu0 0
  %1348 = vmatpush1.bf16.msra.mxu0 0
  %1349 = vmatprep.subr.bf16.mxu0 0
  %1350 = vmatpush1.bf16.msra.mxu0 0
  %1351 = vmatprep.subr.bf16.mxu0 0
  %1352 = vmatpush1.bf16.msra.mxu0 0
  %1353 = vmatprep.subr.bf16.mxu0 0
  %1354 = vmatpush1.bf16.msra.mxu0 0
  %1355 = vmatprep.subr.bf16.mxu0 0
  %1356 = vmatpush1.bf16.msra.mxu0 0
  %1357 = vmatprep.mubr.bf16.mxu0 0
  %1358 = vmatmul.mubr.bf16.gmra.mrb[0].mxu0 %v1223
  %v1359 = vpop.f32.mrb[0].mxu0
  %v1360 = vadd.f32 0.0, %v1359
  %v1361 = vpop.f32.mrb[0].mxu0
  %v1362 = vadd.f32 0.0, %v1361
  %v1363 = vpop.f32.mrb[0].mxu0
  %v1364 = vpop.f32.mrb[0].mxu0
  %1365 = vdwg.mxu0
  %v1366 = vadd.f32 %v1196, %v1278
  %v1367 = vadd.f32 %v1197, %v1280
  %v1368 = vadd.f32 %v1198, %v1319
  %v1369 = vadd.f32 %v1199, %v1321
  %v1370 = vadd.f32 %v1200, %v1360
  %v1371 = vadd.f32 %v1201, %v1362
  %s1372 = scalar_lea.vmem %s2, 28
  %v1373 = vld [vmem:[%s1372] sm:$0xf]
  %1374 = vrot.lane.b32.xlu0 %v209, 91
  %v1375 = vpop.permute.xlu0 %1374
  %1376 = vrot.lane.b32.xlu0 %v210, 91
  %v1377 = vpop.permute.xlu0 %1376
  %1378 = vrot.lane.b32.xlu0 %v211, 91
  %v1379 = vpop.permute.xlu0 %1378
  %1380 = vrot.lane.b32.xlu0 %v212, 91
  %v1381 = vpop.permute.xlu0 %1380
  %1382 = vrot.lane.b32.xlu0 %v213, 91
  %v1383 = vpop.permute.xlu0 %1382
  %1384 = vrot.lane.b32.xlu0 %v214, 91
  %v1385 = vpop.permute.xlu0 %1384
  %vm1386 = vcmask 744448
  %v1387 = vsel %vm1386, %v1375, %v1377
  %v1388 = vsel %vm1386, %v1377, %v1379
  %v1389 = vsel %vm1386, %v1379, %v1381
  %v1390 = vsel %vm1386, %v1381, %v1383
  %v1391 = vsel %vm1386, %v1383, %v1385
  %v1393 = vsel %vm233, %v1373, 0
  %v1396 = vsel %vm190, %v1387, 0
  %v1399 = vsel %vm190, %v1388, 0
  %v1402 = vsel %vm190, %v1389, 0
  %v1405 = vsel %vm190, %v1390, 0
  %v1408 = vsel %vm190, %v1391, 0
  %v1411 = vsel %vm190, %v1385, 0
  %1413 = vmatprep.subr.bf16.mxu0 %v1399
  %1414 = vmatpush1.bf16.msra.mxu0 %v1396
  %1415 = vmatprep.subr.bf16.mxu0 0
  %1416 = vmatpush1.bf16.msra.mxu0 0
  %1417 = vmatprep.subr.bf16.mxu0 0
  %1418 = vmatpush1.bf16.msra.mxu0 0
  %1419 = vmatprep.subr.bf16.mxu0 0
  %1420 = vmatpush1.bf16.msra.mxu0 0
  %1421 = vmatprep.subr.bf16.mxu0 0
  %1422 = vmatpush1.bf16.msra.mxu0 0
  %1423 = vmatprep.subr.bf16.mxu0 0
  %1424 = vmatpush1.bf16.msra.mxu0 0
  %1425 = vmatprep.subr.bf16.mxu0 0
  %1426 = vmatpush1.bf16.msra.mxu0 0
  %1427 = vmatprep.subr.bf16.mxu0 0
  %1428 = vmatpush1.bf16.msra.mxu0 0
  %1429 = vmatprep.subr.bf16.mxu0 0
  %1430 = vmatpush1.bf16.msra.mxu0 0
  %1431 = vmatprep.subr.bf16.mxu0 0
  %1432 = vmatpush1.bf16.msra.mxu0 0
  %1433 = vmatprep.subr.bf16.mxu0 0
  %1434 = vmatpush1.bf16.msra.mxu0 0
  %1435 = vmatprep.subr.bf16.mxu0 0
  %1436 = vmatpush1.bf16.msra.mxu0 0
  %1437 = vmatprep.subr.bf16.mxu0 0
  %1438 = vmatpush1.bf16.msra.mxu0 0
  %1439 = vmatprep.subr.bf16.mxu0 0
  %1440 = vmatpush1.bf16.msra.mxu0 0
  %1441 = vmatprep.subr.bf16.mxu0 0
  %1442 = vmatpush1.bf16.msra.mxu0 0
  %1443 = vmatprep.subr.bf16.mxu0 0
  %1444 = vmatpush1.bf16.msra.mxu0 0
  %1445 = vmatprep.mubr.bf16.mxu0 0
  %1446 = vmatmul.mubr.bf16.gmra.mrb[0].mxu0 %v1393
  %v1447 = vpop.f32.mrb[0].mxu0
  %v1448 = vadd.f32 0.0, %v1447
  %v1449 = vpop.f32.mrb[0].mxu0
  %v1450 = vadd.f32 0.0, %v1449
  %v1451 = vpop.f32.mrb[0].mxu0
  %v1452 = vpop.f32.mrb[0].mxu0
  %1453 = vdwg.mxu0
  %1454 = vmatprep.subr.bf16.mxu0 %v1405
  %1455 = vmatpush1.bf16.msra.mxu0 %v1402
  %1456 = vmatprep.subr.bf16.mxu0 0
  %1457 = vmatpush1.bf16.msra.mxu0 0
  %1458 = vmatprep.subr.bf16.mxu0 0
  %1459 = vmatpush1.bf16.msra.mxu0 0
  %1460 = vmatprep.subr.bf16.mxu0 0
  %1461 = vmatpush1.bf16.msra.mxu0 0
  %1462 = vmatprep.subr.bf16.mxu0 0
  %1463 = vmatpush1.bf16.msra.mxu0 0
  %1464 = vmatprep.subr.bf16.mxu0 0
  %1465 = vmatpush1.bf16.msra.mxu0 0
  %1466 = vmatprep.subr.bf16.mxu0 0
  %1467 = vmatpush1.bf16.msra.mxu0 0
  %1468 = vmatprep.subr.bf16.mxu0 0
  %1469 = vmatpush1.bf16.msra.mxu0 0
  %1470 = vmatprep.subr.bf16.mxu0 0
  %1471 = vmatpush1.bf16.msra.mxu0 0
  %1472 = vmatprep.subr.bf16.mxu0 0
  %1473 = vmatpush1.bf16.msra.mxu0 0
  %1474 = vmatprep.subr.bf16.mxu0 0
  %1475 = vmatpush1.bf16.msra.mxu0 0
  %1476 = vmatprep.subr.bf16.mxu0 0
  %1477 = vmatpush1.bf16.msra.mxu0 0
  %1478 = vmatprep.subr.bf16.mxu0 0
  %1479 = vmatpush1.bf16.msra.mxu0 0
  %1480 = vmatprep.subr.bf16.mxu0 0
  %1481 = vmatpush1.bf16.msra.mxu0 0
  %1482 = vmatprep.subr.bf16.mxu0 0
  %1483 = vmatpush1.bf16.msra.mxu0 0
  %1484 = vmatprep.subr.bf16.mxu0 0
  %1485 = vmatpush1.bf16.msra.mxu0 0
  %1486 = vmatprep.mubr.bf16.mxu0 0
  %1487 = vmatmul.mubr.bf16.gmra.mrb[0].mxu0 %v1393
  %v1488 = vpop.f32.mrb[0].mxu0
  %v1489 = vadd.f32 0.0, %v1488
  %v1490 = vpop.f32.mrb[0].mxu0
  %v1491 = vadd.f32 0.0, %v1490
  %v1492 = vpop.f32.mrb[0].mxu0
  %v1493 = vpop.f32.mrb[0].mxu0
  %1494 = vdwg.mxu0
  %1495 = vmatprep.subr.bf16.mxu0 %v1411
  %1496 = vmatpush1.bf16.msra.mxu0 %v1408
  %1497 = vmatprep.subr.bf16.mxu0 0
  %1498 = vmatpush1.bf16.msra.mxu0 0
  %1499 = vmatprep.subr.bf16.mxu0 0
  %1500 = vmatpush1.bf16.msra.mxu0 0
  %1501 = vmatprep.subr.bf16.mxu0 0
  %1502 = vmatpush1.bf16.msra.mxu0 0
  %1503 = vmatprep.subr.bf16.mxu0 0
  %1504 = vmatpush1.bf16.msra.mxu0 0
  %1505 = vmatprep.subr.bf16.mxu0 0
  %1506 = vmatpush1.bf16.msra.mxu0 0
  %1507 = vmatprep.subr.bf16.mxu0 0
  %1508 = vmatpush1.bf16.msra.mxu0 0
  %1509 = vmatprep.subr.bf16.mxu0 0
  %1510 = vmatpush1.bf16.msra.mxu0 0
  %1511 = vmatprep.subr.bf16.mxu0 0
  %1512 = vmatpush1.bf16.msra.mxu0 0
  %1513 = vmatprep.subr.bf16.mxu0 0
  %1514 = vmatpush1.bf16.msra.mxu0 0
  %1515 = vmatprep.subr.bf16.mxu0 0
  %1516 = vmatpush1.bf16.msra.mxu0 0
  %1517 = vmatprep.subr.bf16.mxu0 0
  %1518 = vmatpush1.bf16.msra.mxu0 0
  %1519 = vmatprep.subr.bf16.mxu0 0
  %1520 = vmatpush1.bf16.msra.mxu0 0
  %1521 = vmatprep.subr.bf16.mxu0 0
  %1522 = vmatpush1.bf16.msra.mxu0 0
  %1523 = vmatprep.subr.bf16.mxu0 0
  %1524 = vmatpush1.bf16.msra.mxu0 0
  %1525 = vmatprep.subr.bf16.mxu0 0
  %1526 = vmatpush1.bf16.msra.mxu0 0
  %1527 = vmatprep.mubr.bf16.mxu0 0
  %1528 = vmatmul.mubr.bf16.gmra.mrb[0].mxu0 %v1393
  %v1529 = vpop.f32.mrb[0].mxu0
  %v1530 = vadd.f32 0.0, %v1529
  %v1531 = vpop.f32.mrb[0].mxu0
  %v1532 = vadd.f32 0.0, %v1531
  %v1533 = vpop.f32.mrb[0].mxu0
  %v1534 = vpop.f32.mrb[0].mxu0
  %1535 = vdwg.mxu0
  %v1536 = vadd.f32 %v1366, %v1448
  %v1537 = vadd.f32 %v1367, %v1450
  %v1538 = vadd.f32 %v1368, %v1489
  %v1539 = vadd.f32 %v1369, %v1491
  %v1540 = vadd.f32 %v1370, %v1530
  %v1541 = vadd.f32 %v1371, %v1532
  %s1542 = scalar_lea.vmem %s2, 32
  %v1543 = vld [vmem:[%s1542] sm:$0xf]
  %1544 = vrot.lane.b32.xlu0 %v209, 90
  %v1545 = vpop.permute.xlu0 %1544
  %1546 = vrot.lane.b32.xlu0 %v210, 90
  %v1547 = vpop.permute.xlu0 %1546
  %1548 = vrot.lane.b32.xlu0 %v211, 90
  %v1549 = vpop.permute.xlu0 %1548
  %1550 = vrot.lane.b32.xlu0 %v212, 90
  %v1551 = vpop.permute.xlu0 %1550
  %1552 = vrot.lane.b32.xlu0 %v213, 90
  %v1553 = vpop.permute.xlu0 %1552
  %1554 = vrot.lane.b32.xlu0 %v214, 90
  %v1555 = vpop.permute.xlu0 %1554
  %vm1556 = vcmask 736256
  %v1557 = vsel %vm1556, %v1545, %v1547
  %v1558 = vsel %vm1556, %v1547, %v1549
  %v1559 = vsel %vm1556, %v1549, %v1551
  %v1560 = vsel %vm1556, %v1551, %v1553
  %v1561 = vsel %vm1556, %v1553, %v1555
  %v1563 = vsel %vm233, %v1543, 0
  %v1566 = vsel %vm190, %v1557, 0
  %v1569 = vsel %vm190, %v1558, 0
  %v1572 = vsel %vm190, %v1559, 0
  %v1575 = vsel %vm190, %v1560, 0
  %v1578 = vsel %vm190, %v1561, 0
  %v1581 = vsel %vm190, %v1555, 0
  %1583 = vmatprep.subr.bf16.mxu0 %v1569
  %1584 = vmatpush1.bf16.msra.mxu0 %v1566
  %1585 = vmatprep.subr.bf16.mxu0 0
  %1586 = vmatpush1.bf16.msra.mxu0 0
  %1587 = vmatprep.subr.bf16.mxu0 0
  %1588 = vmatpush1.bf16.msra.mxu0 0
  %1589 = vmatprep.subr.bf16.mxu0 0
  %1590 = vmatpush1.bf16.msra.mxu0 0
  %1591 = vmatprep.subr.bf16.mxu0 0
  %1592 = vmatpush1.bf16.msra.mxu0 0
  %1593 = vmatprep.subr.bf16.mxu0 0
  %1594 = vmatpush1.bf16.msra.mxu0 0
  %1595 = vmatprep.subr.bf16.mxu0 0
  %1596 = vmatpush1.bf16.msra.mxu0 0
  %1597 = vmatprep.subr.bf16.mxu0 0
  %1598 = vmatpush1.bf16.msra.mxu0 0
  %1599 = vmatprep.subr.bf16.mxu0 0
  %1600 = vmatpush1.bf16.msra.mxu0 0
  %1601 = vmatprep.subr.bf16.mxu0 0
  %1602 = vmatpush1.bf16.msra.mxu0 0
  %1603 = vmatprep.subr.bf16.mxu0 0
  %1604 = vmatpush1.bf16.msra.mxu0 0
  %1605 = vmatprep.subr.bf16.mxu0 0
  %1606 = vmatpush1.bf16.msra.mxu0 0
  %1607 = vmatprep.subr.bf16.mxu0 0
  %1608 = vmatpush1.bf16.msra.mxu0 0
  %1609 = vmatprep.subr.bf16.mxu0 0
  %1610 = vmatpush1.bf16.msra.mxu0 0
  %1611 = vmatprep.subr.bf16.mxu0 0
  %1612 = vmatpush1.bf16.msra.mxu0 0
  %1613 = vmatprep.subr.bf16.mxu0 0
  %1614 = vmatpush1.bf16.msra.mxu0 0
  %1615 = vmatprep.mubr.bf16.mxu0 0
  %1616 = vmatmul.mubr.bf16.gmra.mrb[0].mxu0 %v1563
  %v1617 = vpop.f32.mrb[0].mxu0
  %v1618 = vadd.f32 0.0, %v1617
  %v1619 = vpop.f32.mrb[0].mxu0
  %v1620 = vadd.f32 0.0, %v1619
  %v1621 = vpop.f32.mrb[0].mxu0
  %v1622 = vpop.f32.mrb[0].mxu0
  %1623 = vdwg.mxu0
  %1624 = vmatprep.subr.bf16.mxu0 %v1575
  %1625 = vmatpush1.bf16.msra.mxu0 %v1572
  %1626 = vmatprep.subr.bf16.mxu0 0
  %1627 = vmatpush1.bf16.msra.mxu0 0
  %1628 = vmatprep.subr.bf16.mxu0 0
  %1629 = vmatpush1.bf16.msra.mxu0 0
  %1630 = vmatprep.subr.bf16.mxu0 0
  %1631 = vmatpush1.bf16.msra.mxu0 0
  %1632 = vmatprep.subr.bf16.mxu0 0
  %1633 = vmatpush1.bf16.msra.mxu0 0
  %1634 = vmatprep.subr.bf16.mxu0 0
  %1635 = vmatpush1.bf16.msra.mxu0 0
  %1636 = vmatprep.subr.bf16.mxu0 0
  %1637 = vmatpush1.bf16.msra.mxu0 0
  %1638 = vmatprep.subr.bf16.mxu0 0
  %1639 = vmatpush1.bf16.msra.mxu0 0
  %1640 = vmatprep.subr.bf16.mxu0 0
  %1641 = vmatpush1.bf16.msra.mxu0 0
  %1642 = vmatprep.subr.bf16.mxu0 0
  %1643 = vmatpush1.bf16.msra.mxu0 0
  %1644 = vmatprep.subr.bf16.mxu0 0
  %1645 = vmatpush1.bf16.msra.mxu0 0
  %1646 = vmatprep.subr.bf16.mxu0 0
  %1647 = vmatpush1.bf16.msra.mxu0 0
  %1648 = vmatprep.subr.bf16.mxu0 0
  %1649 = vmatpush1.bf16.msra.mxu0 0
  %1650 = vmatprep.subr.bf16.mxu0 0
  %1651 = vmatpush1.bf16.msra.mxu0 0
  %1652 = vmatprep.subr.bf16.mxu0 0
  %1653 = vmatpush1.bf16.msra.mxu0 0
  %1654 = vmatprep.subr.bf16.mxu0 0
  %1655 = vmatpush1.bf16.msra.mxu0 0
  %1656 = vmatprep.mubr.bf16.mxu0 0
  %1657 = vmatmul.mubr.bf16.gmra.mrb[0].mxu0 %v1563
  %v1658 = vpop.f32.mrb[0].mxu0
  %v1659 = vadd.f32 0.0, %v1658
  %v1660 = vpop.f32.mrb[0].mxu0
  %v1661 = vadd.f32 0.0, %v1660
  %v1662 = vpop.f32.mrb[0].mxu0
  %v1663 = vpop.f32.mrb[0].mxu0
  %1664 = vdwg.mxu0
  %1665 = vmatprep.subr.bf16.mxu0 %v1581
  %1666 = vmatpush1.bf16.msra.mxu0 %v1578
  %1667 = vmatprep.subr.bf16.mxu0 0
  %1668 = vmatpush1.bf16.msra.mxu0 0
  %1669 = vmatprep.subr.bf16.mxu0 0
  %1670 = vmatpush1.bf16.msra.mxu0 0
  %1671 = vmatprep.subr.bf16.mxu0 0
  %1672 = vmatpush1.bf16.msra.mxu0 0
  %1673 = vmatprep.subr.bf16.mxu0 0
  %1674 = vmatpush1.bf16.msra.mxu0 0
  %1675 = vmatprep.subr.bf16.mxu0 0
  %1676 = vmatpush1.bf16.msra.mxu0 0
  %1677 = vmatprep.subr.bf16.mxu0 0
  %1678 = vmatpush1.bf16.msra.mxu0 0
  %1679 = vmatprep.subr.bf16.mxu0 0
  %1680 = vmatpush1.bf16.msra.mxu0 0
  %1681 = vmatprep.subr.bf16.mxu0 0
  %1682 = vmatpush1.bf16.msra.mxu0 0
  %1683 = vmatprep.subr.bf16.mxu0 0
  %1684 = vmatpush1.bf16.msra.mxu0 0
  %1685 = vmatprep.subr.bf16.mxu0 0
  %1686 = vmatpush1.bf16.msra.mxu0 0
  %1687 = vmatprep.subr.bf16.mxu0 0
  %1688 = vmatpush1.bf16.msra.mxu0 0
  %1689 = vmatprep.subr.bf16.mxu0 0
  %1690 = vmatpush1.bf16.msra.mxu0 0
  %1691 = vmatprep.subr.bf16.mxu0 0
  %1692 = vmatpush1.bf16.msra.mxu0 0
  %1693 = vmatprep.subr.bf16.mxu0 0
  %1694 = vmatpush1.bf16.msra.mxu0 0
  %1695 = vmatprep.subr.bf16.mxu0 0
  %1696 = vmatpush1.bf16.msra.mxu0 0
  %1697 = vmatprep.mubr.bf16.mxu0 0
  %1698 = vmatmul.mubr.bf16.gmra.mrb[0].mxu0 %v1563
  %v1699 = vpop.f32.mrb[0].mxu0
  %v1700 = vadd.f32 0.0, %v1699
  %v1701 = vpop.f32.mrb[0].mxu0
  %v1702 = vadd.f32 0.0, %v1701
  %v1703 = vpop.f32.mrb[0].mxu0
  %v1704 = vpop.f32.mrb[0].mxu0
  %1705 = vdwg.mxu0
  %v1706 = vadd.f32 %v1536, %v1618
  %v1707 = vadd.f32 %v1537, %v1620
  %v1708 = vadd.f32 %v1538, %v1659
  %v1709 = vadd.f32 %v1539, %v1661
  %v1710 = vadd.f32 %v1540, %v1700
  %v1711 = vadd.f32 %v1541, %v1702
  %v1712 = vld [vmem:[%s3] sm:$0xff]
  %1714 = vset.pattern.permute.xlu0 0
  %1715 = vperm.xlu0 %1714, %v1712
  %v1716 = vpop.permute.xlu0 %1715
  %v1718 = vadd.f32 %v1706, %v1716
  %v1719 = vadd.f32 %v1707, %v1716
  %v1720 = vadd.f32 %v1708, %v1716
  %v1721 = vadd.f32 %v1709, %v1716
  %v1722 = vadd.f32 %v1710, %v1716
  %v1723 = vadd.f32 %v1711, %v1716
  %1724 = vrot.lane.b32.xlu0 %v50, 109
  %v1725 = vpop.permute.xlu0 %1724
  %1726 = vrot.lane.b32.xlu0 %v54, 109
  %v1727 = vpop.permute.xlu0 %1726
  %1728 = vrot.lane.b32.xlu0 %v58, 109
  %v1729 = vpop.permute.xlu0 %1728
  %1730 = vrot.lane.b32.xlu0 %v62, 109
  %v1731 = vpop.permute.xlu0 %1730
  %1732 = vrot.lane.b32.xlu0 %v66, 109
  %v1733 = vpop.permute.xlu0 %1732
  %1734 = vrot.lane.b32.xlu0 %v70, 109
  %v1735 = vpop.permute.xlu0 %1734
  %vm1736 = vcmask 891904
  %v1737 = vsel %vm1736, %v1725, %v1727
  %v1738 = vsel %vm1736, %v1727, %v1729
  %v1739 = vsel %vm1736, %v1729, %v1731
  %v1740 = vsel %vm1736, %v1731, %v1733
  %v1741 = vsel %vm1736, %v1733, %v1735
  %v1748 = vmul.f32 %v1718, %v1737
  %v1749 = vmul.f32 %v1719, %v1738
  %v1750 = vmul.f32 %v1720, %v1739
  %v1751 = vmul.f32 %v1721, %v1740
  %v1752 = vmul.f32 %v1722, %v1741
  %v1753 = vmul.f32 %v1723, %v1735
  %v1754 = vadd.f32 %v1748, %v1749
  %v1755 = vadd.f32 %v1754, %v1750
  %v1756 = vadd.f32 %v1755, %v1751
  %v1757 = vadd.f32 %v1756, %v1752
  %v1758 = vsel %vm233, %v1753, 0.0
  %v1759 = vadd.f32 %v1757, %v1758
  %1760 = vadd.xlane.f32.xlu0 %v1759
  %v1761 = vpop.xlane.xlu0 %1760
  %v1762 = vmul.f32 %v1761, 0.001953125
  %v1763 = vsub.f32 %v1718, %v1762
  %v1764 = vsub.f32 %v1719, %v1762
  %v1765 = vsub.f32 %v1720, %v1762
  %v1766 = vsub.f32 %v1721, %v1762
  %v1767 = vsub.f32 %v1722, %v1762
  %v1768 = vsub.f32 %v1723, %v1762
  %v1769 = vmul.f32 %v1763, %v1737
  %v1770 = vmul.f32 %v1764, %v1738
  %v1771 = vmul.f32 %v1765, %v1739
  %v1772 = vmul.f32 %v1766, %v1740
  %v1773 = vmul.f32 %v1767, %v1741
  %v1774 = vmul.f32 %v1768, %v1735
  %v1775 = vmul.f32 %v1769, %v1769
  %v1776 = vmul.f32 %v1770, %v1770
  %v1777 = vmul.f32 %v1771, %v1771
  %v1778 = vmul.f32 %v1772, %v1772
  %v1779 = vmul.f32 %v1773, %v1773
  %v1780 = vmul.f32 %v1774, %v1774
  %v1781 = vadd.f32 %v1775, %v1776
  %v1782 = vadd.f32 %v1781, %v1777
  %v1783 = vadd.f32 %v1782, %v1778
  %v1784 = vadd.f32 %v1783, %v1779
  %v1785 = vsel %vm233, %v1780, 0.0
  %v1786 = vadd.f32 %v1784, %v1785
  %1787 = vadd.xlane.f32.xlu0 %v1786
  %v1788 = vpop.xlane.xlu0 %1787
  %v1789 = vmul.f32 %v1788, 0.001953125
  %v1790 = vadd.f32 %v1789, 1e-05
  %v1791 = vrsqrt.pop %v1790
  %v1792 = vmul.f32 %v1763, %v1791
  %v1793 = vmul.f32 %v1764, %v1791
  %v1794 = vmul.f32 %v1765, %v1791
  %v1795 = vmul.f32 %v1766, %v1791
  %v1796 = vmul.f32 %v1767, %v1791
  %v1797 = vmul.f32 %v1768, %v1791
  %v1798 = vld [vmem:[%s8] sm:$0xff]
  %1800 = vset.pattern.permute.xlu0 0
  %1801 = vperm.xlu0 %1800, %v1798
  %v1802 = vpop.permute.xlu0 %1801
  %v1804 = vmul.f32 %v1792, %v1802
  %v1805 = vmul.f32 %v1793, %v1802
  %v1806 = vmul.f32 %v1794, %v1802
  %v1807 = vmul.f32 %v1795, %v1802
  %v1808 = vmul.f32 %v1796, %v1802
  %v1809 = vmul.f32 %v1797, %v1802
  %v1810 = vld [vmem:[%s9] sm:$0xff]
  %1812 = vset.pattern.permute.xlu0 0
  %1813 = vperm.xlu0 %1812, %v1810
  %v1814 = vpop.permute.xlu0 %1813
  %v1816 = vadd.f32 %v1804, %v1814
  %v1817 = vadd.f32 %v1805, %v1814
  %v1818 = vadd.f32 %v1806, %v1814
  %v1819 = vadd.f32 %v1807, %v1814
  %v1820 = vadd.f32 %v1808, %v1814
  %v1821 = vadd.f32 %v1809, %v1814
  %v1822 = vmax.f32 %v1816, 0.0
  %v1823 = vmax.f32 %v1817, 0.0
  %v1824 = vmax.f32 %v1818, 0.0
  %v1825 = vmax.f32 %v1819, 0.0
  %v1826 = vmax.f32 %v1820, 0.0
  %v1827 = vmax.f32 %v1821, 0.0
  %v1828 = vmul.f32 %v1822, %v1737
  %v1829 = vmul.f32 %v1823, %v1738
  %v1830 = vmul.f32 %v1824, %v1739
  %v1831 = vmul.f32 %v1825, %v1740
  %v1832 = vmul.f32 %v1826, %v1741
  %v1833 = vmul.f32 %v1827, %v1735
  %1834 = vst [vmem:[#allocation3] sm:$0xff] 0
  %1835 = vst [vmem:[#allocation3 + $0x8] sm:$0xff] 0
  %1836 = vst.msk [vmem:[#allocation3 + $0x10] sm:$0xff] %vm192, 0
  %v1837 = vpack.c.bf16 %v1828, %v1828
  %v1838 = vpack.c.bf16 %v1829, %v1829
  %v1839 = vpack.c.bf16 %v1830, %v1830
  %v1840 = vpack.c.bf16 %v1831, %v1831
  %v1841 = vpack.c.bf16 %v1832, %v1832
  %v1842 = vpack.c.bf16 %v1833, %v1833
  %v1849 = vunpack.c.l.b16 %v1837
  %v1850 = vunpack.c.l.b16 %v1838
  %v1851 = vunpack.c.l.b16 %v1839
  %v1852 = vunpack.c.l.b16 %v1840
  %v1853 = vunpack.c.l.b16 %v1841
  %v1854 = vunpack.c.l.b16 %v1842
  %v1855 = vpack.c.b16 %v1850, %v1849
  %v1856 = vpack.c.b16 %v1852, %v1851
  %v1857 = vpack.c.b16 %v1854, %v1853
  %1858 = vrot.lane.b32.xlu0 %v1855, 19
  %v1859 = vpop.permute.xlu0 %1858
  %1860 = vrot.lane.b32.xlu0 %v1856, 19
  %v1861 = vpop.permute.xlu0 %1860
  %1862 = vrot.lane.b32.xlu0 %v1857, 19
  %v1863 = vpop.permute.xlu0 %1862
  %v1864 = vrot.slane %v1859, 4
  %v1865 = vrot.slane %v1861, 4
  %v1866 = vrot.slane %v1863, 4
  %vm1867 = vcmask 154624
  %v1868 = vsel %vm1867, %v1864, %v1859
  %vm1869 = vcmask 1043456
  %v1870 = vsel %vm1869, %v1864, %v1865
  %v1871 = vsel %vm1867, %v1870, %v1861
  %v1872 = vsel %vm1869, %v1865, %v1866
  %v1873 = vsel %vm1867, %v1872, %v1863
  %vm1877 = vcmask 1043608
  %vm1878 = vcmask 1047556
  %vm1879 = vmor %vm1878, %vm1877
  %1880 = vst.msk [vmem:[#allocation3] sm:$0xff] %vm1879, %v1868
  %1881 = vst [vmem:[#allocation3 + $0x8] sm:$0xff] %v1871
  %vm1882 = vcmask 220164
  %vm1883 = vmor %vm1882, %vm190
  %1884 = vst.msk [vmem:[#allocation3 + $0x10] sm:$0xff] %vm1883, %v1873
  %v1885 = vld [vmem:[%s4] sm:$0xf]
  %v1886 = vld [vmem:[#allocation3] sm:$0xff]
  %v1887 = vld [vmem:[#allocation3 + $0x8] sm:$0xff]
  %v1888 = vld [vmem:[#allocation3 + $0x10] sm:$0xff]
  %s1889 = scalar_lea.vmem %s4, 4
  %v1890 = vld [vmem:[%s1889] sm:$0xf]
  %v1894 = vunpack.c.l.b16 %v1886
  %v1895 = vunpack.c.h.b16 %v1886
  %v1896 = vunpack.c.l.b16 %v1887
  %v1897 = vunpack.c.h.b16 %v1887
  %v1898 = vunpack.c.l.b16 %v1888
  %v1899 = vunpack.c.h.b16 %v1888
  %v1900 = vpack.c.b16 %v1894, %v1894
  %v1901 = vpack.c.b16 %v1895, %v1895
  %v1902 = vpack.c.b16 %v1896, %v1896
  %v1903 = vpack.c.b16 %v1897, %v1897
  %v1904 = vpack.c.b16 %v1898, %v1898
  %v1905 = vpack.c.b16 %v1899, %v1899
  %1906 = vrot.lane.b32.xlu0 %v1900, 127
  %v1907 = vpop.permute.xlu0 %1906
  %1908 = vrot.lane.b32.xlu0 %v1901, 127
  %v1909 = vpop.permute.xlu0 %1908
  %1910 = vrot.lane.b32.xlu0 %v1902, 127
  %v1911 = vpop.permute.xlu0 %1910
  %1912 = vrot.lane.b32.xlu0 %v1903, 127
  %v1913 = vpop.permute.xlu0 %1912
  %1914 = vrot.lane.b32.xlu0 %v1904, 127
  %v1915 = vpop.permute.xlu0 %1914
  %1916 = vrot.lane.b32.xlu0 %v1905, 127
  %v1917 = vpop.permute.xlu0 %1916
  %v1918 = vsel %vm227, %v1907, %v1909
  %v1919 = vsel %vm227, %v1909, %v1911
  %v1920 = vsel %vm227, %v1911, %v1913
  %v1921 = vsel %vm227, %v1913, %v1915
  %v1922 = vsel %vm227, %v1915, %v1917
  %v1924 = vsel %vm233, %v1890, 0
  %v1927 = vsel %vm190, %v1918, 0
  %v1930 = vsel %vm190, %v1919, 0
  %v1933 = vsel %vm190, %v1920, 0
  %v1936 = vsel %vm190, %v1921, 0
  %v1939 = vsel %vm190, %v1922, 0
  %v1942 = vsel %vm190, %v1917, 0
  %1944 = vmatprep.subr.bf16.mxu0 %v1930
  %1945 = vmatpush1.bf16.msra.mxu0 %v1927
  %1946 = vmatprep.subr.bf16.mxu0 0
  %1947 = vmatpush1.bf16.msra.mxu0 0
  %1948 = vmatprep.subr.bf16.mxu0 0
  %1949 = vmatpush1.bf16.msra.mxu0 0
  %1950 = vmatprep.subr.bf16.mxu0 0
  %1951 = vmatpush1.bf16.msra.mxu0 0
  %1952 = vmatprep.subr.bf16.mxu0 0
  %1953 = vmatpush1.bf16.msra.mxu0 0
  %1954 = vmatprep.subr.bf16.mxu0 0
  %1955 = vmatpush1.bf16.msra.mxu0 0
  %1956 = vmatprep.subr.bf16.mxu0 0
  %1957 = vmatpush1.bf16.msra.mxu0 0
  %1958 = vmatprep.subr.bf16.mxu0 0
  %1959 = vmatpush1.bf16.msra.mxu0 0
  %1960 = vmatprep.subr.bf16.mxu0 0
  %1961 = vmatpush1.bf16.msra.mxu0 0
  %1962 = vmatprep.subr.bf16.mxu0 0
  %1963 = vmatpush1.bf16.msra.mxu0 0
  %1964 = vmatprep.subr.bf16.mxu0 0
  %1965 = vmatpush1.bf16.msra.mxu0 0
  %1966 = vmatprep.subr.bf16.mxu0 0
  %1967 = vmatpush1.bf16.msra.mxu0 0
  %1968 = vmatprep.subr.bf16.mxu0 0
  %1969 = vmatpush1.bf16.msra.mxu0 0
  %1970 = vmatprep.subr.bf16.mxu0 0
  %1971 = vmatpush1.bf16.msra.mxu0 0
  %1972 = vmatprep.subr.bf16.mxu0 0
  %1973 = vmatpush1.bf16.msra.mxu0 0
  %1974 = vmatprep.subr.bf16.mxu0 0
  %1975 = vmatpush1.bf16.msra.mxu0 0
  %1976 = vmatprep.mubr.bf16.mxu0 0
  %1977 = vmatmul.mubr.bf16.gmra.mrb[0].mxu0 %v1924
  %v1978 = vpop.f32.mrb[0].mxu0
  %v1979 = vadd.f32 0.0, %v1978
  %v1980 = vpop.f32.mrb[0].mxu0
  %v1981 = vadd.f32 0.0, %v1980
  %v1982 = vpop.f32.mrb[0].mxu0
  %v1983 = vpop.f32.mrb[0].mxu0
  %1984 = vdwg.mxu0
  %1985 = vmatprep.subr.bf16.mxu0 %v1936
  %1986 = vmatpush1.bf16.msra.mxu0 %v1933
  %1987 = vmatprep.subr.bf16.mxu0 0
  %1988 = vmatpush1.bf16.msra.mxu0 0
  %1989 = vmatprep.subr.bf16.mxu0 0
  %1990 = vmatpush1.bf16.msra.mxu0 0
  %1991 = vmatprep.subr.bf16.mxu0 0
  %1992 = vmatpush1.bf16.msra.mxu0 0
  %1993 = vmatprep.subr.bf16.mxu0 0
  %1994 = vmatpush1.bf16.msra.mxu0 0
  %1995 = vmatprep.subr.bf16.mxu0 0
  %1996 = vmatpush1.bf16.msra.mxu0 0
  %1997 = vmatprep.subr.bf16.mxu0 0
  %1998 = vmatpush1.bf16.msra.mxu0 0
  %1999 = vmatprep.subr.bf16.mxu0 0
  %2000 = vmatpush1.bf16.msra.mxu0 0
  %2001 = vmatprep.subr.bf16.mxu0 0
  %2002 = vmatpush1.bf16.msra.mxu0 0
  %2003 = vmatprep.subr.bf16.mxu0 0
  %2004 = vmatpush1.bf16.msra.mxu0 0
  %2005 = vmatprep.subr.bf16.mxu0 0
  %2006 = vmatpush1.bf16.msra.mxu0 0
  %2007 = vmatprep.subr.bf16.mxu0 0
  %2008 = vmatpush1.bf16.msra.mxu0 0
  %2009 = vmatprep.subr.bf16.mxu0 0
  %2010 = vmatpush1.bf16.msra.mxu0 0
  %2011 = vmatprep.subr.bf16.mxu0 0
  %2012 = vmatpush1.bf16.msra.mxu0 0
  %2013 = vmatprep.subr.bf16.mxu0 0
  %2014 = vmatpush1.bf16.msra.mxu0 0
  %2015 = vmatprep.subr.bf16.mxu0 0
  %2016 = vmatpush1.bf16.msra.mxu0 0
  %2017 = vmatprep.mubr.bf16.mxu0 0
  %2018 = vmatmul.mubr.bf16.gmra.mrb[0].mxu0 %v1924
  %v2019 = vpop.f32.mrb[0].mxu0
  %v2020 = vadd.f32 0.0, %v2019
  %v2021 = vpop.f32.mrb[0].mxu0
  %v2022 = vadd.f32 0.0, %v2021
  %v2023 = vpop.f32.mrb[0].mxu0
  %v2024 = vpop.f32.mrb[0].mxu0
  %2025 = vdwg.mxu0
  %2026 = vmatprep.subr.bf16.mxu0 %v1942
  %2027 = vmatpush1.bf16.msra.mxu0 %v1939
  %2028 = vmatprep.subr.bf16.mxu0 0
  %2029 = vmatpush1.bf16.msra.mxu0 0
  %2030 = vmatprep.subr.bf16.mxu0 0
  %2031 = vmatpush1.bf16.msra.mxu0 0
  %2032 = vmatprep.subr.bf16.mxu0 0
  %2033 = vmatpush1.bf16.msra.mxu0 0
  %2034 = vmatprep.subr.bf16.mxu0 0
  %2035 = vmatpush1.bf16.msra.mxu0 0
  %2036 = vmatprep.subr.bf16.mxu0 0
  %2037 = vmatpush1.bf16.msra.mxu0 0
  %2038 = vmatprep.subr.bf16.mxu0 0
  %2039 = vmatpush1.bf16.msra.mxu0 0
  %2040 = vmatprep.subr.bf16.mxu0 0
  %2041 = vmatpush1.bf16.msra.mxu0 0
  %2042 = vmatprep.subr.bf16.mxu0 0
  %2043 = vmatpush1.bf16.msra.mxu0 0
  %2044 = vmatprep.subr.bf16.mxu0 0
  %2045 = vmatpush1.bf16.msra.mxu0 0
  %2046 = vmatprep.subr.bf16.mxu0 0
  %2047 = vmatpush1.bf16.msra.mxu0 0
  %2048 = vmatprep.subr.bf16.mxu0 0
  %2049 = vmatpush1.bf16.msra.mxu0 0
  %2050 = vmatprep.subr.bf16.mxu0 0
  %2051 = vmatpush1.bf16.msra.mxu0 0
  %2052 = vmatprep.subr.bf16.mxu0 0
  %2053 = vmatpush1.bf16.msra.mxu0 0
  %2054 = vmatprep.subr.bf16.mxu0 0
  %2055 = vmatpush1.bf16.msra.mxu0 0
  %2056 = vmatprep.subr.bf16.mxu0 0
  %2057 = vmatpush1.bf16.msra.mxu0 0
  %2058 = vmatprep.mubr.bf16.mxu0 0
  %2059 = vmatmul.mubr.bf16.gmra.mrb[0].mxu0 %v1924
  %v2060 = vpop.f32.mrb[0].mxu0
  %v2061 = vadd.f32 0.0, %v2060
  %v2062 = vpop.f32.mrb[0].mxu0
  %v2063 = vadd.f32 0.0, %v2062
  %v2064 = vpop.f32.mrb[0].mxu0
  %v2065 = vpop.f32.mrb[0].mxu0
  %2066 = vdwg.mxu0
  %v2068 = vsel %vm233, %v1885, 0
  %v2071 = vsel %vm190, %v1900, 0
  %v2074 = vsel %vm190, %v1901, 0
  %v2077 = vsel %vm190, %v1902, 0
  %v2080 = vsel %vm190, %v1903, 0
  %v2083 = vsel %vm190, %v1904, 0
  %v2086 = vsel %vm190, %v1905, 0
  %2088 = vmatprep.subr.bf16.mxu0 %v2074
  %2089 = vmatpush1.bf16.msra.mxu0 %v2071
  %2090 = vmatprep.subr.bf16.mxu0 0
  %2091 = vmatpush1.bf16.msra.mxu0 0
  %2092 = vmatprep.subr.bf16.mxu0 0
  %2093 = vmatpush1.bf16.msra.mxu0 0
  %2094 = vmatprep.subr.bf16.mxu0 0
  %2095 = vmatpush1.bf16.msra.mxu0 0
  %2096 = vmatprep.subr.bf16.mxu0 0
  %2097 = vmatpush1.bf16.msra.mxu0 0
  %2098 = vmatprep.subr.bf16.mxu0 0
  %2099 = vmatpush1.bf16.msra.mxu0 0
  %2100 = vmatprep.subr.bf16.mxu0 0
  %2101 = vmatpush1.bf16.msra.mxu0 0
  %2102 = vmatprep.subr.bf16.mxu0 0
  %2103 = vmatpush1.bf16.msra.mxu0 0
  %2104 = vmatprep.subr.bf16.mxu0 0
  %2105 = vmatpush1.bf16.msra.mxu0 0
  %2106 = vmatprep.subr.bf16.mxu0 0
  %2107 = vmatpush1.bf16.msra.mxu0 0
  %2108 = vmatprep.subr.bf16.mxu0 0
  %2109 = vmatpush1.bf16.msra.mxu0 0
  %2110 = vmatprep.subr.bf16.mxu0 0
  %2111 = vmatpush1.bf16.msra.mxu0 0
  %2112 = vmatprep.subr.bf16.mxu0 0
  %2113 = vmatpush1.bf16.msra.mxu0 0
  %2114 = vmatprep.subr.bf16.mxu0 0
  %2115 = vmatpush1.bf16.msra.mxu0 0
  %2116 = vmatprep.subr.bf16.mxu0 0
  %2117 = vmatpush1.bf16.msra.mxu0 0
  %2118 = vmatprep.subr.bf16.mxu0 0
  %2119 = vmatpush1.bf16.msra.mxu0 0
  %2120 = vmatprep.mubr.bf16.mxu0 0
  %2121 = vmatmul.mubr.bf16.gmra.mrb[0].mxu0 %v2068
  %v2122 = vpop.f32.mrb[0].mxu0
  %v2123 = vadd.f32 %v1979, %v2122
  %v2124 = vpop.f32.mrb[0].mxu0
  %v2125 = vadd.f32 %v1981, %v2124
  %v2126 = vpop.f32.mrb[0].mxu0
  %v2127 = vpop.f32.mrb[0].mxu0
  %2128 = vdwg.mxu0
  %2129 = vmatprep.subr.bf16.mxu0 %v2080
  %2130 = vmatpush1.bf16.msra.mxu0 %v2077
  %2131 = vmatprep.subr.bf16.mxu0 0
  %2132 = vmatpush1.bf16.msra.mxu0 0
  %2133 = vmatprep.subr.bf16.mxu0 0
  %2134 = vmatpush1.bf16.msra.mxu0 0
  %2135 = vmatprep.subr.bf16.mxu0 0
  %2136 = vmatpush1.bf16.msra.mxu0 0
  %2137 = vmatprep.subr.bf16.mxu0 0
  %2138 = vmatpush1.bf16.msra.mxu0 0
  %2139 = vmatprep.subr.bf16.mxu0 0
  %2140 = vmatpush1.bf16.msra.mxu0 0
  %2141 = vmatprep.subr.bf16.mxu0 0
  %2142 = vmatpush1.bf16.msra.mxu0 0
  %2143 = vmatprep.subr.bf16.mxu0 0
  %2144 = vmatpush1.bf16.msra.mxu0 0
  %2145 = vmatprep.subr.bf16.mxu0 0
  %2146 = vmatpush1.bf16.msra.mxu0 0
  %2147 = vmatprep.subr.bf16.mxu0 0
  %2148 = vmatpush1.bf16.msra.mxu0 0
  %2149 = vmatprep.subr.bf16.mxu0 0
  %2150 = vmatpush1.bf16.msra.mxu0 0
  %2151 = vmatprep.subr.bf16.mxu0 0
  %2152 = vmatpush1.bf16.msra.mxu0 0
  %2153 = vmatprep.subr.bf16.mxu0 0
  %2154 = vmatpush1.bf16.msra.mxu0 0
  %2155 = vmatprep.subr.bf16.mxu0 0
  %2156 = vmatpush1.bf16.msra.mxu0 0
  %2157 = vmatprep.subr.bf16.mxu0 0
  %2158 = vmatpush1.bf16.msra.mxu0 0
  %2159 = vmatprep.subr.bf16.mxu0 0
  %2160 = vmatpush1.bf16.msra.mxu0 0
  %2161 = vmatprep.mubr.bf16.mxu0 0
  %2162 = vmatmul.mubr.bf16.gmra.mrb[0].mxu0 %v2068
  %v2163 = vpop.f32.mrb[0].mxu0
  %v2164 = vadd.f32 %v2020, %v2163
  %v2165 = vpop.f32.mrb[0].mxu0
  %v2166 = vadd.f32 %v2022, %v2165
  %v2167 = vpop.f32.mrb[0].mxu0
  %v2168 = vpop.f32.mrb[0].mxu0
  %2169 = vdwg.mxu0
  %2170 = vmatprep.subr.bf16.mxu0 %v2086
  %2171 = vmatpush1.bf16.msra.mxu0 %v2083
  %2172 = vmatprep.subr.bf16.mxu0 0
  %2173 = vmatpush1.bf16.msra.mxu0 0
  %2174 = vmatprep.subr.bf16.mxu0 0
  %2175 = vmatpush1.bf16.msra.mxu0 0
  %2176 = vmatprep.subr.bf16.mxu0 0
  %2177 = vmatpush1.bf16.msra.mxu0 0
  %2178 = vmatprep.subr.bf16.mxu0 0
  %2179 = vmatpush1.bf16.msra.mxu0 0
  %2180 = vmatprep.subr.bf16.mxu0 0
  %2181 = vmatpush1.bf16.msra.mxu0 0
  %2182 = vmatprep.subr.bf16.mxu0 0
  %2183 = vmatpush1.bf16.msra.mxu0 0
  %2184 = vmatprep.subr.bf16.mxu0 0
  %2185 = vmatpush1.bf16.msra.mxu0 0
  %2186 = vmatprep.subr.bf16.mxu0 0
  %2187 = vmatpush1.bf16.msra.mxu0 0
  %2188 = vmatprep.subr.bf16.mxu0 0
  %2189 = vmatpush1.bf16.msra.mxu0 0
  %2190 = vmatprep.subr.bf16.mxu0 0
  %2191 = vmatpush1.bf16.msra.mxu0 0
  %2192 = vmatprep.subr.bf16.mxu0 0
  %2193 = vmatpush1.bf16.msra.mxu0 0
  %2194 = vmatprep.subr.bf16.mxu0 0
  %2195 = vmatpush1.bf16.msra.mxu0 0
  %2196 = vmatprep.subr.bf16.mxu0 0
  %2197 = vmatpush1.bf16.msra.mxu0 0
  %2198 = vmatprep.subr.bf16.mxu0 0
  %2199 = vmatpush1.bf16.msra.mxu0 0
  %2200 = vmatprep.subr.bf16.mxu0 0
  %2201 = vmatpush1.bf16.msra.mxu0 0
  %2202 = vmatprep.mubr.bf16.mxu0 0
  %2203 = vmatmul.mubr.bf16.gmra.mrb[0].mxu0 %v2068
  %v2204 = vpop.f32.mrb[0].mxu0
  %v2205 = vadd.f32 %v2061, %v2204
  %v2206 = vpop.f32.mrb[0].mxu0
  %v2207 = vadd.f32 %v2063, %v2206
  %v2208 = vpop.f32.mrb[0].mxu0
  %v2209 = vpop.f32.mrb[0].mxu0
  %2210 = vdwg.mxu0
  %s2211 = scalar_lea.vmem %s4, 8
  %v2212 = vld [vmem:[%s2211] sm:$0xf]
  %2213 = vrot.lane.b32.xlu0 %v1900, 126
  %v2214 = vpop.permute.xlu0 %2213
  %2215 = vrot.lane.b32.xlu0 %v1901, 126
  %v2216 = vpop.permute.xlu0 %2215
  %2217 = vrot.lane.b32.xlu0 %v1902, 126
  %v2218 = vpop.permute.xlu0 %2217
  %2219 = vrot.lane.b32.xlu0 %v1903, 126
  %v2220 = vpop.permute.xlu0 %2219
  %2221 = vrot.lane.b32.xlu0 %v1904, 126
  %v2222 = vpop.permute.xlu0 %2221
  %2223 = vrot.lane.b32.xlu0 %v1905, 126
  %v2224 = vpop.permute.xlu0 %2223
  %v2225 = vsel %vm536, %v2214, %v2216
  %v2226 = vsel %vm536, %v2216, %v2218
  %v2227 = vsel %vm536, %v2218, %v2220
  %v2228 = vsel %vm536, %v2220, %v2222
  %v2229 = vsel %vm536, %v2222, %v2224
  %v2231 = vsel %vm233, %v2212, 0
  %v2234 = vsel %vm190, %v2225, 0
  %v2237 = vsel %vm190, %v2226, 0
  %v2240 = vsel %vm190, %v2227, 0
  %v2243 = vsel %vm190, %v2228, 0
  %v2246 = vsel %vm190, %v2229, 0
  %v2249 = vsel %vm190, %v2224, 0
  %2251 = vmatprep.subr.bf16.mxu0 %v2237
  %2252 = vmatpush1.bf16.msra.mxu0 %v2234
  %2253 = vmatprep.subr.bf16.mxu0 0
  %2254 = vmatpush1.bf16.msra.mxu0 0
  %2255 = vmatprep.subr.bf16.mxu0 0
  %2256 = vmatpush1.bf16.msra.mxu0 0
  %2257 = vmatprep.subr.bf16.mxu0 0
  %2258 = vmatpush1.bf16.msra.mxu0 0
  %2259 = vmatprep.subr.bf16.mxu0 0
  %2260 = vmatpush1.bf16.msra.mxu0 0
  %2261 = vmatprep.subr.bf16.mxu0 0
  %2262 = vmatpush1.bf16.msra.mxu0 0
  %2263 = vmatprep.subr.bf16.mxu0 0
  %2264 = vmatpush1.bf16.msra.mxu0 0
  %2265 = vmatprep.subr.bf16.mxu0 0
  %2266 = vmatpush1.bf16.msra.mxu0 0
  %2267 = vmatprep.subr.bf16.mxu0 0
  %2268 = vmatpush1.bf16.msra.mxu0 0
  %2269 = vmatprep.subr.bf16.mxu0 0
  %2270 = vmatpush1.bf16.msra.mxu0 0
  %2271 = vmatprep.subr.bf16.mxu0 0
  %2272 = vmatpush1.bf16.msra.mxu0 0
  %2273 = vmatprep.subr.bf16.mxu0 0
  %2274 = vmatpush1.bf16.msra.mxu0 0
  %2275 = vmatprep.subr.bf16.mxu0 0
  %2276 = vmatpush1.bf16.msra.mxu0 0
  %2277 = vmatprep.subr.bf16.mxu0 0
  %2278 = vmatpush1.bf16.msra.mxu0 0
  %2279 = vmatprep.subr.bf16.mxu0 0
  %2280 = vmatpush1.bf16.msra.mxu0 0
  %2281 = vmatprep.subr.bf16.mxu0 0
  %2282 = vmatpush1.bf16.msra.mxu0 0
  %2283 = vmatprep.mubr.bf16.mxu0 0
  %2284 = vmatmul.mubr.bf16.gmra.mrb[0].mxu0 %v2231
  %v2285 = vpop.f32.mrb[0].mxu0
  %v2286 = vadd.f32 0.0, %v2285
  %v2287 = vpop.f32.mrb[0].mxu0
  %v2288 = vadd.f32 0.0, %v2287
  %v2289 = vpop.f32.mrb[0].mxu0
  %v2290 = vpop.f32.mrb[0].mxu0
  %2291 = vdwg.mxu0
  %2292 = vmatprep.subr.bf16.mxu0 %v2243
  %2293 = vmatpush1.bf16.msra.mxu0 %v2240
  %2294 = vmatprep.subr.bf16.mxu0 0
  %2295 = vmatpush1.bf16.msra.mxu0 0
  %2296 = vmatprep.subr.bf16.mxu0 0
  %2297 = vmatpush1.bf16.msra.mxu0 0
  %2298 = vmatprep.subr.bf16.mxu0 0
  %2299 = vmatpush1.bf16.msra.mxu0 0
  %2300 = vmatprep.subr.bf16.mxu0 0
  %2301 = vmatpush1.bf16.msra.mxu0 0
  %2302 = vmatprep.subr.bf16.mxu0 0
  %2303 = vmatpush1.bf16.msra.mxu0 0
  %2304 = vmatprep.subr.bf16.mxu0 0
  %2305 = vmatpush1.bf16.msra.mxu0 0
  %2306 = vmatprep.subr.bf16.mxu0 0
  %2307 = vmatpush1.bf16.msra.mxu0 0
  %2308 = vmatprep.subr.bf16.mxu0 0
  %2309 = vmatpush1.bf16.msra.mxu0 0
  %2310 = vmatprep.subr.bf16.mxu0 0
  %2311 = vmatpush1.bf16.msra.mxu0 0
  %2312 = vmatprep.subr.bf16.mxu0 0
  %2313 = vmatpush1.bf16.msra.mxu0 0
  %2314 = vmatprep.subr.bf16.mxu0 0
  %2315 = vmatpush1.bf16.msra.mxu0 0
  %2316 = vmatprep.subr.bf16.mxu0 0
  %2317 = vmatpush1.bf16.msra.mxu0 0
  %2318 = vmatprep.subr.bf16.mxu0 0
  %2319 = vmatpush1.bf16.msra.mxu0 0
  %2320 = vmatprep.subr.bf16.mxu0 0
  %2321 = vmatpush1.bf16.msra.mxu0 0
  %2322 = vmatprep.subr.bf16.mxu0 0
  %2323 = vmatpush1.bf16.msra.mxu0 0
  %2324 = vmatprep.mubr.bf16.mxu0 0
  %2325 = vmatmul.mubr.bf16.gmra.mrb[0].mxu0 %v2231
  %v2326 = vpop.f32.mrb[0].mxu0
  %v2327 = vadd.f32 0.0, %v2326
  %v2328 = vpop.f32.mrb[0].mxu0
  %v2329 = vadd.f32 0.0, %v2328
  %v2330 = vpop.f32.mrb[0].mxu0
  %v2331 = vpop.f32.mrb[0].mxu0
  %2332 = vdwg.mxu0
  %2333 = vmatprep.subr.bf16.mxu0 %v2249
  %2334 = vmatpush1.bf16.msra.mxu0 %v2246
  %2335 = vmatprep.subr.bf16.mxu0 0
  %2336 = vmatpush1.bf16.msra.mxu0 0
  %2337 = vmatprep.subr.bf16.mxu0 0
  %2338 = vmatpush1.bf16.msra.mxu0 0
  %2339 = vmatprep.subr.bf16.mxu0 0
  %2340 = vmatpush1.bf16.msra.mxu0 0
  %2341 = vmatprep.subr.bf16.mxu0 0
  %2342 = vmatpush1.bf16.msra.mxu0 0
  %2343 = vmatprep.subr.bf16.mxu0 0
  %2344 = vmatpush1.bf16.msra.mxu0 0
  %2345 = vmatprep.subr.bf16.mxu0 0
  %2346 = vmatpush1.bf16.msra.mxu0 0
  %2347 = vmatprep.subr.bf16.mxu0 0
  %2348 = vmatpush1.bf16.msra.mxu0 0
  %2349 = vmatprep.subr.bf16.mxu0 0
  %2350 = vmatpush1.bf16.msra.mxu0 0
  %2351 = vmatprep.subr.bf16.mxu0 0
  %2352 = vmatpush1.bf16.msra.mxu0 0
  %2353 = vmatprep.subr.bf16.mxu0 0
  %2354 = vmatpush1.bf16.msra.mxu0 0
  %2355 = vmatprep.subr.bf16.mxu0 0
  %2356 = vmatpush1.bf16.msra.mxu0 0
  %2357 = vmatprep.subr.bf16.mxu0 0
  %2358 = vmatpush1.bf16.msra.mxu0 0
  %2359 = vmatprep.subr.bf16.mxu0 0
  %2360 = vmatpush1.bf16.msra.mxu0 0
  %2361 = vmatprep.subr.bf16.mxu0 0
  %2362 = vmatpush1.bf16.msra.mxu0 0
  %2363 = vmatprep.subr.bf16.mxu0 0
  %2364 = vmatpush1.bf16.msra.mxu0 0
  %2365 = vmatprep.mubr.bf16.mxu0 0
  %2366 = vmatmul.mubr.bf16.gmra.mrb[0].mxu0 %v2231
  %v2367 = vpop.f32.mrb[0].mxu0
  %v2368 = vadd.f32 0.0, %v2367
  %v2369 = vpop.f32.mrb[0].mxu0
  %v2370 = vadd.f32 0.0, %v2369
  %v2371 = vpop.f32.mrb[0].mxu0
  %v2372 = vpop.f32.mrb[0].mxu0
  %2373 = vdwg.mxu0
  %v2374 = vadd.f32 %v2123, %v2286
  %v2375 = vadd.f32 %v2125, %v2288
  %v2376 = vadd.f32 %v2164, %v2327
  %v2377 = vadd.f32 %v2166, %v2329
  %v2378 = vadd.f32 %v2205, %v2368
  %v2379 = vadd.f32 %v2207, %v2370
  %s2380 = scalar_lea.vmem %s4, 12
  %v2381 = vld [vmem:[%s2380] sm:$0xf]
  %2382 = vrot.lane.b32.xlu0 %v1900, 110
  %v2383 = vpop.permute.xlu0 %2382
  %2384 = vrot.lane.b32.xlu0 %v1901, 110
  %v2385 = vpop.permute.xlu0 %2384
  %2386 = vrot.lane.b32.xlu0 %v1902, 110
  %v2387 = vpop.permute.xlu0 %2386
  %2388 = vrot.lane.b32.xlu0 %v1903, 110
  %v2389 = vpop.permute.xlu0 %2388
  %2390 = vrot.lane.b32.xlu0 %v1904, 110
  %v2391 = vpop.permute.xlu0 %2390
  %2392 = vrot.lane.b32.xlu0 %v1905, 110
  %v2393 = vpop.permute.xlu0 %2392
  %v2394 = vsel %vm706, %v2383, %v2385
  %v2395 = vsel %vm706, %v2385, %v2387
  %v2396 = vsel %vm706, %v2387, %v2389
  %v2397 = vsel %vm706, %v2389, %v2391
  %v2398 = vsel %vm706, %v2391, %v2393
  %v2400 = vsel %vm233, %v2381, 0
  %v2403 = vsel %vm190, %v2394, 0
  %v2406 = vsel %vm190, %v2395, 0
  %v2409 = vsel %vm190, %v2396, 0
  %v2412 = vsel %vm190, %v2397, 0
  %v2415 = vsel %vm190, %v2398, 0
  %v2418 = vsel %vm190, %v2393, 0
  %2420 = vmatprep.subr.bf16.mxu0 %v2406
  %2421 = vmatpush1.bf16.msra.mxu0 %v2403
  %2422 = vmatprep.subr.bf16.mxu0 0
  %2423 = vmatpush1.bf16.msra.mxu0 0
  %2424 = vmatprep.subr.bf16.mxu0 0
  %2425 = vmatpush1.bf16.msra.mxu0 0
  %2426 = vmatprep.subr.bf16.mxu0 0
  %2427 = vmatpush1.bf16.msra.mxu0 0
  %2428 = vmatprep.subr.bf16.mxu0 0
  %2429 = vmatpush1.bf16.msra.mxu0 0
  %2430 = vmatprep.subr.bf16.mxu0 0
  %2431 = vmatpush1.bf16.msra.mxu0 0
  %2432 = vmatprep.subr.bf16.mxu0 0
  %2433 = vmatpush1.bf16.msra.mxu0 0
  %2434 = vmatprep.subr.bf16.mxu0 0
  %2435 = vmatpush1.bf16.msra.mxu0 0
  %2436 = vmatprep.subr.bf16.mxu0 0
  %2437 = vmatpush1.bf16.msra.mxu0 0
  %2438 = vmatprep.subr.bf16.mxu0 0
  %2439 = vmatpush1.bf16.msra.mxu0 0
  %2440 = vmatprep.subr.bf16.mxu0 0
  %2441 = vmatpush1.bf16.msra.mxu0 0
  %2442 = vmatprep.subr.bf16.mxu0 0
  %2443 = vmatpush1.bf16.msra.mxu0 0
  %2444 = vmatprep.subr.bf16.mxu0 0
  %2445 = vmatpush1.bf16.msra.mxu0 0
  %2446 = vmatprep.subr.bf16.mxu0 0
  %2447 = vmatpush1.bf16.msra.mxu0 0
  %2448 = vmatprep.subr.bf16.mxu0 0
  %2449 = vmatpush1.bf16.msra.mxu0 0
  %2450 = vmatprep.subr.bf16.mxu0 0
  %2451 = vmatpush1.bf16.msra.mxu0 0
  %2452 = vmatprep.mubr.bf16.mxu0 0
  %2453 = vmatmul.mubr.bf16.gmra.mrb[0].mxu0 %v2400
  %v2454 = vpop.f32.mrb[0].mxu0
  %v2455 = vadd.f32 0.0, %v2454
  %v2456 = vpop.f32.mrb[0].mxu0
  %v2457 = vadd.f32 0.0, %v2456
  %v2458 = vpop.f32.mrb[0].mxu0
  %v2459 = vpop.f32.mrb[0].mxu0
  %2460 = vdwg.mxu0
  %2461 = vmatprep.subr.bf16.mxu0 %v2412
  %2462 = vmatpush1.bf16.msra.mxu0 %v2409
  %2463 = vmatprep.subr.bf16.mxu0 0
  %2464 = vmatpush1.bf16.msra.mxu0 0
  %2465 = vmatprep.subr.bf16.mxu0 0
  %2466 = vmatpush1.bf16.msra.mxu0 0
  %2467 = vmatprep.subr.bf16.mxu0 0
  %2468 = vmatpush1.bf16.msra.mxu0 0
  %2469 = vmatprep.subr.bf16.mxu0 0
  %2470 = vmatpush1.bf16.msra.mxu0 0
  %2471 = vmatprep.subr.bf16.mxu0 0
  %2472 = vmatpush1.bf16.msra.mxu0 0
  %2473 = vmatprep.subr.bf16.mxu0 0
  %2474 = vmatpush1.bf16.msra.mxu0 0
  %2475 = vmatprep.subr.bf16.mxu0 0
  %2476 = vmatpush1.bf16.msra.mxu0 0
  %2477 = vmatprep.subr.bf16.mxu0 0
  %2478 = vmatpush1.bf16.msra.mxu0 0
  %2479 = vmatprep.subr.bf16.mxu0 0
  %2480 = vmatpush1.bf16.msra.mxu0 0
  %2481 = vmatprep.subr.bf16.mxu0 0
  %2482 = vmatpush1.bf16.msra.mxu0 0
  %2483 = vmatprep.subr.bf16.mxu0 0
  %2484 = vmatpush1.bf16.msra.mxu0 0
  %2485 = vmatprep.subr.bf16.mxu0 0
  %2486 = vmatpush1.bf16.msra.mxu0 0
  %2487 = vmatprep.subr.bf16.mxu0 0
  %2488 = vmatpush1.bf16.msra.mxu0 0
  %2489 = vmatprep.subr.bf16.mxu0 0
  %2490 = vmatpush1.bf16.msra.mxu0 0
  %2491 = vmatprep.subr.bf16.mxu0 0
  %2492 = vmatpush1.bf16.msra.mxu0 0
  %2493 = vmatprep.mubr.bf16.mxu0 0
  %2494 = vmatmul.mubr.bf16.gmra.mrb[0].mxu0 %v2400
  %v2495 = vpop.f32.mrb[0].mxu0
  %v2496 = vadd.f32 0.0, %v2495
  %v2497 = vpop.f32.mrb[0].mxu0
  %v2498 = vadd.f32 0.0, %v2497
  %v2499 = vpop.f32.mrb[0].mxu0
  %v2500 = vpop.f32.mrb[0].mxu0
  %2501 = vdwg.mxu0
  %2502 = vmatprep.subr.bf16.mxu0 %v2418
  %2503 = vmatpush1.bf16.msra.mxu0 %v2415
  %2504 = vmatprep.subr.bf16.mxu0 0
  %2505 = vmatpush1.bf16.msra.mxu0 0
  %2506 = vmatprep.subr.bf16.mxu0 0
  %2507 = vmatpush1.bf16.msra.mxu0 0
  %2508 = vmatprep.subr.bf16.mxu0 0
  %2509 = vmatpush1.bf16.msra.mxu0 0
  %2510 = vmatprep.subr.bf16.mxu0 0
  %2511 = vmatpush1.bf16.msra.mxu0 0
  %2512 = vmatprep.subr.bf16.mxu0 0
  %2513 = vmatpush1.bf16.msra.mxu0 0
  %2514 = vmatprep.subr.bf16.mxu0 0
  %2515 = vmatpush1.bf16.msra.mxu0 0
  %2516 = vmatprep.subr.bf16.mxu0 0
  %2517 = vmatpush1.bf16.msra.mxu0 0
  %2518 = vmatprep.subr.bf16.mxu0 0
  %2519 = vmatpush1.bf16.msra.mxu0 0
  %2520 = vmatprep.subr.bf16.mxu0 0
  %2521 = vmatpush1.bf16.msra.mxu0 0
  %2522 = vmatprep.subr.bf16.mxu0 0
  %2523 = vmatpush1.bf16.msra.mxu0 0
  %2524 = vmatprep.subr.bf16.mxu0 0
  %2525 = vmatpush1.bf16.msra.mxu0 0
  %2526 = vmatprep.subr.bf16.mxu0 0
  %2527 = vmatpush1.bf16.msra.mxu0 0
  %2528 = vmatprep.subr.bf16.mxu0 0
  %2529 = vmatpush1.bf16.msra.mxu0 0
  %2530 = vmatprep.subr.bf16.mxu0 0
  %2531 = vmatpush1.bf16.msra.mxu0 0
  %2532 = vmatprep.subr.bf16.mxu0 0
  %2533 = vmatpush1.bf16.msra.mxu0 0
  %2534 = vmatprep.mubr.bf16.mxu0 0
  %2535 = vmatmul.mubr.bf16.gmra.mrb[0].mxu0 %v2400
  %v2536 = vpop.f32.mrb[0].mxu0
  %v2537 = vadd.f32 0.0, %v2536
  %v2538 = vpop.f32.mrb[0].mxu0
  %v2539 = vadd.f32 0.0, %v2538
  %v2540 = vpop.f32.mrb[0].mxu0
  %v2541 = vpop.f32.mrb[0].mxu0
  %2542 = vdwg.mxu0
  %v2543 = vadd.f32 %v2374, %v2455
  %v2544 = vadd.f32 %v2375, %v2457
  %v2545 = vadd.f32 %v2376, %v2496
  %v2546 = vadd.f32 %v2377, %v2498
  %v2547 = vadd.f32 %v2378, %v2537
  %v2548 = vadd.f32 %v2379, %v2539
  %s2549 = scalar_lea.vmem %s4, 16
  %v2550 = vld [vmem:[%s2549] sm:$0xf]
  %2551 = vrot.lane.b32.xlu0 %v1900, 109
  %v2552 = vpop.permute.xlu0 %2551
  %2553 = vrot.lane.b32.xlu0 %v1901, 109
  %v2554 = vpop.permute.xlu0 %2553
  %2555 = vrot.lane.b32.xlu0 %v1902, 109
  %v2556 = vpop.permute.xlu0 %2555
  %2557 = vrot.lane.b32.xlu0 %v1903, 109
  %v2558 = vpop.permute.xlu0 %2557
  %2559 = vrot.lane.b32.xlu0 %v1904, 109
  %v2560 = vpop.permute.xlu0 %2559
  %2561 = vrot.lane.b32.xlu0 %v1905, 109
  %v2562 = vpop.permute.xlu0 %2561
  %v2563 = vsel %vm876, %v2552, %v2554
  %v2564 = vsel %vm876, %v2554, %v2556
  %v2565 = vsel %vm876, %v2556, %v2558
  %v2566 = vsel %vm876, %v2558, %v2560
  %v2567 = vsel %vm876, %v2560, %v2562
  %v2569 = vsel %vm233, %v2550, 0
  %v2572 = vsel %vm190, %v2563, 0
  %v2575 = vsel %vm190, %v2564, 0
  %v2578 = vsel %vm190, %v2565, 0
  %v2581 = vsel %vm190, %v2566, 0
  %v2584 = vsel %vm190, %v2567, 0
  %v2587 = vsel %vm190, %v2562, 0
  %2589 = vmatprep.subr.bf16.mxu0 %v2575
  %2590 = vmatpush1.bf16.msra.mxu0 %v2572
  %2591 = vmatprep.subr.bf16.mxu0 0
  %2592 = vmatpush1.bf16.msra.mxu0 0
  %2593 = vmatprep.subr.bf16.mxu0 0
  %2594 = vmatpush1.bf16.msra.mxu0 0
  %2595 = vmatprep.subr.bf16.mxu0 0
  %2596 = vmatpush1.bf16.msra.mxu0 0
  %2597 = vmatprep.subr.bf16.mxu0 0
  %2598 = vmatpush1.bf16.msra.mxu0 0
  %2599 = vmatprep.subr.bf16.mxu0 0
  %2600 = vmatpush1.bf16.msra.mxu0 0
  %2601 = vmatprep.subr.bf16.mxu0 0
  %2602 = vmatpush1.bf16.msra.mxu0 0
  %2603 = vmatprep.subr.bf16.mxu0 0
  %2604 = vmatpush1.bf16.msra.mxu0 0
  %2605 = vmatprep.subr.bf16.mxu0 0
  %2606 = vmatpush1.bf16.msra.mxu0 0
  %2607 = vmatprep.subr.bf16.mxu0 0
  %2608 = vmatpush1.bf16.msra.mxu0 0
  %2609 = vmatprep.subr.bf16.mxu0 0
  %2610 = vmatpush1.bf16.msra.mxu0 0
  %2611 = vmatprep.subr.bf16.mxu0 0
  %2612 = vmatpush1.bf16.msra.mxu0 0
  %2613 = vmatprep.subr.bf16.mxu0 0
  %2614 = vmatpush1.bf16.msra.mxu0 0
  %2615 = vmatprep.subr.bf16.mxu0 0
  %2616 = vmatpush1.bf16.msra.mxu0 0
  %2617 = vmatprep.subr.bf16.mxu0 0
  %2618 = vmatpush1.bf16.msra.mxu0 0
  %2619 = vmatprep.subr.bf16.mxu0 0
  %2620 = vmatpush1.bf16.msra.mxu0 0
  %2621 = vmatprep.mubr.bf16.mxu0 0
  %2622 = vmatmul.mubr.bf16.gmra.mrb[0].mxu0 %v2569
  %v2623 = vpop.f32.mrb[0].mxu0
  %v2624 = vadd.f32 0.0, %v2623
  %v2625 = vpop.f32.mrb[0].mxu0
  %v2626 = vadd.f32 0.0, %v2625
  %v2627 = vpop.f32.mrb[0].mxu0
  %v2628 = vpop.f32.mrb[0].mxu0
  %2629 = vdwg.mxu0
  %2630 = vmatprep.subr.bf16.mxu0 %v2581
  %2631 = vmatpush1.bf16.msra.mxu0 %v2578
  %2632 = vmatprep.subr.bf16.mxu0 0
  %2633 = vmatpush1.bf16.msra.mxu0 0
  %2634 = vmatprep.subr.bf16.mxu0 0
  %2635 = vmatpush1.bf16.msra.mxu0 0
  %2636 = vmatprep.subr.bf16.mxu0 0
  %2637 = vmatpush1.bf16.msra.mxu0 0
  %2638 = vmatprep.subr.bf16.mxu0 0
  %2639 = vmatpush1.bf16.msra.mxu0 0
  %2640 = vmatprep.subr.bf16.mxu0 0
  %2641 = vmatpush1.bf16.msra.mxu0 0
  %2642 = vmatprep.subr.bf16.mxu0 0
  %2643 = vmatpush1.bf16.msra.mxu0 0
  %2644 = vmatprep.subr.bf16.mxu0 0
  %2645 = vmatpush1.bf16.msra.mxu0 0
  %2646 = vmatprep.subr.bf16.mxu0 0
  %2647 = vmatpush1.bf16.msra.mxu0 0
  %2648 = vmatprep.subr.bf16.mxu0 0
  %2649 = vmatpush1.bf16.msra.mxu0 0
  %2650 = vmatprep.subr.bf16.mxu0 0
  %2651 = vmatpush1.bf16.msra.mxu0 0
  %2652 = vmatprep.subr.bf16.mxu0 0
  %2653 = vmatpush1.bf16.msra.mxu0 0
  %2654 = vmatprep.subr.bf16.mxu0 0
  %2655 = vmatpush1.bf16.msra.mxu0 0
  %2656 = vmatprep.subr.bf16.mxu0 0
  %2657 = vmatpush1.bf16.msra.mxu0 0
  %2658 = vmatprep.subr.bf16.mxu0 0
  %2659 = vmatpush1.bf16.msra.mxu0 0
  %2660 = vmatprep.subr.bf16.mxu0 0
  %2661 = vmatpush1.bf16.msra.mxu0 0
  %2662 = vmatprep.mubr.bf16.mxu0 0
  %2663 = vmatmul.mubr.bf16.gmra.mrb[0].mxu0 %v2569
  %v2664 = vpop.f32.mrb[0].mxu0
  %v2665 = vadd.f32 0.0, %v2664
  %v2666 = vpop.f32.mrb[0].mxu0
  %v2667 = vadd.f32 0.0, %v2666
  %v2668 = vpop.f32.mrb[0].mxu0
  %v2669 = vpop.f32.mrb[0].mxu0
  %2670 = vdwg.mxu0
  %2671 = vmatprep.subr.bf16.mxu0 %v2587
  %2672 = vmatpush1.bf16.msra.mxu0 %v2584
  %2673 = vmatprep.subr.bf16.mxu0 0
  %2674 = vmatpush1.bf16.msra.mxu0 0
  %2675 = vmatprep.subr.bf16.mxu0 0
  %2676 = vmatpush1.bf16.msra.mxu0 0
  %2677 = vmatprep.subr.bf16.mxu0 0
  %2678 = vmatpush1.bf16.msra.mxu0 0
  %2679 = vmatprep.subr.bf16.mxu0 0
  %2680 = vmatpush1.bf16.msra.mxu0 0
  %2681 = vmatprep.subr.bf16.mxu0 0
  %2682 = vmatpush1.bf16.msra.mxu0 0
  %2683 = vmatprep.subr.bf16.mxu0 0
  %2684 = vmatpush1.bf16.msra.mxu0 0
  %2685 = vmatprep.subr.bf16.mxu0 0
  %2686 = vmatpush1.bf16.msra.mxu0 0
  %2687 = vmatprep.subr.bf16.mxu0 0
  %2688 = vmatpush1.bf16.msra.mxu0 0
  %2689 = vmatprep.subr.bf16.mxu0 0
  %2690 = vmatpush1.bf16.msra.mxu0 0
  %2691 = vmatprep.subr.bf16.mxu0 0
  %2692 = vmatpush1.bf16.msra.mxu0 0
  %2693 = vmatprep.subr.bf16.mxu0 0
  %2694 = vmatpush1.bf16.msra.mxu0 0
  %2695 = vmatprep.subr.bf16.mxu0 0
  %2696 = vmatpush1.bf16.msra.mxu0 0
  %2697 = vmatprep.subr.bf16.mxu0 0
  %2698 = vmatpush1.bf16.msra.mxu0 0
  %2699 = vmatprep.subr.bf16.mxu0 0
  %2700 = vmatpush1.bf16.msra.mxu0 0
  %2701 = vmatprep.subr.bf16.mxu0 0
  %2702 = vmatpush1.bf16.msra.mxu0 0
  %2703 = vmatprep.mubr.bf16.mxu0 0
  %2704 = vmatmul.mubr.bf16.gmra.mrb[0].mxu0 %v2569
  %v2705 = vpop.f32.mrb[0].mxu0
  %v2706 = vadd.f32 0.0, %v2705
  %v2707 = vpop.f32.mrb[0].mxu0
  %v2708 = vadd.f32 0.0, %v2707
  %v2709 = vpop.f32.mrb[0].mxu0
  %v2710 = vpop.f32.mrb[0].mxu0
  %2711 = vdwg.mxu0
  %v2712 = vadd.f32 %v2543, %v2624
  %v2713 = vadd.f32 %v2544, %v2626
  %v2714 = vadd.f32 %v2545, %v2665
  %v2715 = vadd.f32 %v2546, %v2667
  %v2716 = vadd.f32 %v2547, %v2706
  %v2717 = vadd.f32 %v2548, %v2708
  %s2718 = scalar_lea.vmem %s4, 20
  %v2719 = vld [vmem:[%s2718] sm:$0xf]
  %2720 = vrot.lane.b32.xlu0 %v1900, 108
  %v2721 = vpop.permute.xlu0 %2720
  %2722 = vrot.lane.b32.xlu0 %v1901, 108
  %v2723 = vpop.permute.xlu0 %2722
  %2724 = vrot.lane.b32.xlu0 %v1902, 108
  %v2725 = vpop.permute.xlu0 %2724
  %2726 = vrot.lane.b32.xlu0 %v1903, 108
  %v2727 = vpop.permute.xlu0 %2726
  %2728 = vrot.lane.b32.xlu0 %v1904, 108
  %v2729 = vpop.permute.xlu0 %2728
  %2730 = vrot.lane.b32.xlu0 %v1905, 108
  %v2731 = vpop.permute.xlu0 %2730
  %v2732 = vsel %vm1046, %v2721, %v2723
  %v2733 = vsel %vm1046, %v2723, %v2725
  %v2734 = vsel %vm1046, %v2725, %v2727
  %v2735 = vsel %vm1046, %v2727, %v2729
  %v2736 = vsel %vm1046, %v2729, %v2731
  %v2738 = vsel %vm233, %v2719, 0
  %v2741 = vsel %vm190, %v2732, 0
  %v2744 = vsel %vm190, %v2733, 0
  %v2747 = vsel %vm190, %v2734, 0
  %v2750 = vsel %vm190, %v2735, 0
  %v2753 = vsel %vm190, %v2736, 0
  %v2756 = vsel %vm190, %v2731, 0
  %2758 = vmatprep.subr.bf16.mxu0 %v2744
  %2759 = vmatpush1.bf16.msra.mxu0 %v2741
  %2760 = vmatprep.subr.bf16.mxu0 0
  %2761 = vmatpush1.bf16.msra.mxu0 0
  %2762 = vmatprep.subr.bf16.mxu0 0
  %2763 = vmatpush1.bf16.msra.mxu0 0
  %2764 = vmatprep.subr.bf16.mxu0 0
  %2765 = vmatpush1.bf16.msra.mxu0 0
  %2766 = vmatprep.subr.bf16.mxu0 0
  %2767 = vmatpush1.bf16.msra.mxu0 0
  %2768 = vmatprep.subr.bf16.mxu0 0
  %2769 = vmatpush1.bf16.msra.mxu0 0
  %2770 = vmatprep.subr.bf16.mxu0 0
  %2771 = vmatpush1.bf16.msra.mxu0 0
  %2772 = vmatprep.subr.bf16.mxu0 0
  %2773 = vmatpush1.bf16.msra.mxu0 0
  %2774 = vmatprep.subr.bf16.mxu0 0
  %2775 = vmatpush1.bf16.msra.mxu0 0
  %2776 = vmatprep.subr.bf16.mxu0 0
  %2777 = vmatpush1.bf16.msra.mxu0 0
  %2778 = vmatprep.subr.bf16.mxu0 0
  %2779 = vmatpush1.bf16.msra.mxu0 0
  %2780 = vmatprep.subr.bf16.mxu0 0
  %2781 = vmatpush1.bf16.msra.mxu0 0
  %2782 = vmatprep.subr.bf16.mxu0 0
  %2783 = vmatpush1.bf16.msra.mxu0 0
  %2784 = vmatprep.subr.bf16.mxu0 0
  %2785 = vmatpush1.bf16.msra.mxu0 0
  %2786 = vmatprep.subr.bf16.mxu0 0
  %2787 = vmatpush1.bf16.msra.mxu0 0
  %2788 = vmatprep.subr.bf16.mxu0 0
  %2789 = vmatpush1.bf16.msra.mxu0 0
  %2790 = vmatprep.mubr.bf16.mxu0 0
  %2791 = vmatmul.mubr.bf16.gmra.mrb[0].mxu0 %v2738
  %v2792 = vpop.f32.mrb[0].mxu0
  %v2793 = vadd.f32 0.0, %v2792
  %v2794 = vpop.f32.mrb[0].mxu0
  %v2795 = vadd.f32 0.0, %v2794
  %v2796 = vpop.f32.mrb[0].mxu0
  %v2797 = vpop.f32.mrb[0].mxu0
  %2798 = vdwg.mxu0
  %2799 = vmatprep.subr.bf16.mxu0 %v2750
  %2800 = vmatpush1.bf16.msra.mxu0 %v2747
  %2801 = vmatprep.subr.bf16.mxu0 0
  %2802 = vmatpush1.bf16.msra.mxu0 0
  %2803 = vmatprep.subr.bf16.mxu0 0
  %2804 = vmatpush1.bf16.msra.mxu0 0
  %2805 = vmatprep.subr.bf16.mxu0 0
  %2806 = vmatpush1.bf16.msra.mxu0 0
  %2807 = vmatprep.subr.bf16.mxu0 0
  %2808 = vmatpush1.bf16.msra.mxu0 0
  %2809 = vmatprep.subr.bf16.mxu0 0
  %2810 = vmatpush1.bf16.msra.mxu0 0
  %2811 = vmatprep.subr.bf16.mxu0 0
  %2812 = vmatpush1.bf16.msra.mxu0 0
  %2813 = vmatprep.subr.bf16.mxu0 0
  %2814 = vmatpush1.bf16.msra.mxu0 0
  %2815 = vmatprep.subr.bf16.mxu0 0
  %2816 = vmatpush1.bf16.msra.mxu0 0
  %2817 = vmatprep.subr.bf16.mxu0 0
  %2818 = vmatpush1.bf16.msra.mxu0 0
  %2819 = vmatprep.subr.bf16.mxu0 0
  %2820 = vmatpush1.bf16.msra.mxu0 0
  %2821 = vmatprep.subr.bf16.mxu0 0
  %2822 = vmatpush1.bf16.msra.mxu0 0
  %2823 = vmatprep.subr.bf16.mxu0 0
  %2824 = vmatpush1.bf16.msra.mxu0 0
  %2825 = vmatprep.subr.bf16.mxu0 0
  %2826 = vmatpush1.bf16.msra.mxu0 0
  %2827 = vmatprep.subr.bf16.mxu0 0
  %2828 = vmatpush1.bf16.msra.mxu0 0
  %2829 = vmatprep.subr.bf16.mxu0 0
  %2830 = vmatpush1.bf16.msra.mxu0 0
  %2831 = vmatprep.mubr.bf16.mxu0 0
  %2832 = vmatmul.mubr.bf16.gmra.mrb[0].mxu0 %v2738
  %v2833 = vpop.f32.mrb[0].mxu0
  %v2834 = vadd.f32 0.0, %v2833
  %v2835 = vpop.f32.mrb[0].mxu0
  %v2836 = vadd.f32 0.0, %v2835
  %v2837 = vpop.f32.mrb[0].mxu0
  %v2838 = vpop.f32.mrb[0].mxu0
  %2839 = vdwg.mxu0
  %2840 = vmatprep.subr.bf16.mxu0 %v2756
  %2841 = vmatpush1.bf16.msra.mxu0 %v2753
  %2842 = vmatprep.subr.bf16.mxu0 0
  %2843 = vmatpush1.bf16.msra.mxu0 0
  %2844 = vmatprep.subr.bf16.mxu0 0
  %2845 = vmatpush1.bf16.msra.mxu0 0
  %2846 = vmatprep.subr.bf16.mxu0 0
  %2847 = vmatpush1.bf16.msra.mxu0 0
  %2848 = vmatprep.subr.bf16.mxu0 0
  %2849 = vmatpush1.bf16.msra.mxu0 0
  %2850 = vmatprep.subr.bf16.mxu0 0
  %2851 = vmatpush1.bf16.msra.mxu0 0
  %2852 = vmatprep.subr.bf16.mxu0 0
  %2853 = vmatpush1.bf16.msra.mxu0 0
  %2854 = vmatprep.subr.bf16.mxu0 0
  %2855 = vmatpush1.bf16.msra.mxu0 0
  %2856 = vmatprep.subr.bf16.mxu0 0
  %2857 = vmatpush1.bf16.msra.mxu0 0
  %2858 = vmatprep.subr.bf16.mxu0 0
  %2859 = vmatpush1.bf16.msra.mxu0 0
  %2860 = vmatprep.subr.bf16.mxu0 0
  %2861 = vmatpush1.bf16.msra.mxu0 0
  %2862 = vmatprep.subr.bf16.mxu0 0
  %2863 = vmatpush1.bf16.msra.mxu0 0
  %2864 = vmatprep.subr.bf16.mxu0 0
  %2865 = vmatpush1.bf16.msra.mxu0 0
  %2866 = vmatprep.subr.bf16.mxu0 0
  %2867 = vmatpush1.bf16.msra.mxu0 0
  %2868 = vmatprep.subr.bf16.mxu0 0
  %2869 = vmatpush1.bf16.msra.mxu0 0
  %2870 = vmatprep.subr.bf16.mxu0 0
  %2871 = vmatpush1.bf16.msra.mxu0 0
  %2872 = vmatprep.mubr.bf16.mxu0 0
  %2873 = vmatmul.mubr.bf16.gmra.mrb[0].mxu0 %v2738
  %v2874 = vpop.f32.mrb[0].mxu0
  %v2875 = vadd.f32 0.0, %v2874
  %v2876 = vpop.f32.mrb[0].mxu0
  %v2877 = vadd.f32 0.0, %v2876
  %v2878 = vpop.f32.mrb[0].mxu0
  %v2879 = vpop.f32.mrb[0].mxu0
  %2880 = vdwg.mxu0
  %v2881 = vadd.f32 %v2712, %v2793
  %v2882 = vadd.f32 %v2713, %v2795
  %v2883 = vadd.f32 %v2714, %v2834
  %v2884 = vadd.f32 %v2715, %v2836
  %v2885 = vadd.f32 %v2716, %v2875
  %v2886 = vadd.f32 %v2717, %v2877
  %s2887 = scalar_lea.vmem %s4, 24
  %v2888 = vld [vmem:[%s2887] sm:$0xf]
  %2889 = vrot.lane.b32.xlu0 %v1900, 92
  %v2890 = vpop.permute.xlu0 %2889
  %2891 = vrot.lane.b32.xlu0 %v1901, 92
  %v2892 = vpop.permute.xlu0 %2891
  %2893 = vrot.lane.b32.xlu0 %v1902, 92
  %v2894 = vpop.permute.xlu0 %2893
  %2895 = vrot.lane.b32.xlu0 %v1903, 92
  %v2896 = vpop.permute.xlu0 %2895
  %2897 = vrot.lane.b32.xlu0 %v1904, 92
  %v2898 = vpop.permute.xlu0 %2897
  %2899 = vrot.lane.b32.xlu0 %v1905, 92
  %v2900 = vpop.permute.xlu0 %2899
  %v2901 = vsel %vm1216, %v2890, %v2892
  %v2902 = vsel %vm1216, %v2892, %v2894
  %v2903 = vsel %vm1216, %v2894, %v2896
  %v2904 = vsel %vm1216, %v2896, %v2898
  %v2905 = vsel %vm1216, %v2898, %v2900
  %v2907 = vsel %vm233, %v2888, 0
  %v2910 = vsel %vm190, %v2901, 0
  %v2913 = vsel %vm190, %v2902, 0
  %v2916 = vsel %vm190, %v2903, 0
  %v2919 = vsel %vm190, %v2904, 0
  %v2922 = vsel %vm190, %v2905, 0
  %v2925 = vsel %vm190, %v2900, 0
  %2927 = vmatprep.subr.bf16.mxu0 %v2913
  %2928 = vmatpush1.bf16.msra.mxu0 %v2910
  %2929 = vmatprep.subr.bf16.mxu0 0
  %2930 = vmatpush1.bf16.msra.mxu0 0
  %2931 = vmatprep.subr.bf16.mxu0 0
  %2932 = vmatpush1.bf16.msra.mxu0 0
  %2933 = vmatprep.subr.bf16.mxu0 0
  %2934 = vmatpush1.bf16.msra.mxu0 0
  %2935 = vmatprep.subr.bf16.mxu0 0
  %2936 = vmatpush1.bf16.msra.mxu0 0
  %2937 = vmatprep.subr.bf16.mxu0 0
  %2938 = vmatpush1.bf16.msra.mxu0 0
  %2939 = vmatprep.subr.bf16.mxu0 0
  %2940 = vmatpush1.bf16.msra.mxu0 0
  %2941 = vmatprep.subr.bf16.mxu0 0
  %2942 = vmatpush1.bf16.msra.mxu0 0
  %2943 = vmatprep.subr.bf16.mxu0 0
  %2944 = vmatpush1.bf16.msra.mxu0 0
  %2945 = vmatprep.subr.bf16.mxu0 0
  %2946 = vmatpush1.bf16.msra.mxu0 0
  %2947 = vmatprep.subr.bf16.mxu0 0
  %2948 = vmatpush1.bf16.msra.mxu0 0
  %2949 = vmatprep.subr.bf16.mxu0 0
  %2950 = vmatpush1.bf16.msra.mxu0 0
  %2951 = vmatprep.subr.bf16.mxu0 0
  %2952 = vmatpush1.bf16.msra.mxu0 0
  %2953 = vmatprep.subr.bf16.mxu0 0
  %2954 = vmatpush1.bf16.msra.mxu0 0
  %2955 = vmatprep.subr.bf16.mxu0 0
  %2956 = vmatpush1.bf16.msra.mxu0 0
  %2957 = vmatprep.subr.bf16.mxu0 0
  %2958 = vmatpush1.bf16.msra.mxu0 0
  %2959 = vmatprep.mubr.bf16.mxu0 0
  %2960 = vmatmul.mubr.bf16.gmra.mrb[0].mxu0 %v2907
  %v2961 = vpop.f32.mrb[0].mxu0
  %v2962 = vadd.f32 0.0, %v2961
  %v2963 = vpop.f32.mrb[0].mxu0
  %v2964 = vadd.f32 0.0, %v2963
  %v2965 = vpop.f32.mrb[0].mxu0
  %v2966 = vpop.f32.mrb[0].mxu0
  %2967 = vdwg.mxu0
  %2968 = vmatprep.subr.bf16.mxu0 %v2919
  %2969 = vmatpush1.bf16.msra.mxu0 %v2916
  %2970 = vmatprep.subr.bf16.mxu0 0
  %2971 = vmatpush1.bf16.msra.mxu0 0
  %2972 = vmatprep.subr.bf16.mxu0 0
  %2973 = vmatpush1.bf16.msra.mxu0 0
  %2974 = vmatprep.subr.bf16.mxu0 0
  %2975 = vmatpush1.bf16.msra.mxu0 0
  %2976 = vmatprep.subr.bf16.mxu0 0
  %2977 = vmatpush1.bf16.msra.mxu0 0
  %2978 = vmatprep.subr.bf16.mxu0 0
  %2979 = vmatpush1.bf16.msra.mxu0 0
  %2980 = vmatprep.subr.bf16.mxu0 0
  %2981 = vmatpush1.bf16.msra.mxu0 0
  %2982 = vmatprep.subr.bf16.mxu0 0
  %2983 = vmatpush1.bf16.msra.mxu0 0
  %2984 = vmatprep.subr.bf16.mxu0 0
  %2985 = vmatpush1.bf16.msra.mxu0 0
  %2986 = vmatprep.subr.bf16.mxu0 0
  %2987 = vmatpush1.bf16.msra.mxu0 0
  %2988 = vmatprep.subr.bf16.mxu0 0
  %2989 = vmatpush1.bf16.msra.mxu0 0
  %2990 = vmatprep.subr.bf16.mxu0 0
  %2991 = vmatpush1.bf16.msra.mxu0 0
  %2992 = vmatprep.subr.bf16.mxu0 0
  %2993 = vmatpush1.bf16.msra.mxu0 0
  %2994 = vmatprep.subr.bf16.mxu0 0
  %2995 = vmatpush1.bf16.msra.mxu0 0
  %2996 = vmatprep.subr.bf16.mxu0 0
  %2997 = vmatpush1.bf16.msra.mxu0 0
  %2998 = vmatprep.subr.bf16.mxu0 0
  %2999 = vmatpush1.bf16.msra.mxu0 0
  %3000 = vmatprep.mubr.bf16.mxu0 0
  %3001 = vmatmul.mubr.bf16.gmra.mrb[0].mxu0 %v2907
  %v3002 = vpop.f32.mrb[0].mxu0
  %v3003 = vadd.f32 0.0, %v3002
  %v3004 = vpop.f32.mrb[0].mxu0
  %v3005 = vadd.f32 0.0, %v3004
  %v3006 = vpop.f32.mrb[0].mxu0
  %v3007 = vpop.f32.mrb[0].mxu0
  %3008 = vdwg.mxu0
  %3009 = vmatprep.subr.bf16.mxu0 %v2925
  %3010 = vmatpush1.bf16.msra.mxu0 %v2922
  %3011 = vmatprep.subr.bf16.mxu0 0
  %3012 = vmatpush1.bf16.msra.mxu0 0
  %3013 = vmatprep.subr.bf16.mxu0 0
  %3014 = vmatpush1.bf16.msra.mxu0 0
  %3015 = vmatprep.subr.bf16.mxu0 0
  %3016 = vmatpush1.bf16.msra.mxu0 0
  %3017 = vmatprep.subr.bf16.mxu0 0
  %3018 = vmatpush1.bf16.msra.mxu0 0
  %3019 = vmatprep.subr.bf16.mxu0 0
  %3020 = vmatpush1.bf16.msra.mxu0 0
  %3021 = vmatprep.subr.bf16.mxu0 0
  %3022 = vmatpush1.bf16.msra.mxu0 0
  %3023 = vmatprep.subr.bf16.mxu0 0
  %3024 = vmatpush1.bf16.msra.mxu0 0
  %3025 = vmatprep.subr.bf16.mxu0 0
  %3026 = vmatpush1.bf16.msra.mxu0 0
  %3027 = vmatprep.subr.bf16.mxu0 0
  %3028 = vmatpush1.bf16.msra.mxu0 0
  %3029 = vmatprep.subr.bf16.mxu0 0
  %3030 = vmatpush1.bf16.msra.mxu0 0
  %3031 = vmatprep.subr.bf16.mxu0 0
  %3032 = vmatpush1.bf16.msra.mxu0 0
  %3033 = vmatprep.subr.bf16.mxu0 0
  %3034 = vmatpush1.bf16.msra.mxu0 0
  %3035 = vmatprep.subr.bf16.mxu0 0
  %3036 = vmatpush1.bf16.msra.mxu0 0
  %3037 = vmatprep.subr.bf16.mxu0 0
  %3038 = vmatpush1.bf16.msra.mxu0 0
  %3039 = vmatprep.subr.bf16.mxu0 0
  %3040 = vmatpush1.bf16.msra.mxu0 0
  %3041 = vmatprep.mubr.bf16.mxu0 0
  %3042 = vmatmul.mubr.bf16.gmra.mrb[0].mxu0 %v2907
  %v3043 = vpop.f32.mrb[0].mxu0
  %v3044 = vadd.f32 0.0, %v3043
  %v3045 = vpop.f32.mrb[0].mxu0
  %v3046 = vadd.f32 0.0, %v3045
  %v3047 = vpop.f32.mrb[0].mxu0
  %v3048 = vpop.f32.mrb[0].mxu0
  %3049 = vdwg.mxu0
  %v3050 = vadd.f32 %v2881, %v2962
  %v3051 = vadd.f32 %v2882, %v2964
  %v3052 = vadd.f32 %v2883, %v3003
  %v3053 = vadd.f32 %v2884, %v3005
  %v3054 = vadd.f32 %v2885, %v3044
  %v3055 = vadd.f32 %v2886, %v3046
  %s3056 = scalar_lea.vmem %s4, 28
  %v3057 = vld [vmem:[%s3056] sm:$0xf]
  %3058 = vrot.lane.b32.xlu0 %v1900, 91
  %v3059 = vpop.permute.xlu0 %3058
  %3060 = vrot.lane.b32.xlu0 %v1901, 91
  %v3061 = vpop.permute.xlu0 %3060
  %3062 = vrot.lane.b32.xlu0 %v1902, 91
  %v3063 = vpop.permute.xlu0 %3062
  %3064 = vrot.lane.b32.xlu0 %v1903, 91
  %v3065 = vpop.permute.xlu0 %3064
  %3066 = vrot.lane.b32.xlu0 %v1904, 91
  %v3067 = vpop.permute.xlu0 %3066
  %3068 = vrot.lane.b32.xlu0 %v1905, 91
  %v3069 = vpop.permute.xlu0 %3068
  %v3070 = vsel %vm1386, %v3059, %v3061
  %v3071 = vsel %vm1386, %v3061, %v3063
  %v3072 = vsel %vm1386, %v3063, %v3065
  %v3073 = vsel %vm1386, %v3065, %v3067
  %v3074 = vsel %vm1386, %v3067, %v3069
  %v3076 = vsel %vm233, %v3057, 0
  %v3079 = vsel %vm190, %v3070, 0
  %v3082 = vsel %vm190, %v3071, 0
  %v3085 = vsel %vm190, %v3072, 0
  %v3088 = vsel %vm190, %v3073, 0
  %v3091 = vsel %vm190, %v3074, 0
  %v3094 = vsel %vm190, %v3069, 0
  %3096 = vmatprep.subr.bf16.mxu0 %v3082
  %3097 = vmatpush1.bf16.msra.mxu0 %v3079
  %3098 = vmatprep.subr.bf16.mxu0 0
  %3099 = vmatpush1.bf16.msra.mxu0 0
  %3100 = vmatprep.subr.bf16.mxu0 0
  %3101 = vmatpush1.bf16.msra.mxu0 0
  %3102 = vmatprep.subr.bf16.mxu0 0
  %3103 = vmatpush1.bf16.msra.mxu0 0
  %3104 = vmatprep.subr.bf16.mxu0 0
  %3105 = vmatpush1.bf16.msra.mxu0 0
  %3106 = vmatprep.subr.bf16.mxu0 0
  %3107 = vmatpush1.bf16.msra.mxu0 0
  %3108 = vmatprep.subr.bf16.mxu0 0
  %3109 = vmatpush1.bf16.msra.mxu0 0
  %3110 = vmatprep.subr.bf16.mxu0 0
  %3111 = vmatpush1.bf16.msra.mxu0 0
  %3112 = vmatprep.subr.bf16.mxu0 0
  %3113 = vmatpush1.bf16.msra.mxu0 0
  %3114 = vmatprep.subr.bf16.mxu0 0
  %3115 = vmatpush1.bf16.msra.mxu0 0
  %3116 = vmatprep.subr.bf16.mxu0 0
  %3117 = vmatpush1.bf16.msra.mxu0 0
  %3118 = vmatprep.subr.bf16.mxu0 0
  %3119 = vmatpush1.bf16.msra.mxu0 0
  %3120 = vmatprep.subr.bf16.mxu0 0
  %3121 = vmatpush1.bf16.msra.mxu0 0
  %3122 = vmatprep.subr.bf16.mxu0 0
  %3123 = vmatpush1.bf16.msra.mxu0 0
  %3124 = vmatprep.subr.bf16.mxu0 0
  %3125 = vmatpush1.bf16.msra.mxu0 0
  %3126 = vmatprep.subr.bf16.mxu0 0
  %3127 = vmatpush1.bf16.msra.mxu0 0
  %3128 = vmatprep.mubr.bf16.mxu0 0
  %3129 = vmatmul.mubr.bf16.gmra.mrb[0].mxu0 %v3076
  %v3130 = vpop.f32.mrb[0].mxu0
  %v3131 = vadd.f32 0.0, %v3130
  %v3132 = vpop.f32.mrb[0].mxu0
  %v3133 = vadd.f32 0.0, %v3132
  %v3134 = vpop.f32.mrb[0].mxu0
  %v3135 = vpop.f32.mrb[0].mxu0
  %3136 = vdwg.mxu0
  %3137 = vmatprep.subr.bf16.mxu0 %v3088
  %3138 = vmatpush1.bf16.msra.mxu0 %v3085
  %3139 = vmatprep.subr.bf16.mxu0 0
  %3140 = vmatpush1.bf16.msra.mxu0 0
  %3141 = vmatprep.subr.bf16.mxu0 0
  %3142 = vmatpush1.bf16.msra.mxu0 0
  %3143 = vmatprep.subr.bf16.mxu0 0
  %3144 = vmatpush1.bf16.msra.mxu0 0
  %3145 = vmatprep.subr.bf16.mxu0 0
  %3146 = vmatpush1.bf16.msra.mxu0 0
  %3147 = vmatprep.subr.bf16.mxu0 0
  %3148 = vmatpush1.bf16.msra.mxu0 0
  %3149 = vmatprep.subr.bf16.mxu0 0
  %3150 = vmatpush1.bf16.msra.mxu0 0
  %3151 = vmatprep.subr.bf16.mxu0 0
  %3152 = vmatpush1.bf16.msra.mxu0 0
  %3153 = vmatprep.subr.bf16.mxu0 0
  %3154 = vmatpush1.bf16.msra.mxu0 0
  %3155 = vmatprep.subr.bf16.mxu0 0
  %3156 = vmatpush1.bf16.msra.mxu0 0
  %3157 = vmatprep.subr.bf16.mxu0 0
  %3158 = vmatpush1.bf16.msra.mxu0 0
  %3159 = vmatprep.subr.bf16.mxu0 0
  %3160 = vmatpush1.bf16.msra.mxu0 0
  %3161 = vmatprep.subr.bf16.mxu0 0
  %3162 = vmatpush1.bf16.msra.mxu0 0
  %3163 = vmatprep.subr.bf16.mxu0 0
  %3164 = vmatpush1.bf16.msra.mxu0 0
  %3165 = vmatprep.subr.bf16.mxu0 0
  %3166 = vmatpush1.bf16.msra.mxu0 0
  %3167 = vmatprep.subr.bf16.mxu0 0
  %3168 = vmatpush1.bf16.msra.mxu0 0
  %3169 = vmatprep.mubr.bf16.mxu0 0
  %3170 = vmatmul.mubr.bf16.gmra.mrb[0].mxu0 %v3076
  %v3171 = vpop.f32.mrb[0].mxu0
  %v3172 = vadd.f32 0.0, %v3171
  %v3173 = vpop.f32.mrb[0].mxu0
  %v3174 = vadd.f32 0.0, %v3173
  %v3175 = vpop.f32.mrb[0].mxu0
  %v3176 = vpop.f32.mrb[0].mxu0
  %3177 = vdwg.mxu0
  %3178 = vmatprep.subr.bf16.mxu0 %v3094
  %3179 = vmatpush1.bf16.msra.mxu0 %v3091
  %3180 = vmatprep.subr.bf16.mxu0 0
  %3181 = vmatpush1.bf16.msra.mxu0 0
  %3182 = vmatprep.subr.bf16.mxu0 0
  %3183 = vmatpush1.bf16.msra.mxu0 0
  %3184 = vmatprep.subr.bf16.mxu0 0
  %3185 = vmatpush1.bf16.msra.mxu0 0
  %3186 = vmatprep.subr.bf16.mxu0 0
  %3187 = vmatpush1.bf16.msra.mxu0 0
  %3188 = vmatprep.subr.bf16.mxu0 0
  %3189 = vmatpush1.bf16.msra.mxu0 0
  %3190 = vmatprep.subr.bf16.mxu0 0
  %3191 = vmatpush1.bf16.msra.mxu0 0
  %3192 = vmatprep.subr.bf16.mxu0 0
  %3193 = vmatpush1.bf16.msra.mxu0 0
  %3194 = vmatprep.subr.bf16.mxu0 0
  %3195 = vmatpush1.bf16.msra.mxu0 0
  %3196 = vmatprep.subr.bf16.mxu0 0
  %3197 = vmatpush1.bf16.msra.mxu0 0
  %3198 = vmatprep.subr.bf16.mxu0 0
  %3199 = vmatpush1.bf16.msra.mxu0 0
  %3200 = vmatprep.subr.bf16.mxu0 0
  %3201 = vmatpush1.bf16.msra.mxu0 0
  %3202 = vmatprep.subr.bf16.mxu0 0
  %3203 = vmatpush1.bf16.msra.mxu0 0
  %3204 = vmatprep.subr.bf16.mxu0 0
  %3205 = vmatpush1.bf16.msra.mxu0 0
  %3206 = vmatprep.subr.bf16.mxu0 0
  %3207 = vmatpush1.bf16.msra.mxu0 0
  %3208 = vmatprep.subr.bf16.mxu0 0
  %3209 = vmatpush1.bf16.msra.mxu0 0
  %3210 = vmatprep.mubr.bf16.mxu0 0
  %3211 = vmatmul.mubr.bf16.gmra.mrb[0].mxu0 %v3076
  %v3212 = vpop.f32.mrb[0].mxu0
  %v3213 = vadd.f32 0.0, %v3212
  %v3214 = vpop.f32.mrb[0].mxu0
  %v3215 = vadd.f32 0.0, %v3214
  %v3216 = vpop.f32.mrb[0].mxu0
  %v3217 = vpop.f32.mrb[0].mxu0
  %3218 = vdwg.mxu0
  %v3219 = vadd.f32 %v3050, %v3131
  %v3220 = vadd.f32 %v3051, %v3133
  %v3221 = vadd.f32 %v3052, %v3172
  %v3222 = vadd.f32 %v3053, %v3174
  %v3223 = vadd.f32 %v3054, %v3213
  %v3224 = vadd.f32 %v3055, %v3215
  %s3225 = scalar_lea.vmem %s4, 32
  %v3226 = vld [vmem:[%s3225] sm:$0xf]
  %3227 = vrot.lane.b32.xlu0 %v1900, 90
  %v3228 = vpop.permute.xlu0 %3227
  %3229 = vrot.lane.b32.xlu0 %v1901, 90
  %v3230 = vpop.permute.xlu0 %3229
  %3231 = vrot.lane.b32.xlu0 %v1902, 90
  %v3232 = vpop.permute.xlu0 %3231
  %3233 = vrot.lane.b32.xlu0 %v1903, 90
  %v3234 = vpop.permute.xlu0 %3233
  %3235 = vrot.lane.b32.xlu0 %v1904, 90
  %v3236 = vpop.permute.xlu0 %3235
  %3237 = vrot.lane.b32.xlu0 %v1905, 90
  %v3238 = vpop.permute.xlu0 %3237
  %v3239 = vsel %vm1556, %v3228, %v3230
  %v3240 = vsel %vm1556, %v3230, %v3232
  %v3241 = vsel %vm1556, %v3232, %v3234
  %v3242 = vsel %vm1556, %v3234, %v3236
  %v3243 = vsel %vm1556, %v3236, %v3238
  %v3245 = vsel %vm233, %v3226, 0
  %v3248 = vsel %vm190, %v3239, 0
  %v3251 = vsel %vm190, %v3240, 0
  %v3254 = vsel %vm190, %v3241, 0
  %v3257 = vsel %vm190, %v3242, 0
  %v3260 = vsel %vm190, %v3243, 0
  %v3263 = vsel %vm190, %v3238, 0
  %3265 = vmatprep.subr.bf16.mxu0 %v3251
  %3266 = vmatpush1.bf16.msra.mxu0 %v3248
  %3267 = vmatprep.subr.bf16.mxu0 0
  %3268 = vmatpush1.bf16.msra.mxu0 0
  %3269 = vmatprep.subr.bf16.mxu0 0
  %3270 = vmatpush1.bf16.msra.mxu0 0
  %3271 = vmatprep.subr.bf16.mxu0 0
  %3272 = vmatpush1.bf16.msra.mxu0 0
  %3273 = vmatprep.subr.bf16.mxu0 0
  %3274 = vmatpush1.bf16.msra.mxu0 0
  %3275 = vmatprep.subr.bf16.mxu0 0
  %3276 = vmatpush1.bf16.msra.mxu0 0
  %3277 = vmatprep.subr.bf16.mxu0 0
  %3278 = vmatpush1.bf16.msra.mxu0 0
  %3279 = vmatprep.subr.bf16.mxu0 0
  %3280 = vmatpush1.bf16.msra.mxu0 0
  %3281 = vmatprep.subr.bf16.mxu0 0
  %3282 = vmatpush1.bf16.msra.mxu0 0
  %3283 = vmatprep.subr.bf16.mxu0 0
  %3284 = vmatpush1.bf16.msra.mxu0 0
  %3285 = vmatprep.subr.bf16.mxu0 0
  %3286 = vmatpush1.bf16.msra.mxu0 0
  %3287 = vmatprep.subr.bf16.mxu0 0
  %3288 = vmatpush1.bf16.msra.mxu0 0
  %3289 = vmatprep.subr.bf16.mxu0 0
  %3290 = vmatpush1.bf16.msra.mxu0 0
  %3291 = vmatprep.subr.bf16.mxu0 0
  %3292 = vmatpush1.bf16.msra.mxu0 0
  %3293 = vmatprep.subr.bf16.mxu0 0
  %3294 = vmatpush1.bf16.msra.mxu0 0
  %3295 = vmatprep.subr.bf16.mxu0 0
  %3296 = vmatpush1.bf16.msra.mxu0 0
  %3297 = vmatprep.mubr.bf16.mxu0 0
  %3298 = vmatmul.mubr.bf16.gmra.mrb[0].mxu0 %v3245
  %v3299 = vpop.f32.mrb[0].mxu0
  %v3300 = vadd.f32 0.0, %v3299
  %v3301 = vpop.f32.mrb[0].mxu0
  %v3302 = vadd.f32 0.0, %v3301
  %v3303 = vpop.f32.mrb[0].mxu0
  %v3304 = vpop.f32.mrb[0].mxu0
  %3305 = vdwg.mxu0
  %3306 = vmatprep.subr.bf16.mxu0 %v3257
  %3307 = vmatpush1.bf16.msra.mxu0 %v3254
  %3308 = vmatprep.subr.bf16.mxu0 0
  %3309 = vmatpush1.bf16.msra.mxu0 0
  %3310 = vmatprep.subr.bf16.mxu0 0
  %3311 = vmatpush1.bf16.msra.mxu0 0
  %3312 = vmatprep.subr.bf16.mxu0 0
  %3313 = vmatpush1.bf16.msra.mxu0 0
  %3314 = vmatprep.subr.bf16.mxu0 0
  %3315 = vmatpush1.bf16.msra.mxu0 0
  %3316 = vmatprep.subr.bf16.mxu0 0
  %3317 = vmatpush1.bf16.msra.mxu0 0
  %3318 = vmatprep.subr.bf16.mxu0 0
  %3319 = vmatpush1.bf16.msra.mxu0 0
  %3320 = vmatprep.subr.bf16.mxu0 0
  %3321 = vmatpush1.bf16.msra.mxu0 0
  %3322 = vmatprep.subr.bf16.mxu0 0
  %3323 = vmatpush1.bf16.msra.mxu0 0
  %3324 = vmatprep.subr.bf16.mxu0 0
  %3325 = vmatpush1.bf16.msra.mxu0 0
  %3326 = vmatprep.subr.bf16.mxu0 0
  %3327 = vmatpush1.bf16.msra.mxu0 0
  %3328 = vmatprep.subr.bf16.mxu0 0
  %3329 = vmatpush1.bf16.msra.mxu0 0
  %3330 = vmatprep.subr.bf16.mxu0 0
  %3331 = vmatpush1.bf16.msra.mxu0 0
  %3332 = vmatprep.subr.bf16.mxu0 0
  %3333 = vmatpush1.bf16.msra.mxu0 0
  %3334 = vmatprep.subr.bf16.mxu0 0
  %3335 = vmatpush1.bf16.msra.mxu0 0
  %3336 = vmatprep.subr.bf16.mxu0 0
  %3337 = vmatpush1.bf16.msra.mxu0 0
  %3338 = vmatprep.mubr.bf16.mxu0 0
  %3339 = vmatmul.mubr.bf16.gmra.mrb[0].mxu0 %v3245
  %v3340 = vpop.f32.mrb[0].mxu0
  %v3341 = vadd.f32 0.0, %v3340
  %v3342 = vpop.f32.mrb[0].mxu0
  %v3343 = vadd.f32 0.0, %v3342
  %v3344 = vpop.f32.mrb[0].mxu0
  %v3345 = vpop.f32.mrb[0].mxu0
  %3346 = vdwg.mxu0
  %3347 = vmatprep.subr.bf16.mxu0 %v3263
  %3348 = vmatpush1.bf16.msra.mxu0 %v3260
  %3349 = vmatprep.subr.bf16.mxu0 0
  %3350 = vmatpush1.bf16.msra.mxu0 0
  %3351 = vmatprep.subr.bf16.mxu0 0
  %3352 = vmatpush1.bf16.msra.mxu0 0
  %3353 = vmatprep.subr.bf16.mxu0 0
  %3354 = vmatpush1.bf16.msra.mxu0 0
  %3355 = vmatprep.subr.bf16.mxu0 0
  %3356 = vmatpush1.bf16.msra.mxu0 0
  %3357 = vmatprep.subr.bf16.mxu0 0
  %3358 = vmatpush1.bf16.msra.mxu0 0
  %3359 = vmatprep.subr.bf16.mxu0 0
  %3360 = vmatpush1.bf16.msra.mxu0 0
  %3361 = vmatprep.subr.bf16.mxu0 0
  %3362 = vmatpush1.bf16.msra.mxu0 0
  %3363 = vmatprep.subr.bf16.mxu0 0
  %3364 = vmatpush1.bf16.msra.mxu0 0
  %3365 = vmatprep.subr.bf16.mxu0 0
  %3366 = vmatpush1.bf16.msra.mxu0 0
  %3367 = vmatprep.subr.bf16.mxu0 0
  %3368 = vmatpush1.bf16.msra.mxu0 0
  %3369 = vmatprep.subr.bf16.mxu0 0
  %3370 = vmatpush1.bf16.msra.mxu0 0
  %3371 = vmatprep.subr.bf16.mxu0 0
  %3372 = vmatpush1.bf16.msra.mxu0 0
  %3373 = vmatprep.subr.bf16.mxu0 0
  %3374 = vmatpush1.bf16.msra.mxu0 0
  %3375 = vmatprep.subr.bf16.mxu0 0
  %3376 = vmatpush1.bf16.msra.mxu0 0
  %3377 = vmatprep.subr.bf16.mxu0 0
  %3378 = vmatpush1.bf16.msra.mxu0 0
  %3379 = vmatprep.mubr.bf16.mxu0 0
  %3380 = vmatmul.mubr.bf16.gmra.mrb[0].mxu0 %v3245
  %v3381 = vpop.f32.mrb[0].mxu0
  %v3382 = vadd.f32 0.0, %v3381
  %v3383 = vpop.f32.mrb[0].mxu0
  %v3384 = vadd.f32 0.0, %v3383
  %v3385 = vpop.f32.mrb[0].mxu0
  %v3386 = vpop.f32.mrb[0].mxu0
  %3387 = vdwg.mxu0
  %v3388 = vadd.f32 %v3219, %v3300
  %v3389 = vadd.f32 %v3220, %v3302
  %v3390 = vadd.f32 %v3221, %v3341
  %v3391 = vadd.f32 %v3222, %v3343
  %v3392 = vadd.f32 %v3223, %v3382
  %v3393 = vadd.f32 %v3224, %v3384
  %v3394 = vld [vmem:[%s5] sm:$0xff]
  %3396 = vset.pattern.permute.xlu0 0
  %3397 = vperm.xlu0 %3396, %v3394
  %v3398 = vpop.permute.xlu0 %3397
  %v3400 = vadd.f32 %v3388, %v3398
  %v3401 = vadd.f32 %v3389, %v3398
  %v3402 = vadd.f32 %v3390, %v3398
  %v3403 = vadd.f32 %v3391, %v3398
  %v3404 = vadd.f32 %v3392, %v3398
  %v3405 = vadd.f32 %v3393, %v3398
  %v3406 = vld [vmem:[%s0] sm:$0xff]
  %v3407 = vld [vmem:[%s0 + $0x8] sm:$0xff]
  %v3408 = vld [vmem:[%s0 + $0x10] sm:$0xff]
  %v3409 = vunpack.c.l.bf16 %v3406
  %v3410 = vunpack.c.h.bf16 %v3406
  %v3411 = vunpack.c.l.bf16 %v3407
  %v3412 = vunpack.c.h.bf16 %v3407
  %v3413 = vunpack.c.l.bf16 %v3408
  %v3414 = vunpack.c.h.bf16 %v3408
  %3421 = vrot.lane.b32.xlu0 %v3409, 109
  %v3422 = vpop.permute.xlu0 %3421
  %3423 = vrot.lane.b32.xlu0 %v3410, 109
  %v3424 = vpop.permute.xlu0 %3423
  %3425 = vrot.lane.b32.xlu0 %v3411, 109
  %v3426 = vpop.permute.xlu0 %3425
  %3427 = vrot.lane.b32.xlu0 %v3412, 109
  %v3428 = vpop.permute.xlu0 %3427
  %3429 = vrot.lane.b32.xlu0 %v3413, 109
  %v3430 = vpop.permute.xlu0 %3429
  %3431 = vrot.lane.b32.xlu0 %v3414, 109
  %v3432 = vpop.permute.xlu0 %3431
  %v3433 = vsel %vm1736, %v3422, %v3424
  %v3434 = vsel %vm1736, %v3424, %v3426
  %v3435 = vsel %vm1736, %v3426, %v3428
  %v3436 = vsel %vm1736, %v3428, %v3430
  %v3437 = vsel %vm1736, %v3430, %v3432
  %v3444 = vadd.f32 %v3400, %v3433
  %v3445 = vadd.f32 %v3401, %v3434
  %v3446 = vadd.f32 %v3402, %v3435
  %v3447 = vadd.f32 %v3403, %v3436
  %v3448 = vadd.f32 %v3404, %v3437
  %v3449 = vadd.f32 %v3405, %v3432
  %v3450 = vmul.f32 %v3444, %v1737
  %v3451 = vmul.f32 %v3445, %v1738
  %v3452 = vmul.f32 %v3446, %v1739
  %v3453 = vmul.f32 %v3447, %v1740
  %v3454 = vmul.f32 %v3448, %v1741
  %v3455 = vmul.f32 %v3449, %v1735
  %3456 = vst [vmem:[%s10] sm:$0xff] 0
  %3457 = vst [vmem:[%s10 + $0x8] sm:$0xff] 0
  %3458 = vst.msk [vmem:[%s10 + $0x10] sm:$0xff] %vm192, 0
  %v3459 = vpack.c.bf16 %v3450, %v3450
  %v3460 = vpack.c.bf16 %v3451, %v3451
  %v3461 = vpack.c.bf16 %v3452, %v3452
  %v3462 = vpack.c.bf16 %v3453, %v3453
  %v3463 = vpack.c.bf16 %v3454, %v3454
  %v3464 = vpack.c.bf16 %v3455, %v3455
  %v3471 = vunpack.c.l.b16 %v3459
  %v3472 = vunpack.c.l.b16 %v3460
  %v3473 = vunpack.c.l.b16 %v3461
  %v3474 = vunpack.c.l.b16 %v3462
  %v3475 = vunpack.c.l.b16 %v3463
  %v3476 = vunpack.c.l.b16 %v3464
  %v3477 = vpack.c.b16 %v3472, %v3471
  %v3478 = vpack.c.b16 %v3474, %v3473
  %v3479 = vpack.c.b16 %v3476, %v3475
  %3480 = vrot.lane.b32.xlu0 %v3477, 19
  %v3481 = vpop.permute.xlu0 %3480
  %3482 = vrot.lane.b32.xlu0 %v3478, 19
  %v3483 = vpop.permute.xlu0 %3482
  %3484 = vrot.lane.b32.xlu0 %v3479, 19
  %v3485 = vpop.permute.xlu0 %3484
  %v3486 = vrot.slane %v3481, 4
  %v3487 = vrot.slane %v3483, 4
  %v3488 = vrot.slane %v3485, 4
  %v3489 = vsel %vm1867, %v3486, %v3481
  %v3490 = vsel %vm1869, %v3486, %v3487
  %v3491 = vsel %vm1867, %v3490, %v3483
  %v3492 = vsel %vm1869, %v3487, %v3488
  %v3493 = vsel %vm1867, %v3492, %v3485
  %3497 = vst.msk [vmem:[%s10] sm:$0xff] %vm1879, %v3489
  %3498 = vst [vmem:[%s10 + $0x8] sm:$0xff] %v3491
  %3499 = vst.msk [vmem:[%s10 + $0x10] sm:$0xff] %vm1883, %v3493
  // Predicated region
  $region42: #{encoder_forward.10} parent=0 // pred_check
    _
  $region43: #{encoder_forward.10} parent=0 // pred_check_branch
    %3501 = sbr.rel (0) target = $region45
  $region44: #{encoder_forward.10} parent=0 // pred_region
    _
  $region45: #{encoder_forward.10} parent=0 // pred_fallthru
    _
  // Predicated region
  $region46: #{encoder_forward.10} parent=0 // pred_check
    _
  $region47: #{encoder_forward.10} parent=0 // pred_check_branch
    %3503 = sbr.rel (0) target = $region49
  $region48: #{encoder_forward.10} parent=0 // pred_region
    _
  $region49: #{encoder_forward.10} parent=0 // pred_fallthru
    _

// kernel: encoder_forward.13
$region0: #{encoder_forward.13}
  #allocation0 [shape = 'u32[]', space=smem, size = 0x4, offset = 0x4, fixed_abs, tag = 'smem constant byte address 0x4 - core index']
  #allocation1 [shape = 'u32[144,128]{1,0:T(1,128)}', space=vmem, size = 0x12000, scoped, tag = 'internal scratch']
  #allocation2 [shape = 'bf16[16,222]{1,0:T(16,128)(2,1)}', space=vmem, size = 0x2000, scoped, tag = 'scratch operand']
  #allocation3 [shape = 'bf16[16,222]{1,0:T(16,128)(2,1)}', space=vmem, size = 0x2000, scoped, tag = 'scratch operand']
  %s0 = inlined_call_operand.vmem [shape: bf16[16,222], index: 0, kind: input, shape index: {}]
  %s1 = inlined_call_operand.vmem [shape: f32[1,222], index: 1, kind: input, shape index: {}]
  %s2 = inlined_call_operand.vmem [shape: bf16[9,16,16], index: 2, kind: input, shape index: {}]
  %s3 = inlined_call_operand.vmem [shape: f32[16,1], index: 3, kind: input, shape index: {}, may-alias: {3,5}]
  %s4 = inlined_call_operand.vmem [shape: bf16[9,16,16], index: 4, kind: input, shape index: {}]
  %s5 = inlined_call_operand.vmem [shape: f32[16,1], index: 5, kind: input, shape index: {}, may-alias: {3,5}]
  %s6 = inlined_call_operand.vmem [shape: bf16[16,222], index: 6, kind: output, shape index: {}]
  %s7 = sld [smem:[#allocation0]]
  $region34: #{encoder_forward.13} parent=0
    _
  %s9 = ssub.s32 1, %s7
  %s10 = scalar_select 0, %s9, %s7
  // Predicated region
  $region2: #{encoder_forward.13} parent=0 // pred_check
    _
  $region3: #{encoder_forward.13} parent=0 // pred_check_branch
    %12 = sbr.rel (0) target = $region5
  $region4: #{encoder_forward.13} parent=0 // pred_region
    _
  $region5: #{encoder_forward.13} parent=0 // pred_fallthru
    _
  // Predicated region
  $region6: #{encoder_forward.13} parent=0 // pred_check
    _
  $region7: #{encoder_forward.13} parent=0 // pred_check_branch
    %14 = sbr.rel (0) target = $region9
  $region8: #{encoder_forward.13} parent=0 // pred_region
    _
  $region9: #{encoder_forward.13} parent=0 // pred_fallthru
    _
  // Predicated region
  $region10: #{encoder_forward.13} parent=0 // pred_check
    _
  $region11: #{encoder_forward.13} parent=0 // pred_check_branch
    %16 = sbr.rel (0) target = $region13
  $region12: #{encoder_forward.13} parent=0 // pred_region
    _
  $region13: #{encoder_forward.13} parent=0 // pred_fallthru
    _
  // Predicated region
  $region14: #{encoder_forward.13} parent=0 // pred_check
    _
  $region15: #{encoder_forward.13} parent=0 // pred_check_branch
    %18 = sbr.rel (0) target = $region17
  $region16: #{encoder_forward.13} parent=0 // pred_region
    _
  $region17: #{encoder_forward.13} parent=0 // pred_fallthru
    _
  // Predicated region
  $region18: #{encoder_forward.13} parent=0 // pred_check
    _
  $region19: #{encoder_forward.13} parent=0 // pred_check_branch
    %20 = sbr.rel (0) target = $region21
  $region20: #{encoder_forward.13} parent=0 // pred_region
    _
  $region21: #{encoder_forward.13} parent=0 // pred_fallthru
    _
  // Predicated region
  $region22: #{encoder_forward.13} parent=0 // pred_check
    _
  $region23: #{encoder_forward.13} parent=0 // pred_check_branch
    %22 = sbr.rel (0) target = $region25
  $region24: #{encoder_forward.13} parent=0 // pred_region
    _
  $region25: #{encoder_forward.13} parent=0 // pred_fallthru
    _
  %v24 = vld [vmem:[%s1] sm:$0x3]
  %v25 = vld [vmem:[%s0] sm:$0xff]
  %v26 = vld [vmem:[%s0 + $0x8] sm:$0xff]
  %v27 = vunpack.c.l.bf16 %v25
  %v28 = vunpack.c.h.bf16 %v25
  %v29 = vunpack.c.l.bf16 %v26
  %v30 = vunpack.c.h.bf16 %v26
  %v31 = vmax.f32 %v27, 0.0
  %v32 = vmax.f32 %v28, 0.0
  %v33 = vmax.f32 %v29, 0.0
  %v34 = vmax.f32 %v30, 0.0
  %v36 = vlaneseq
  %v37 = vshrl.u32 %v36, 7
  %v38 = vsub.s32 0, %v37
  %v39 = vrot.slane %v24, %v38
  %v40 = vlaneseq
  %v41 = vshrl.u32 %v40, 7
  %v42 = vsub.s32 1, %v41
  %v43 = vrot.slane %v24, %v42
  %v46 = vmul.f32 %v31, %v39
  %v47 = vmul.f32 %v32, %v43
  %v48 = vmul.f32 %v33, %v39
  %v49 = vmul.f32 %v34, %v43
  %v50 = vpack.c.bf16 %v48, %v46
  %v51 = vpack.c.bf16 %v49, %v47
  %52 = vst [vmem:[#allocation2] sm:$0xff] %v50
  %vm53 = vcmask 769024
  %54 = vst.msk [vmem:[#allocation2 + $0x8] sm:$0xff] %vm53, %v51
  %v55 = vld [vmem:[%s2] sm:$0xf]
  %v56 = vld [vmem:[%s2 + $0x4] sm:$0xf]
  %v57 = vld [vmem:[#allocation2] sm:$0xff]
  %v58 = vld [vmem:[#allocation2 + $0x8] sm:$0xff]
  %s59 = scalar_lea.vmem %s2, 8
  %v60 = vld [vmem:[%s59] sm:$0xf]
  %v61 = vld [vmem:[%s59 + $0x4] sm:$0xf]
  %v64 = vunpack.c.l.b16 %v60
  %v65 = vunpack.c.l.b16 %v61
  %v66 = vpack.c.b16 %v65, %v64
  %69 = vrot.lane.b32.xlu0 %v57, 127
  %v70 = vpop.permute.xlu0 %69
  %71 = vrot.lane.b32.xlu0 %v58, 127
  %v72 = vpop.permute.xlu0 %71
  %vm73 = vcmask 1039360
  %v74 = vsel %vm73, %v70, %v72
  %vm77 = vcmask 130048
  %v79 = vsel %vm77, %v66, 0
  %81 = vmatprep.subr.bf16.mxu0 %v72
  %82 = vmatpush1.bf16.msra.mxu0 %v74
  %83 = vmatprep.subr.bf16.mxu0 0
  %84 = vmatpush1.bf16.msra.mxu0 0
  %85 = vmatprep.subr.bf16.mxu0 0
  %86 = vmatpush1.bf16.msra.mxu0 0
  %87 = vmatprep.subr.bf16.mxu0 0
  %88 = vmatpush1.bf16.msra.mxu0 0
  %89 = vmatprep.subr.bf16.mxu0 0
  %90 = vmatpush1.bf16.msra.mxu0 0
  %91 = vmatprep.subr.bf16.mxu0 0
  %92 = vmatpush1.bf16.msra.mxu0 0
  %93 = vmatprep.subr.bf16.mxu0 0
  %94 = vmatpush1.bf16.msra.mxu0 0
  %95 = vmatprep.subr.bf16.mxu0 0
  %96 = vmatpush1.bf16.msra.mxu0 0
  %97 = vmatprep.subr.bf16.mxu0 0
  %98 = vmatpush1.bf16.msra.mxu0 0
  %99 = vmatprep.subr.bf16.mxu0 0
  %100 = vmatpush1.bf16.msra.mxu0 0
  %101 = vmatprep.subr.bf16.mxu0 0
  %102 = vmatpush1.bf16.msra.mxu0 0
  %103 = vmatprep.subr.bf16.mxu0 0
  %104 = vmatpush1.bf16.msra.mxu0 0
  %105 = vmatprep.subr.bf16.mxu0 0
  %106 = vmatpush1.bf16.msra.mxu0 0
  %107 = vmatprep.subr.bf16.mxu0 0
  %108 = vmatpush1.bf16.msra.mxu0 0
  %109 = vmatprep.subr.bf16.mxu0 0
  %110 = vmatpush1.bf16.msra.mxu0 0
  %111 = vmatprep.subr.bf16.mxu0 0
  %112 = vmatpush1.bf16.msra.mxu0 0
  %113 = vmatprep.mubr.bf16.mxu0 0
  %114 = vmatmul.mubr.bf16.gmra.mrb[0].mxu0 %v79
  %v115 = vpop.f32.mrb[0].mxu0
  %v116 = vadd.f32 0.0, %v115
  %v117 = vpop.f32.mrb[0].mxu0
  %v118 = vadd.f32 0.0, %v117
  %v119 = vpop.f32.mrb[0].mxu0
  %v120 = vadd.f32 0.0, %v119
  %v121 = vpop.f32.mrb[0].mxu0
  %v122 = vadd.f32 0.0, %v121
  %123 = vdwg.mxu0
  %v126 = vunpack.c.l.b16 %v55
  %v127 = vunpack.c.l.b16 %v56
  %v128 = vpack.c.b16 %v127, %v126
  %v130 = vsel %vm77, %v128, 0
  %132 = vmatprep.subr.bf16.mxu0 %v58
  %133 = vmatpush1.bf16.msra.mxu0 %v57
  %134 = vmatprep.subr.bf16.mxu0 0
  %135 = vmatpush1.bf16.msra.mxu0 0
  %136 = vmatprep.subr.bf16.mxu0 0
  %137 = vmatpush1.bf16.msra.mxu0 0
  %138 = vmatprep.subr.bf16.mxu0 0
  %139 = vmatpush1.bf16.msra.mxu0 0
  %140 = vmatprep.subr.bf16.mxu0 0
  %141 = vmatpush1.bf16.msra.mxu0 0
  %142 = vmatprep.subr.bf16.mxu0 0
  %143 = vmatpush1.bf16.msra.mxu0 0
  %144 = vmatprep.subr.bf16.mxu0 0
  %145 = vmatpush1.bf16.msra.mxu0 0
  %146 = vmatprep.subr.bf16.mxu0 0
  %147 = vmatpush1.bf16.msra.mxu0 0
  %148 = vmatprep.subr.bf16.mxu0 0
  %149 = vmatpush1.bf16.msra.mxu0 0
  %150 = vmatprep.subr.bf16.mxu0 0
  %151 = vmatpush1.bf16.msra.mxu0 0
  %152 = vmatprep.subr.bf16.mxu0 0
  %153 = vmatpush1.bf16.msra.mxu0 0
  %154 = vmatprep.subr.bf16.mxu0 0
  %155 = vmatpush1.bf16.msra.mxu0 0
  %156 = vmatprep.subr.bf16.mxu0 0
  %157 = vmatpush1.bf16.msra.mxu0 0
  %158 = vmatprep.subr.bf16.mxu0 0
  %159 = vmatpush1.bf16.msra.mxu0 0
  %160 = vmatprep.subr.bf16.mxu0 0
  %161 = vmatpush1.bf16.msra.mxu0 0
  %162 = vmatprep.subr.bf16.mxu0 0
  %163 = vmatpush1.bf16.msra.mxu0 0
  %164 = vmatprep.mubr.bf16.mxu0 0
  %165 = vmatmul.mubr.bf16.gmra.mrb[0].mxu0 %v130
  %v166 = vpop.f32.mrb[0].mxu0
  %v167 = vadd.f32 %v116, %v166
  %v168 = vpop.f32.mrb[0].mxu0
  %v169 = vadd.f32 %v118, %v168
  %v170 = vpop.f32.mrb[0].mxu0
  %v171 = vadd.f32 %v120, %v170
  %v172 = vpop.f32.mrb[0].mxu0
  %v173 = vadd.f32 %v122, %v172
  %174 = vdwg.mxu0
  %s175 = scalar_lea.vmem %s2, 16
  %v176 = vld [vmem:[%s175] sm:$0xf]
  %v177 = vld [vmem:[%s175 + $0x4] sm:$0xf]
  %v180 = vunpack.c.l.b16 %v176
  %v181 = vunpack.c.l.b16 %v177
  %v182 = vpack.c.b16 %v181, %v180
  %183 = vrot.lane.b32.xlu0 %v57, 126
  %v184 = vpop.permute.xlu0 %183
  %185 = vrot.lane.b32.xlu0 %v58, 126
  %v186 = vpop.permute.xlu0 %185
  %vm187 = vcmask 1031168
  %v188 = vsel %vm187, %v184, %v186
  %v192 = vsel %vm77, %v182, 0
  %194 = vmatprep.subr.bf16.mxu0 %v186
  %195 = vmatpush1.bf16.msra.mxu0 %v188
  %196 = vmatprep.subr.bf16.mxu0 0
  %197 = vmatpush1.bf16.msra.mxu0 0
  %198 = vmatprep.subr.bf16.mxu0 0
  %199 = vmatpush1.bf16.msra.mxu0 0
  %200 = vmatprep.subr.bf16.mxu0 0
  %201 = vmatpush1.bf16.msra.mxu0 0
  %202 = vmatprep.subr.bf16.mxu0 0
  %203 = vmatpush1.bf16.msra.mxu0 0
  %204 = vmatprep.subr.bf16.mxu0 0
  %205 = vmatpush1.bf16.msra.mxu0 0
  %206 = vmatprep.subr.bf16.mxu0 0
  %207 = vmatpush1.bf16.msra.mxu0 0
  %208 = vmatprep.subr.bf16.mxu0 0
  %209 = vmatpush1.bf16.msra.mxu0 0
  %210 = vmatprep.subr.bf16.mxu0 0
  %211 = vmatpush1.bf16.msra.mxu0 0
  %212 = vmatprep.subr.bf16.mxu0 0
  %213 = vmatpush1.bf16.msra.mxu0 0
  %214 = vmatprep.subr.bf16.mxu0 0
  %215 = vmatpush1.bf16.msra.mxu0 0
  %216 = vmatprep.subr.bf16.mxu0 0
  %217 = vmatpush1.bf16.msra.mxu0 0
  %218 = vmatprep.subr.bf16.mxu0 0
  %219 = vmatpush1.bf16.msra.mxu0 0
  %220 = vmatprep.subr.bf16.mxu0 0
  %221 = vmatpush1.bf16.msra.mxu0 0
  %222 = vmatprep.subr.bf16.mxu0 0
  %223 = vmatpush1.bf16.msra.mxu0 0
  %224 = vmatprep.subr.bf16.mxu0 0
  %225 = vmatpush1.bf16.msra.mxu0 0
  %226 = vmatprep.mubr.bf16.mxu0 0
  %227 = vmatmul.mubr.bf16.gmra.mrb[0].mxu0 %v192
  %v228 = vpop.f32.mrb[0].mxu0
  %v229 = vadd.f32 0.0, %v228
  %v230 = vpop.f32.mrb[0].mxu0
  %v231 = vadd.f32 0.0, %v230
  %v232 = vpop.f32.mrb[0].mxu0
  %v233 = vadd.f32 0.0, %v232
  %v234 = vpop.f32.mrb[0].mxu0
  %v235 = vadd.f32 0.0, %v234
  %236 = vdwg.mxu0
  %v237 = vadd.f32 %v167, %v229
  %v238 = vadd.f32 %v169, %v231
  %v239 = vadd.f32 %v171, %v233
  %v240 = vadd.f32 %v173, %v235
  %s241 = scalar_lea.vmem %s2, 24
  %v242 = vld [vmem:[%s241] sm:$0xf]
  %v243 = vld [vmem:[%s241 + $0x4] sm:$0xf]
  %v246 = vunpack.c.l.b16 %v242
  %v247 = vunpack.c.l.b16 %v243
  %v248 = vpack.c.b16 %v247, %v246
  %249 = vrot.lane.b32.xlu0 %v57, 118
  %v250 = vpop.permute.xlu0 %249
  %251 = vrot.lane.b32.xlu0 %v58, 118
  %v252 = vpop.permute.xlu0 %251
  %vm253 = vcmask 965632
  %v254 = vsel %vm253, %v250, %v252
  %v258 = vsel %vm77, %v248, 0
  %260 = vmatprep.subr.bf16.mxu0 %v252
  %261 = vmatpush1.bf16.msra.mxu0 %v254
  %262 = vmatprep.subr.bf16.mxu0 0
  %263 = vmatpush1.bf16.msra.mxu0 0
  %264 = vmatprep.subr.bf16.mxu0 0
  %265 = vmatpush1.bf16.msra.mxu0 0
  %266 = vmatprep.subr.bf16.mxu0 0
  %267 = vmatpush1.bf16.msra.mxu0 0
  %268 = vmatprep.subr.bf16.mxu0 0
  %269 = vmatpush1.bf16.msra.mxu0 0
  %270 = vmatprep.subr.bf16.mxu0 0
  %271 = vmatpush1.bf16.msra.mxu0 0
  %272 = vmatprep.subr.bf16.mxu0 0
  %273 = vmatpush1.bf16.msra.mxu0 0
  %274 = vmatprep.subr.bf16.mxu0 0
  %275 = vmatpush1.bf16.msra.mxu0 0
  %276 = vmatprep.subr.bf16.mxu0 0
  %277 = vmatpush1.bf16.msra.mxu0 0
  %278 = vmatprep.subr.bf16.mxu0 0
  %279 = vmatpush1.bf16.msra.mxu0 0
  %280 = vmatprep.subr.bf16.mxu0 0
  %281 = vmatpush1.bf16.msra.mxu0 0
  %282 = vmatprep.subr.bf16.mxu0 0
  %283 = vmatpush1.bf16.msra.mxu0 0
  %284 = vmatprep.subr.bf16.mxu0 0
  %285 = vmatpush1.bf16.msra.mxu0 0
  %286 = vmatprep.subr.bf16.mxu0 0
  %287 = vmatpush1.bf16.msra.mxu0 0
  %288 = vmatprep.subr.bf16.mxu0 0
  %289 = vmatpush1.bf16.msra.mxu0 0
  %290 = vmatprep.subr.bf16.mxu0 0
  %291 = vmatpush1.bf16.msra.mxu0 0
  %292 = vmatprep.mubr.bf16.mxu0 0
  %293 = vmatmul.mubr.bf16.gmra.mrb[0].mxu0 %v258
  %v294 = vpop.f32.mrb[0].mxu0
  %v295 = vadd.f32 0.0, %v294
  %v296 = vpop.f32.mrb[0].mxu0
  %v297 = vadd.f32 0.0, %v296
  %v298 = vpop.f32.mrb[0].mxu0
  %v299 = vadd.f32 0.0, %v298
  %v300 = vpop.f32.mrb[0].mxu0
  %v301 = vadd.f32 0.0, %v300
  %302 = vdwg.mxu0
  %v303 = vadd.f32 %v237, %v295
  %v304 = vadd.f32 %v238, %v297
  %v305 = vadd.f32 %v239, %v299
  %v306 = vadd.f32 %v240, %v301
  %s307 = scalar_lea.vmem %s2, 32
  %v308 = vld [vmem:[%s307] sm:$0xf]
  %v309 = vld [vmem:[%s307 + $0x4] sm:$0xf]
  %v312 = vunpack.c.l.b16 %v308
  %v313 = vunpack.c.l.b16 %v309
  %v314 = vpack.c.b16 %v313, %v312
  %315 = vrot.lane.b32.xlu0 %v57, 117
  %v316 = vpop.permute.xlu0 %315
  %317 = vrot.lane.b32.xlu0 %v58, 117
  %v318 = vpop.permute.xlu0 %317
  %vm319 = vcmask 957440
  %v320 = vsel %vm319, %v316, %v318
  %v324 = vsel %vm77, %v314, 0
  %326 = vmatprep.subr.bf16.mxu0 %v318
  %327 = vmatpush1.bf16.msra.mxu0 %v320
  %328 = vmatprep.subr.bf16.mxu0 0
  %329 = vmatpush1.bf16.msra.mxu0 0
  %330 = vmatprep.subr.bf16.mxu0 0
  %331 = vmatpush1.bf16.msra.mxu0 0
  %332 = vmatprep.subr.bf16.mxu0 0
  %333 = vmatpush1.bf16.msra.mxu0 0
  %334 = vmatprep.subr.bf16.mxu0 0
  %335 = vmatpush1.bf16.msra.mxu0 0
  %336 = vmatprep.subr.bf16.mxu0 0
  %337 = vmatpush1.bf16.msra.mxu0 0
  %338 = vmatprep.subr.bf16.mxu0 0
  %339 = vmatpush1.bf16.msra.mxu0 0
  %340 = vmatprep.subr.bf16.mxu0 0
  %341 = vmatpush1.bf16.msra.mxu0 0
  %342 = vmatprep.subr.bf16.mxu0 0
  %343 = vmatpush1.bf16.msra.mxu0 0
  %344 = vmatprep.subr.bf16.mxu0 0
  %345 = vmatpush1.bf16.msra.mxu0 0
  %346 = vmatprep.subr.bf16.mxu0 0
  %347 = vmatpush1.bf16.msra.mxu0 0
  %348 = vmatprep.subr.bf16.mxu0 0
  %349 = vmatpush1.bf16.msra.mxu0 0
  %350 = vmatprep.subr.bf16.mxu0 0
  %351 = vmatpush1.bf16.msra.mxu0 0
  %352 = vmatprep.subr.bf16.mxu0 0
  %353 = vmatpush1.bf16.msra.mxu0 0
  %354 = vmatprep.subr.bf16.mxu0 0
  %355 = vmatpush1.bf16.msra.mxu0 0
  %356 = vmatprep.subr.bf16.mxu0 0
  %357 = vmatpush1.bf16.msra.mxu0 0
  %358 = vmatprep.mubr.bf16.mxu0 0
  %359 = vmatmul.mubr.bf16.gmra.mrb[0].mxu0 %v324
  %v360 = vpop.f32.mrb[0].mxu0
  %v361 = vadd.f32 0.0, %v360
  %v362 = vpop.f32.mrb[0].mxu0
  %v363 = vadd.f32 0.0, %v362
  %v364 = vpop.f32.mrb[0].mxu0
  %v365 = vadd.f32 0.0, %v364
  %v366 = vpop.f32.mrb[0].mxu0
  %v367 = vadd.f32 0.0, %v366
  %368 = vdwg.mxu0
  %v369 = vadd.f32 %v303, %v361
  %v370 = vadd.f32 %v304, %v363
  %v371 = vadd.f32 %v305, %v365
  %v372 = vadd.f32 %v306, %v367
  %s373 = scalar_lea.vmem %s2, 40
  %v374 = vld [vmem:[%s373] sm:$0xf]
  %v375 = vld [vmem:[%s373 + $0x4] sm:$0xf]
  %v378 = vunpack.c.l.b16 %v374
  %v379 = vunpack.c.l.b16 %v375
  %v380 = vpack.c.b16 %v379, %v378
  %381 = vrot.lane.b32.xlu0 %v57, 116
  %v382 = vpop.permute.xlu0 %381
  %383 = vrot.lane.b32.xlu0 %v58, 116
  %v384 = vpop.permute.xlu0 %383
  %vm385 = vcmask 949248
  %v386 = vsel %vm385, %v382, %v384
  %v390 = vsel %vm77, %v380, 0
  %392 = vmatprep.subr.bf16.mxu0 %v384
  %393 = vmatpush1.bf16.msra.mxu0 %v386
  %394 = vmatprep.subr.bf16.mxu0 0
  %395 = vmatpush1.bf16.msra.mxu0 0
  %396 = vmatprep.subr.bf16.mxu0 0
  %397 = vmatpush1.bf16.msra.mxu0 0
  %398 = vmatprep.subr.bf16.mxu0 0
  %399 = vmatpush1.bf16.msra.mxu0 0
  %400 = vmatprep.subr.bf16.mxu0 0
  %401 = vmatpush1.bf16.msra.mxu0 0
  %402 = vmatprep.subr.bf16.mxu0 0
  %403 = vmatpush1.bf16.msra.mxu0 0
  %404 = vmatprep.subr.bf16.mxu0 0
  %405 = vmatpush1.bf16.msra.mxu0 0
  %406 = vmatprep.subr.bf16.mxu0 0
  %407 = vmatpush1.bf16.msra.mxu0 0
  %408 = vmatprep.subr.bf16.mxu0 0
  %409 = vmatpush1.bf16.msra.mxu0 0
  %410 = vmatprep.subr.bf16.mxu0 0
  %411 = vmatpush1.bf16.msra.mxu0 0
  %412 = vmatprep.subr.bf16.mxu0 0
  %413 = vmatpush1.bf16.msra.mxu0 0
  %414 = vmatprep.subr.bf16.mxu0 0
  %415 = vmatpush1.bf16.msra.mxu0 0
  %416 = vmatprep.subr.bf16.mxu0 0
  %417 = vmatpush1.bf16.msra.mxu0 0
  %418 = vmatprep.subr.bf16.mxu0 0
  %419 = vmatpush1.bf16.msra.mxu0 0
  %420 = vmatprep.subr.bf16.mxu0 0
  %421 = vmatpush1.bf16.msra.mxu0 0
  %422 = vmatprep.subr.bf16.mxu0 0
  %423 = vmatpush1.bf16.msra.mxu0 0
  %424 = vmatprep.mubr.bf16.mxu0 0
  %425 = vmatmul.mubr.bf16.gmra.mrb[0].mxu0 %v390
  %v426 = vpop.f32.mrb[0].mxu0
  %v427 = vadd.f32 0.0, %v426
  %v428 = vpop.f32.mrb[0].mxu0
  %v429 = vadd.f32 0.0, %v428
  %v430 = vpop.f32.mrb[0].mxu0
  %v431 = vadd.f32 0.0, %v430
  %v432 = vpop.f32.mrb[0].mxu0
  %v433 = vadd.f32 0.0, %v432
  %434 = vdwg.mxu0
  %v435 = vadd.f32 %v369, %v427
  %v436 = vadd.f32 %v370, %v429
  %v437 = vadd.f32 %v371, %v431
  %v438 = vadd.f32 %v372, %v433
  %s439 = scalar_lea.vmem %s2, 48
  %v440 = vld [vmem:[%s439] sm:$0xf]
  %v441 = vld [vmem:[%s439 + $0x4] sm:$0xf]
  %v444 = vunpack.c.l.b16 %v440
  %v445 = vunpack.c.l.b16 %v441
  %v446 = vpack.c.b16 %v445, %v444
  %447 = vrot.lane.b32.xlu0 %v57, 108
  %v448 = vpop.permute.xlu0 %447
  %449 = vrot.lane.b32.xlu0 %v58, 108
  %v450 = vpop.permute.xlu0 %449
  %vm451 = vcmask 883712
  %v452 = vsel %vm451, %v448, %v450
  %v456 = vsel %vm77, %v446, 0
  %458 = vmatprep.subr.bf16.mxu0 %v450
  %459 = vmatpush1.bf16.msra.mxu0 %v452
  %460 = vmatprep.subr.bf16.mxu0 0
  %461 = vmatpush1.bf16.msra.mxu0 0
  %462 = vmatprep.subr.bf16.mxu0 0
  %463 = vmatpush1.bf16.msra.mxu0 0
  %464 = vmatprep.subr.bf16.mxu0 0
  %465 = vmatpush1.bf16.msra.mxu0 0
  %466 = vmatprep.subr.bf16.mxu0 0
  %467 = vmatpush1.bf16.msra.mxu0 0
  %468 = vmatprep.subr.bf16.mxu0 0
  %469 = vmatpush1.bf16.msra.mxu0 0
  %470 = vmatprep.subr.bf16.mxu0 0
  %471 = vmatpush1.bf16.msra.mxu0 0
  %472 = vmatprep.subr.bf16.mxu0 0
  %473 = vmatpush1.bf16.msra.mxu0 0
  %474 = vmatprep.subr.bf16.mxu0 0
  %475 = vmatpush1.bf16.msra.mxu0 0
  %476 = vmatprep.subr.bf16.mxu0 0
  %477 = vmatpush1.bf16.msra.mxu0 0
  %478 = vmatprep.subr.bf16.mxu0 0
  %479 = vmatpush1.bf16.msra.mxu0 0
  %480 = vmatprep.subr.bf16.mxu0 0
  %481 = vmatpush1.bf16.msra.mxu0 0
  %482 = vmatprep.subr.bf16.mxu0 0
  %483 = vmatpush1.bf16.msra.mxu0 0
  %484 = vmatprep.subr.bf16.mxu0 0
  %485 = vmatpush1.bf16.msra.mxu0 0
  %486 = vmatprep.subr.bf16.mxu0 0
  %487 = vmatpush1.bf16.msra.mxu0 0
  %488 = vmatprep.subr.bf16.mxu0 0
  %489 = vmatpush1.bf16.msra.mxu0 0
  %490 = vmatprep.mubr.bf16.mxu0 0
  %491 = vmatmul.mubr.bf16.gmra.mrb[0].mxu0 %v456
  %v492 = vpop.f32.mrb[0].mxu0
  %v493 = vadd.f32 0.0, %v492
  %v494 = vpop.f32.mrb[0].mxu0
  %v495 = vadd.f32 0.0, %v494
  %v496 = vpop.f32.mrb[0].mxu0
  %v497 = vadd.f32 0.0, %v496
  %v498 = vpop.f32.mrb[0].mxu0
  %v499 = vadd.f32 0.0, %v498
  %500 = vdwg.mxu0
  %v501 = vadd.f32 %v435, %v493
  %v502 = vadd.f32 %v436, %v495
  %v503 = vadd.f32 %v437, %v497
  %v504 = vadd.f32 %v438, %v499
  %s505 = scalar_lea.vmem %s2, 56
  %v506 = vld [vmem:[%s505] sm:$0xf]
  %v507 = vld [vmem:[%s505 + $0x4] sm:$0xf]
  %v510 = vunpack.c.l.b16 %v506
  %v511 = vunpack.c.l.b16 %v507
  %v512 = vpack.c.b16 %v511, %v510
  %513 = vrot.lane.b32.xlu0 %v57, 107
  %v514 = vpop.permute.xlu0 %513
  %515 = vrot.lane.b32.xlu0 %v58, 107
  %v516 = vpop.permute.xlu0 %515
  %vm517 = vcmask 875520
  %v518 = vsel %vm517, %v514, %v516
  %v522 = vsel %vm77, %v512, 0
  %524 = vmatprep.subr.bf16.mxu0 %v516
  %525 = vmatpush1.bf16.msra.mxu0 %v518
  %526 = vmatprep.subr.bf16.mxu0 0
  %527 = vmatpush1.bf16.msra.mxu0 0
  %528 = vmatprep.subr.bf16.mxu0 0
  %529 = vmatpush1.bf16.msra.mxu0 0
  %530 = vmatprep.subr.bf16.mxu0 0
  %531 = vmatpush1.bf16.msra.mxu0 0
  %532 = vmatprep.subr.bf16.mxu0 0
  %533 = vmatpush1.bf16.msra.mxu0 0
  %534 = vmatprep.subr.bf16.mxu0 0
  %535 = vmatpush1.bf16.msra.mxu0 0
  %536 = vmatprep.subr.bf16.mxu0 0
  %537 = vmatpush1.bf16.msra.mxu0 0
  %538 = vmatprep.subr.bf16.mxu0 0
  %539 = vmatpush1.bf16.msra.mxu0 0
  %540 = vmatprep.subr.bf16.mxu0 0
  %541 = vmatpush1.bf16.msra.mxu0 0
  %542 = vmatprep.subr.bf16.mxu0 0
  %543 = vmatpush1.bf16.msra.mxu0 0
  %544 = vmatprep.subr.bf16.mxu0 0
  %545 = vmatpush1.bf16.msra.mxu0 0
  %546 = vmatprep.subr.bf16.mxu0 0
  %547 = vmatpush1.bf16.msra.mxu0 0
  %548 = vmatprep.subr.bf16.mxu0 0
  %549 = vmatpush1.bf16.msra.mxu0 0
  %550 = vmatprep.subr.bf16.mxu0 0
  %551 = vmatpush1.bf16.msra.mxu0 0
  %552 = vmatprep.subr.bf16.mxu0 0
  %553 = vmatpush1.bf16.msra.mxu0 0
  %554 = vmatprep.subr.bf16.mxu0 0
  %555 = vmatpush1.bf16.msra.mxu0 0
  %556 = vmatprep.mubr.bf16.mxu0 0
  %557 = vmatmul.mubr.bf16.gmra.mrb[0].mxu0 %v522
  %v558 = vpop.f32.mrb[0].mxu0
  %v559 = vadd.f32 0.0, %v558
  %v560 = vpop.f32.mrb[0].mxu0
  %v561 = vadd.f32 0.0, %v560
  %v562 = vpop.f32.mrb[0].mxu0
  %v563 = vadd.f32 0.0, %v562
  %v564 = vpop.f32.mrb[0].mxu0
  %v565 = vadd.f32 0.0, %v564
  %566 = vdwg.mxu0
  %v567 = vadd.f32 %v501, %v559
  %v568 = vadd.f32 %v502, %v561
  %v569 = vadd.f32 %v503, %v563
  %v570 = vadd.f32 %v504, %v565
  %s571 = scalar_lea.vmem %s2, 64
  %v572 = vld [vmem:[%s571] sm:$0xf]
  %v573 = vld [vmem:[%s571 + $0x4] sm:$0xf]
  %v576 = vunpack.c.l.b16 %v572
  %v577 = vunpack.c.l.b16 %v573
  %v578 = vpack.c.b16 %v577, %v576
  %579 = vrot.lane.b32.xlu0 %v57, 106
  %v580 = vpop.permute.xlu0 %579
  %581 = vrot.lane.b32.xlu0 %v58, 106
  %v582 = vpop.permute.xlu0 %581
  %vm583 = vcmask 867328
  %v584 = vsel %vm583, %v580, %v582
  %v588 = vsel %vm77, %v578, 0
  %590 = vmatprep.subr.bf16.mxu0 %v582
  %591 = vmatpush1.bf16.msra.mxu0 %v584
  %592 = vmatprep.subr.bf16.mxu0 0
  %593 = vmatpush1.bf16.msra.mxu0 0
  %594 = vmatprep.subr.bf16.mxu0 0
  %595 = vmatpush1.bf16.msra.mxu0 0
  %596 = vmatprep.subr.bf16.mxu0 0
  %597 = vmatpush1.bf16.msra.mxu0 0
  %598 = vmatprep.subr.bf16.mxu0 0
  %599 = vmatpush1.bf16.msra.mxu0 0
  %600 = vmatprep.subr.bf16.mxu0 0
  %601 = vmatpush1.bf16.msra.mxu0 0
  %602 = vmatprep.subr.bf16.mxu0 0
  %603 = vmatpush1.bf16.msra.mxu0 0
  %604 = vmatprep.subr.bf16.mxu0 0
  %605 = vmatpush1.bf16.msra.mxu0 0
  %606 = vmatprep.subr.bf16.mxu0 0
  %607 = vmatpush1.bf16.msra.mxu0 0
  %608 = vmatprep.subr.bf16.mxu0 0
  %609 = vmatpush1.bf16.msra.mxu0 0
  %610 = vmatprep.subr.bf16.mxu0 0
  %611 = vmatpush1.bf16.msra.mxu0 0
  %612 = vmatprep.subr.bf16.mxu0 0
  %613 = vmatpush1.bf16.msra.mxu0 0
  %614 = vmatprep.subr.bf16.mxu0 0
  %615 = vmatpush1.bf16.msra.mxu0 0
  %616 = vmatprep.subr.bf16.mxu0 0
  %617 = vmatpush1.bf16.msra.mxu0 0
  %618 = vmatprep.subr.bf16.mxu0 0
  %619 = vmatpush1.bf16.msra.mxu0 0
  %620 = vmatprep.subr.bf16.mxu0 0
  %621 = vmatpush1.bf16.msra.mxu0 0
  %622 = vmatprep.mubr.bf16.mxu0 0
  %623 = vmatmul.mubr.bf16.gmra.mrb[0].mxu0 %v588
  %v624 = vpop.f32.mrb[0].mxu0
  %v625 = vadd.f32 0.0, %v624
  %v626 = vpop.f32.mrb[0].mxu0
  %v627 = vadd.f32 0.0, %v626
  %v628 = vpop.f32.mrb[0].mxu0
  %v629 = vadd.f32 0.0, %v628
  %v630 = vpop.f32.mrb[0].mxu0
  %v631 = vadd.f32 0.0, %v630
  %632 = vdwg.mxu0
  %v633 = vadd.f32 %v567, %v625
  %v634 = vadd.f32 %v568, %v627
  %v635 = vadd.f32 %v569, %v629
  %v636 = vadd.f32 %v570, %v631
  %v637 = vld [vmem:[%s3] sm:$0xff]
  %v638 = vld [vmem:[%s3 + $0x8] sm:$0xff]
  %640 = vset.pattern.permute.xlu0 0
  %641 = vperm.xlu0 %640, %v637
  %v642 = vpop.permute.xlu0 %641
  %645 = vset.pattern.permute.xlu0 0
  %646 = vperm.xlu0 %645, %v638
  %v647 = vpop.permute.xlu0 %646
  %v649 = vadd.f32 %v633, %v642
  %v650 = vadd.f32 %v634, %v642
  %v651 = vadd.f32 %v635, %v647
  %v652 = vadd.f32 %v636, %v647
  %v653 = vmax.f32 %v649, 0.0
  %v654 = vmax.f32 %v650, 0.0
  %v655 = vmax.f32 %v651, 0.0
  %v656 = vmax.f32 %v652, 0.0
  %657 = vrot.lane.b32.xlu0 %v39, 117
  %v658 = vpop.permute.xlu0 %657
  %659 = vrot.lane.b32.xlu0 %v43, 117
  %v660 = vpop.permute.xlu0 %659
  %vm661 = vcmask 957440
  %v662 = vsel %vm661, %v658, %v660
  %v665 = vmul.f32 %v653, %v662
  %v666 = vmul.f32 %v654, %v660
  %v667 = vmul.f32 %v655, %v662
  %v668 = vmul.f32 %v656, %v660
  %669 = vst [vmem:[#allocation3] sm:$0xff] 0
  %670 = vst.msk [vmem:[#allocation3 + $0x8] sm:$0xff] %vm53, 0
  %v671 = vpack.c.bf16 %v667, %v665
  %v672 = vpack.c.bf16 %v668, %v666
  %675 = vrot.lane.b32.xlu0 %v671, 11
  %v676 = vpop.permute.xlu0 %675
  %677 = vrot.lane.b32.xlu0 %v672, 11
  %v678 = vpop.permute.xlu0 %677
  %vm679 = vcmask 89088
  %v680 = vsel %vm679, %v676, %v678
  %vm683 = vcmask 1047640
  %684 = vst.msk [vmem:[#allocation3] sm:$0xff] %vm683, %v676
  %vm685 = vcmask 678912
  %686 = vst.msk [vmem:[#allocation3 + $0x8] sm:$0xff] %vm685, %v680
  %v687 = vld [vmem:[%s4] sm:$0xf]
  %v688 = vld [vmem:[%s4 + $0x4] sm:$0xf]
  %v689 = vld [vmem:[#allocation3] sm:$0xff]
  %v690 = vld [vmem:[#allocation3 + $0x8] sm:$0xff]
  %s691 = scalar_lea.vmem %s4, 8
  %v692 = vld [vmem:[%s691] sm:$0xf]
  %v693 = vld [vmem:[%s691 + $0x4] sm:$0xf]
  %v696 = vunpack.c.l.b16 %v692
  %v697 = vunpack.c.l.b16 %v693
  %v698 = vpack.c.b16 %v697, %v696
  %701 = vrot.lane.b32.xlu0 %v689, 127
  %v702 = vpop.permute.xlu0 %701
  %703 = vrot.lane.b32.xlu0 %v690, 127
  %v704 = vpop.permute.xlu0 %703
  %v705 = vsel %vm73, %v702, %v704
  %v709 = vsel %vm77, %v698, 0
  %711 = vmatprep.subr.bf16.mxu0 %v704
  %712 = vmatpush1.bf16.msra.mxu0 %v705
  %713 = vmatprep.subr.bf16.mxu0 0
  %714 = vmatpush1.bf16.msra.mxu0 0
  %715 = vmatprep.subr.bf16.mxu0 0
  %716 = vmatpush1.bf16.msra.mxu0 0
  %717 = vmatprep.subr.bf16.mxu0 0
  %718 = vmatpush1.bf16.msra.mxu0 0
  %719 = vmatprep.subr.bf16.mxu0 0
  %720 = vmatpush1.bf16.msra.mxu0 0
  %721 = vmatprep.subr.bf16.mxu0 0
  %722 = vmatpush1.bf16.msra.mxu0 0
  %723 = vmatprep.subr.bf16.mxu0 0
  %724 = vmatpush1.bf16.msra.mxu0 0
  %725 = vmatprep.subr.bf16.mxu0 0
  %726 = vmatpush1.bf16.msra.mxu0 0
  %727 = vmatprep.subr.bf16.mxu0 0
  %728 = vmatpush1.bf16.msra.mxu0 0
  %729 = vmatprep.subr.bf16.mxu0 0
  %730 = vmatpush1.bf16.msra.mxu0 0
  %731 = vmatprep.subr.bf16.mxu0 0
  %732 = vmatpush1.bf16.msra.mxu0 0
  %733 = vmatprep.subr.bf16.mxu0 0
  %734 = vmatpush1.bf16.msra.mxu0 0
  %735 = vmatprep.subr.bf16.mxu0 0
  %736 = vmatpush1.bf16.msra.mxu0 0
  %737 = vmatprep.subr.bf16.mxu0 0
  %738 = vmatpush1.bf16.msra.mxu0 0
  %739 = vmatprep.subr.bf16.mxu0 0
  %740 = vmatpush1.bf16.msra.mxu0 0
  %741 = vmatprep.subr.bf16.mxu0 0
  %742 = vmatpush1.bf16.msra.mxu0 0
  %743 = vmatprep.mubr.bf16.mxu0 0
  %744 = vmatmul.mubr.bf16.gmra.mrb[0].mxu0 %v709
  %v745 = vpop.f32.mrb[0].mxu0
  %v746 = vadd.f32 0.0, %v745
  %v747 = vpop.f32.mrb[0].mxu0
  %v748 = vadd.f32 0.0, %v747
  %v749 = vpop.f32.mrb[0].mxu0
  %v750 = vadd.f32 0.0, %v749
  %v751 = vpop.f32.mrb[0].mxu0
  %v752 = vadd.f32 0.0, %v751
  %753 = vdwg.mxu0
  %v756 = vunpack.c.l.b16 %v687
  %v757 = vunpack.c.l.b16 %v688
  %v758 = vpack.c.b16 %v757, %v756
  %v760 = vsel %vm77, %v758, 0
  %762 = vmatprep.subr.bf16.mxu0 %v690
  %763 = vmatpush1.bf16.msra.mxu0 %v689
  %764 = vmatprep.subr.bf16.mxu0 0
  %765 = vmatpush1.bf16.msra.mxu0 0
  %766 = vmatprep.subr.bf16.mxu0 0
  %767 = vmatpush1.bf16.msra.mxu0 0
  %768 = vmatprep.subr.bf16.mxu0 0
  %769 = vmatpush1.bf16.msra.mxu0 0
  %770 = vmatprep.subr.bf16.mxu0 0
  %771 = vmatpush1.bf16.msra.mxu0 0
  %772 = vmatprep.subr.bf16.mxu0 0
  %773 = vmatpush1.bf16.msra.mxu0 0
  %774 = vmatprep.subr.bf16.mxu0 0
  %775 = vmatpush1.bf16.msra.mxu0 0
  %776 = vmatprep.subr.bf16.mxu0 0
  %777 = vmatpush1.bf16.msra.mxu0 0
  %778 = vmatprep.subr.bf16.mxu0 0
  %779 = vmatpush1.bf16.msra.mxu0 0
  %780 = vmatprep.subr.bf16.mxu0 0
  %781 = vmatpush1.bf16.msra.mxu0 0
  %782 = vmatprep.subr.bf16.mxu0 0
  %783 = vmatpush1.bf16.msra.mxu0 0
  %784 = vmatprep.subr.bf16.mxu0 0
  %785 = vmatpush1.bf16.msra.mxu0 0
  %786 = vmatprep.subr.bf16.mxu0 0
  %787 = vmatpush1.bf16.msra.mxu0 0
  %788 = vmatprep.subr.bf16.mxu0 0
  %789 = vmatpush1.bf16.msra.mxu0 0
  %790 = vmatprep.subr.bf16.mxu0 0
  %791 = vmatpush1.bf16.msra.mxu0 0
  %792 = vmatprep.subr.bf16.mxu0 0
  %793 = vmatpush1.bf16.msra.mxu0 0
  %794 = vmatprep.mubr.bf16.mxu0 0
  %795 = vmatmul.mubr.bf16.gmra.mrb[0].mxu0 %v760
  %v796 = vpop.f32.mrb[0].mxu0
  %v797 = vadd.f32 %v746, %v796
  %v798 = vpop.f32.mrb[0].mxu0
  %v799 = vadd.f32 %v748, %v798
  %v800 = vpop.f32.mrb[0].mxu0
  %v801 = vadd.f32 %v750, %v800
  %v802 = vpop.f32.mrb[0].mxu0
  %v803 = vadd.f32 %v752, %v802
  %804 = vdwg.mxu0
  %s805 = scalar_lea.vmem %s4, 16
  %v806 = vld [vmem:[%s805] sm:$0xf]
  %v807 = vld [vmem:[%s805 + $0x4] sm:$0xf]
  %v810 = vunpack.c.l.b16 %v806
  %v811 = vunpack.c.l.b16 %v807
  %v812 = vpack.c.b16 %v811, %v810
  %813 = vrot.lane.b32.xlu0 %v689, 126
  %v814 = vpop.permute.xlu0 %813
  %815 = vrot.lane.b32.xlu0 %v690, 126
  %v816 = vpop.permute.xlu0 %815
  %v817 = vsel %vm187, %v814, %v816
  %v821 = vsel %vm77, %v812, 0
  %823 = vmatprep.subr.bf16.mxu0 %v816
  %824 = vmatpush1.bf16.msra.mxu0 %v817
  %825 = vmatprep.subr.bf16.mxu0 0
  %826 = vmatpush1.bf16.msra.mxu0 0
  %827 = vmatprep.subr.bf16.mxu0 0
  %828 = vmatpush1.bf16.msra.mxu0 0
  %829 = vmatprep.subr.bf16.mxu0 0
  %830 = vmatpush1.bf16.msra.mxu0 0
  %831 = vmatprep.subr.bf16.mxu0 0
  %832 = vmatpush1.bf16.msra.mxu0 0
  %833 = vmatprep.subr.bf16.mxu0 0
  %834 = vmatpush1.bf16.msra.mxu0 0
  %835 = vmatprep.subr.bf16.mxu0 0
  %836 = vmatpush1.bf16.msra.mxu0 0
  %837 = vmatprep.subr.bf16.mxu0 0
  %838 = vmatpush1.bf16.msra.mxu0 0
  %839 = vmatprep.subr.bf16.mxu0 0
  %840 = vmatpush1.bf16.msra.mxu0 0
  %841 = vmatprep.subr.bf16.mxu0 0
  %842 = vmatpush1.bf16.msra.mxu0 0
  %843 = vmatprep.subr.bf16.mxu0 0
  %844 = vmatpush1.bf16.msra.mxu0 0
  %845 = vmatprep.subr.bf16.mxu0 0
  %846 = vmatpush1.bf16.msra.mxu0 0
  %847 = vmatprep.subr.bf16.mxu0 0
  %848 = vmatpush1.bf16.msra.mxu0 0
  %849 = vmatprep.subr.bf16.mxu0 0
  %850 = vmatpush1.bf16.msra.mxu0 0
  %851 = vmatprep.subr.bf16.mxu0 0
  %852 = vmatpush1.bf16.msra.mxu0 0
  %853 = vmatprep.subr.bf16.mxu0 0
  %854 = vmatpush1.bf16.msra.mxu0 0
  %855 = vmatprep.mubr.bf16.mxu0 0
  %856 = vmatmul.mubr.bf16.gmra.mrb[0].mxu0 %v821
  %v857 = vpop.f32.mrb[0].mxu0
  %v858 = vadd.f32 0.0, %v857
  %v859 = vpop.f32.mrb[0].mxu0
  %v860 = vadd.f32 0.0, %v859
  %v861 = vpop.f32.mrb[0].mxu0
  %v862 = vadd.f32 0.0, %v861
  %v863 = vpop.f32.mrb[0].mxu0
  %v864 = vadd.f32 0.0, %v863
  %865 = vdwg.mxu0
  %v866 = vadd.f32 %v797, %v858
  %v867 = vadd.f32 %v799, %v860
  %v868 = vadd.f32 %v801, %v862
  %v869 = vadd.f32 %v803, %v864
  %s870 = scalar_lea.vmem %s4, 24
  %v871 = vld [vmem:[%s870] sm:$0xf]
  %v872 = vld [vmem:[%s870 + $0x4] sm:$0xf]
  %v875 = vunpack.c.l.b16 %v871
  %v876 = vunpack.c.l.b16 %v872
  %v877 = vpack.c.b16 %v876, %v875
  %878 = vrot.lane.b32.xlu0 %v689, 118
  %v879 = vpop.permute.xlu0 %878
  %880 = vrot.lane.b32.xlu0 %v690, 118
  %v881 = vpop.permute.xlu0 %880
  %v882 = vsel %vm253, %v879, %v881
  %v886 = vsel %vm77, %v877, 0
  %888 = vmatprep.subr.bf16.mxu0 %v881
  %889 = vmatpush1.bf16.msra.mxu0 %v882
  %890 = vmatprep.subr.bf16.mxu0 0
  %891 = vmatpush1.bf16.msra.mxu0 0
  %892 = vmatprep.subr.bf16.mxu0 0
  %893 = vmatpush1.bf16.msra.mxu0 0
  %894 = vmatprep.subr.bf16.mxu0 0
  %895 = vmatpush1.bf16.msra.mxu0 0
  %896 = vmatprep.subr.bf16.mxu0 0
  %897 = vmatpush1.bf16.msra.mxu0 0
  %898 = vmatprep.subr.bf16.mxu0 0
  %899 = vmatpush1.bf16.msra.mxu0 0
  %900 = vmatprep.subr.bf16.mxu0 0
  %901 = vmatpush1.bf16.msra.mxu0 0
  %902 = vmatprep.subr.bf16.mxu0 0
  %903 = vmatpush1.bf16.msra.mxu0 0
  %904 = vmatprep.subr.bf16.mxu0 0
  %905 = vmatpush1.bf16.msra.mxu0 0
  %906 = vmatprep.subr.bf16.mxu0 0
  %907 = vmatpush1.bf16.msra.mxu0 0
  %908 = vmatprep.subr.bf16.mxu0 0
  %909 = vmatpush1.bf16.msra.mxu0 0
  %910 = vmatprep.subr.bf16.mxu0 0
  %911 = vmatpush1.bf16.msra.mxu0 0
  %912 = vmatprep.subr.bf16.mxu0 0
  %913 = vmatpush1.bf16.msra.mxu0 0
  %914 = vmatprep.subr.bf16.mxu0 0
  %915 = vmatpush1.bf16.msra.mxu0 0
  %916 = vmatprep.subr.bf16.mxu0 0
  %917 = vmatpush1.bf16.msra.mxu0 0
  %918 = vmatprep.subr.bf16.mxu0 0
  %919 = vmatpush1.bf16.msra.mxu0 0
  %920 = vmatprep.mubr.bf16.mxu0 0
  %921 = vmatmul.mubr.bf16.gmra.mrb[0].mxu0 %v886
  %v922 = vpop.f32.mrb[0].mxu0
  %v923 = vadd.f32 0.0, %v922
  %v924 = vpop.f32.mrb[0].mxu0
  %v925 = vadd.f32 0.0, %v924
  %v926 = vpop.f32.mrb[0].mxu0
  %v927 = vadd.f32 0.0, %v926
  %v928 = vpop.f32.mrb[0].mxu0
  %v929 = vadd.f32 0.0, %v928
  %930 = vdwg.mxu0
  %v931 = vadd.f32 %v866, %v923
  %v932 = vadd.f32 %v867, %v925
  %v933 = vadd.f32 %v868, %v927
  %v934 = vadd.f32 %v869, %v929
  %s935 = scalar_lea.vmem %s4, 32
  %v936 = vld [vmem:[%s935] sm:$0xf]
  %v937 = vld [vmem:[%s935 + $0x4] sm:$0xf]
  %v940 = vunpack.c.l.b16 %v936
  %v941 = vunpack.c.l.b16 %v937
  %v942 = vpack.c.b16 %v941, %v940
  %943 = vrot.lane.b32.xlu0 %v689, 117
  %v944 = vpop.permute.xlu0 %943
  %945 = vrot.lane.b32.xlu0 %v690, 117
  %v946 = vpop.permute.xlu0 %945
  %v947 = vsel %vm319, %v944, %v946
  %v951 = vsel %vm77, %v942, 0
  %953 = vmatprep.subr.bf16.mxu0 %v946
  %954 = vmatpush1.bf16.msra.mxu0 %v947
  %955 = vmatprep.subr.bf16.mxu0 0
  %956 = vmatpush1.bf16.msra.mxu0 0
  %957 = vmatprep.subr.bf16.mxu0 0
  %958 = vmatpush1.bf16.msra.mxu0 0
  %959 = vmatprep.subr.bf16.mxu0 0
  %960 = vmatpush1.bf16.msra.mxu0 0
  %961 = vmatprep.subr.bf16.mxu0 0
  %962 = vmatpush1.bf16.msra.mxu0 0
  %963 = vmatprep.subr.bf16.mxu0 0
  %964 = vmatpush1.bf16.msra.mxu0 0
  %965 = vmatprep.subr.bf16.mxu0 0
  %966 = vmatpush1.bf16.msra.mxu0 0
  %967 = vmatprep.subr.bf16.mxu0 0
  %968 = vmatpush1.bf16.msra.mxu0 0
  %969 = vmatprep.subr.bf16.mxu0 0
  %970 = vmatpush1.bf16.msra.mxu0 0
  %971 = vmatprep.subr.bf16.mxu0 0
  %972 = vmatpush1.bf16.msra.mxu0 0
  %973 = vmatprep.subr.bf16.mxu0 0
  %974 = vmatpush1.bf16.msra.mxu0 0
  %975 = vmatprep.subr.bf16.mxu0 0
  %976 = vmatpush1.bf16.msra.mxu0 0
  %977 = vmatprep.subr.bf16.mxu0 0
  %978 = vmatpush1.bf16.msra.mxu0 0
  %979 = vmatprep.subr.bf16.mxu0 0
  %980 = vmatpush1.bf16.msra.mxu0 0
  %981 = vmatprep.subr.bf16.mxu0 0
  %982 = vmatpush1.bf16.msra.mxu0 0
  %983 = vmatprep.subr.bf16.mxu0 0
  %984 = vmatpush1.bf16.msra.mxu0 0
  %985 = vmatprep.mubr.bf16.mxu0 0
  %986 = vmatmul.mubr.bf16.gmra.mrb[0].mxu0 %v951
  %v987 = vpop.f32.mrb[0].mxu0
  %v988 = vadd.f32 0.0, %v987
  %v989 = vpop.f32.mrb[0].mxu0
  %v990 = vadd.f32 0.0, %v989
  %v991 = vpop.f32.mrb[0].mxu0
  %v992 = vadd.f32 0.0, %v991
  %v993 = vpop.f32.mrb[0].mxu0
  %v994 = vadd.f32 0.0, %v993
  %995 = vdwg.mxu0
  %v996 = vadd.f32 %v931, %v988
  %v997 = vadd.f32 %v932, %v990
  %v998 = vadd.f32 %v933, %v992
  %v999 = vadd.f32 %v934, %v994
  %s1000 = scalar_lea.vmem %s4, 40
  %v1001 = vld [vmem:[%s1000] sm:$0xf]
  %v1002 = vld [vmem:[%s1000 + $0x4] sm:$0xf]
  %v1005 = vunpack.c.l.b16 %v1001
  %v1006 = vunpack.c.l.b16 %v1002
  %v1007 = vpack.c.b16 %v1006, %v1005
  %1008 = vrot.lane.b32.xlu0 %v689, 116
  %v1009 = vpop.permute.xlu0 %1008
  %1010 = vrot.lane.b32.xlu0 %v690, 116
  %v1011 = vpop.permute.xlu0 %1010
  %v1012 = vsel %vm385, %v1009, %v1011
  %v1016 = vsel %vm77, %v1007, 0
  %1018 = vmatprep.subr.bf16.mxu0 %v1011
  %1019 = vmatpush1.bf16.msra.mxu0 %v1012
  %1020 = vmatprep.subr.bf16.mxu0 0
  %1021 = vmatpush1.bf16.msra.mxu0 0
  %1022 = vmatprep.subr.bf16.mxu0 0
  %1023 = vmatpush1.bf16.msra.mxu0 0
  %1024 = vmatprep.subr.bf16.mxu0 0
  %1025 = vmatpush1.bf16.msra.mxu0 0
  %1026 = vmatprep.subr.bf16.mxu0 0
  %1027 = vmatpush1.bf16.msra.mxu0 0
  %1028 = vmatprep.subr.bf16.mxu0 0
  %1029 = vmatpush1.bf16.msra.mxu0 0
  %1030 = vmatprep.subr.bf16.mxu0 0
  %1031 = vmatpush1.bf16.msra.mxu0 0
  %1032 = vmatprep.subr.bf16.mxu0 0
  %1033 = vmatpush1.bf16.msra.mxu0 0
  %1034 = vmatprep.subr.bf16.mxu0 0
  %1035 = vmatpush1.bf16.msra.mxu0 0
  %1036 = vmatprep.subr.bf16.mxu0 0
  %1037 = vmatpush1.bf16.msra.mxu0 0
  %1038 = vmatprep.subr.bf16.mxu0 0
  %1039 = vmatpush1.bf16.msra.mxu0 0
  %1040 = vmatprep.subr.bf16.mxu0 0
  %1041 = vmatpush1.bf16.msra.mxu0 0
  %1042 = vmatprep.subr.bf16.mxu0 0
  %1043 = vmatpush1.bf16.msra.mxu0 0
  %1044 = vmatprep.subr.bf16.mxu0 0
  %1045 = vmatpush1.bf16.msra.mxu0 0
  %1046 = vmatprep.subr.bf16.mxu0 0
  %1047 = vmatpush1.bf16.msra.mxu0 0
  %1048 = vmatprep.subr.bf16.mxu0 0
  %1049 = vmatpush1.bf16.msra.mxu0 0
  %1050 = vmatprep.mubr.bf16.mxu0 0
  %1051 = vmatmul.mubr.bf16.gmra.mrb[0].mxu0 %v1016
  %v1052 = vpop.f32.mrb[0].mxu0
  %v1053 = vadd.f32 0.0, %v1052
  %v1054 = vpop.f32.mrb[0].mxu0
  %v1055 = vadd.f32 0.0, %v1054
  %v1056 = vpop.f32.mrb[0].mxu0
  %v1057 = vadd.f32 0.0, %v1056
  %v1058 = vpop.f32.mrb[0].mxu0
  %v1059 = vadd.f32 0.0, %v1058
  %1060 = vdwg.mxu0
  %v1061 = vadd.f32 %v996, %v1053
  %v1062 = vadd.f32 %v997, %v1055
  %v1063 = vadd.f32 %v998, %v1057
  %v1064 = vadd.f32 %v999, %v1059
  %s1065 = scalar_lea.vmem %s4, 48
  %v1066 = vld [vmem:[%s1065] sm:$0xf]
  %v1067 = vld [vmem:[%s1065 + $0x4] sm:$0xf]
  %v1070 = vunpack.c.l.b16 %v1066
  %v1071 = vunpack.c.l.b16 %v1067
  %v1072 = vpack.c.b16 %v1071, %v1070
  %1073 = vrot.lane.b32.xlu0 %v689, 108
  %v1074 = vpop.permute.xlu0 %1073
  %1075 = vrot.lane.b32.xlu0 %v690, 108
  %v1076 = vpop.permute.xlu0 %1075
  %v1077 = vsel %vm451, %v1074, %v1076
  %v1081 = vsel %vm77, %v1072, 0
  %1083 = vmatprep.subr.bf16.mxu0 %v1076
  %1084 = vmatpush1.bf16.msra.mxu0 %v1077
  %1085 = vmatprep.subr.bf16.mxu0 0
  %1086 = vmatpush1.bf16.msra.mxu0 0
  %1087 = vmatprep.subr.bf16.mxu0 0
  %1088 = vmatpush1.bf16.msra.mxu0 0
  %1089 = vmatprep.subr.bf16.mxu0 0
  %1090 = vmatpush1.bf16.msra.mxu0 0
  %1091 = vmatprep.subr.bf16.mxu0 0
  %1092 = vmatpush1.bf16.msra.mxu0 0
  %1093 = vmatprep.subr.bf16.mxu0 0
  %1094 = vmatpush1.bf16.msra.mxu0 0
  %1095 = vmatprep.subr.bf16.mxu0 0
  %1096 = vmatpush1.bf16.msra.mxu0 0
  %1097 = vmatprep.subr.bf16.mxu0 0
  %1098 = vmatpush1.bf16.msra.mxu0 0
  %1099 = vmatprep.subr.bf16.mxu0 0
  %1100 = vmatpush1.bf16.msra.mxu0 0
  %1101 = vmatprep.subr.bf16.mxu0 0
  %1102 = vmatpush1.bf16.msra.mxu0 0
  %1103 = vmatprep.subr.bf16.mxu0 0
  %1104 = vmatpush1.bf16.msra.mxu0 0
  %1105 = vmatprep.subr.bf16.mxu0 0
  %1106 = vmatpush1.bf16.msra.mxu0 0
  %1107 = vmatprep.subr.bf16.mxu0 0
  %1108 = vmatpush1.bf16.msra.mxu0 0
  %1109 = vmatprep.subr.bf16.mxu0 0
  %1110 = vmatpush1.bf16.msra.mxu0 0
  %1111 = vmatprep.subr.bf16.mxu0 0
  %1112 = vmatpush1.bf16.msra.mxu0 0
  %1113 = vmatprep.subr.bf16.mxu0 0
  %1114 = vmatpush1.bf16.msra.mxu0 0
  %1115 = vmatprep.mubr.bf16.mxu0 0
  %1116 = vmatmul.mubr.bf16.gmra.mrb[0].mxu0 %v1081
  %v1117 = vpop.f32.mrb[0].mxu0
  %v1118 = vadd.f32 0.0, %v1117
  %v1119 = vpop.f32.mrb[0].mxu0
  %v1120 = vadd.f32 0.0, %v1119
  %v1121 = vpop.f32.mrb[0].mxu0
  %v1122 = vadd.f32 0.0, %v1121
  %v1123 = vpop.f32.mrb[0].mxu0
  %v1124 = vadd.f32 0.0, %v1123
  %1125 = vdwg.mxu0
  %v1126 = vadd.f32 %v1061, %v1118
  %v1127 = vadd.f32 %v1062, %v1120
  %v1128 = vadd.f32 %v1063, %v1122
  %v1129 = vadd.f32 %v1064, %v1124
  %s1130 = scalar_lea.vmem %s4, 56
  %v1131 = vld [vmem:[%s1130] sm:$0xf]
  %v1132 = vld [vmem:[%s1130 + $0x4] sm:$0xf]
  %v1135 = vunpack.c.l.b16 %v1131
  %v1136 = vunpack.c.l.b16 %v1132
  %v1137 = vpack.c.b16 %v1136, %v1135
  %1138 = vrot.lane.b32.xlu0 %v689, 107
  %v1139 = vpop.permute.xlu0 %1138
  %1140 = vrot.lane.b32.xlu0 %v690, 107
  %v1141 = vpop.permute.xlu0 %1140
  %v1142 = vsel %vm517, %v1139, %v1141
  %v1146 = vsel %vm77, %v1137, 0
  %1148 = vmatprep.subr.bf16.mxu0 %v1141
  %1149 = vmatpush1.bf16.msra.mxu0 %v1142
  %1150 = vmatprep.subr.bf16.mxu0 0
  %1151 = vmatpush1.bf16.msra.mxu0 0
  %1152 = vmatprep.subr.bf16.mxu0 0
  %1153 = vmatpush1.bf16.msra.mxu0 0
  %1154 = vmatprep.subr.bf16.mxu0 0
  %1155 = vmatpush1.bf16.msra.mxu0 0
  %1156 = vmatprep.subr.bf16.mxu0 0
  %1157 = vmatpush1.bf16.msra.mxu0 0
  %1158 = vmatprep.subr.bf16.mxu0 0
  %1159 = vmatpush1.bf16.msra.mxu0 0
  %1160 = vmatprep.subr.bf16.mxu0 0
  %1161 = vmatpush1.bf16.msra.mxu0 0
  %1162 = vmatprep.subr.bf16.mxu0 0
  %1163 = vmatpush1.bf16.msra.mxu0 0
  %1164 = vmatprep.subr.bf16.mxu0 0
  %1165 = vmatpush1.bf16.msra.mxu0 0
  %1166 = vmatprep.subr.bf16.mxu0 0
  %1167 = vmatpush1.bf16.msra.mxu0 0
  %1168 = vmatprep.subr.bf16.mxu0 0
  %1169 = vmatpush1.bf16.msra.mxu0 0
  %1170 = vmatprep.subr.bf16.mxu0 0
  %1171 = vmatpush1.bf16.msra.mxu0 0
  %1172 = vmatprep.subr.bf16.mxu0 0
  %1173 = vmatpush1.bf16.msra.mxu0 0
  %1174 = vmatprep.subr.bf16.mxu0 0
  %1175 = vmatpush1.bf16.msra.mxu0 0
  %1176 = vmatprep.subr.bf16.mxu0 0
  %1177 = vmatpush1.bf16.msra.mxu0 0
  %1178 = vmatprep.subr.bf16.mxu0 0
  %1179 = vmatpush1.bf16.msra.mxu0 0
  %1180 = vmatprep.mubr.bf16.mxu0 0
  %1181 = vmatmul.mubr.bf16.gmra.mrb[0].mxu0 %v1146
  %v1182 = vpop.f32.mrb[0].mxu0
  %v1183 = vadd.f32 0.0, %v1182
  %v1184 = vpop.f32.mrb[0].mxu0
  %v1185 = vadd.f32 0.0, %v1184
  %v1186 = vpop.f32.mrb[0].mxu0
  %v1187 = vadd.f32 0.0, %v1186
  %v1188 = vpop.f32.mrb[0].mxu0
  %v1189 = vadd.f32 0.0, %v1188
  %1190 = vdwg.mxu0
  %v1191 = vadd.f32 %v1126, %v1183
  %v1192 = vadd.f32 %v1127, %v1185
  %v1193 = vadd.f32 %v1128, %v1187
  %v1194 = vadd.f32 %v1129, %v1189
  %s1195 = scalar_lea.vmem %s4, 64
  %v1196 = vld [vmem:[%s1195] sm:$0xf]
  %v1197 = vld [vmem:[%s1195 + $0x4] sm:$0xf]
  %v1200 = vunpack.c.l.b16 %v1196
  %v1201 = vunpack.c.l.b16 %v1197
  %v1202 = vpack.c.b16 %v1201, %v1200
  %1203 = vrot.lane.b32.xlu0 %v689, 106
  %v1204 = vpop.permute.xlu0 %1203
  %1205 = vrot.lane.b32.xlu0 %v690, 106
  %v1206 = vpop.permute.xlu0 %1205
  %v1207 = vsel %vm583, %v1204, %v1206
  %v1211 = vsel %vm77, %v1202, 0
  %1213 = vmatprep.subr.bf16.mxu0 %v1206
  %1214 = vmatpush1.bf16.msra.mxu0 %v1207
  %1215 = vmatprep.subr.bf16.mxu0 0
  %1216 = vmatpush1.bf16.msra.mxu0 0
  %1217 = vmatprep.subr.bf16.mxu0 0
  %1218 = vmatpush1.bf16.msra.mxu0 0
  %1219 = vmatprep.subr.bf16.mxu0 0
  %1220 = vmatpush1.bf16.msra.mxu0 0
  %1221 = vmatprep.subr.bf16.mxu0 0
  %1222 = vmatpush1.bf16.msra.mxu0 0
  %1223 = vmatprep.subr.bf16.mxu0 0
  %1224 = vmatpush1.bf16.msra.mxu0 0
  %1225 = vmatprep.subr.bf16.mxu0 0
  %1226 = vmatpush1.bf16.msra.mxu0 0
  %1227 = vmatprep.subr.bf16.mxu0 0
  %1228 = vmatpush1.bf16.msra.mxu0 0
  %1229 = vmatprep.subr.bf16.mxu0 0
  %1230 = vmatpush1.bf16.msra.mxu0 0
  %1231 = vmatprep.subr.bf16.mxu0 0
  %1232 = vmatpush1.bf16.msra.mxu0 0
  %1233 = vmatprep.subr.bf16.mxu0 0
  %1234 = vmatpush1.bf16.msra.mxu0 0
  %1235 = vmatprep.subr.bf16.mxu0 0
  %1236 = vmatpush1.bf16.msra.mxu0 0
  %1237 = vmatprep.subr.bf16.mxu0 0
  %1238 = vmatpush1.bf16.msra.mxu0 0
  %1239 = vmatprep.subr.bf16.mxu0 0
  %1240 = vmatpush1.bf16.msra.mxu0 0
  %1241 = vmatprep.subr.bf16.mxu0 0
  %1242 = vmatpush1.bf16.msra.mxu0 0
  %1243 = vmatprep.subr.bf16.mxu0 0
  %1244 = vmatpush1.bf16.msra.mxu0 0
  %1245 = vmatprep.mubr.bf16.mxu0 0
  %1246 = vmatmul.mubr.bf16.gmra.mrb[0].mxu0 %v1211
  %v1247 = vpop.f32.mrb[0].mxu0
  %v1248 = vadd.f32 0.0, %v1247
  %v1249 = vpop.f32.mrb[0].mxu0
  %v1250 = vadd.f32 0.0, %v1249
  %v1251 = vpop.f32.mrb[0].mxu0
  %v1252 = vadd.f32 0.0, %v1251
  %v1253 = vpop.f32.mrb[0].mxu0
  %v1254 = vadd.f32 0.0, %v1253
  %1255 = vdwg.mxu0
  %v1256 = vadd.f32 %v1191, %v1248
  %v1257 = vadd.f32 %v1192, %v1250
  %v1258 = vadd.f32 %v1193, %v1252
  %v1259 = vadd.f32 %v1194, %v1254
  %v1260 = vld [vmem:[%s5] sm:$0xff]
  %v1261 = vld [vmem:[%s5 + $0x8] sm:$0xff]
  %1263 = vset.pattern.permute.xlu0 0
  %1264 = vperm.xlu0 %1263, %v1260
  %v1265 = vpop.permute.xlu0 %1264
  %1268 = vset.pattern.permute.xlu0 0
  %1269 = vperm.xlu0 %1268, %v1261
  %v1270 = vpop.permute.xlu0 %1269
  %v1272 = vadd.f32 %v1256, %v1265
  %v1273 = vadd.f32 %v1257, %v1265
  %v1274 = vadd.f32 %v1258, %v1270
  %v1275 = vadd.f32 %v1259, %v1270
  %v1276 = vld [vmem:[%s0] sm:$0xff]
  %v1277 = vld [vmem:[%s0 + $0x8] sm:$0xff]
  %v1278 = vunpack.c.l.bf16 %v1276
  %v1279 = vunpack.c.h.bf16 %v1276
  %v1280 = vunpack.c.l.bf16 %v1277
  %v1281 = vunpack.c.h.bf16 %v1277
  %1286 = vrot.lane.b32.xlu0 %v1278, 117
  %v1287 = vpop.permute.xlu0 %1286
  %1288 = vrot.lane.b32.xlu0 %v1279, 117
  %v1289 = vpop.permute.xlu0 %1288
  %1290 = vrot.lane.b32.xlu0 %v1280, 117
  %v1291 = vpop.permute.xlu0 %1290
  %1292 = vrot.lane.b32.xlu0 %v1281, 117
  %v1293 = vpop.permute.xlu0 %1292
  %v1294 = vsel %vm661, %v1287, %v1289
  %v1295 = vsel %vm661, %v1291, %v1293
  %v1300 = vadd.f32 %v1272, %v1294
  %v1301 = vadd.f32 %v1273, %v1289
  %v1302 = vadd.f32 %v1274, %v1295
  %v1303 = vadd.f32 %v1275, %v1293
  %v1304 = vmul.f32 %v1300, %v662
  %v1305 = vmul.f32 %v1301, %v660
  %v1306 = vmul.f32 %v1302, %v662
  %v1307 = vmul.f32 %v1303, %v660
  %vm1308 = vcmask 1043456
  %vm1309 = vcmask 769028
  %vm1310 = vmor %vm1309, %vm1308
  %1311 = vst.msk [vmem:[%s6] sm:$0xff] %vm1310, 0
  %1312 = vst.msk [vmem:[%s6 + $0x8] sm:$0xff] %vm1310, 0
  %v1313 = vpack.c.bf16 %v1306, %v1304
  %v1314 = vpack.c.bf16 %v1307, %v1305
  %v1317 = vunpack.c.l.b16 %v1313
  %v1318 = vunpack.c.l.b16 %v1314
  %v1319 = vunpack.c.h.b16 %v1313
  %v1320 = vunpack.c.h.b16 %v1314
  %v1321 = vpack.c.b16 %v1318, %v1317
  %v1322 = vpack.c.b16 %v1320, %v1319
  %1323 = vrot.lane.b32.xlu0 %v1321, 11
  %v1324 = vpop.permute.xlu0 %1323
  %1325 = vrot.lane.b32.xlu0 %v1322, 11
  %v1326 = vpop.permute.xlu0 %1325
  %v1327 = vrot.slane %v1324, 4
  %v1328 = vrot.slane %v1326, 4
  %v1329 = vsel %vm679, %v1327, %v1324
  %v1330 = vsel %vm679, %v1328, %v1326
  %vm1333 = vcmask 1043544
  %vm1334 = vcmask 678916
  %vm1335 = vmor %vm1334, %vm1333
  %1336 = vst.msk [vmem:[%s6] sm:$0xff] %vm1335, %v1329
  %1337 = vst.msk [vmem:[%s6 + $0x8] sm:$0xff] %vm1335, %v1330
  // Predicated region
  $region26: #{encoder_forward.13} parent=0 // pred_check
    _
  $region27: #{encoder_forward.13} parent=0 // pred_check_branch
    %1339 = sbr.rel (0) target = $region29
  $region28: #{encoder_forward.13} parent=0 // pred_region
    _
  $region29: #{encoder_forward.13} parent=0 // pred_fallthru
    _
  // Predicated region
  $region30: #{encoder_forward.13} parent=0 // pred_check
    _
  $region31: #{encoder_forward.13} parent=0 // pred_check_branch
    %1341 = sbr.rel (0) target = $region33
  $region32: #{encoder_forward.13} parent=0 // pred_region
    _
  $region33: #{encoder_forward.13} parent=0 // pred_fallthru
    _

// kernel: encoder_forward.12
$region0: #{encoder_forward.12}
  #allocation0 [shape = 'u32[]', space=smem, size = 0x4, offset = 0x4, fixed_abs, tag = 'smem constant byte address 0x4 - core index']
  #allocation1 [shape = 'u32[144,128]{1,0:T(1,128)}', space=vmem, size = 0x12000, scoped, tag = 'internal scratch']
  #allocation2 [shape = 'bf16[8,222]{1,0:T(8,128)(2,1)}', space=vmem, size = 0x1000, scoped, tag = 'scratch operand']
  #allocation3 [shape = 'bf16[16,222]{1,0:T(16,128)(2,1)}', space=vmem, size = 0x2000, scoped, tag = 'scratch operand']
  %s0 = inlined_call_operand.vmem [shape: bf16[8,222], index: 0, kind: input, shape index: {}]
  %s1 = inlined_call_operand.vmem [shape: f32[1,222], index: 1, kind: input, shape index: {}]
  %s2 = inlined_call_operand.vmem [shape: bf16[9,16,8], index: 2, kind: input, shape index: {}]
  %s3 = inlined_call_operand.vmem [shape: f32[16,1], index: 3, kind: input, shape index: {}, may-alias: {3,5,9,11}]
  %s4 = inlined_call_operand.vmem [shape: bf16[9,16,16], index: 4, kind: input, shape index: {}]
  %s5 = inlined_call_operand.vmem [shape: f32[16,1], index: 5, kind: input, shape index: {}, may-alias: {3,5,9,11}]
  %s6 = inlined_call_operand.vmem [shape: f32[8,1], index: 6, kind: input, shape index: {}]
  %s7 = inlined_call_operand.vmem [shape: f32[8,1], index: 7, kind: input, shape index: {}]
  %s8 = inlined_call_operand.vmem [shape: f32[16,1], index: 8, kind: input, shape index: {}]
  %s9 = inlined_call_operand.vmem [shape: f32[16,1], index: 9, kind: input, shape index: {}, may-alias: {3,5,9,11}]
  %s10 = inlined_call_operand.vmem [shape: bf16[16,8], index: 10, kind: input, shape index: {}]
  %s11 = inlined_call_operand.vmem [shape: f32[16,1], index: 11, kind: input, shape index: {}, may-alias: {3,5,9,11}]
  %s12 = inlined_call_operand.vmem [shape: bf16[16,222], index: 12, kind: output, shape index: {}]
  %s13 = sld [smem:[#allocation0]]
  $region58: #{encoder_forward.12} parent=0
    _
  %s15 = ssub.s32 1, %s13
  %s16 = scalar_select 0, %s15, %s13
  // Predicated region
  $region2: #{encoder_forward.12} parent=0 // pred_check
    _
  $region3: #{encoder_forward.12} parent=0 // pred_check_branch
    %18 = sbr.rel (0) target = $region5
  $region4: #{encoder_forward.12} parent=0 // pred_region
    _
  $region5: #{encoder_forward.12} parent=0 // pred_fallthru
    _
  // Predicated region
  $region6: #{encoder_forward.12} parent=0 // pred_check
    _
  $region7: #{encoder_forward.12} parent=0 // pred_check_branch
    %20 = sbr.rel (0) target = $region9
  $region8: #{encoder_forward.12} parent=0 // pred_region
    _
  $region9: #{encoder_forward.12} parent=0 // pred_fallthru
    _
  // Predicated region
  $region10: #{encoder_forward.12} parent=0 // pred_check
    _
  $region11: #{encoder_forward.12} parent=0 // pred_check_branch
    %22 = sbr.rel (0) target = $region13
  $region12: #{encoder_forward.12} parent=0 // pred_region
    _
  $region13: #{encoder_forward.12} parent=0 // pred_fallthru
    _
  // Predicated region
  $region14: #{encoder_forward.12} parent=0 // pred_check
    _
  $region15: #{encoder_forward.12} parent=0 // pred_check_branch
    %24 = sbr.rel (0) target = $region17
  $region16: #{encoder_forward.12} parent=0 // pred_region
    _
  $region17: #{encoder_forward.12} parent=0 // pred_fallthru
    _
  // Predicated region
  $region18: #{encoder_forward.12} parent=0 // pred_check
    _
  $region19: #{encoder_forward.12} parent=0 // pred_check_branch
    %26 = sbr.rel (0) target = $region21
  $region20: #{encoder_forward.12} parent=0 // pred_region
    _
  $region21: #{encoder_forward.12} parent=0 // pred_fallthru
    _
  // Predicated region
  $region22: #{encoder_forward.12} parent=0 // pred_check
    _
  $region23: #{encoder_forward.12} parent=0 // pred_check_branch
    %28 = sbr.rel (0) target = $region25
  $region24: #{encoder_forward.12} parent=0 // pred_region
    _
  $region25: #{encoder_forward.12} parent=0 // pred_fallthru
    _
  // Predicated region
  $region26: #{encoder_forward.12} parent=0 // pred_check
    _
  $region27: #{encoder_forward.12} parent=0 // pred_check_branch
    %30 = sbr.rel (0) target = $region29
  $region28: #{encoder_forward.12} parent=0 // pred_region
    _
  $region29: #{encoder_forward.12} parent=0 // pred_fallthru
    _
  // Predicated region
  $region30: #{encoder_forward.12} parent=0 // pred_check
    _
  $region31: #{encoder_forward.12} parent=0 // pred_check_branch
    %32 = sbr.rel (0) target = $region33
  $region32: #{encoder_forward.12} parent=0 // pred_region
    _
  $region33: #{encoder_forward.12} parent=0 // pred_fallthru
    _
  // Predicated region
  $region34: #{encoder_forward.12} parent=0 // pred_check
    _
  $region35: #{encoder_forward.12} parent=0 // pred_check_branch
    %34 = sbr.rel (0) target = $region37
  $region36: #{encoder_forward.12} parent=0 // pred_region
    _
  $region37: #{encoder_forward.12} parent=0 // pred_fallthru
    _
  // Predicated region
  $region38: #{encoder_forward.12} parent=0 // pred_check
    _
  $region39: #{encoder_forward.12} parent=0 // pred_check_branch
    %36 = sbr.rel (0) target = $region41
  $region40: #{encoder_forward.12} parent=0 // pred_region
    _
  $region41: #{encoder_forward.12} parent=0 // pred_fallthru
    _
  // Predicated region
  $region42: #{encoder_forward.12} parent=0 // pred_check
    _
  $region43: #{encoder_forward.12} parent=0 // pred_check_branch
    %38 = sbr.rel (0) target = $region45
  $region44: #{encoder_forward.12} parent=0 // pred_region
    _
  $region45: #{encoder_forward.12} parent=0 // pred_fallthru
    _
  // Predicated region
  $region46: #{encoder_forward.12} parent=0 // pred_check
    _
  $region47: #{encoder_forward.12} parent=0 // pred_check_branch
    %40 = sbr.rel (0) target = $region49
  $region48: #{encoder_forward.12} parent=0 // pred_region
    _
  $region49: #{encoder_forward.12} parent=0 // pred_fallthru
    _
  %v42 = vld [vmem:[%s1] sm:$0x3]
  %v43 = vld [vmem:[%s0] sm:$0xff]
  %v44 = vunpack.c.l.bf16 %v43
  %v45 = vunpack.c.h.bf16 %v43
  %v47 = vlaneseq
  %v48 = vshrl.u32 %v47, 7
  %v49 = vsub.s32 0, %v48
  %v50 = vrot.slane %v42, %v49
  %v51 = vlaneseq
  %v52 = vshrl.u32 %v51, 7
  %v53 = vsub.s32 1, %v52
  %v54 = vrot.slane %v42, %v53
  %v57 = vmul.f32 %v44, %v50
  %v58 = vmul.f32 %v45, %v54
  %vm59 = vcmask 769024
  %v60 = vsel %vm59, %v58, 0.0
  %v61 = vadd.f32 %v57, %v60
  %62 = vadd.xlane.f32.xlu0 %v61
  %v63 = vpop.xlane.xlu0 %62
  %v64 = vmul.f32 %v63, 0.0078125
  %v65 = vsub.f32 %v44, %v64
  %v66 = vsub.f32 %v45, %v64
  %v67 = vmul.f32 %v65, %v50
  %v68 = vmul.f32 %v66, %v54
  %v69 = vmul.f32 %v67, %v67
  %v70 = vmul.f32 %v68, %v68
  %v71 = vsel %vm59, %v70, 0.0
  %v72 = vadd.f32 %v69, %v71
  %73 = vadd.xlane.f32.xlu0 %v72
  %v74 = vpop.xlane.xlu0 %73
  %v75 = vmul.f32 %v74, 0.0078125
  %v76 = vadd.f32 %v75, 1e-05
  %v77 = vrsqrt.pop %v76
  %v78 = vmul.f32 %v65, %v77
  %v79 = vmul.f32 %v66, %v77
  %v80 = vld [vmem:[%s6] sm:$0xff]
  %82 = vset.pattern.permute.xlu0 0
  %83 = vperm.xlu0 %82, %v80
  %v84 = vpop.permute.xlu0 %83
  %v86 = vmul.f32 %v78, %v84
  %v87 = vmul.f32 %v79, %v84
  %v88 = vld [vmem:[%s7] sm:$0xff]
  %90 = vset.pattern.permute.xlu0 0
  %91 = vperm.xlu0 %90, %v88
  %v92 = vpop.permute.xlu0 %91
  %v94 = vadd.f32 %v86, %v92
  %v95 = vadd.f32 %v87, %v92
  %v96 = vmax.f32 %v94, 0.0
  %v97 = vmax.f32 %v95, 0.0
  %v98 = vmul.f32 %v96, %v50
  %v99 = vmul.f32 %v97, %v54
  %v100 = vpack.c.bf16 %v98, %v98
  %v101 = vpack.c.bf16 %v99, %v99
  %v104 = vunpack.c.l.b16 %v100
  %v105 = vunpack.c.l.b16 %v101
  %v106 = vpack.c.b16 %v105, %v104
  %vm108 = vcmask 1043456
  %vm109 = vcmask 769028
  %vm110 = vmor %vm109, %vm108
  %111 = vst.msk [vmem:[#allocation2] sm:$0xff] %vm110, %v106
  %v112 = vld [vmem:[%s2] sm:$0xf]
  %v113 = vld [vmem:[%s2 + $0x4] sm:$0xf]
  %v114 = vld [vmem:[#allocation2] sm:$0xff]
  %s115 = scalar_lea.vmem %s2, 8
  %v116 = vld [vmem:[%s115] sm:$0xf]
  %v117 = vld [vmem:[%s115 + $0x4] sm:$0xf]
  %v120 = vunpack.c.l.b16 %v116
  %v121 = vunpack.c.l.b16 %v117
  %v122 = vpack.c.b16 %v121, %v120
  %v124 = vunpack.c.l.b16 %v114
  %v125 = vunpack.c.h.b16 %v114
  %v126 = vpack.c.b16 %v124, %v124
  %v127 = vpack.c.b16 %v125, %v125
  %128 = vrot.lane.b32.xlu0 %v126, 127
  %v129 = vpop.permute.xlu0 %128
  %130 = vrot.lane.b32.xlu0 %v127, 127
  %v131 = vpop.permute.xlu0 %130
  %vm132 = vcmask 1039360
  %v133 = vsel %vm132, %v129, %v131
  %vm134 = vcmask 64512
  %v136 = vsel %vm134, %v122, 0
  %v139 = vsel %vm108, %v133, 0
  %v142 = vsel %vm108, %v131, 0
  %144 = vmatprep.subr.bf16.mxu0 %v142
  %145 = vmatpush1.bf16.msra.mxu0 %v139
  %146 = vmatprep.subr.bf16.mxu0 0
  %147 = vmatpush1.bf16.msra.mxu0 0
  %148 = vmatprep.subr.bf16.mxu0 0
  %149 = vmatpush1.bf16.msra.mxu0 0
  %150 = vmatprep.subr.bf16.mxu0 0
  %151 = vmatpush1.bf16.msra.mxu0 0
  %152 = vmatprep.subr.bf16.mxu0 0
  %153 = vmatpush1.bf16.msra.mxu0 0
  %154 = vmatprep.subr.bf16.mxu0 0
  %155 = vmatpush1.bf16.msra.mxu0 0
  %156 = vmatprep.subr.bf16.mxu0 0
  %157 = vmatpush1.bf16.msra.mxu0 0
  %158 = vmatprep.subr.bf16.mxu0 0
  %159 = vmatpush1.bf16.msra.mxu0 0
  %160 = vmatprep.subr.bf16.mxu0 0
  %161 = vmatpush1.bf16.msra.mxu0 0
  %162 = vmatprep.subr.bf16.mxu0 0
  %163 = vmatpush1.bf16.msra.mxu0 0
  %164 = vmatprep.subr.bf16.mxu0 0
  %165 = vmatpush1.bf16.msra.mxu0 0
  %166 = vmatprep.subr.bf16.mxu0 0
  %167 = vmatpush1.bf16.msra.mxu0 0
  %168 = vmatprep.subr.bf16.mxu0 0
  %169 = vmatpush1.bf16.msra.mxu0 0
  %170 = vmatprep.subr.bf16.mxu0 0
  %171 = vmatpush1.bf16.msra.mxu0 0
  %172 = vmatprep.subr.bf16.mxu0 0
  %173 = vmatpush1.bf16.msra.mxu0 0
  %174 = vmatprep.subr.bf16.mxu0 0
  %175 = vmatpush1.bf16.msra.mxu0 0
  %176 = vmatprep.mubr.bf16.mxu0 0
  %177 = vmatmul.mubr.bf16.gmra.mrb[0].mxu0 %v136
  %v178 = vpop.f32.mrb[0].mxu0
  %v179 = vadd.f32 0.0, %v178
  %v180 = vpop.f32.mrb[0].mxu0
  %v181 = vadd.f32 0.0, %v180
  %v182 = vpop.f32.mrb[0].mxu0
  %v183 = vadd.f32 0.0, %v182
  %v184 = vpop.f32.mrb[0].mxu0
  %v185 = vadd.f32 0.0, %v184
  %186 = vdwg.mxu0
  %v189 = vunpack.c.l.b16 %v112
  %v190 = vunpack.c.l.b16 %v113
  %v191 = vpack.c.b16 %v190, %v189
  %v193 = vsel %vm134, %v191, 0
  %v196 = vsel %vm108, %v126, 0
  %v199 = vsel %vm108, %v127, 0
  %201 = vmatprep.subr.bf16.mxu0 %v199
  %202 = vmatpush1.bf16.msra.mxu0 %v196
  %203 = vmatprep.subr.bf16.mxu0 0
  %204 = vmatpush1.bf16.msra.mxu0 0
  %205 = vmatprep.subr.bf16.mxu0 0
  %206 = vmatpush1.bf16.msra.mxu0 0
  %207 = vmatprep.subr.bf16.mxu0 0
  %208 = vmatpush1.bf16.msra.mxu0 0
  %209 = vmatprep.subr.bf16.mxu0 0
  %210 = vmatpush1.bf16.msra.mxu0 0
  %211 = vmatprep.subr.bf16.mxu0 0
  %212 = vmatpush1.bf16.msra.mxu0 0
  %213 = vmatprep.subr.bf16.mxu0 0
  %214 = vmatpush1.bf16.msra.mxu0 0
  %215 = vmatprep.subr.bf16.mxu0 0
  %216 = vmatpush1.bf16.msra.mxu0 0
  %217 = vmatprep.subr.bf16.mxu0 0
  %218 = vmatpush1.bf16.msra.mxu0 0
  %219 = vmatprep.subr.bf16.mxu0 0
  %220 = vmatpush1.bf16.msra.mxu0 0
  %221 = vmatprep.subr.bf16.mxu0 0
  %222 = vmatpush1.bf16.msra.mxu0 0
  %223 = vmatprep.subr.bf16.mxu0 0
  %224 = vmatpush1.bf16.msra.mxu0 0
  %225 = vmatprep.subr.bf16.mxu0 0
  %226 = vmatpush1.bf16.msra.mxu0 0
  %227 = vmatprep.subr.bf16.mxu0 0
  %228 = vmatpush1.bf16.msra.mxu0 0
  %229 = vmatprep.subr.bf16.mxu0 0
  %230 = vmatpush1.bf16.msra.mxu0 0
  %231 = vmatprep.subr.bf16.mxu0 0
  %232 = vmatpush1.bf16.msra.mxu0 0
  %233 = vmatprep.mubr.bf16.mxu0 0
  %234 = vmatmul.mubr.bf16.gmra.mrb[0].mxu0 %v193
  %v235 = vpop.f32.mrb[0].mxu0
  %v236 = vadd.f32 %v179, %v235
  %v237 = vpop.f32.mrb[0].mxu0
  %v238 = vadd.f32 %v181, %v237
  %v239 = vpop.f32.mrb[0].mxu0
  %v240 = vadd.f32 %v183, %v239
  %v241 = vpop.f32.mrb[0].mxu0
  %v242 = vadd.f32 %v185, %v241
  %243 = vdwg.mxu0
  %s244 = scalar_lea.vmem %s2, 16
  %v245 = vld [vmem:[%s244] sm:$0xf]
  %v246 = vld [vmem:[%s244 + $0x4] sm:$0xf]
  %v249 = vunpack.c.l.b16 %v245
  %v250 = vunpack.c.l.b16 %v246
  %v251 = vpack.c.b16 %v250, %v249
  %252 = vrot.lane.b32.xlu0 %v126, 126
  %v253 = vpop.permute.xlu0 %252
  %254 = vrot.lane.b32.xlu0 %v127, 126
  %v255 = vpop.permute.xlu0 %254
  %vm256 = vcmask 1031168
  %v257 = vsel %vm256, %v253, %v255
  %v259 = vsel %vm134, %v251, 0
  %v262 = vsel %vm108, %v257, 0
  %v265 = vsel %vm108, %v255, 0
  %267 = vmatprep.subr.bf16.mxu0 %v265
  %268 = vmatpush1.bf16.msra.mxu0 %v262
  %269 = vmatprep.subr.bf16.mxu0 0
  %270 = vmatpush1.bf16.msra.mxu0 0
  %271 = vmatprep.subr.bf16.mxu0 0
  %272 = vmatpush1.bf16.msra.mxu0 0
  %273 = vmatprep.subr.bf16.mxu0 0
  %274 = vmatpush1.bf16.msra.mxu0 0
  %275 = vmatprep.subr.bf16.mxu0 0
  %276 = vmatpush1.bf16.msra.mxu0 0
  %277 = vmatprep.subr.bf16.mxu0 0
  %278 = vmatpush1.bf16.msra.mxu0 0
  %279 = vmatprep.subr.bf16.mxu0 0
  %280 = vmatpush1.bf16.msra.mxu0 0
  %281 = vmatprep.subr.bf16.mxu0 0
  %282 = vmatpush1.bf16.msra.mxu0 0
  %283 = vmatprep.subr.bf16.mxu0 0
  %284 = vmatpush1.bf16.msra.mxu0 0
  %285 = vmatprep.subr.bf16.mxu0 0
  %286 = vmatpush1.bf16.msra.mxu0 0
  %287 = vmatprep.subr.bf16.mxu0 0
  %288 = vmatpush1.bf16.msra.mxu0 0
  %289 = vmatprep.subr.bf16.mxu0 0
  %290 = vmatpush1.bf16.msra.mxu0 0
  %291 = vmatprep.subr.bf16.mxu0 0
  %292 = vmatpush1.bf16.msra.mxu0 0
  %293 = vmatprep.subr.bf16.mxu0 0
  %294 = vmatpush1.bf16.msra.mxu0 0
  %295 = vmatprep.subr.bf16.mxu0 0
  %296 = vmatpush1.bf16.msra.mxu0 0
  %297 = vmatprep.subr.bf16.mxu0 0
  %298 = vmatpush1.bf16.msra.mxu0 0
  %299 = vmatprep.mubr.bf16.mxu0 0
  %300 = vmatmul.mubr.bf16.gmra.mrb[0].mxu0 %v259
  %v301 = vpop.f32.mrb[0].mxu0
  %v302 = vadd.f32 0.0, %v301
  %v303 = vpop.f32.mrb[0].mxu0
  %v304 = vadd.f32 0.0, %v303
  %v305 = vpop.f32.mrb[0].mxu0
  %v306 = vadd.f32 0.0, %v305
  %v307 = vpop.f32.mrb[0].mxu0
  %v308 = vadd.f32 0.0, %v307
  %309 = vdwg.mxu0
  %v310 = vadd.f32 %v236, %v302
  %v311 = vadd.f32 %v238, %v304
  %v312 = vadd.f32 %v240, %v306
  %v313 = vadd.f32 %v242, %v308
  %s314 = scalar_lea.vmem %s2, 24
  %v315 = vld [vmem:[%s314] sm:$0xf]
  %v316 = vld [vmem:[%s314 + $0x4] sm:$0xf]
  %v319 = vunpack.c.l.b16 %v315
  %v320 = vunpack.c.l.b16 %v316
  %v321 = vpack.c.b16 %v320, %v319
  %322 = vrot.lane.b32.xlu0 %v126, 118
  %v323 = vpop.permute.xlu0 %322
  %324 = vrot.lane.b32.xlu0 %v127, 118
  %v325 = vpop.permute.xlu0 %324
  %vm326 = vcmask 965632
  %v327 = vsel %vm326, %v323, %v325
  %v329 = vsel %vm134, %v321, 0
  %v332 = vsel %vm108, %v327, 0
  %v335 = vsel %vm108, %v325, 0
  %337 = vmatprep.subr.bf16.mxu0 %v335
  %338 = vmatpush1.bf16.msra.mxu0 %v332
  %339 = vmatprep.subr.bf16.mxu0 0
  %340 = vmatpush1.bf16.msra.mxu0 0
  %341 = vmatprep.subr.bf16.mxu0 0
  %342 = vmatpush1.bf16.msra.mxu0 0
  %343 = vmatprep.subr.bf16.mxu0 0
  %344 = vmatpush1.bf16.msra.mxu0 0
  %345 = vmatprep.subr.bf16.mxu0 0
  %346 = vmatpush1.bf16.msra.mxu0 0
  %347 = vmatprep.subr.bf16.mxu0 0
  %348 = vmatpush1.bf16.msra.mxu0 0
  %349 = vmatprep.subr.bf16.mxu0 0
  %350 = vmatpush1.bf16.msra.mxu0 0
  %351 = vmatprep.subr.bf16.mxu0 0
  %352 = vmatpush1.bf16.msra.mxu0 0
  %353 = vmatprep.subr.bf16.mxu0 0
  %354 = vmatpush1.bf16.msra.mxu0 0
  %355 = vmatprep.subr.bf16.mxu0 0
  %356 = vmatpush1.bf16.msra.mxu0 0
  %357 = vmatprep.subr.bf16.mxu0 0
  %358 = vmatpush1.bf16.msra.mxu0 0
  %359 = vmatprep.subr.bf16.mxu0 0
  %360 = vmatpush1.bf16.msra.mxu0 0
  %361 = vmatprep.subr.bf16.mxu0 0
  %362 = vmatpush1.bf16.msra.mxu0 0
  %363 = vmatprep.subr.bf16.mxu0 0
  %364 = vmatpush1.bf16.msra.mxu0 0
  %365 = vmatprep.subr.bf16.mxu0 0
  %366 = vmatpush1.bf16.msra.mxu0 0
  %367 = vmatprep.subr.bf16.mxu0 0
  %368 = vmatpush1.bf16.msra.mxu0 0
  %369 = vmatprep.mubr.bf16.mxu0 0
  %370 = vmatmul.mubr.bf16.gmra.mrb[0].mxu0 %v329
  %v371 = vpop.f32.mrb[0].mxu0
  %v372 = vadd.f32 0.0, %v371
  %v373 = vpop.f32.mrb[0].mxu0
  %v374 = vadd.f32 0.0, %v373
  %v375 = vpop.f32.mrb[0].mxu0
  %v376 = vadd.f32 0.0, %v375
  %v377 = vpop.f32.mrb[0].mxu0
  %v378 = vadd.f32 0.0, %v377
  %379 = vdwg.mxu0
  %v380 = vadd.f32 %v310, %v372
  %v381 = vadd.f32 %v311, %v374
  %v382 = vadd.f32 %v312, %v376
  %v383 = vadd.f32 %v313, %v378
  %s384 = scalar_lea.vmem %s2, 32
  %v385 = vld [vmem:[%s384] sm:$0xf]
  %v386 = vld [vmem:[%s384 + $0x4] sm:$0xf]
  %v389 = vunpack.c.l.b16 %v385
  %v390 = vunpack.c.l.b16 %v386
  %v391 = vpack.c.b16 %v390, %v389
  %392 = vrot.lane.b32.xlu0 %v126, 117
  %v393 = vpop.permute.xlu0 %392
  %394 = vrot.lane.b32.xlu0 %v127, 117
  %v395 = vpop.permute.xlu0 %394
  %vm396 = vcmask 957440
  %v397 = vsel %vm396, %v393, %v395
  %v399 = vsel %vm134, %v391, 0
  %v402 = vsel %vm108, %v397, 0
  %v405 = vsel %vm108, %v395, 0
  %407 = vmatprep.subr.bf16.mxu0 %v405
  %408 = vmatpush1.bf16.msra.mxu0 %v402
  %409 = vmatprep.subr.bf16.mxu0 0
  %410 = vmatpush1.bf16.msra.mxu0 0
  %411 = vmatprep.subr.bf16.mxu0 0
  %412 = vmatpush1.bf16.msra.mxu0 0
  %413 = vmatprep.subr.bf16.mxu0 0
  %414 = vmatpush1.bf16.msra.mxu0 0
  %415 = vmatprep.subr.bf16.mxu0 0
  %416 = vmatpush1.bf16.msra.mxu0 0
  %417 = vmatprep.subr.bf16.mxu0 0
  %418 = vmatpush1.bf16.msra.mxu0 0
  %419 = vmatprep.subr.bf16.mxu0 0
  %420 = vmatpush1.bf16.msra.mxu0 0
  %421 = vmatprep.subr.bf16.mxu0 0
  %422 = vmatpush1.bf16.msra.mxu0 0
  %423 = vmatprep.subr.bf16.mxu0 0
  %424 = vmatpush1.bf16.msra.mxu0 0
  %425 = vmatprep.subr.bf16.mxu0 0
  %426 = vmatpush1.bf16.msra.mxu0 0
  %427 = vmatprep.subr.bf16.mxu0 0
  %428 = vmatpush1.bf16.msra.mxu0 0
  %429 = vmatprep.subr.bf16.mxu0 0
  %430 = vmatpush1.bf16.msra.mxu0 0
  %431 = vmatprep.subr.bf16.mxu0 0
  %432 = vmatpush1.bf16.msra.mxu0 0
  %433 = vmatprep.subr.bf16.mxu0 0
  %434 = vmatpush1.bf16.msra.mxu0 0
  %435 = vmatprep.subr.bf16.mxu0 0
  %436 = vmatpush1.bf16.msra.mxu0 0
  %437 = vmatprep.subr.bf16.mxu0 0
  %438 = vmatpush1.bf16.msra.mxu0 0
  %439 = vmatprep.mubr.bf16.mxu0 0
  %440 = vmatmul.mubr.bf16.gmra.mrb[0].mxu0 %v399
  %v441 = vpop.f32.mrb[0].mxu0
  %v442 = vadd.f32 0.0, %v441
  %v443 = vpop.f32.mrb[0].mxu0
  %v444 = vadd.f32 0.0, %v443
  %v445 = vpop.f32.mrb[0].mxu0
  %v446 = vadd.f32 0.0, %v445
  %v447 = vpop.f32.mrb[0].mxu0
  %v448 = vadd.f32 0.0, %v447
  %449 = vdwg.mxu0
  %v450 = vadd.f32 %v380, %v442
  %v451 = vadd.f32 %v381, %v444
  %v452 = vadd.f32 %v382, %v446
  %v453 = vadd.f32 %v383, %v448
  %s454 = scalar_lea.vmem %s2, 40
  %v455 = vld [vmem:[%s454] sm:$0xf]
  %v456 = vld [vmem:[%s454 + $0x4] sm:$0xf]
  %v459 = vunpack.c.l.b16 %v455
  %v460 = vunpack.c.l.b16 %v456
  %v461 = vpack.c.b16 %v460, %v459
  %462 = vrot.lane.b32.xlu0 %v126, 116
  %v463 = vpop.permute.xlu0 %462
  %464 = vrot.lane.b32.xlu0 %v127, 116
  %v465 = vpop.permute.xlu0 %464
  %vm466 = vcmask 949248
  %v467 = vsel %vm466, %v463, %v465
  %v469 = vsel %vm134, %v461, 0
  %v472 = vsel %vm108, %v467, 0
  %v475 = vsel %vm108, %v465, 0
  %477 = vmatprep.subr.bf16.mxu0 %v475
  %478 = vmatpush1.bf16.msra.mxu0 %v472
  %479 = vmatprep.subr.bf16.mxu0 0
  %480 = vmatpush1.bf16.msra.mxu0 0
  %481 = vmatprep.subr.bf16.mxu0 0
  %482 = vmatpush1.bf16.msra.mxu0 0
  %483 = vmatprep.subr.bf16.mxu0 0
  %484 = vmatpush1.bf16.msra.mxu0 0
  %485 = vmatprep.subr.bf16.mxu0 0
  %486 = vmatpush1.bf16.msra.mxu0 0
  %487 = vmatprep.subr.bf16.mxu0 0
  %488 = vmatpush1.bf16.msra.mxu0 0
  %489 = vmatprep.subr.bf16.mxu0 0
  %490 = vmatpush1.bf16.msra.mxu0 0
  %491 = vmatprep.subr.bf16.mxu0 0
  %492 = vmatpush1.bf16.msra.mxu0 0
  %493 = vmatprep.subr.bf16.mxu0 0
  %494 = vmatpush1.bf16.msra.mxu0 0
  %495 = vmatprep.subr.bf16.mxu0 0
  %496 = vmatpush1.bf16.msra.mxu0 0
  %497 = vmatprep.subr.bf16.mxu0 0
  %498 = vmatpush1.bf16.msra.mxu0 0
  %499 = vmatprep.subr.bf16.mxu0 0
  %500 = vmatpush1.bf16.msra.mxu0 0
  %501 = vmatprep.subr.bf16.mxu0 0
  %502 = vmatpush1.bf16.msra.mxu0 0
  %503 = vmatprep.subr.bf16.mxu0 0
  %504 = vmatpush1.bf16.msra.mxu0 0
  %505 = vmatprep.subr.bf16.mxu0 0
  %506 = vmatpush1.bf16.msra.mxu0 0
  %507 = vmatprep.subr.bf16.mxu0 0
  %508 = vmatpush1.bf16.msra.mxu0 0
  %509 = vmatprep.mubr.bf16.mxu0 0
  %510 = vmatmul.mubr.bf16.gmra.mrb[0].mxu0 %v469
  %v511 = vpop.f32.mrb[0].mxu0
  %v512 = vadd.f32 0.0, %v511
  %v513 = vpop.f32.mrb[0].mxu0
  %v514 = vadd.f32 0.0, %v513
  %v515 = vpop.f32.mrb[0].mxu0
  %v516 = vadd.f32 0.0, %v515
  %v517 = vpop.f32.mrb[0].mxu0
  %v518 = vadd.f32 0.0, %v517
  %519 = vdwg.mxu0
  %v520 = vadd.f32 %v450, %v512
  %v521 = vadd.f32 %v451, %v514
  %v522 = vadd.f32 %v452, %v516
  %v523 = vadd.f32 %v453, %v518
  %s524 = scalar_lea.vmem %s2, 48
  %v525 = vld [vmem:[%s524] sm:$0xf]
  %v526 = vld [vmem:[%s524 + $0x4] sm:$0xf]
  %v529 = vunpack.c.l.b16 %v525
  %v530 = vunpack.c.l.b16 %v526
  %v531 = vpack.c.b16 %v530, %v529
  %532 = vrot.lane.b32.xlu0 %v126, 108
  %v533 = vpop.permute.xlu0 %532
  %534 = vrot.lane.b32.xlu0 %v127, 108
  %v535 = vpop.permute.xlu0 %534
  %vm536 = vcmask 883712
  %v537 = vsel %vm536, %v533, %v535
  %v539 = vsel %vm134, %v531, 0
  %v542 = vsel %vm108, %v537, 0
  %v545 = vsel %vm108, %v535, 0
  %547 = vmatprep.subr.bf16.mxu0 %v545
  %548 = vmatpush1.bf16.msra.mxu0 %v542
  %549 = vmatprep.subr.bf16.mxu0 0
  %550 = vmatpush1.bf16.msra.mxu0 0
  %551 = vmatprep.subr.bf16.mxu0 0
  %552 = vmatpush1.bf16.msra.mxu0 0
  %553 = vmatprep.subr.bf16.mxu0 0
  %554 = vmatpush1.bf16.msra.mxu0 0
  %555 = vmatprep.subr.bf16.mxu0 0
  %556 = vmatpush1.bf16.msra.mxu0 0
  %557 = vmatprep.subr.bf16.mxu0 0
  %558 = vmatpush1.bf16.msra.mxu0 0
  %559 = vmatprep.subr.bf16.mxu0 0
  %560 = vmatpush1.bf16.msra.mxu0 0
  %561 = vmatprep.subr.bf16.mxu0 0
  %562 = vmatpush1.bf16.msra.mxu0 0
  %563 = vmatprep.subr.bf16.mxu0 0
  %564 = vmatpush1.bf16.msra.mxu0 0
  %565 = vmatprep.subr.bf16.mxu0 0
  %566 = vmatpush1.bf16.msra.mxu0 0
  %567 = vmatprep.subr.bf16.mxu0 0
  %568 = vmatpush1.bf16.msra.mxu0 0
  %569 = vmatprep.subr.bf16.mxu0 0
  %570 = vmatpush1.bf16.msra.mxu0 0
  %571 = vmatprep.subr.bf16.mxu0 0
  %572 = vmatpush1.bf16.msra.mxu0 0
  %573 = vmatprep.subr.bf16.mxu0 0
  %574 = vmatpush1.bf16.msra.mxu0 0
  %575 = vmatprep.subr.bf16.mxu0 0
  %576 = vmatpush1.bf16.msra.mxu0 0
  %577 = vmatprep.subr.bf16.mxu0 0
  %578 = vmatpush1.bf16.msra.mxu0 0
  %579 = vmatprep.mubr.bf16.mxu0 0
  %580 = vmatmul.mubr.bf16.gmra.mrb[0].mxu0 %v539
  %v581 = vpop.f32.mrb[0].mxu0
  %v582 = vadd.f32 0.0, %v581
  %v583 = vpop.f32.mrb[0].mxu0
  %v584 = vadd.f32 0.0, %v583
  %v585 = vpop.f32.mrb[0].mxu0
  %v586 = vadd.f32 0.0, %v585
  %v587 = vpop.f32.mrb[0].mxu0
  %v588 = vadd.f32 0.0, %v587
  %589 = vdwg.mxu0
  %v590 = vadd.f32 %v520, %v582
  %v591 = vadd.f32 %v521, %v584
  %v592 = vadd.f32 %v522, %v586
  %v593 = vadd.f32 %v523, %v588
  %s594 = scalar_lea.vmem %s2, 56
  %v595 = vld [vmem:[%s594] sm:$0xf]
  %v596 = vld [vmem:[%s594 + $0x4] sm:$0xf]
  %v599 = vunpack.c.l.b16 %v595
  %v600 = vunpack.c.l.b16 %v596
  %v601 = vpack.c.b16 %v600, %v599
  %602 = vrot.lane.b32.xlu0 %v126, 107
  %v603 = vpop.permute.xlu0 %602
  %604 = vrot.lane.b32.xlu0 %v127, 107
  %v605 = vpop.permute.xlu0 %604
  %vm606 = vcmask 875520
  %v607 = vsel %vm606, %v603, %v605
  %v609 = vsel %vm134, %v601, 0
  %v612 = vsel %vm108, %v607, 0
  %v615 = vsel %vm108, %v605, 0
  %617 = vmatprep.subr.bf16.mxu0 %v615
  %618 = vmatpush1.bf16.msra.mxu0 %v612
  %619 = vmatprep.subr.bf16.mxu0 0
  %620 = vmatpush1.bf16.msra.mxu0 0
  %621 = vmatprep.subr.bf16.mxu0 0
  %622 = vmatpush1.bf16.msra.mxu0 0
  %623 = vmatprep.subr.bf16.mxu0 0
  %624 = vmatpush1.bf16.msra.mxu0 0
  %625 = vmatprep.subr.bf16.mxu0 0
  %626 = vmatpush1.bf16.msra.mxu0 0
  %627 = vmatprep.subr.bf16.mxu0 0
  %628 = vmatpush1.bf16.msra.mxu0 0
  %629 = vmatprep.subr.bf16.mxu0 0
  %630 = vmatpush1.bf16.msra.mxu0 0
  %631 = vmatprep.subr.bf16.mxu0 0
  %632 = vmatpush1.bf16.msra.mxu0 0
  %633 = vmatprep.subr.bf16.mxu0 0
  %634 = vmatpush1.bf16.msra.mxu0 0
  %635 = vmatprep.subr.bf16.mxu0 0
  %636 = vmatpush1.bf16.msra.mxu0 0
  %637 = vmatprep.subr.bf16.mxu0 0
  %638 = vmatpush1.bf16.msra.mxu0 0
  %639 = vmatprep.subr.bf16.mxu0 0
  %640 = vmatpush1.bf16.msra.mxu0 0
  %641 = vmatprep.subr.bf16.mxu0 0
  %642 = vmatpush1.bf16.msra.mxu0 0
  %643 = vmatprep.subr.bf16.mxu0 0
  %644 = vmatpush1.bf16.msra.mxu0 0
  %645 = vmatprep.subr.bf16.mxu0 0
  %646 = vmatpush1.bf16.msra.mxu0 0
  %647 = vmatprep.subr.bf16.mxu0 0
  %648 = vmatpush1.bf16.msra.mxu0 0
  %649 = vmatprep.mubr.bf16.mxu0 0
  %650 = vmatmul.mubr.bf16.gmra.mrb[0].mxu0 %v609
  %v651 = vpop.f32.mrb[0].mxu0
  %v652 = vadd.f32 0.0, %v651
  %v653 = vpop.f32.mrb[0].mxu0
  %v654 = vadd.f32 0.0, %v653
  %v655 = vpop.f32.mrb[0].mxu0
  %v656 = vadd.f32 0.0, %v655
  %v657 = vpop.f32.mrb[0].mxu0
  %v658 = vadd.f32 0.0, %v657
  %659 = vdwg.mxu0
  %v660 = vadd.f32 %v590, %v652
  %v661 = vadd.f32 %v591, %v654
  %v662 = vadd.f32 %v592, %v656
  %v663 = vadd.f32 %v593, %v658
  %s664 = scalar_lea.vmem %s2, 64
  %v665 = vld [vmem:[%s664] sm:$0xf]
  %v666 = vld [vmem:[%s664 + $0x4] sm:$0xf]
  %v669 = vunpack.c.l.b16 %v665
  %v670 = vunpack.c.l.b16 %v666
  %v671 = vpack.c.b16 %v670, %v669
  %672 = vrot.lane.b32.xlu0 %v126, 106
  %v673 = vpop.permute.xlu0 %672
  %674 = vrot.lane.b32.xlu0 %v127, 106
  %v675 = vpop.permute.xlu0 %674
  %vm676 = vcmask 867328
  %v677 = vsel %vm676, %v673, %v675
  %v679 = vsel %vm134, %v671, 0
  %v682 = vsel %vm108, %v677, 0
  %v685 = vsel %vm108, %v675, 0
  %687 = vmatprep.subr.bf16.mxu0 %v685
  %688 = vmatpush1.bf16.msra.mxu0 %v682
  %689 = vmatprep.subr.bf16.mxu0 0
  %690 = vmatpush1.bf16.msra.mxu0 0
  %691 = vmatprep.subr.bf16.mxu0 0
  %692 = vmatpush1.bf16.msra.mxu0 0
  %693 = vmatprep.subr.bf16.mxu0 0
  %694 = vmatpush1.bf16.msra.mxu0 0
  %695 = vmatprep.subr.bf16.mxu0 0
  %696 = vmatpush1.bf16.msra.mxu0 0
  %697 = vmatprep.subr.bf16.mxu0 0
  %698 = vmatpush1.bf16.msra.mxu0 0
  %699 = vmatprep.subr.bf16.mxu0 0
  %700 = vmatpush1.bf16.msra.mxu0 0
  %701 = vmatprep.subr.bf16.mxu0 0
  %702 = vmatpush1.bf16.msra.mxu0 0
  %703 = vmatprep.subr.bf16.mxu0 0
  %704 = vmatpush1.bf16.msra.mxu0 0
  %705 = vmatprep.subr.bf16.mxu0 0
  %706 = vmatpush1.bf16.msra.mxu0 0
  %707 = vmatprep.subr.bf16.mxu0 0
  %708 = vmatpush1.bf16.msra.mxu0 0
  %709 = vmatprep.subr.bf16.mxu0 0
  %710 = vmatpush1.bf16.msra.mxu0 0
  %711 = vmatprep.subr.bf16.mxu0 0
  %712 = vmatpush1.bf16.msra.mxu0 0
  %713 = vmatprep.subr.bf16.mxu0 0
  %714 = vmatpush1.bf16.msra.mxu0 0
  %715 = vmatprep.subr.bf16.mxu0 0
  %716 = vmatpush1.bf16.msra.mxu0 0
  %717 = vmatprep.subr.bf16.mxu0 0
  %718 = vmatpush1.bf16.msra.mxu0 0
  %719 = vmatprep.mubr.bf16.mxu0 0
  %720 = vmatmul.mubr.bf16.gmra.mrb[0].mxu0 %v679
  %v721 = vpop.f32.mrb[0].mxu0
  %v722 = vadd.f32 0.0, %v721
  %v723 = vpop.f32.mrb[0].mxu0
  %v724 = vadd.f32 0.0, %v723
  %v725 = vpop.f32.mrb[0].mxu0
  %v726 = vadd.f32 0.0, %v725
  %v727 = vpop.f32.mrb[0].mxu0
  %v728 = vadd.f32 0.0, %v727
  %729 = vdwg.mxu0
  %v730 = vadd.f32 %v660, %v722
  %v731 = vadd.f32 %v661, %v724
  %v732 = vadd.f32 %v662, %v726
  %v733 = vadd.f32 %v663, %v728
  %v734 = vld [vmem:[%s3] sm:$0xff]
  %v735 = vld [vmem:[%s3 + $0x8] sm:$0xff]
  %737 = vset.pattern.permute.xlu0 0
  %738 = vperm.xlu0 %737, %v734
  %v739 = vpop.permute.xlu0 %738
  %742 = vset.pattern.permute.xlu0 0
  %743 = vperm.xlu0 %742, %v735
  %v744 = vpop.permute.xlu0 %743
  %v746 = vadd.f32 %v730, %v739
  %v747 = vadd.f32 %v731, %v739
  %v748 = vadd.f32 %v732, %v744
  %v749 = vadd.f32 %v733, %v744
  %750 = vrot.lane.b32.xlu0 %v50, 117
  %v751 = vpop.permute.xlu0 %750
  %752 = vrot.lane.b32.xlu0 %v54, 117
  %v753 = vpop.permute.xlu0 %752
  %vm754 = vcmask 957440
  %v755 = vsel %vm754, %v751, %v753
  %v758 = vmul.f32 %v746, %v755
  %v759 = vmul.f32 %v747, %v753
  %v760 = vmul.f32 %v748, %v755
  %v761 = vmul.f32 %v749, %v753
  %vm762 = vcmask 588800
  %v763 = vsel %vm762, %v759, 0.0
  %v764 = vadd.f32 %v758, %v763
  %765 = vadd.xlane.f32.xlu0 %v764
  %v766 = vpop.xlane.xlu0 %765
  %v767 = vsel %vm762, %v761, 0.0
  %v768 = vadd.f32 %v760, %v767
  %769 = vadd.xlane.f32.xlu0 %v768
  %v770 = vpop.xlane.xlu0 %769
  %v771 = vmul.f32 %v766, 0.0078125
  %v772 = vmul.f32 %v770, 0.0078125
  %v773 = vsub.f32 %v746, %v771
  %v774 = vsub.f32 %v747, %v771
  %v775 = vsub.f32 %v748, %v772
  %v776 = vsub.f32 %v749, %v772
  %v777 = vmul.f32 %v773, %v755
  %v778 = vmul.f32 %v774, %v753
  %v779 = vmul.f32 %v775, %v755
  %v780 = vmul.f32 %v776, %v753
  %v781 = vmul.f32 %v777, %v777
  %v782 = vmul.f32 %v778, %v778
  %v783 = vmul.f32 %v779, %v779
  %v784 = vmul.f32 %v780, %v780
  %v785 = vsel %vm762, %v782, 0.0
  %v786 = vadd.f32 %v781, %v785
  %787 = vadd.xlane.f32.xlu0 %v786
  %v788 = vpop.xlane.xlu0 %787
  %v789 = vsel %vm762, %v784, 0.0
  %v790 = vadd.f32 %v783, %v789
  %791 = vadd.xlane.f32.xlu0 %v790
  %v792 = vpop.xlane.xlu0 %791
  %v793 = vmul.f32 %v788, 0.0078125
  %v794 = vmul.f32 %v792, 0.0078125
  %v795 = vadd.f32 %v793, 1e-05
  %v796 = vadd.f32 %v794, 1e-05
  %v797 = vrsqrt.pop %v795
  %v798 = vrsqrt.pop %v796
  %v799 = vmul.f32 %v773, %v797
  %v800 = vmul.f32 %v774, %v797
  %v801 = vmul.f32 %v775, %v798
  %v802 = vmul.f32 %v776, %v798
  %v803 = vld [vmem:[%s8] sm:$0xff]
  %v804 = vld [vmem:[%s8 + $0x8] sm:$0xff]
  %806 = vset.pattern.permute.xlu0 0
  %807 = vperm.xlu0 %806, %v803
  %v808 = vpop.permute.xlu0 %807
  %811 = vset.pattern.permute.xlu0 0
  %812 = vperm.xlu0 %811, %v804
  %v813 = vpop.permute.xlu0 %812
  %v815 = vmul.f32 %v799, %v808
  %v816 = vmul.f32 %v800, %v808
  %v817 = vmul.f32 %v801, %v813
  %v818 = vmul.f32 %v802, %v813
  %v819 = vld [vmem:[%s9] sm:$0xff]
  %v820 = vld [vmem:[%s9 + $0x8] sm:$0xff]
  %822 = vset.pattern.permute.xlu0 0
  %823 = vperm.xlu0 %822, %v819
  %v824 = vpop.permute.xlu0 %823
  %827 = vset.pattern.permute.xlu0 0
  %828 = vperm.xlu0 %827, %v820
  %v829 = vpop.permute.xlu0 %828
  %v831 = vadd.f32 %v815, %v824
  %v832 = vadd.f32 %v816, %v824
  %v833 = vadd.f32 %v817, %v829
  %v834 = vadd.f32 %v818, %v829
  %v835 = vmax.f32 %v831, 0.0
  %v836 = vmax.f32 %v832, 0.0
  %v837 = vmax.f32 %v833, 0.0
  %v838 = vmax.f32 %v834, 0.0
  %v839 = vmul.f32 %v835, %v755
  %v840 = vmul.f32 %v836, %v753
  %v841 = vmul.f32 %v837, %v755
  %v842 = vmul.f32 %v838, %v753
  %843 = vst [vmem:[#allocation3] sm:$0xff] 0
  %844 = vst.msk [vmem:[#allocation3 + $0x8] sm:$0xff] %vm59, 0
  %v845 = vpack.c.bf16 %v841, %v839
  %v846 = vpack.c.bf16 %v842, %v840
  %849 = vrot.lane.b32.xlu0 %v845, 11
  %v850 = vpop.permute.xlu0 %849
  %851 = vrot.lane.b32.xlu0 %v846, 11
  %v852 = vpop.permute.xlu0 %851
  %vm853 = vcmask 89088
  %v854 = vsel %vm853, %v850, %v852
  %vm857 = vcmask 1047640
  %858 = vst.msk [vmem:[#allocation3] sm:$0xff] %vm857, %v850
  %vm859 = vcmask 678912
  %860 = vst.msk [vmem:[#allocation3 + $0x8] sm:$0xff] %vm859, %v854
  %v861 = vld [vmem:[%s4] sm:$0xf]
  %v862 = vld [vmem:[%s4 + $0x4] sm:$0xf]
  %v863 = vld [vmem:[#allocation3] sm:$0xff]
  %v864 = vld [vmem:[#allocation3 + $0x8] sm:$0xff]
  %s865 = scalar_lea.vmem %s4, 8
  %v866 = vld [vmem:[%s865] sm:$0xf]
  %v867 = vld [vmem:[%s865 + $0x4] sm:$0xf]
  %v870 = vunpack.c.l.b16 %v866
  %v871 = vunpack.c.l.b16 %v867
  %v872 = vpack.c.b16 %v871, %v870
  %875 = vrot.lane.b32.xlu0 %v863, 127
  %v876 = vpop.permute.xlu0 %875
  %877 = vrot.lane.b32.xlu0 %v864, 127
  %v878 = vpop.permute.xlu0 %877
  %v879 = vsel %vm132, %v876, %v878
  %vm882 = vcmask 130048
  %v884 = vsel %vm882, %v872, 0
  %886 = vmatprep.subr.bf16.mxu0 %v878
  %887 = vmatpush1.bf16.msra.mxu0 %v879
  %888 = vmatprep.subr.bf16.mxu0 0
  %889 = vmatpush1.bf16.msra.mxu0 0
  %890 = vmatprep.subr.bf16.mxu0 0
  %891 = vmatpush1.bf16.msra.mxu0 0
  %892 = vmatprep.subr.bf16.mxu0 0
  %893 = vmatpush1.bf16.msra.mxu0 0
  %894 = vmatprep.subr.bf16.mxu0 0
  %895 = vmatpush1.bf16.msra.mxu0 0
  %896 = vmatprep.subr.bf16.mxu0 0
  %897 = vmatpush1.bf16.msra.mxu0 0
  %898 = vmatprep.subr.bf16.mxu0 0
  %899 = vmatpush1.bf16.msra.mxu0 0
  %900 = vmatprep.subr.bf16.mxu0 0
  %901 = vmatpush1.bf16.msra.mxu0 0
  %902 = vmatprep.subr.bf16.mxu0 0
  %903 = vmatpush1.bf16.msra.mxu0 0
  %904 = vmatprep.subr.bf16.mxu0 0
  %905 = vmatpush1.bf16.msra.mxu0 0
  %906 = vmatprep.subr.bf16.mxu0 0
  %907 = vmatpush1.bf16.msra.mxu0 0
  %908 = vmatprep.subr.bf16.mxu0 0
  %909 = vmatpush1.bf16.msra.mxu0 0
  %910 = vmatprep.subr.bf16.mxu0 0
  %911 = vmatpush1.bf16.msra.mxu0 0
  %912 = vmatprep.subr.bf16.mxu0 0
  %913 = vmatpush1.bf16.msra.mxu0 0
  %914 = vmatprep.subr.bf16.mxu0 0
  %915 = vmatpush1.bf16.msra.mxu0 0
  %916 = vmatprep.subr.bf16.mxu0 0
  %917 = vmatpush1.bf16.msra.mxu0 0
  %918 = vmatprep.mubr.bf16.mxu0 0
  %919 = vmatmul.mubr.bf16.gmra.mrb[0].mxu0 %v884
  %v920 = vpop.f32.mrb[0].mxu0
  %v921 = vadd.f32 0.0, %v920
  %v922 = vpop.f32.mrb[0].mxu0
  %v923 = vadd.f32 0.0, %v922
  %v924 = vpop.f32.mrb[0].mxu0
  %v925 = vadd.f32 0.0, %v924
  %v926 = vpop.f32.mrb[0].mxu0
  %v927 = vadd.f32 0.0, %v926
  %928 = vdwg.mxu0
  %v931 = vunpack.c.l.b16 %v861
  %v932 = vunpack.c.l.b16 %v862
  %v933 = vpack.c.b16 %v932, %v931
  %v935 = vsel %vm882, %v933, 0
  %937 = vmatprep.subr.bf16.mxu0 %v864
  %938 = vmatpush1.bf16.msra.mxu0 %v863
  %939 = vmatprep.subr.bf16.mxu0 0
  %940 = vmatpush1.bf16.msra.mxu0 0
  %941 = vmatprep.subr.bf16.mxu0 0
  %942 = vmatpush1.bf16.msra.mxu0 0
  %943 = vmatprep.subr.bf16.mxu0 0
  %944 = vmatpush1.bf16.msra.mxu0 0
  %945 = vmatprep.subr.bf16.mxu0 0
  %946 = vmatpush1.bf16.msra.mxu0 0
  %947 = vmatprep.subr.bf16.mxu0 0
  %948 = vmatpush1.bf16.msra.mxu0 0
  %949 = vmatprep.subr.bf16.mxu0 0
  %950 = vmatpush1.bf16.msra.mxu0 0
  %951 = vmatprep.subr.bf16.mxu0 0
  %952 = vmatpush1.bf16.msra.mxu0 0
  %953 = vmatprep.subr.bf16.mxu0 0
  %954 = vmatpush1.bf16.msra.mxu0 0
  %955 = vmatprep.subr.bf16.mxu0 0
  %956 = vmatpush1.bf16.msra.mxu0 0
  %957 = vmatprep.subr.bf16.mxu0 0
  %958 = vmatpush1.bf16.msra.mxu0 0
  %959 = vmatprep.subr.bf16.mxu0 0
  %960 = vmatpush1.bf16.msra.mxu0 0
  %961 = vmatprep.subr.bf16.mxu0 0
  %962 = vmatpush1.bf16.msra.mxu0 0
  %963 = vmatprep.subr.bf16.mxu0 0
  %964 = vmatpush1.bf16.msra.mxu0 0
  %965 = vmatprep.subr.bf16.mxu0 0
  %966 = vmatpush1.bf16.msra.mxu0 0
  %967 = vmatprep.subr.bf16.mxu0 0
  %968 = vmatpush1.bf16.msra.mxu0 0
  %969 = vmatprep.mubr.bf16.mxu0 0
  %970 = vmatmul.mubr.bf16.gmra.mrb[0].mxu0 %v935
  %v971 = vpop.f32.mrb[0].mxu0
  %v972 = vadd.f32 %v921, %v971
  %v973 = vpop.f32.mrb[0].mxu0
  %v974 = vadd.f32 %v923, %v973
  %v975 = vpop.f32.mrb[0].mxu0
  %v976 = vadd.f32 %v925, %v975
  %v977 = vpop.f32.mrb[0].mxu0
  %v978 = vadd.f32 %v927, %v977
  %979 = vdwg.mxu0
  %s980 = scalar_lea.vmem %s4, 16
  %v981 = vld [vmem:[%s980] sm:$0xf]
  %v982 = vld [vmem:[%s980 + $0x4] sm:$0xf]
  %v985 = vunpack.c.l.b16 %v981
  %v986 = vunpack.c.l.b16 %v982
  %v987 = vpack.c.b16 %v986, %v985
  %988 = vrot.lane.b32.xlu0 %v863, 126
  %v989 = vpop.permute.xlu0 %988
  %990 = vrot.lane.b32.xlu0 %v864, 126
  %v991 = vpop.permute.xlu0 %990
  %v992 = vsel %vm256, %v989, %v991
  %v996 = vsel %vm882, %v987, 0
  %998 = vmatprep.subr.bf16.mxu0 %v991
  %999 = vmatpush1.bf16.msra.mxu0 %v992
  %1000 = vmatprep.subr.bf16.mxu0 0
  %1001 = vmatpush1.bf16.msra.mxu0 0
  %1002 = vmatprep.subr.bf16.mxu0 0
  %1003 = vmatpush1.bf16.msra.mxu0 0
  %1004 = vmatprep.subr.bf16.mxu0 0
  %1005 = vmatpush1.bf16.msra.mxu0 0
  %1006 = vmatprep.subr.bf16.mxu0 0
  %1007 = vmatpush1.bf16.msra.mxu0 0
  %1008 = vmatprep.subr.bf16.mxu0 0
  %1009 = vmatpush1.bf16.msra.mxu0 0
  %1010 = vmatprep.subr.bf16.mxu0 0
  %1011 = vmatpush1.bf16.msra.mxu0 0
  %1012 = vmatprep.subr.bf16.mxu0 0
  %1013 = vmatpush1.bf16.msra.mxu0 0
  %1014 = vmatprep.subr.bf16.mxu0 0
  %1015 = vmatpush1.bf16.msra.mxu0 0
  %1016 = vmatprep.subr.bf16.mxu0 0
  %1017 = vmatpush1.bf16.msra.mxu0 0
  %1018 = vmatprep.subr.bf16.mxu0 0
  %1019 = vmatpush1.bf16.msra.mxu0 0
  %1020 = vmatprep.subr.bf16.mxu0 0
  %1021 = vmatpush1.bf16.msra.mxu0 0
  %1022 = vmatprep.subr.bf16.mxu0 0
  %1023 = vmatpush1.bf16.msra.mxu0 0
  %1024 = vmatprep.subr.bf16.mxu0 0
  %1025 = vmatpush1.bf16.msra.mxu0 0
  %1026 = vmatprep.subr.bf16.mxu0 0
  %1027 = vmatpush1.bf16.msra.mxu0 0
  %1028 = vmatprep.subr.bf16.mxu0 0
  %1029 = vmatpush1.bf16.msra.mxu0 0
  %1030 = vmatprep.mubr.bf16.mxu0 0
  %1031 = vmatmul.mubr.bf16.gmra.mrb[0].mxu0 %v996
  %v1032 = vpop.f32.mrb[0].mxu0
  %v1033 = vadd.f32 0.0, %v1032
  %v1034 = vpop.f32.mrb[0].mxu0
  %v1035 = vadd.f32 0.0, %v1034
  %v1036 = vpop.f32.mrb[0].mxu0
  %v1037 = vadd.f32 0.0, %v1036
  %v1038 = vpop.f32.mrb[0].mxu0
  %v1039 = vadd.f32 0.0, %v1038
  %1040 = vdwg.mxu0
  %v1041 = vadd.f32 %v972, %v1033
  %v1042 = vadd.f32 %v974, %v1035
  %v1043 = vadd.f32 %v976, %v1037
  %v1044 = vadd.f32 %v978, %v1039
  %s1045 = scalar_lea.vmem %s4, 24
  %v1046 = vld [vmem:[%s1045] sm:$0xf]
  %v1047 = vld [vmem:[%s1045 + $0x4] sm:$0xf]
  %v1050 = vunpack.c.l.b16 %v1046
  %v1051 = vunpack.c.l.b16 %v1047
  %v1052 = vpack.c.b16 %v1051, %v1050
  %1053 = vrot.lane.b32.xlu0 %v863, 118
  %v1054 = vpop.permute.xlu0 %1053
  %1055 = vrot.lane.b32.xlu0 %v864, 118
  %v1056 = vpop.permute.xlu0 %1055
  %v1057 = vsel %vm326, %v1054, %v1056
  %v1061 = vsel %vm882, %v1052, 0
  %1063 = vmatprep.subr.bf16.mxu0 %v1056
  %1064 = vmatpush1.bf16.msra.mxu0 %v1057
  %1065 = vmatprep.subr.bf16.mxu0 0
  %1066 = vmatpush1.bf16.msra.mxu0 0
  %1067 = vmatprep.subr.bf16.mxu0 0
  %1068 = vmatpush1.bf16.msra.mxu0 0
  %1069 = vmatprep.subr.bf16.mxu0 0
  %1070 = vmatpush1.bf16.msra.mxu0 0
  %1071 = vmatprep.subr.bf16.mxu0 0
  %1072 = vmatpush1.bf16.msra.mxu0 0
  %1073 = vmatprep.subr.bf16.mxu0 0
  %1074 = vmatpush1.bf16.msra.mxu0 0
  %1075 = vmatprep.subr.bf16.mxu0 0
  %1076 = vmatpush1.bf16.msra.mxu0 0
  %1077 = vmatprep.subr.bf16.mxu0 0
  %1078 = vmatpush1.bf16.msra.mxu0 0
  %1079 = vmatprep.subr.bf16.mxu0 0
  %1080 = vmatpush1.bf16.msra.mxu0 0
  %1081 = vmatprep.subr.bf16.mxu0 0
  %1082 = vmatpush1.bf16.msra.mxu0 0
  %1083 = vmatprep.subr.bf16.mxu0 0
  %1084 = vmatpush1.bf16.msra.mxu0 0
  %1085 = vmatprep.subr.bf16.mxu0 0
  %1086 = vmatpush1.bf16.msra.mxu0 0
  %1087 = vmatprep.subr.bf16.mxu0 0
  %1088 = vmatpush1.bf16.msra.mxu0 0
  %1089 = vmatprep.subr.bf16.mxu0 0
  %1090 = vmatpush1.bf16.msra.mxu0 0
  %1091 = vmatprep.subr.bf16.mxu0 0
  %1092 = vmatpush1.bf16.msra.mxu0 0
  %1093 = vmatprep.subr.bf16.mxu0 0
  %1094 = vmatpush1.bf16.msra.mxu0 0
  %1095 = vmatprep.mubr.bf16.mxu0 0
  %1096 = vmatmul.mubr.bf16.gmra.mrb[0].mxu0 %v1061
  %v1097 = vpop.f32.mrb[0].mxu0
  %v1098 = vadd.f32 0.0, %v1097
  %v1099 = vpop.f32.mrb[0].mxu0
  %v1100 = vadd.f32 0.0, %v1099
  %v1101 = vpop.f32.mrb[0].mxu0
  %v1102 = vadd.f32 0.0, %v1101
  %v1103 = vpop.f32.mrb[0].mxu0
  %v1104 = vadd.f32 0.0, %v1103
  %1105 = vdwg.mxu0
  %v1106 = vadd.f32 %v1041, %v1098
  %v1107 = vadd.f32 %v1042, %v1100
  %v1108 = vadd.f32 %v1043, %v1102
  %v1109 = vadd.f32 %v1044, %v1104
  %s1110 = scalar_lea.vmem %s4, 32
  %v1111 = vld [vmem:[%s1110] sm:$0xf]
  %v1112 = vld [vmem:[%s1110 + $0x4] sm:$0xf]
  %v1115 = vunpack.c.l.b16 %v1111
  %v1116 = vunpack.c.l.b16 %v1112
  %v1117 = vpack.c.b16 %v1116, %v1115
  %1118 = vrot.lane.b32.xlu0 %v863, 117
  %v1119 = vpop.permute.xlu0 %1118
  %1120 = vrot.lane.b32.xlu0 %v864, 117
  %v1121 = vpop.permute.xlu0 %1120
  %v1122 = vsel %vm396, %v1119, %v1121
  %v1126 = vsel %vm882, %v1117, 0
  %1128 = vmatprep.subr.bf16.mxu0 %v1121
  %1129 = vmatpush1.bf16.msra.mxu0 %v1122
  %1130 = vmatprep.subr.bf16.mxu0 0
  %1131 = vmatpush1.bf16.msra.mxu0 0
  %1132 = vmatprep.subr.bf16.mxu0 0
  %1133 = vmatpush1.bf16.msra.mxu0 0
  %1134 = vmatprep.subr.bf16.mxu0 0
  %1135 = vmatpush1.bf16.msra.mxu0 0
  %1136 = vmatprep.subr.bf16.mxu0 0
  %1137 = vmatpush1.bf16.msra.mxu0 0
  %1138 = vmatprep.subr.bf16.mxu0 0
  %1139 = vmatpush1.bf16.msra.mxu0 0
  %1140 = vmatprep.subr.bf16.mxu0 0
  %1141 = vmatpush1.bf16.msra.mxu0 0
  %1142 = vmatprep.subr.bf16.mxu0 0
  %1143 = vmatpush1.bf16.msra.mxu0 0
  %1144 = vmatprep.subr.bf16.mxu0 0
  %1145 = vmatpush1.bf16.msra.mxu0 0
  %1146 = vmatprep.subr.bf16.mxu0 0
  %1147 = vmatpush1.bf16.msra.mxu0 0
  %1148 = vmatprep.subr.bf16.mxu0 0
  %1149 = vmatpush1.bf16.msra.mxu0 0
  %1150 = vmatprep.subr.bf16.mxu0 0
  %1151 = vmatpush1.bf16.msra.mxu0 0
  %1152 = vmatprep.subr.bf16.mxu0 0
  %1153 = vmatpush1.bf16.msra.mxu0 0
  %1154 = vmatprep.subr.bf16.mxu0 0
  %1155 = vmatpush1.bf16.msra.mxu0 0
  %1156 = vmatprep.subr.bf16.mxu0 0
  %1157 = vmatpush1.bf16.msra.mxu0 0
  %1158 = vmatprep.subr.bf16.mxu0 0
  %1159 = vmatpush1.bf16.msra.mxu0 0
  %1160 = vmatprep.mubr.bf16.mxu0 0
  %1161 = vmatmul.mubr.bf16.gmra.mrb[0].mxu0 %v1126
  %v1162 = vpop.f32.mrb[0].mxu0
  %v1163 = vadd.f32 0.0, %v1162
  %v1164 = vpop.f32.mrb[0].mxu0
  %v1165 = vadd.f32 0.0, %v1164
  %v1166 = vpop.f32.mrb[0].mxu0
  %v1167 = vadd.f32 0.0, %v1166
  %v1168 = vpop.f32.mrb[0].mxu0
  %v1169 = vadd.f32 0.0, %v1168
  %1170 = vdwg.mxu0
  %v1171 = vadd.f32 %v1106, %v1163
  %v1172 = vadd.f32 %v1107, %v1165
  %v1173 = vadd.f32 %v1108, %v1167
  %v1174 = vadd.f32 %v1109, %v1169
  %s1175 = scalar_lea.vmem %s4, 40
  %v1176 = vld [vmem:[%s1175] sm:$0xf]
  %v1177 = vld [vmem:[%s1175 + $0x4] sm:$0xf]
  %v1180 = vunpack.c.l.b16 %v1176
  %v1181 = vunpack.c.l.b16 %v1177
  %v1182 = vpack.c.b16 %v1181, %v1180
  %1183 = vrot.lane.b32.xlu0 %v863, 116
  %v1184 = vpop.permute.xlu0 %1183
  %1185 = vrot.lane.b32.xlu0 %v864, 116
  %v1186 = vpop.permute.xlu0 %1185
  %v1187 = vsel %vm466, %v1184, %v1186
  %v1191 = vsel %vm882, %v1182, 0
  %1193 = vmatprep.subr.bf16.mxu0 %v1186
  %1194 = vmatpush1.bf16.msra.mxu0 %v1187
  %1195 = vmatprep.subr.bf16.mxu0 0
  %1196 = vmatpush1.bf16.msra.mxu0 0
  %1197 = vmatprep.subr.bf16.mxu0 0
  %1198 = vmatpush1.bf16.msra.mxu0 0
  %1199 = vmatprep.subr.bf16.mxu0 0
  %1200 = vmatpush1.bf16.msra.mxu0 0
  %1201 = vmatprep.subr.bf16.mxu0 0
  %1202 = vmatpush1.bf16.msra.mxu0 0
  %1203 = vmatprep.subr.bf16.mxu0 0
  %1204 = vmatpush1.bf16.msra.mxu0 0
  %1205 = vmatprep.subr.bf16.mxu0 0
  %1206 = vmatpush1.bf16.msra.mxu0 0
  %1207 = vmatprep.subr.bf16.mxu0 0
  %1208 = vmatpush1.bf16.msra.mxu0 0
  %1209 = vmatprep.subr.bf16.mxu0 0
  %1210 = vmatpush1.bf16.msra.mxu0 0
  %1211 = vmatprep.subr.bf16.mxu0 0
  %1212 = vmatpush1.bf16.msra.mxu0 0
  %1213 = vmatprep.subr.bf16.mxu0 0
  %1214 = vmatpush1.bf16.msra.mxu0 0
  %1215 = vmatprep.subr.bf16.mxu0 0
  %1216 = vmatpush1.bf16.msra.mxu0 0
  %1217 = vmatprep.subr.bf16.mxu0 0
  %1218 = vmatpush1.bf16.msra.mxu0 0
  %1219 = vmatprep.subr.bf16.mxu0 0
  %1220 = vmatpush1.bf16.msra.mxu0 0
  %1221 = vmatprep.subr.bf16.mxu0 0
  %1222 = vmatpush1.bf16.msra.mxu0 0
  %1223 = vmatprep.subr.bf16.mxu0 0
  %1224 = vmatpush1.bf16.msra.mxu0 0
  %1225 = vmatprep.mubr.bf16.mxu0 0
  %1226 = vmatmul.mubr.bf16.gmra.mrb[0].mxu0 %v1191
  %v1227 = vpop.f32.mrb[0].mxu0
  %v1228 = vadd.f32 0.0, %v1227
  %v1229 = vpop.f32.mrb[0].mxu0
  %v1230 = vadd.f32 0.0, %v1229
  %v1231 = vpop.f32.mrb[0].mxu0
  %v1232 = vadd.f32 0.0, %v1231
  %v1233 = vpop.f32.mrb[0].mxu0
  %v1234 = vadd.f32 0.0, %v1233
  %1235 = vdwg.mxu0
  %v1236 = vadd.f32 %v1171, %v1228
  %v1237 = vadd.f32 %v1172, %v1230
  %v1238 = vadd.f32 %v1173, %v1232
  %v1239 = vadd.f32 %v1174, %v1234
  %s1240 = scalar_lea.vmem %s4, 48
  %v1241 = vld [vmem:[%s1240] sm:$0xf]
  %v1242 = vld [vmem:[%s1240 + $0x4] sm:$0xf]
  %v1245 = vunpack.c.l.b16 %v1241
  %v1246 = vunpack.c.l.b16 %v1242
  %v1247 = vpack.c.b16 %v1246, %v1245
  %1248 = vrot.lane.b32.xlu0 %v863, 108
  %v1249 = vpop.permute.xlu0 %1248
  %1250 = vrot.lane.b32.xlu0 %v864, 108
  %v1251 = vpop.permute.xlu0 %1250
  %v1252 = vsel %vm536, %v1249, %v1251
  %v1256 = vsel %vm882, %v1247, 0
  %1258 = vmatprep.subr.bf16.mxu0 %v1251
  %1259 = vmatpush1.bf16.msra.mxu0 %v1252
  %1260 = vmatprep.subr.bf16.mxu0 0
  %1261 = vmatpush1.bf16.msra.mxu0 0
  %1262 = vmatprep.subr.bf16.mxu0 0
  %1263 = vmatpush1.bf16.msra.mxu0 0
  %1264 = vmatprep.subr.bf16.mxu0 0
  %1265 = vmatpush1.bf16.msra.mxu0 0
  %1266 = vmatprep.subr.bf16.mxu0 0
  %1267 = vmatpush1.bf16.msra.mxu0 0
  %1268 = vmatprep.subr.bf16.mxu0 0
  %1269 = vmatpush1.bf16.msra.mxu0 0
  %1270 = vmatprep.subr.bf16.mxu0 0
  %1271 = vmatpush1.bf16.msra.mxu0 0
  %1272 = vmatprep.subr.bf16.mxu0 0
  %1273 = vmatpush1.bf16.msra.mxu0 0
  %1274 = vmatprep.subr.bf16.mxu0 0
  %1275 = vmatpush1.bf16.msra.mxu0 0
  %1276 = vmatprep.subr.bf16.mxu0 0
  %1277 = vmatpush1.bf16.msra.mxu0 0
  %1278 = vmatprep.subr.bf16.mxu0 0
  %1279 = vmatpush1.bf16.msra.mxu0 0
  %1280 = vmatprep.subr.bf16.mxu0 0
  %1281 = vmatpush1.bf16.msra.mxu0 0
  %1282 = vmatprep.subr.bf16.mxu0 0
  %1283 = vmatpush1.bf16.msra.mxu0 0
  %1284 = vmatprep.subr.bf16.mxu0 0
  %1285 = vmatpush1.bf16.msra.mxu0 0
  %1286 = vmatprep.subr.bf16.mxu0 0
  %1287 = vmatpush1.bf16.msra.mxu0 0
  %1288 = vmatprep.subr.bf16.mxu0 0
  %1289 = vmatpush1.bf16.msra.mxu0 0
  %1290 = vmatprep.mubr.bf16.mxu0 0
  %1291 = vmatmul.mubr.bf16.gmra.mrb[0].mxu0 %v1256
  %v1292 = vpop.f32.mrb[0].mxu0
  %v1293 = vadd.f32 0.0, %v1292
  %v1294 = vpop.f32.mrb[0].mxu0
  %v1295 = vadd.f32 0.0, %v1294
  %v1296 = vpop.f32.mrb[0].mxu0
  %v1297 = vadd.f32 0.0, %v1296
  %v1298 = vpop.f32.mrb[0].mxu0
  %v1299 = vadd.f32 0.0, %v1298
  %1300 = vdwg.mxu0
  %v1301 = vadd.f32 %v1236, %v1293
  %v1302 = vadd.f32 %v1237, %v1295
  %v1303 = vadd.f32 %v1238, %v1297
  %v1304 = vadd.f32 %v1239, %v1299
  %s1305 = scalar_lea.vmem %s4, 56
  %v1306 = vld [vmem:[%s1305] sm:$0xf]
  %v1307 = vld [vmem:[%s1305 + $0x4] sm:$0xf]
  %v1310 = vunpack.c.l.b16 %v1306
  %v1311 = vunpack.c.l.b16 %v1307
  %v1312 = vpack.c.b16 %v1311, %v1310
  %1313 = vrot.lane.b32.xlu0 %v863, 107
  %v1314 = vpop.permute.xlu0 %1313
  %1315 = vrot.lane.b32.xlu0 %v864, 107
  %v1316 = vpop.permute.xlu0 %1315
  %v1317 = vsel %vm606, %v1314, %v1316
  %v1321 = vsel %vm882, %v1312, 0
  %1323 = vmatprep.subr.bf16.mxu0 %v1316
  %1324 = vmatpush1.bf16.msra.mxu0 %v1317
  %1325 = vmatprep.subr.bf16.mxu0 0
  %1326 = vmatpush1.bf16.msra.mxu0 0
  %1327 = vmatprep.subr.bf16.mxu0 0
  %1328 = vmatpush1.bf16.msra.mxu0 0
  %1329 = vmatprep.subr.bf16.mxu0 0
  %1330 = vmatpush1.bf16.msra.mxu0 0
  %1331 = vmatprep.subr.bf16.mxu0 0
  %1332 = vmatpush1.bf16.msra.mxu0 0
  %1333 = vmatprep.subr.bf16.mxu0 0
  %1334 = vmatpush1.bf16.msra.mxu0 0
  %1335 = vmatprep.subr.bf16.mxu0 0
  %1336 = vmatpush1.bf16.msra.mxu0 0
  %1337 = vmatprep.subr.bf16.mxu0 0
  %1338 = vmatpush1.bf16.msra.mxu0 0
  %1339 = vmatprep.subr.bf16.mxu0 0
  %1340 = vmatpush1.bf16.msra.mxu0 0
  %1341 = vmatprep.subr.bf16.mxu0 0
  %1342 = vmatpush1.bf16.msra.mxu0 0
  %1343 = vmatprep.subr.bf16.mxu0 0
  %1344 = vmatpush1.bf16.msra.mxu0 0
  %1345 = vmatprep.subr.bf16.mxu0 0
  %1346 = vmatpush1.bf16.msra.mxu0 0
  %1347 = vmatprep.subr.bf16.mxu0 0
  %1348 = vmatpush1.bf16.msra.mxu0 0
  %1349 = vmatprep.subr.bf16.mxu0 0
  %1350 = vmatpush1.bf16.msra.mxu0 0
  %1351 = vmatprep.subr.bf16.mxu0 0
  %1352 = vmatpush1.bf16.msra.mxu0 0
  %1353 = vmatprep.subr.bf16.mxu0 0
  %1354 = vmatpush1.bf16.msra.mxu0 0
  %1355 = vmatprep.mubr.bf16.mxu0 0
  %1356 = vmatmul.mubr.bf16.gmra.mrb[0].mxu0 %v1321
  %v1357 = vpop.f32.mrb[0].mxu0
  %v1358 = vadd.f32 0.0, %v1357
  %v1359 = vpop.f32.mrb[0].mxu0
  %v1360 = vadd.f32 0.0, %v1359
  %v1361 = vpop.f32.mrb[0].mxu0
  %v1362 = vadd.f32 0.0, %v1361
  %v1363 = vpop.f32.mrb[0].mxu0
  %v1364 = vadd.f32 0.0, %v1363
  %1365 = vdwg.mxu0
  %v1366 = vadd.f32 %v1301, %v1358
  %v1367 = vadd.f32 %v1302, %v1360
  %v1368 = vadd.f32 %v1303, %v1362
  %v1369 = vadd.f32 %v1304, %v1364
  %s1370 = scalar_lea.vmem %s4, 64
  %v1371 = vld [vmem:[%s1370] sm:$0xf]
  %v1372 = vld [vmem:[%s1370 + $0x4] sm:$0xf]
  %v1375 = vunpack.c.l.b16 %v1371
  %v1376 = vunpack.c.l.b16 %v1372
  %v1377 = vpack.c.b16 %v1376, %v1375
  %1378 = vrot.lane.b32.xlu0 %v863, 106
  %v1379 = vpop.permute.xlu0 %1378
  %1380 = vrot.lane.b32.xlu0 %v864, 106
  %v1381 = vpop.permute.xlu0 %1380
  %v1382 = vsel %vm676, %v1379, %v1381
  %v1386 = vsel %vm882, %v1377, 0
  %1388 = vmatprep.subr.bf16.mxu0 %v1381
  %1389 = vmatpush1.bf16.msra.mxu0 %v1382
  %1390 = vmatprep.subr.bf16.mxu0 0
  %1391 = vmatpush1.bf16.msra.mxu0 0
  %1392 = vmatprep.subr.bf16.mxu0 0
  %1393 = vmatpush1.bf16.msra.mxu0 0
  %1394 = vmatprep.subr.bf16.mxu0 0
  %1395 = vmatpush1.bf16.msra.mxu0 0
  %1396 = vmatprep.subr.bf16.mxu0 0
  %1397 = vmatpush1.bf16.msra.mxu0 0
  %1398 = vmatprep.subr.bf16.mxu0 0
  %1399 = vmatpush1.bf16.msra.mxu0 0
  %1400 = vmatprep.subr.bf16.mxu0 0
  %1401 = vmatpush1.bf16.msra.mxu0 0
  %1402 = vmatprep.subr.bf16.mxu0 0
  %1403 = vmatpush1.bf16.msra.mxu0 0
  %1404 = vmatprep.subr.bf16.mxu0 0
  %1405 = vmatpush1.bf16.msra.mxu0 0
  %1406 = vmatprep.subr.bf16.mxu0 0
  %1407 = vmatpush1.bf16.msra.mxu0 0
  %1408 = vmatprep.subr.bf16.mxu0 0
  %1409 = vmatpush1.bf16.msra.mxu0 0
  %1410 = vmatprep.subr.bf16.mxu0 0
  %1411 = vmatpush1.bf16.msra.mxu0 0
  %1412 = vmatprep.subr.bf16.mxu0 0
  %1413 = vmatpush1.bf16.msra.mxu0 0
  %1414 = vmatprep.subr.bf16.mxu0 0
  %1415 = vmatpush1.bf16.msra.mxu0 0
  %1416 = vmatprep.subr.bf16.mxu0 0
  %1417 = vmatpush1.bf16.msra.mxu0 0
  %1418 = vmatprep.subr.bf16.mxu0 0
  %1419 = vmatpush1.bf16.msra.mxu0 0
  %1420 = vmatprep.mubr.bf16.mxu0 0
  %1421 = vmatmul.mubr.bf16.gmra.mrb[0].mxu0 %v1386
  %v1422 = vpop.f32.mrb[0].mxu0
  %v1423 = vadd.f32 0.0, %v1422
  %v1424 = vpop.f32.mrb[0].mxu0
  %v1425 = vadd.f32 0.0, %v1424
  %v1426 = vpop.f32.mrb[0].mxu0
  %v1427 = vadd.f32 0.0, %v1426
  %v1428 = vpop.f32.mrb[0].mxu0
  %v1429 = vadd.f32 0.0, %v1428
  %1430 = vdwg.mxu0
  %v1431 = vadd.f32 %v1366, %v1423
  %v1432 = vadd.f32 %v1367, %v1425
  %v1433 = vadd.f32 %v1368, %v1427
  %v1434 = vadd.f32 %v1369, %v1429
  %v1435 = vld [vmem:[%s5] sm:$0xff]
  %v1436 = vld [vmem:[%s5 + $0x8] sm:$0xff]
  %1438 = vset.pattern.permute.xlu0 0
  %1439 = vperm.xlu0 %1438, %v1435
  %v1440 = vpop.permute.xlu0 %1439
  %1443 = vset.pattern.permute.xlu0 0
  %1444 = vperm.xlu0 %1443, %v1436
  %v1445 = vpop.permute.xlu0 %1444
  %v1447 = vadd.f32 %v1431, %v1440
  %v1448 = vadd.f32 %v1432, %v1440
  %v1449 = vadd.f32 %v1433, %v1445
  %v1450 = vadd.f32 %v1434, %v1445
  %v1451 = vld [vmem:[%s10] sm:$0xf]
  %v1452 = vld [vmem:[%s10 + $0x4] sm:$0xf]
  %v1453 = vld [vmem:[%s0] sm:$0xff]
  %v1454 = vld [vmem:[%s11] sm:$0xff]
  %v1455 = vld [vmem:[%s11 + $0x8] sm:$0xff]
  %1457 = vset.pattern.permute.xlu0 0
  %1458 = vperm.xlu0 %1457, %v1454
  %v1459 = vpop.permute.xlu0 %1458
  %1462 = vset.pattern.permute.xlu0 0
  %1463 = vperm.xlu0 %1462, %v1455
  %v1464 = vpop.permute.xlu0 %1463
  %v1468 = vunpack.c.l.b16 %v1451
  %v1469 = vunpack.c.l.b16 %v1452
  %v1470 = vpack.c.b16 %v1469, %v1468
  %v1472 = vunpack.c.l.b16 %v1453
  %v1473 = vunpack.c.h.b16 %v1453
  %v1474 = vpack.c.b16 %v1472, %v1472
  %v1475 = vpack.c.b16 %v1473, %v1473
  %1476 = vrot.lane.b32.xlu0 %v1474, 117
  %v1477 = vpop.permute.xlu0 %1476
  %1478 = vrot.lane.b32.xlu0 %v1475, 117
  %v1479 = vpop.permute.xlu0 %1478
  %v1480 = vsel %vm396, %v1477, %v1479
  %v1482 = vsel %vm134, %v1470, 0
  %v1485 = vsel %vm108, %v1480, 0
  %v1488 = vsel %vm108, %v1479, 0
  %1490 = vmatprep.subr.bf16.mxu0 %v1488
  %1491 = vmatpush1.bf16.msra.mxu0 %v1485
  %1492 = vmatprep.subr.bf16.mxu0 0
  %1493 = vmatpush1.bf16.msra.mxu0 0
  %1494 = vmatprep.subr.bf16.mxu0 0
  %1495 = vmatpush1.bf16.msra.mxu0 0
  %1496 = vmatprep.subr.bf16.mxu0 0
  %1497 = vmatpush1.bf16.msra.mxu0 0
  %1498 = vmatprep.subr.bf16.mxu0 0
  %1499 = vmatpush1.bf16.msra.mxu0 0
  %1500 = vmatprep.subr.bf16.mxu0 0
  %1501 = vmatpush1.bf16.msra.mxu0 0
  %1502 = vmatprep.subr.bf16.mxu0 0
  %1503 = vmatpush1.bf16.msra.mxu0 0
  %1504 = vmatprep.subr.bf16.mxu0 0
  %1505 = vmatpush1.bf16.msra.mxu0 0
  %1506 = vmatprep.subr.bf16.mxu0 0
  %1507 = vmatpush1.bf16.msra.mxu0 0
  %1508 = vmatprep.subr.bf16.mxu0 0
  %1509 = vmatpush1.bf16.msra.mxu0 0
  %1510 = vmatprep.subr.bf16.mxu0 0
  %1511 = vmatpush1.bf16.msra.mxu0 0
  %1512 = vmatprep.subr.bf16.mxu0 0
  %1513 = vmatpush1.bf16.msra.mxu0 0
  %1514 = vmatprep.subr.bf16.mxu0 0
  %1515 = vmatpush1.bf16.msra.mxu0 0
  %1516 = vmatprep.subr.bf16.mxu0 0
  %1517 = vmatpush1.bf16.msra.mxu0 0
  %1518 = vmatprep.subr.bf16.mxu0 0
  %1519 = vmatpush1.bf16.msra.mxu0 0
  %1520 = vmatprep.subr.bf16.mxu0 0
  %1521 = vmatpush1.bf16.msra.mxu0 0
  %1522 = vmatprep.mubr.bf16.mxu0 0
  %1523 = vmatmul.mubr.bf16.gmra.mrb[0].mxu0 %v1482
  %v1524 = vpop.f32.mrb[0].mxu0
  %v1525 = vadd.f32 %v1459, %v1524
  %v1526 = vpop.f32.mrb[0].mxu0
  %v1527 = vadd.f32 %v1459, %v1526
  %v1528 = vpop.f32.mrb[0].mxu0
  %v1529 = vadd.f32 %v1464, %v1528
  %v1530 = vpop.f32.mrb[0].mxu0
  %v1531 = vadd.f32 %v1464, %v1530
  %1532 = vdwg.mxu0
  %v1533 = vadd.f32 %v1447, %v1525
  %v1534 = vadd.f32 %v1448, %v1527
  %v1535 = vadd.f32 %v1449, %v1529
  %v1536 = vadd.f32 %v1450, %v1531
  %v1537 = vmul.f32 %v1533, %v755
  %v1538 = vmul.f32 %v1534, %v753
  %v1539 = vmul.f32 %v1535, %v755
  %v1540 = vmul.f32 %v1536, %v753
  %1541 = vst.msk [vmem:[%s12] sm:$0xff] %vm110, 0
  %1542 = vst.msk [vmem:[%s12 + $0x8] sm:$0xff] %vm110, 0
  %v1543 = vpack.c.bf16 %v1539, %v1537
  %v1544 = vpack.c.bf16 %v1540, %v1538
  %v1547 = vunpack.c.l.b16 %v1543
  %v1548 = vunpack.c.l.b16 %v1544
  %v1549 = vunpack.c.h.b16 %v1543
  %v1550 = vunpack.c.h.b16 %v1544
  %v1551 = vpack.c.b16 %v1548, %v1547
  %v1552 = vpack.c.b16 %v1550, %v1549
  %1553 = vrot.lane.b32.xlu0 %v1551, 11
  %v1554 = vpop.permute.xlu0 %1553
  %1555 = vrot.lane.b32.xlu0 %v1552, 11
  %v1556 = vpop.permute.xlu0 %1555
  %v1557 = vrot.slane %v1554, 4
  %v1558 = vrot.slane %v1556, 4
  %v1559 = vsel %vm853, %v1557, %v1554
  %v1560 = vsel %vm853, %v1558, %v1556
  %vm1563 = vcmask 1043544
  %vm1564 = vcmask 678916
  %vm1565 = vmor %vm1564, %vm1563
  %1566 = vst.msk [vmem:[%s12] sm:$0xff] %vm1565, %v1559
  %1567 = vst.msk [vmem:[%s12 + $0x8] sm:$0xff] %vm1565, %v1560
  // Predicated region
  $region50: #{encoder_forward.12} parent=0 // pred_check
    _
  $region51: #{encoder_forward.12} parent=0 // pred_check_branch
    %1569 = sbr.rel (0) target = $region53
  $region52: #{encoder_forward.12} parent=0 // pred_region
    _
  $region53: #{encoder_forward.12} parent=0 // pred_fallthru
    _
  // Predicated region
  $region54: #{encoder_forward.12} parent=0 // pred_check
    _
  $region55: #{encoder_forward.12} parent=0 // pred_check_branch
    %1571 = sbr.rel (0) target = $region57
  $region56: #{encoder_forward.12} parent=0 // pred_region
    _
  $region57: #{encoder_forward.12} parent=0 // pred_fallthru
    _

// kernel: encoder_forward.14
$region0: #{encoder_forward.14}
  #allocation0 [shape = 'u32[]', space=smem, size = 0x4, offset = 0x4, fixed_abs, tag = 'smem constant byte address 0x4 - core index']
  #allocation1 [shape = 'u32[144,128]{1,0:T(1,128)}', space=vmem, size = 0x12000, scoped, tag = 'internal scratch']
  %s0 = inlined_call_operand.vmem [shape: bf16[2,64,16], index: 0, kind: input, shape index: {}, may-alias: {0,2}]
  %s1 = inlined_call_operand.vmem [shape: bf16[2,16,64], index: 1, kind: input, shape index: {}]
  %s2 = inlined_call_operand.vmem [shape: bf16[2,64,16], index: 2, kind: input, shape index: {}, may-alias: {0,2}]
  %s3 = inlined_call_operand.vmem [shape: bf16[16,16], index: 3, kind: input, shape index: {}]
  %s4 = inlined_call_operand.vmem [shape: bf16[16,16], index: 4, kind: input, shape index: {}]
  %s5 = inlined_call_operand.vmem [shape: bf16[16,16], index: 5, kind: input, shape index: {}]
  %s6 = inlined_call_operand.vmem [shape: bf16[16,16], index: 6, kind: input, shape index: {}]
  %s7 = inlined_call_operand.vmem [shape: f32[1,16], index: 7, kind: input, shape index: {}, may-alias: {7,9,10}]
  %s8 = inlined_call_operand.vmem [shape: f32[16,1], index: 8, kind: input, shape index: {}]
  %s9 = inlined_call_operand.vmem [shape: f32[1,16], index: 9, kind: input, shape index: {}, may-alias: {7,9,10}]
  %s10 = inlined_call_operand.vmem [shape: f32[1,16], index: 10, kind: input, shape index: {}, may-alias: {7,9,10}]
  %s11 = inlined_call_operand.vmem [shape: bf16[2,64,16], index: 11, kind: output, shape index: {}]
  %s12 = sld [smem:[#allocation0]]
  $region77: #{encoder_forward.14} parent=0
    _
  %s14 = ssub.s32 1, %s12
  %s15 = scalar_select 0, %s14, %s12
  loop: start=0, step=1, limit=4
  $region2: #{encoder_forward.14} parent=0 // loop_pre_header
    _
  $region3: #{encoder_forward.14} parent=0 // loop_header
    %s17 = sphi 0, %s21
    %p18 = scmp.ge.s32.totalorder %s17, 4
    %s27 = sphi 0, %s29
    %s30 = sphi 0, %s27
    %s31 = sphi 0, %s30
    %s47 = sphi 0, %s31
    %s53 = sphi 0, %s55
    %s56 = sphi 0, %s53
    %s57 = sphi 0, %s56
    %s73 = sphi 0, %s57
    %s79 = sphi 0, %s81
    %s82 = sphi 0, %s79
    %s83 = sphi 0, %s82
    %s99 = sphi 0, %s83
    %s103 = sphi 0, %s103
    %s105 = sphi 0, %s103
    %s106 = sphi 0, %s105
    %s120 = sphi 0, %s106
    %s124 = sphi 0, %s124
    %s126 = sphi 0, %s124
    %s127 = sphi 0, %s126
    %s141 = sphi 0, %s127
    %s145 = sphi 0, %s145
    %s147 = sphi 0, %s145
    %s148 = sphi 0, %s147
    %s162 = sphi 0, %s148
    %s166 = sphi 0, %s166
    %s168 = sphi 0, %s166
    %s169 = sphi 0, %s168
    %s183 = sphi 0, %s169
    %s187 = sphi 0, %s187
    %s189 = sphi 0, %s187
    %s190 = sphi 0, %s189
    %s204 = sphi 0, %s190
    %s208 = sphi 0, %s208
    %s210 = sphi 0, %s208
    %s211 = sphi 0, %s210
    %s225 = sphi 0, %s211
    %s229 = sphi 0, %s229
    %s231 = sphi 0, %s229
    %s232 = sphi 0, %s231
    %s246 = sphi 0, %s232
    %s250 = sphi 0, %s250
    %s252 = sphi 0, %s250
    %s253 = sphi 0, %s252
    %s267 = sphi 0, %s253
    %s273 = sphi 0, %s275
    %s276 = sphi 0, %s273
    %s277 = sphi 0, %s276
    %s293 = sphi 0, %s277
  $region4: #{encoder_forward.14} parent=0 // loop_header_branch
    %20 = sbr.rel (%p18) target = $region8
  $region5: #{encoder_forward.14} parent=0 // loop_body
    %s22 = ssub.s32 %s17, 1
    %s23 = ssub.s32 %s17, 2
    %s24 = sadd.s32 %s17, 1
    %s25 = ssub.s32 %s17, %s24
    %p26 = scmp.eq.s32.totalorder %s25, 0
    %s28 = sadd.s32 %s27, 1
    %s29 = scalar_select %p26, %s27, %s28
    %p32 = pneg %p26
    %p33 = scmp.eq.s32.totalorder %s17, 1
    %p34 = por %p32, %p33
    %p35 = scmp.ne.s32.totalorder %s27, %s30
    %p36 = scmp.eq.s32.totalorder %s17, 0
    %p37 = por %p35, %p36
    %p38 = scmp.ne.s32.totalorder %s27, %s30
    %p39 = scmp.eq.s32.totalorder %s22, 1
    %p40 = por %p38, %p39
    %p41 = scmp.ne.s32.totalorder %s30, %s31
    %p42 = scmp.eq.s32.totalorder %s22, 0
    %p43 = por %p41, %p42
    %p44 = scmp.ne.s32.totalorder %s30, %s31
    %p45 = scmp.eq.s32.totalorder %s23, 1
    %p46 = por %p44, %p45
    %p48 = scmp.ne.s32.totalorder %s31, %s47
    %p49 = scmp.eq.s32.totalorder %s23, 0
    %p50 = por %p48, %p49
    %s51 = ssub.s32 %s17, %s24
    %p52 = scmp.eq.s32.totalorder %s51, 0
    %s54 = sadd.s32 %s53, 1
    %s55 = scalar_select %p52, %s53, %s54
    %p58 = pneg %p52
    %p59 = scmp.eq.s32.totalorder %s17, 1
    %p60 = por %p58, %p59
    %p61 = scmp.ne.s32.totalorder %s53, %s56
    %p62 = scmp.eq.s32.totalorder %s17, 0
    %p63 = por %p61, %p62
    %p64 = scmp.ne.s32.totalorder %s53, %s56
    %p65 = scmp.eq.s32.totalorder %s22, 1
    %p66 = por %p64, %p65
    %p67 = scmp.ne.s32.totalorder %s56, %s57
    %p68 = scmp.eq.s32.totalorder %s22, 0
    %p69 = por %p67, %p68
    %p70 = scmp.ne.s32.totalorder %s56, %s57
    %p71 = scmp.eq.s32.totalorder %s23, 1
    %p72 = por %p70, %p71
    %p74 = scmp.ne.s32.totalorder %s57, %s73
    %p75 = scmp.eq.s32.totalorder %s23, 0
    %p76 = por %p74, %p75
    %s77 = ssub.s32 %s17, %s24
    %p78 = scmp.eq.s32.totalorder %s77, 0
    %s80 = sadd.s32 %s79, 1
    %s81 = scalar_select %p78, %s79, %s80
    %p84 = pneg %p78
    %p85 = scmp.eq.s32.totalorder %s17, 1
    %p86 = por %p84, %p85
    %p87 = scmp.ne.s32.totalorder %s79, %s82
    %p88 = scmp.eq.s32.totalorder %s17, 0
    %p89 = por %p87, %p88
    %p90 = scmp.ne.s32.totalorder %s79, %s82
    %p91 = scmp.eq.s32.totalorder %s22, 1
    %p92 = por %p90, %p91
    %p93 = scmp.ne.s32.totalorder %s82, %s83
    %p94 = scmp.eq.s32.totalorder %s22, 0
    %p95 = por %p93, %p94
    %p96 = scmp.ne.s32.totalorder %s82, %s83
    %p97 = scmp.eq.s32.totalorder %s23, 1
    %p98 = por %p96, %p97
    %p100 = scmp.ne.s32.totalorder %s83, %s99
    %p101 = scmp.eq.s32.totalorder %s23, 0
    %p102 = por %p100, %p101
    %s104 = sadd.s32 %s103, 1
    %p107 = scmp.eq.s32.totalorder %s17, 1
    %p108 = scmp.ne.s32.totalorder %s103, %s105
    %p109 = scmp.eq.s32.totalorder %s17, 0
    %p110 = por %p108, %p109
    %p111 = scmp.ne.s32.totalorder %s103, %s105
    %p112 = scmp.eq.s32.totalorder %s22, 1
    %p113 = por %p111, %p112
    %p114 = scmp.ne.s32.totalorder %s105, %s106
    %p115 = scmp.eq.s32.totalorder %s22, 0
    %p116 = por %p114, %p115
    %p117 = scmp.ne.s32.totalorder %s105, %s106
    %p118 = scmp.eq.s32.totalorder %s23, 1
    %p119 = por %p117, %p118
    %p121 = scmp.ne.s32.totalorder %s106, %s120
    %p122 = scmp.eq.s32.totalorder %s23, 0
    %p123 = por %p121, %p122
    %s125 = sadd.s32 %s124, 1
    %p128 = scmp.eq.s32.totalorder %s17, 1
    %p129 = scmp.ne.s32.totalorder %s124, %s126
    %p130 = scmp.eq.s32.totalorder %s17, 0
    %p131 = por %p129, %p130
    %p132 = scmp.ne.s32.totalorder %s124, %s126
    %p133 = scmp.eq.s32.totalorder %s22, 1
    %p134 = por %p132, %p133
    %p135 = scmp.ne.s32.totalorder %s126, %s127
    %p136 = scmp.eq.s32.totalorder %s22, 0
    %p137 = por %p135, %p136
    %p138 = scmp.ne.s32.totalorder %s126, %s127
    %p139 = scmp.eq.s32.totalorder %s23, 1
    %p140 = por %p138, %p139
    %p142 = scmp.ne.s32.totalorder %s127, %s141
    %p143 = scmp.eq.s32.totalorder %s23, 0
    %p144 = por %p142, %p143
    %s146 = sadd.s32 %s145, 1
    %p149 = scmp.eq.s32.totalorder %s17, 1
    %p150 = scmp.ne.s32.totalorder %s145, %s147
    %p151 = scmp.eq.s32.totalorder %s17, 0
    %p152 = por %p150, %p151
    %p153 = scmp.ne.s32.totalorder %s145, %s147
    %p154 = scmp.eq.s32.totalorder %s22, 1
    %p155 = por %p153, %p154
    %p156 = scmp.ne.s32.totalorder %s147, %s148
    %p157 = scmp.eq.s32.totalorder %s22, 0
    %p158 = por %p156, %p157
    %p159 = scmp.ne.s32.totalorder %s147, %s148
    %p160 = scmp.eq.s32.totalorder %s23, 1
    %p161 = por %p159, %p160
    %p163 = scmp.ne.s32.totalorder %s148, %s162
    %p164 = scmp.eq.s32.totalorder %s23, 0
    %p165 = por %p163, %p164
    %s167 = sadd.s32 %s166, 1
    %p170 = scmp.eq.s32.totalorder %s17, 1
    %p171 = scmp.ne.s32.totalorder %s166, %s168
    %p172 = scmp.eq.s32.totalorder %s17, 0
    %p173 = por %p171, %p172
    %p174 = scmp.ne.s32.totalorder %s166, %s168
    %p175 = scmp.eq.s32.totalorder %s22, 1
    %p176 = por %p174, %p175
    %p177 = scmp.ne.s32.totalorder %s168, %s169
    %p178 = scmp.eq.s32.totalorder %s22, 0
    %p179 = por %p177, %p178
    %p180 = scmp.ne.s32.totalorder %s168, %s169
    %p181 = scmp.eq.s32.totalorder %s23, 1
    %p182 = por %p180, %p181
    %p184 = scmp.ne.s32.totalorder %s169, %s183
    %p185 = scmp.eq.s32.totalorder %s23, 0
    %p186 = por %p184, %p185
    %s188 = sadd.s32 %s187, 1
    %p191 = scmp.eq.s32.totalorder %s17, 1
    %p192 = scmp.ne.s32.totalorder %s187, %s189
    %p193 = scmp.eq.s32.totalorder %s17, 0
    %p194 = por %p192, %p193
    %p195 = scmp.ne.s32.totalorder %s187, %s189
    %p196 = scmp.eq.s32.totalorder %s22, 1
    %p197 = por %p195, %p196
    %p198 = scmp.ne.s32.totalorder %s189, %s190
    %p199 = scmp.eq.s32.totalorder %s22, 0
    %p200 = por %p198, %p199
    %p201 = scmp.ne.s32.totalorder %s189, %s190
    %p202 = scmp.eq.s32.totalorder %s23, 1
    %p203 = por %p201, %p202
    %p205 = scmp.ne.s32.totalorder %s190, %s204
    %p206 = scmp.eq.s32.totalorder %s23, 0
    %p207 = por %p205, %p206
    %s209 = sadd.s32 %s208, 1
    %p212 = scmp.eq.s32.totalorder %s17, 1
    %p213 = scmp.ne.s32.totalorder %s208, %s210
    %p214 = scmp.eq.s32.totalorder %s17, 0
    %p215 = por %p213, %p214
    %p216 = scmp.ne.s32.totalorder %s208, %s210
    %p217 = scmp.eq.s32.totalorder %s22, 1
    %p218 = por %p216, %p217
    %p219 = scmp.ne.s32.totalorder %s210, %s211
    %p220 = scmp.eq.s32.totalorder %s22, 0
    %p221 = por %p219, %p220
    %p222 = scmp.ne.s32.totalorder %s210, %s211
    %p223 = scmp.eq.s32.totalorder %s23, 1
    %p224 = por %p222, %p223
    %p226 = scmp.ne.s32.totalorder %s211, %s225
    %p227 = scmp.eq.s32.totalorder %s23, 0
    %p228 = por %p226, %p227
    %s230 = sadd.s32 %s229, 1
    %p233 = scmp.eq.s32.totalorder %s17, 1
    %p234 = scmp.ne.s32.totalorder %s229, %s231
    %p235 = scmp.eq.s32.totalorder %s17, 0
    %p236 = por %p234, %p235
    %p237 = scmp.ne.s32.totalorder %s229, %s231
    %p238 = scmp.eq.s32.totalorder %s22, 1
    %p239 = por %p237, %p238
    %p240 = scmp.ne.s32.totalorder %s231, %s232
    %p241 = scmp.eq.s32.totalorder %s22, 0
    %p242 = por %p240, %p241
    %p243 = scmp.ne.s32.totalorder %s231, %s232
    %p244 = scmp.eq.s32.totalorder %s23, 1
    %p245 = por %p243, %p244
    %p247 = scmp.ne.s32.totalorder %s232, %s246
    %p248 = scmp.eq.s32.totalorder %s23, 0
    %p249 = por %p247, %p248
    %s251 = sadd.s32 %s250, 1
    %p254 = scmp.eq.s32.totalorder %s17, 1
    %p255 = scmp.ne.s32.totalorder %s250, %s252
    %p256 = scmp.eq.s32.totalorder %s17, 0
    %p257 = por %p255, %p256
    %p258 = scmp.ne.s32.totalorder %s250, %s252
    %p259 = scmp.eq.s32.totalorder %s22, 1
    %p260 = por %p258, %p259
    %p261 = scmp.ne.s32.totalorder %s252, %s253
    %p262 = scmp.eq.s32.totalorder %s22, 0
    %p263 = por %p261, %p262
    %p264 = scmp.ne.s32.totalorder %s252, %s253
    %p265 = scmp.eq.s32.totalorder %s23, 1
    %p266 = por %p264, %p265
    %p268 = scmp.ne.s32.totalorder %s253, %s267
    %p269 = scmp.eq.s32.totalorder %s23, 0
    %p270 = por %p268, %p269
    %s271 = ssub.s32 %s17, %s24
    %p272 = scmp.eq.s32.totalorder %s271, 0
    %s274 = sadd.s32 %s273, 1
    %s275 = scalar_select %p272, %s273, %s274
    %p278 = pneg %p272
    %p279 = scmp.eq.s32.totalorder %s17, 1
    %p280 = por %p278, %p279
    %p281 = scmp.ne.s32.totalorder %s273, %s276
    %p282 = scmp.eq.s32.totalorder %s17, 0
    %p283 = por %p281, %p282
    %p284 = scmp.ne.s32.totalorder %s273, %s276
    %p285 = scmp.eq.s32.totalorder %s22, 1
    %p286 = por %p284, %p285
    %p287 = scmp.ne.s32.totalorder %s276, %s277
    %p288 = scmp.eq.s32.totalorder %s22, 0
    %p289 = por %p287, %p288
    %p290 = scmp.ne.s32.totalorder %s276, %s277
    %p291 = scmp.eq.s32.totalorder %s23, 1
    %p292 = por %p290, %p291
    %p294 = scmp.ne.s32.totalorder %s277, %s293
    %p295 = scmp.eq.s32.totalorder %s23, 0
    %p296 = por %p294, %p295
    %p297 = scmp.le.s32.totalorder 1, %s17
    %p298 = scmp.lt.s32.totalorder %s17, 3
    %p299 = pnand %p297, %p298
    %p300 = pneg %p299
    // Predicated region
    $region9: #{encoder_forward.14} parent=5 // pred_check
      _
    $region10: #{encoder_forward.14} parent=5 // pred_check_branch
      %302 = sbr.rel (%p299) target = $region12
    $region11: #{encoder_forward.14} parent=5 // pred_region
      %s303 = ssub.s32 %s17, 1
      // Predicated region
      $region13: #{encoder_forward.14} parent=11 // pred_check
        %p304 = pneg %p116
      $region14: #{encoder_forward.14} parent=11 // pred_check_branch
        %306 = sbr.rel (%p304) target = $region16
      $region15: #{encoder_forward.14} parent=11 // pred_region
        _
      $region16: #{encoder_forward.14} parent=11 // pred_fallthru
        _
      // Predicated region
      $region17: #{encoder_forward.14} parent=11 // pred_check
        %p307 = pneg %p137
      $region18: #{encoder_forward.14} parent=11 // pred_check_branch
        %309 = sbr.rel (%p307) target = $region20
      $region19: #{encoder_forward.14} parent=11 // pred_region
        _
      $region20: #{encoder_forward.14} parent=11 // pred_fallthru
        _
      // Predicated region
      $region21: #{encoder_forward.14} parent=11 // pred_check
        %p310 = pneg %p158
      $region22: #{encoder_forward.14} parent=11 // pred_check_branch
        %312 = sbr.rel (%p310) target = $region24
      $region23: #{encoder_forward.14} parent=11 // pred_region
        _
      $region24: #{encoder_forward.14} parent=11 // pred_fallthru
        _
      // Predicated region
      $region25: #{encoder_forward.14} parent=11 // pred_check
        %p313 = pneg %p179
      $region26: #{encoder_forward.14} parent=11 // pred_check_branch
        %315 = sbr.rel (%p313) target = $region28
      $region27: #{encoder_forward.14} parent=11 // pred_region
        _
      $region28: #{encoder_forward.14} parent=11 // pred_fallthru
        _
      // Predicated region
      $region29: #{encoder_forward.14} parent=11 // pred_check
        %p316 = pneg %p200
      $region30: #{encoder_forward.14} parent=11 // pred_check_branch
        %318 = sbr.rel (%p316) target = $region32
      $region31: #{encoder_forward.14} parent=11 // pred_region
        _
      $region32: #{encoder_forward.14} parent=11 // pred_fallthru
        _
      // Predicated region
      $region33: #{encoder_forward.14} parent=11 // pred_check
        %p319 = pneg %p221
      $region34: #{encoder_forward.14} parent=11 // pred_check_branch
        %321 = sbr.rel (%p319) target = $region36
      $region35: #{encoder_forward.14} parent=11 // pred_region
        _
      $region36: #{encoder_forward.14} parent=11 // pred_fallthru
        _
      // Predicated region
      $region37: #{encoder_forward.14} parent=11 // pred_check
        %p322 = pneg %p242
      $region38: #{encoder_forward.14} parent=11 // pred_check_branch
        %324 = sbr.rel (%p322) target = $region40
      $region39: #{encoder_forward.14} parent=11 // pred_region
        _
      $region40: #{encoder_forward.14} parent=11 // pred_fallthru
        _
      // Predicated region
      $region41: #{encoder_forward.14} parent=11 // pred_check
        %p325 = pneg %p263
      $region42: #{encoder_forward.14} parent=11 // pred_check_branch
        %327 = sbr.rel (%p325) target = $region44
      $region43: #{encoder_forward.14} parent=11 // pred_region
        _
      $region44: #{encoder_forward.14} parent=11 // pred_fallthru
        _
    $region12: #{encoder_forward.14} parent=5 // pred_fallthru
      _
    %p328 = scmp.lt.s32.totalorder %s17, 2
    // Predicated region
    $region45: #{encoder_forward.14} parent=5 // pred_check
      %p329 = pneg %p328
    $region46: #{encoder_forward.14} parent=5 // pred_check_branch
      %331 = sbr.rel (%p329) target = $region48
    $region47: #{encoder_forward.14} parent=5 // pred_region
      // Predicated region
      $region49: #{encoder_forward.14} parent=47 // pred_check
        %p332 = pneg %p37
      $region50: #{encoder_forward.14} parent=47 // pred_check_branch
        %334 = sbr.rel (%p332) target = $region52
      $region51: #{encoder_forward.14} parent=47 // pred_region
        %p335 = scmp.lt.s32.totalorder %s17, 1
        %s336 = scalar_select %p335, %s17, 1
        %s337 = smul.addr %s336, 8
        %s338 = smul.addr %s337, 4
        %s339 = scalar_lea.vmem %s0, %s338
      $region52: #{encoder_forward.14} parent=47 // pred_fallthru
        _
      // Predicated region
      $region53: #{encoder_forward.14} parent=47 // pred_check
        %p340 = pneg %p63
      $region54: #{encoder_forward.14} parent=47 // pred_check_branch
        %342 = sbr.rel (%p340) target = $region56
      $region55: #{encoder_forward.14} parent=47 // pred_region
        %p343 = scmp.lt.s32.totalorder %s17, 1
        %s344 = scalar_select %p343, %s17, 1
        %s345 = smul.addr %s344, 2
        %s346 = smul.addr %s345, 4
        %s347 = scalar_lea.vmem %s1, %s346
      $region56: #{encoder_forward.14} parent=47 // pred_fallthru
        _
      // Predicated region
      $region57: #{encoder_forward.14} parent=47 // pred_check
        %p348 = pneg %p89
      $region58: #{encoder_forward.14} parent=47 // pred_check_branch
        %350 = sbr.rel (%p348) target = $region60
      $region59: #{encoder_forward.14} parent=47 // pred_region
        %p351 = scmp.lt.s32.totalorder %s17, 1
        %s352 = scalar_select %p351, %s17, 1
        %s353 = smul.addr %s352, 8
        %s354 = smul.addr %s353, 4
        %s355 = scalar_lea.vmem %s2, %s354
      $region60: #{encoder_forward.14} parent=47 // pred_fallthru
        _
    $region48: #{encoder_forward.14} parent=5 // pred_fallthru
      _
    %p356 = scmp.le.s32.totalorder 1, %s17
    %p357 = scmp.lt.s32.totalorder %s17, 3
    %p358 = pnand %p356, %p357
    %p359 = pneg %p358
    // Predicated region
    $region61: #{encoder_forward.14} parent=5 // pred_check
      _
    $region62: #{encoder_forward.14} parent=5 // pred_check_branch
      %361 = sbr.rel (%p358) target = $region64
    $region63: #{encoder_forward.14} parent=5 // pred_region
      %s362 = ssub.s32 %s17, 1
      %p363 = scmp.lt.s32.totalorder %s22, 1
      %s364 = scalar_select %p363, %s22, 1
      %s365 = smul.addr %s364, 8
      %s366 = smul.addr %s365, 4
      %s367 = scalar_lea.vmem %s0, %s366
      %p368 = pneg %p43
      %p369 = pneg %p40
      %p370 = scmp.lt.s32.totalorder %s22, 1
      %s371 = scalar_select %p370, %s22, 1
      %s372 = smul.addr %s371, 2
      %s373 = smul.addr %s372, 4
      %s374 = scalar_lea.vmem %s1, %s373
      %p375 = pneg %p69
      %p376 = pneg %p66
      %p377 = scmp.lt.s32.totalorder %s22, 1
      %s378 = scalar_select %p377, %s22, 1
      %s379 = smul.addr %s378, 8
      %s380 = smul.addr %s379, 4
      %s381 = scalar_lea.vmem %s2, %s380
      %p382 = pneg %p95
      %p383 = pneg %p92
      %p384 = pneg %p116
      %p385 = pneg %p113
      %p386 = pneg %p137
      %p387 = pneg %p134
      %p388 = pneg %p158
      %p389 = pneg %p155
      %p390 = pneg %p179
      %p391 = pneg %p176
      %p392 = pneg %p200
      %p393 = pneg %p197
      %p394 = pneg %p221
      %p395 = pneg %p218
      %p396 = pneg %p242
      %p397 = pneg %p239
      %p398 = pneg %p263
      %p399 = pneg %p260
      %p400 = pneg %p289
      %p401 = pneg %p286
      %p402 = scmp.lt.s32.totalorder %s22, 1
      %s403 = scalar_select %p402, %s22, 1
      %s404 = smul.addr %s403, 8
      %s405 = smul.addr %s404, 4
      %s406 = scalar_lea.vmem %s11, %s405
      %p407 = scmp.lt.s32.totalorder %s22, 1
      %s408 = scalar_select %p407, %s22, 1
      %s409 = smul.addr %s408, 8
      %s410 = smul.addr %s409, 4
      %s411 = scalar_lea.vmem %s0, %s410
      %p412 = scmp.lt.s32.totalorder %s22, 1
      %s413 = scalar_select %p412, %s22, 1
      %s414 = smul.addr %s413, 2
      %s415 = smul.addr %s414, 4
      %s416 = scalar_lea.vmem %s1, %s415
      %p417 = scmp.lt.s32.totalorder %s22, 1
      %s418 = scalar_select %p417, %s22, 1
      %s419 = smul.addr %s418, 8
      %s420 = smul.addr %s419, 4
      %s421 = scalar_lea.vmem %s2, %s420
      %p422 = scmp.lt.s32.totalorder %s22, 1
      %s423 = scalar_select %p422, %s22, 1
      %s424 = smul.addr %s423, 8
      %s425 = smul.addr %s424, 4
      %s426 = scalar_lea.vmem %s11, %s425
      %v428 = vld [vmem:[%s411] sm:$0xf]
      %v429 = vld [vmem:[%s411 + $0x4] sm:$0xf]
      %v430 = vld [vmem:[%s411 + $0x8] sm:$0xf]
      %v431 = vld [vmem:[%s411 + $0xc] sm:$0xf]
      %v432 = vld [vmem:[%s411 + $0x10] sm:$0xf]
      %v433 = vld [vmem:[%s411 + $0x14] sm:$0xf]
      %v434 = vld [vmem:[%s411 + $0x18] sm:$0xf]
      %v435 = vld [vmem:[%s411 + $0x1c] sm:$0xf]
      %v436 = vld [vmem:[%s416] sm:$0xf]
      %v437 = vld [vmem:[%s416 + $0x4] sm:$0xf]
      %v438 = vld [vmem:[%s3] sm:$0xf]
      %v439 = vld [vmem:[%s3 + $0x4] sm:$0xf]
      %v440 = vld [vmem:[%s7] sm:$0x1]
      %v442 = vlaneseq
      %v443 = vshrl.u32 %v442, 7
      %v444 = vsub.s32 0, %v443
      %v445 = vrot.slane %v440, %v444
      %v455 = vunpack.c.l.b16 %v428
      %v456 = vunpack.c.l.b16 %v429
      %v457 = vunpack.c.l.b16 %v430
      %v458 = vunpack.c.l.b16 %v431
      %v459 = vunpack.c.l.b16 %v432
      %v460 = vunpack.c.l.b16 %v433
      %v461 = vunpack.c.l.b16 %v434
      %v462 = vunpack.c.l.b16 %v435
      %v463 = vpack.c.b16 %v456, %v455
      %v464 = vpack.c.b16 %v458, %v457
      %v465 = vpack.c.b16 %v460, %v459
      %v466 = vpack.c.b16 %v462, %v461
      %v469 = vunpack.c.l.b16 %v438
      %v470 = vunpack.c.l.b16 %v439
      %v471 = vpack.c.b16 %v470, %v469
      %vm473 = vcmask 130048
      %v475 = vsel %vm473, %v463, 0
      %v478 = vsel %vm473, %v464, 0
      %v481 = vsel %vm473, %v465, 0
      %v484 = vsel %vm473, %v466, 0
      %486 = vmatprep.subr.bf16.mxu0 0
      %487 = vmatpush1.bf16.msra.mxu0 %v471
      %488 = vmatprep.subr.bf16.mxu0 0
      %489 = vmatpush1.bf16.msra.mxu0 0
      %490 = vmatprep.subr.bf16.mxu0 0
      %491 = vmatpush1.bf16.msra.mxu0 0
      %492 = vmatprep.subr.bf16.mxu0 0
      %493 = vmatpush1.bf16.msra.mxu0 0
      %494 = vmatprep.subr.bf16.mxu0 0
      %495 = vmatpush1.bf16.msra.mxu0 0
      %496 = vmatprep.subr.bf16.mxu0 0
      %497 = vmatpush1.bf16.msra.mxu0 0
      %498 = vmatprep.subr.bf16.mxu0 0
      %499 = vmatpush1.bf16.msra.mxu0 0
      %500 = vmatprep.subr.bf16.mxu0 0
      %501 = vmatpush1.bf16.msra.mxu0 0
      %502 = vmatprep.subr.bf16.mxu0 0
      %503 = vmatpush1.bf16.msra.mxu0 0
      %504 = vmatprep.subr.bf16.mxu0 0
      %505 = vmatpush1.bf16.msra.mxu0 0
      %506 = vmatprep.subr.bf16.mxu0 0
      %507 = vmatpush1.bf16.msra.mxu0 0
      %508 = vmatprep.subr.bf16.mxu0 0
      %509 = vmatpush1.bf16.msra.mxu0 0
      %510 = vmatprep.subr.bf16.mxu0 0
      %511 = vmatpush1.bf16.msra.mxu0 0
      %512 = vmatprep.subr.bf16.mxu0 0
      %513 = vmatpush1.bf16.msra.mxu0 0
      %514 = vmatprep.subr.bf16.mxu0 0
      %515 = vmatpush1.bf16.msra.mxu0 0
      %516 = vmatprep.subr.bf16.mxu0 0
      %517 = vmatpush1.bf16.msra.mxu0 0
      %518 = vmatprep.mubr.bf16.mxu0 0
      %519 = vmatmul.mubr.bf16.gmra.mrb[0].mxu0 %v475
      %v520 = vpop.f32.mrb[0].mxu0
      %v521 = vadd.f32 %v445, %v520
      %v522 = vpop.f32.mrb[0].mxu0
      %v523 = vpop.f32.mrb[0].mxu0
      %v524 = vadd.f32 %v445, %v523
      %v525 = vpop.f32.mrb[0].mxu0
      %526 = vmatprep.mubr.bf16.mxu0 0
      %527 = vmatmul.mubr.bf16.gmra.mrb[0].mxu0 %v478
      %v528 = vpop.f32.mrb[0].mxu0
      %v529 = vadd.f32 %v445, %v528
      %v530 = vpop.f32.mrb[0].mxu0
      %v531 = vpop.f32.mrb[0].mxu0
      %v532 = vadd.f32 %v445, %v531
      %v533 = vpop.f32.mrb[0].mxu0
      %534 = vmatprep.mubr.bf16.mxu0 0
      %535 = vmatmul.mubr.bf16.gmra.mrb[0].mxu0 %v481
      %v536 = vpop.f32.mrb[0].mxu0
      %v537 = vadd.f32 %v445, %v536
      %v538 = vpop.f32.mrb[0].mxu0
      %v539 = vpop.f32.mrb[0].mxu0
      %v540 = vadd.f32 %v445, %v539
      %v541 = vpop.f32.mrb[0].mxu0
      %542 = vmatprep.mubr.bf16.mxu0 0
      %543 = vmatmul.mubr.bf16.gmra.mrb[0].mxu0 %v484
      %v544 = vpop.f32.mrb[0].mxu0
      %v545 = vadd.f32 %v445, %v544
      %v546 = vpop.f32.mrb[0].mxu0
      %v547 = vpop.f32.mrb[0].mxu0
      %v548 = vadd.f32 %v445, %v547
      %v549 = vpop.f32.mrb[0].mxu0
      %550 = vdwg.mxu0
      %v551 = vld [vmem:[%s4] sm:$0xf]
      %v552 = vld [vmem:[%s4 + $0x4] sm:$0xf]
      %v553 = vld [vmem:[%s8] sm:$0xff]
      %v554 = vld [vmem:[%s8 + $0x8] sm:$0xff]
      %556 = vset.pattern.permute.xlu0 0
      %557 = vperm.xlu0 %556, %v553
      %v558 = vpop.permute.xlu0 %557
      %561 = vset.pattern.permute.xlu0 0
      %562 = vperm.xlu0 %561, %v554
      %v563 = vpop.permute.xlu0 %562
      %v567 = vunpack.c.l.b16 %v551
      %v568 = vunpack.c.l.b16 %v552
      %v569 = vpack.c.b16 %v568, %v567
      %v572 = vunpack.c.l.b16 %v436
      %v573 = vunpack.c.l.b16 %v437
      %v574 = vpack.c.b16 %v573, %v572
      %v577 = vsel %vm473, %v569, 0
      %579 = vmatprep.subr.bf16.mxu0 0
      %580 = vmatpush1.bf16.msra.mxu0 %v574
      %581 = vmatprep.subr.bf16.mxu0 0
      %582 = vmatpush1.bf16.msra.mxu0 0
      %583 = vmatprep.subr.bf16.mxu0 0
      %584 = vmatpush1.bf16.msra.mxu0 0
      %585 = vmatprep.subr.bf16.mxu0 0
      %586 = vmatpush1.bf16.msra.mxu0 0
      %587 = vmatprep.subr.bf16.mxu0 0
      %588 = vmatpush1.bf16.msra.mxu0 0
      %589 = vmatprep.subr.bf16.mxu0 0
      %590 = vmatpush1.bf16.msra.mxu0 0
      %591 = vmatprep.subr.bf16.mxu0 0
      %592 = vmatpush1.bf16.msra.mxu0 0
      %593 = vmatprep.subr.bf16.mxu0 0
      %594 = vmatpush1.bf16.msra.mxu0 0
      %595 = vmatprep.subr.bf16.mxu0 0
      %596 = vmatpush1.bf16.msra.mxu0 0
      %597 = vmatprep.subr.bf16.mxu0 0
      %598 = vmatpush1.bf16.msra.mxu0 0
      %599 = vmatprep.subr.bf16.mxu0 0
      %600 = vmatpush1.bf16.msra.mxu0 0
      %601 = vmatprep.subr.bf16.mxu0 0
      %602 = vmatpush1.bf16.msra.mxu0 0
      %603 = vmatprep.subr.bf16.mxu0 0
      %604 = vmatpush1.bf16.msra.mxu0 0
      %605 = vmatprep.subr.bf16.mxu0 0
      %606 = vmatpush1.bf16.msra.mxu0 0
      %607 = vmatprep.subr.bf16.mxu0 0
      %608 = vmatpush1.bf16.msra.mxu0 0
      %609 = vmatprep.subr.bf16.mxu0 0
      %610 = vmatpush1.bf16.msra.mxu0 0
      %611 = vmatprep.mubr.bf16.mxu0 0
      %612 = vmatmul.mubr.bf16.gmra.mrb[0].mxu0 %v577
      %v613 = vpop.f32.mrb[0].mxu0
      %v614 = vadd.f32 %v558, %v613
      %v615 = vpop.f32.mrb[0].mxu0
      %v616 = vpop.f32.mrb[0].mxu0
      %v617 = vadd.f32 %v563, %v616
      %v618 = vpop.f32.mrb[0].mxu0
      %619 = vdwg.mxu0
      %v620 = vld [vmem:[%s5] sm:$0xf]
      %v621 = vld [vmem:[%s5 + $0x4] sm:$0xf]
      %v622 = vld [vmem:[%s9] sm:$0x1]
      %v624 = vlaneseq
      %v625 = vshrl.u32 %v624, 7
      %v626 = vsub.s32 0, %v625
      %v627 = vrot.slane %v622, %v626
      %v631 = vunpack.c.l.b16 %v620
      %v632 = vunpack.c.l.b16 %v621
      %v633 = vpack.c.b16 %v632, %v631
      %635 = vmatprep.subr.bf16.mxu0 0
      %636 = vmatpush1.bf16.msra.mxu0 %v633
      %637 = vmatprep.subr.bf16.mxu0 0
      %638 = vmatpush1.bf16.msra.mxu0 0
      %639 = vmatprep.subr.bf16.mxu0 0
      %640 = vmatpush1.bf16.msra.mxu0 0
      %641 = vmatprep.subr.bf16.mxu0 0
      %642 = vmatpush1.bf16.msra.mxu0 0
      %643 = vmatprep.subr.bf16.mxu0 0
      %644 = vmatpush1.bf16.msra.mxu0 0
      %645 = vmatprep.subr.bf16.mxu0 0
      %646 = vmatpush1.bf16.msra.mxu0 0
      %647 = vmatprep.subr.bf16.mxu0 0
      %648 = vmatpush1.bf16.msra.mxu0 0
      %649 = vmatprep.subr.bf16.mxu0 0
      %650 = vmatpush1.bf16.msra.mxu0 0
      %651 = vmatprep.subr.bf16.mxu0 0
      %652 = vmatpush1.bf16.msra.mxu0 0
      %653 = vmatprep.subr.bf16.mxu0 0
      %654 = vmatpush1.bf16.msra.mxu0 0
      %655 = vmatprep.subr.bf16.mxu0 0
      %656 = vmatpush1.bf16.msra.mxu0 0
      %657 = vmatprep.subr.bf16.mxu0 0
      %658 = vmatpush1.bf16.msra.mxu0 0
      %659 = vmatprep.subr.bf16.mxu0 0
      %660 = vmatpush1.bf16.msra.mxu0 0
      %661 = vmatprep.subr.bf16.mxu0 0
      %662 = vmatpush1.bf16.msra.mxu0 0
      %663 = vmatprep.subr.bf16.mxu0 0
      %664 = vmatpush1.bf16.msra.mxu0 0
      %665 = vmatprep.subr.bf16.mxu0 0
      %666 = vmatpush1.bf16.msra.mxu0 0
      %667 = vmatprep.mubr.bf16.mxu0 0
      %668 = vmatmul.mubr.bf16.gmra.mrb[0].mxu0 %v475
      %v669 = vpop.f32.mrb[0].mxu0
      %v670 = vadd.f32 %v627, %v669
      %v671 = vpop.f32.mrb[0].mxu0
      %v672 = vpop.f32.mrb[0].mxu0
      %v673 = vadd.f32 %v627, %v672
      %v674 = vpop.f32.mrb[0].mxu0
      %675 = vmatprep.mubr.bf16.mxu0 0
      %676 = vmatmul.mubr.bf16.gmra.mrb[0].mxu0 %v478
      %v677 = vpop.f32.mrb[0].mxu0
      %v678 = vadd.f32 %v627, %v677
      %v679 = vpop.f32.mrb[0].mxu0
      %v680 = vpop.f32.mrb[0].mxu0
      %v681 = vadd.f32 %v627, %v680
      %v682 = vpop.f32.mrb[0].mxu0
      %683 = vmatprep.mubr.bf16.mxu0 0
      %684 = vmatmul.mubr.bf16.gmra.mrb[0].mxu0 %v481
      %v685 = vpop.f32.mrb[0].mxu0
      %v686 = vadd.f32 %v627, %v685
      %v687 = vpop.f32.mrb[0].mxu0
      %v688 = vpop.f32.mrb[0].mxu0
      %v689 = vadd.f32 %v627, %v688
      %v690 = vpop.f32.mrb[0].mxu0
      %691 = vmatprep.mubr.bf16.mxu0 0
      %692 = vmatmul.mubr.bf16.gmra.mrb[0].mxu0 %v484
      %v693 = vpop.f32.mrb[0].mxu0
      %v694 = vadd.f32 %v627, %v693
      %v695 = vpop.f32.mrb[0].mxu0
      %v696 = vpop.f32.mrb[0].mxu0
      %v697 = vadd.f32 %v627, %v696
      %v698 = vpop.f32.mrb[0].mxu0
      %699 = vdwg.mxu0
      %v700 = vpack.c.bf16 %v524, %v521
      %v701 = vpack.c.bf16 %v532, %v529
      %v702 = vpack.c.bf16 %v540, %v537
      %v703 = vpack.c.bf16 %v548, %v545
      %v704 = vpack.c.bf16 %v617, %v614
      %v706 = vsel %vm473, %v700, 0
      %v709 = vsel %vm473, %v701, 0
      %v712 = vsel %vm473, %v702, 0
      %v715 = vsel %vm473, %v703, 0
      %717 = vmatprep.subr.bf16.mxu0 0
      %718 = vmatpush1.bf16.msra.mxu0 %v704
      %719 = vmatprep.subr.bf16.mxu0 0
      %720 = vmatpush1.bf16.msra.mxu0 0
      %721 = vmatprep.subr.bf16.mxu0 0
      %722 = vmatpush1.bf16.msra.mxu0 0
      %723 = vmatprep.subr.bf16.mxu0 0
      %724 = vmatpush1.bf16.msra.mxu0 0
      %725 = vmatprep.subr.bf16.mxu0 0
      %726 = vmatpush1.bf16.msra.mxu0 0
      %727 = vmatprep.subr.bf16.mxu0 0
      %728 = vmatpush1.bf16.msra.mxu0 0
      %729 = vmatprep.subr.bf16.mxu0 0
      %730 = vmatpush1.bf16.msra.mxu0 0
      %731 = vmatprep.subr.bf16.mxu0 0
      %732 = vmatpush1.bf16.msra.mxu0 0
      %733 = vmatprep.subr.bf16.mxu0 0
      %734 = vmatpush1.bf16.msra.mxu0 0
      %735 = vmatprep.subr.bf16.mxu0 0
      %736 = vmatpush1.bf16.msra.mxu0 0
      %737 = vmatprep.subr.bf16.mxu0 0
      %738 = vmatpush1.bf16.msra.mxu0 0
      %739 = vmatprep.subr.bf16.mxu0 0
      %740 = vmatpush1.bf16.msra.mxu0 0
      %741 = vmatprep.subr.bf16.mxu0 0
      %742 = vmatpush1.bf16.msra.mxu0 0
      %743 = vmatprep.subr.bf16.mxu0 0
      %744 = vmatpush1.bf16.msra.mxu0 0
      %745 = vmatprep.subr.bf16.mxu0 0
      %746 = vmatpush1.bf16.msra.mxu0 0
      %747 = vmatprep.subr.bf16.mxu0 0
      %748 = vmatpush1.bf16.msra.mxu0 0
      %749 = vmatprep.mubr.bf16.mxu0 0
      %750 = vmatmul.mubr.bf16.gmra.mrb[0].mxu0 %v706
      %v751 = vpop.f32.mrb[0].mxu0
      %v752 = vadd.f32 0.0, %v751
      %v753 = vpop.f32.mrb[0].mxu0
      %v754 = vpop.f32.mrb[0].mxu0
      %v755 = vadd.f32 0.0, %v754
      %v756 = vpop.f32.mrb[0].mxu0
      %757 = vmatprep.mubr.bf16.mxu0 0
      %758 = vmatmul.mubr.bf16.gmra.mrb[0].mxu0 %v709
      %v759 = vpop.f32.mrb[0].mxu0
      %v760 = vadd.f32 0.0, %v759
      %v761 = vpop.f32.mrb[0].mxu0
      %v762 = vpop.f32.mrb[0].mxu0
      %v763 = vadd.f32 0.0, %v762
      %v764 = vpop.f32.mrb[0].mxu0
      %765 = vmatprep.mubr.bf16.mxu0 0
      %766 = vmatmul.mubr.bf16.gmra.mrb[0].mxu0 %v712
      %v767 = vpop.f32.mrb[0].mxu0
      %v768 = vadd.f32 0.0, %v767
      %v769 = vpop.f32.mrb[0].mxu0
      %v770 = vpop.f32.mrb[0].mxu0
      %v771 = vadd.f32 0.0, %v770
      %v772 = vpop.f32.mrb[0].mxu0
      %773 = vmatprep.mubr.bf16.mxu0 0
      %774 = vmatmul.mubr.bf16.gmra.mrb[0].mxu0 %v715
      %v775 = vpop.f32.mrb[0].mxu0
      %v776 = vadd.f32 0.0, %v775
      %v777 = vpop.f32.mrb[0].mxu0
      %v778 = vpop.f32.mrb[0].mxu0
      %v779 = vadd.f32 0.0, %v778
      %v780 = vpop.f32.mrb[0].mxu0
      %781 = vdwg.mxu0
      %v782 = vmul.f32 %v752, 0.25
      %v783 = vmul.f32 %v755, 0.25
      %v784 = vmul.f32 %v760, 0.25
      %v785 = vmul.f32 %v763, 0.25
      %v786 = vmul.f32 %v768, 0.25
      %v787 = vmul.f32 %v771, 0.25
      %v788 = vmul.f32 %v776, 0.25
      %v789 = vmul.f32 %v779, 0.25
      %vm790 = vcmask 523264
      %v791 = vsel %vm790, %v782, -inf
      %792 = vmax.xlane.f32.xlu0 %v791
      %v793 = vpop.xlane.xlu0 %792
      %v794 = vsel %vm790, %v783, -inf
      %795 = vmax.xlane.f32.xlu0 %v794
      %v796 = vpop.xlane.xlu0 %795
      %v797 = vsel %vm790, %v784, -inf
      %798 = vmax.xlane.f32.xlu0 %v797
      %v799 = vpop.xlane.xlu0 %798
      %v800 = vsel %vm790, %v785, -inf
      %801 = vmax.xlane.f32.xlu0 %v800
      %v802 = vpop.xlane.xlu0 %801
      %v803 = vsel %vm790, %v786, -inf
      %804 = vmax.xlane.f32.xlu0 %v803
      %v805 = vpop.xlane.xlu0 %804
      %v806 = vsel %vm790, %v787, -inf
      %807 = vmax.xlane.f32.xlu0 %v806
      %v808 = vpop.xlane.xlu0 %807
      %v809 = vsel %vm790, %v788, -inf
      %810 = vmax.xlane.f32.xlu0 %v809
      %v811 = vpop.xlane.xlu0 %810
      %v812 = vsel %vm790, %v789, -inf
      %813 = vmax.xlane.f32.xlu0 %v812
      %v814 = vpop.xlane.xlu0 %813
      %v815 = vsub.f32 %v782, %v793
      %v816 = vsub.f32 %v783, %v796
      %v817 = vsub.f32 %v784, %v799
      %v818 = vsub.f32 %v785, %v802
      %v819 = vsub.f32 %v786, %v805
      %v820 = vsub.f32 %v787, %v808
      %v821 = vsub.f32 %v788, %v811
      %v822 = vsub.f32 %v789, %v814
      %v823 = vmul.f32 %v815, 1.442695
      %v824 = vpow.pop %v823
      %v825 = vmul.f32 %v816, 1.442695
      %v826 = vpow.pop %v825
      %v827 = vmul.f32 %v817, 1.442695
      %v828 = vpow.pop %v827
      %v829 = vmul.f32 %v818, 1.442695
      %v830 = vpow.pop %v829
      %v831 = vmul.f32 %v819, 1.442695
      %v832 = vpow.pop %v831
      %v833 = vmul.f32 %v820, 1.442695
      %v834 = vpow.pop %v833
      %v835 = vmul.f32 %v821, 1.442695
      %v836 = vpow.pop %v835
      %v837 = vmul.f32 %v822, 1.442695
      %v838 = vpow.pop %v837
      %v839 = vsel %vm790, %v824, 0.0
      %840 = vadd.xlane.f32.xlu0 %v839
      %v841 = vpop.xlane.xlu0 %840
      %v842 = vsel %vm790, %v826, 0.0
      %843 = vadd.xlane.f32.xlu0 %v842
      %v844 = vpop.xlane.xlu0 %843
      %v845 = vsel %vm790, %v828, 0.0
      %846 = vadd.xlane.f32.xlu0 %v845
      %v847 = vpop.xlane.xlu0 %846
      %v848 = vsel %vm790, %v830, 0.0
      %849 = vadd.xlane.f32.xlu0 %v848
      %v850 = vpop.xlane.xlu0 %849
      %v851 = vsel %vm790, %v832, 0.0
      %852 = vadd.xlane.f32.xlu0 %v851
      %v853 = vpop.xlane.xlu0 %852
      %v854 = vsel %vm790, %v834, 0.0
      %855 = vadd.xlane.f32.xlu0 %v854
      %v856 = vpop.xlane.xlu0 %855
      %v857 = vsel %vm790, %v836, 0.0
      %858 = vadd.xlane.f32.xlu0 %v857
      %v859 = vpop.xlane.xlu0 %858
      %v860 = vsel %vm790, %v838, 0.0
      %861 = vadd.xlane.f32.xlu0 %v860
      %v862 = vpop.xlane.xlu0 %861
      %v863 = vpack.c.bf16 %v826, %v824
      %v864 = vpack.c.bf16 %v830, %v828
      %v865 = vpack.c.bf16 %v834, %v832
      %v866 = vpack.c.bf16 %v838, %v836
      %v867 = vpack.c.bf16 %v673, %v670
      %v868 = vpack.c.bf16 %v681, %v678
      %v869 = vpack.c.bf16 %v689, %v686
      %v870 = vpack.c.bf16 %v697, %v694
      %v872 = vsel %vm790, %v863, 0
      %v875 = vsel %vm790, %v864, 0
      %v878 = vsel %vm790, %v865, 0
      %v881 = vsel %vm790, %v866, 0
      %883 = vmatprep.subr.bf16.mxu0 0
      %884 = vmatpush1.bf16.msra.mxu0 %v867
      %885 = vmatprep.subr.bf16.mxu0 0
      %886 = vmatpush1.bf16.msra.mxu0 %v868
      %887 = vmatprep.subr.bf16.mxu0 0
      %888 = vmatpush1.bf16.msra.mxu0 %v869
      %889 = vmatprep.subr.bf16.mxu0 0
      %890 = vmatpush1.bf16.msra.mxu0 %v870
      %891 = vmatprep.subr.bf16.mxu0 0
      %892 = vmatpush1.bf16.msra.mxu0 0
      %893 = vmatprep.subr.bf16.mxu0 0
      %894 = vmatpush1.bf16.msra.mxu0 0
      %895 = vmatprep.subr.bf16.mxu0 0
      %896 = vmatpush1.bf16.msra.mxu0 0
      %897 = vmatprep.subr.bf16.mxu0 0
      %898 = vmatpush1.bf16.msra.mxu0 0
      %899 = vmatprep.subr.bf16.mxu0 0
      %900 = vmatpush1.bf16.msra.mxu0 0
      %901 = vmatprep.subr.bf16.mxu0 0
      %902 = vmatpush1.bf16.msra.mxu0 0
      %903 = vmatprep.subr.bf16.mxu0 0
      %904 = vmatpush1.bf16.msra.mxu0 0
      %905 = vmatprep.subr.bf16.mxu0 0
      %906 = vmatpush1.bf16.msra.mxu0 0
      %907 = vmatprep.subr.bf16.mxu0 0
      %908 = vmatpush1.bf16.msra.mxu0 0
      %909 = vmatprep.subr.bf16.mxu0 0
      %910 = vmatpush1.bf16.msra.mxu0 0
      %911 = vmatprep.subr.bf16.mxu0 0
      %912 = vmatpush1.bf16.msra.mxu0 0
      %913 = vmatprep.subr.bf16.mxu0 0
      %914 = vmatpush1.bf16.msra.mxu0 0
      %915 = vmatprep.mubr.bf16.mxu0 0
      %916 = vmatmul.mubr.bf16.gmra.mrb[0].mxu0 %v872
      %v917 = vpop.f32.mrb[0].mxu0
      %v918 = vadd.f32 0.0, %v917
      %v919 = vpop.f32.mrb[0].mxu0
      %v920 = vpop.f32.mrb[0].mxu0
      %v921 = vadd.f32 0.0, %v920
      %v922 = vpop.f32.mrb[0].mxu0
      %923 = vmatprep.mubr.bf16.mxu0 0
      %924 = vmatmul.mubr.bf16.gmra.mrb[0].mxu0 %v875
      %v925 = vpop.f32.mrb[0].mxu0
      %v926 = vadd.f32 0.0, %v925
      %v927 = vpop.f32.mrb[0].mxu0
      %v928 = vpop.f32.mrb[0].mxu0
      %v929 = vadd.f32 0.0, %v928
      %v930 = vpop.f32.mrb[0].mxu0
      %931 = vmatprep.mubr.bf16.mxu0 0
      %932 = vmatmul.mubr.bf16.gmra.mrb[0].mxu0 %v878
      %v933 = vpop.f32.mrb[0].mxu0
      %v934 = vadd.f32 0.0, %v933
      %v935 = vpop.f32.mrb[0].mxu0
      %v936 = vpop.f32.mrb[0].mxu0
      %v937 = vadd.f32 0.0, %v936
      %v938 = vpop.f32.mrb[0].mxu0
      %939 = vmatprep.mubr.bf16.mxu0 0
      %940 = vmatmul.mubr.bf16.gmra.mrb[0].mxu0 %v881
      %v941 = vpop.f32.mrb[0].mxu0
      %v942 = vadd.f32 0.0, %v941
      %v943 = vpop.f32.mrb[0].mxu0
      %v944 = vpop.f32.mrb[0].mxu0
      %v945 = vadd.f32 0.0, %v944
      %v946 = vpop.f32.mrb[0].mxu0
      %947 = vdwg.mxu0
      %v948 = vrcp.pop %v841
      %v949 = vmul.f32 %v918, %v948
      %v950 = vrcp.pop %v844
      %v951 = vmul.f32 %v921, %v950
      %v952 = vrcp.pop %v847
      %v953 = vmul.f32 %v926, %v952
      %v954 = vrcp.pop %v850
      %v955 = vmul.f32 %v929, %v954
      %v956 = vrcp.pop %v853
      %v957 = vmul.f32 %v934, %v956
      %v958 = vrcp.pop %v856
      %v959 = vmul.f32 %v937, %v958
      %v960 = vrcp.pop %v859
      %v961 = vmul.f32 %v942, %v960
      %v962 = vrcp.pop %v862
      %v963 = vmul.f32 %v945, %v962
      %v964 = vpack.c.bf16 %v951, %v949
      %v965 = vpack.c.bf16 %v955, %v953
      %v966 = vpack.c.bf16 %v959, %v957
      %v967 = vpack.c.bf16 %v963, %v961
      %v968 = vld [vmem:[%s6] sm:$0xf]
      %v969 = vld [vmem:[%s6 + $0x4] sm:$0xf]
      %v970 = vld [vmem:[%s10] sm:$0x1]
      %v972 = vlaneseq
      %v973 = vshrl.u32 %v972, 7
      %v974 = vsub.s32 0, %v973
      %v975 = vrot.slane %v970, %v974
      %v979 = vunpack.c.l.b16 %v968
      %v980 = vunpack.c.l.b16 %v969
      %v981 = vpack.c.b16 %v980, %v979
      %v984 = vsel %vm473, %v964, 0
      %v987 = vsel %vm473, %v965, 0
      %v990 = vsel %vm473, %v966, 0
      %v993 = vsel %vm473, %v967, 0
      %995 = vmatprep.subr.bf16.mxu0 0
      %996 = vmatpush1.bf16.msra.mxu0 %v981
      %997 = vmatprep.subr.bf16.mxu0 0
      %998 = vmatpush1.bf16.msra.mxu0 0
      %999 = vmatprep.subr.bf16.mxu0 0
      %1000 = vmatpush1.bf16.msra.mxu0 0
      %1001 = vmatprep.subr.bf16.mxu0 0
      %1002 = vmatpush1.bf16.msra.mxu0 0
      %1003 = vmatprep.subr.bf16.mxu0 0
      %1004 = vmatpush1.bf16.msra.mxu0 0
      %1005 = vmatprep.subr.bf16.mxu0 0
      %1006 = vmatpush1.bf16.msra.mxu0 0
      %1007 = vmatprep.subr.bf16.mxu0 0
      %1008 = vmatpush1.bf16.msra.mxu0 0
      %1009 = vmatprep.subr.bf16.mxu0 0
      %1010 = vmatpush1.bf16.msra.mxu0 0
      %1011 = vmatprep.subr.bf16.mxu0 0
      %1012 = vmatpush1.bf16.msra.mxu0 0
      %1013 = vmatprep.subr.bf16.mxu0 0
      %1014 = vmatpush1.bf16.msra.mxu0 0
      %1015 = vmatprep.subr.bf16.mxu0 0
      %1016 = vmatpush1.bf16.msra.mxu0 0
      %1017 = vmatprep.subr.bf16.mxu0 0
      %1018 = vmatpush1.bf16.msra.mxu0 0
      %1019 = vmatprep.subr.bf16.mxu0 0
      %1020 = vmatpush1.bf16.msra.mxu0 0
      %1021 = vmatprep.subr.bf16.mxu0 0
      %1022 = vmatpush1.bf16.msra.mxu0 0
      %1023 = vmatprep.subr.bf16.mxu0 0
      %1024 = vmatpush1.bf16.msra.mxu0 0
      %1025 = vmatprep.subr.bf16.mxu0 0
      %1026 = vmatpush1.bf16.msra.mxu0 0
      %1027 = vmatprep.mubr.bf16.mxu0 0
      %1028 = vmatmul.mubr.bf16.gmra.mrb[0].mxu0 %v984
      %v1029 = vpop.f32.mrb[0].mxu0
      %v1030 = vadd.f32 %v975, %v1029
      %v1031 = vpop.f32.mrb[0].mxu0
      %v1032 = vpop.f32.mrb[0].mxu0
      %v1033 = vadd.f32 %v975, %v1032
      %v1034 = vpop.f32.mrb[0].mxu0
      %1035 = vmatprep.mubr.bf16.mxu0 0
      %1036 = vmatmul.mubr.bf16.gmra.mrb[0].mxu0 %v987
      %v1037 = vpop.f32.mrb[0].mxu0
      %v1038 = vadd.f32 %v975, %v1037
      %v1039 = vpop.f32.mrb[0].mxu0
      %v1040 = vpop.f32.mrb[0].mxu0
      %v1041 = vadd.f32 %v975, %v1040
      %v1042 = vpop.f32.mrb[0].mxu0
      %1043 = vmatprep.mubr.bf16.mxu0 0
      %1044 = vmatmul.mubr.bf16.gmra.mrb[0].mxu0 %v990
      %v1045 = vpop.f32.mrb[0].mxu0
      %v1046 = vadd.f32 %v975, %v1045
      %v1047 = vpop.f32.mrb[0].mxu0
      %v1048 = vpop.f32.mrb[0].mxu0
      %v1049 = vadd.f32 %v975, %v1048
      %v1050 = vpop.f32.mrb[0].mxu0
      %1051 = vmatprep.mubr.bf16.mxu0 0
      %1052 = vmatmul.mubr.bf16.gmra.mrb[0].mxu0 %v993
      %v1053 = vpop.f32.mrb[0].mxu0
      %v1054 = vadd.f32 %v975, %v1053
      %v1055 = vpop.f32.mrb[0].mxu0
      %v1056 = vpop.f32.mrb[0].mxu0
      %v1057 = vadd.f32 %v975, %v1056
      %v1058 = vpop.f32.mrb[0].mxu0
      %1059 = vdwg.mxu0
      %v1060 = vld [vmem:[%s421] sm:$0xf]
      %v1061 = vld [vmem:[%s421 + $0x4] sm:$0xf]
      %v1062 = vld [vmem:[%s421 + $0x8] sm:$0xf]
      %v1063 = vld [vmem:[%s421 + $0xc] sm:$0xf]
      %v1064 = vld [vmem:[%s421 + $0x10] sm:$0xf]
      %v1065 = vld [vmem:[%s421 + $0x14] sm:$0xf]
      %v1066 = vld [vmem:[%s421 + $0x18] sm:$0xf]
      %v1067 = vld [vmem:[%s421 + $0x1c] sm:$0xf]
      %v1068 = vunpack.c.l.bf16 %v1060
      %v1069 = vunpack.c.l.bf16 %v1061
      %v1070 = vunpack.c.l.bf16 %v1062
      %v1071 = vunpack.c.l.bf16 %v1063
      %v1072 = vunpack.c.l.bf16 %v1064
      %v1073 = vunpack.c.l.bf16 %v1065
      %v1074 = vunpack.c.l.bf16 %v1066
      %v1075 = vunpack.c.l.bf16 %v1067
      %v1076 = vadd.f32 %v1030, %v1068
      %v1077 = vadd.f32 %v1033, %v1069
      %v1078 = vadd.f32 %v1038, %v1070
      %v1079 = vadd.f32 %v1041, %v1071
      %v1080 = vadd.f32 %v1046, %v1072
      %v1081 = vadd.f32 %v1049, %v1073
      %v1082 = vadd.f32 %v1054, %v1074
      %v1083 = vadd.f32 %v1057, %v1075
      %v1084 = vpack.c.bf16 %v1077, %v1076
      %v1085 = vpack.c.bf16 %v1079, %v1078
      %v1086 = vpack.c.bf16 %v1081, %v1080
      %v1087 = vpack.c.bf16 %v1083, %v1082
      %v1092 = vunpack.c.l.b16 %v1084
      %v1093 = vunpack.c.h.b16 %v1084
      %v1094 = vunpack.c.l.b16 %v1085
      %v1095 = vunpack.c.h.b16 %v1085
      %v1096 = vunpack.c.l.b16 %v1086
      %v1097 = vunpack.c.h.b16 %v1086
      %v1098 = vunpack.c.l.b16 %v1087
      %v1099 = vunpack.c.h.b16 %v1087
      %v1100 = vpack.c.b16 %v1092, %v1092
      %v1101 = vpack.c.b16 %v1093, %v1093
      %v1102 = vpack.c.b16 %v1094, %v1094
      %v1103 = vpack.c.b16 %v1095, %v1095
      %v1104 = vpack.c.b16 %v1096, %v1096
      %v1105 = vpack.c.b16 %v1097, %v1097
      %v1106 = vpack.c.b16 %v1098, %v1098
      %v1107 = vpack.c.b16 %v1099, %v1099
      %vm1116 = vcmask 125952
      %1117 = vst.msk [vmem:[%s426] sm:$0xf] %vm1116, %v1100
      %1118 = vst.msk [vmem:[%s426 + $0x4] sm:$0xf] %vm1116, %v1101
      %1119 = vst.msk [vmem:[%s426 + $0x8] sm:$0xf] %vm1116, %v1102
      %1120 = vst.msk [vmem:[%s426 + $0xc] sm:$0xf] %vm1116, %v1103
      %1121 = vst.msk [vmem:[%s426 + $0x10] sm:$0xf] %vm1116, %v1104
      %1122 = vst.msk [vmem:[%s426 + $0x14] sm:$0xf] %vm1116, %v1105
      %1123 = vst.msk [vmem:[%s426 + $0x18] sm:$0xf] %vm1116, %v1106
      %1124 = vst.msk [vmem:[%s426 + $0x1c] sm:$0xf] %vm1116, %v1107
      %p1125 = scmp.lt.s32.totalorder %s22, 1
      %s1126 = scalar_select %p1125, %s22, 1
      %s1127 = smul.addr %s1126, 8
      %s1128 = smul.addr %s1127, 4
      %s1129 = scalar_lea.vmem %s11, %s1128
      // Predicated region
      $region65: #{encoder_forward.14} parent=63 // pred_check
        %p1130 = pneg %p286
      $region66: #{encoder_forward.14} parent=63 // pred_check_branch
        %1132 = sbr.rel (%p1130) target = $region68
      $region67: #{encoder_forward.14} parent=63 // pred_region
        _
      $region68: #{encoder_forward.14} parent=63 // pred_fallthru
        _
    $region64: #{encoder_forward.14} parent=5 // pred_fallthru
      _
    %p1133 = scmp.le.s32.totalorder 2, %s17
    // Predicated region
    $region69: #{encoder_forward.14} parent=5 // pred_check
      %p1134 = pneg %p1133
    $region70: #{encoder_forward.14} parent=5 // pred_check_branch
      %1136 = sbr.rel (%p1134) target = $region72
    $region71: #{encoder_forward.14} parent=5 // pred_region
      %s1137 = ssub.s32 %s17, 2
      // Predicated region
      $region73: #{encoder_forward.14} parent=71 // pred_check
        %p1138 = pneg %p292
      $region74: #{encoder_forward.14} parent=71 // pred_check_branch
        %1140 = sbr.rel (%p1138) target = $region76
      $region75: #{encoder_forward.14} parent=71 // pred_region
        %p1141 = scmp.lt.s32.totalorder %s23, 1
        %s1142 = scalar_select %p1141, %s23, 1
        %s1143 = smul.addr %s1142, 8
        %s1144 = smul.addr %s1143, 4
        %s1145 = scalar_lea.vmem %s11, %s1144
      $region76: #{encoder_forward.14} parent=71 // pred_fallthru
        _
    $region72: #{encoder_forward.14} parent=5 // pred_fallthru
      _
  $region6: #{encoder_forward.14} parent=0 // loop_footer
    %s21 = sadd.s32 1, %s17
  $region7: #{encoder_forward.14} parent=0 // loop_footer_branch
    %16 = sbr.rel target = $region3
  $region8: #{encoder_forward.14} parent=0 // loop_exit
    _

// kernel: encoder_forward.17
$region0: #{encoder_forward.17}
  #allocation0 [shape = 'u32[]', space=smem, size = 0x4, offset = 0x4, fixed_abs, tag = 'smem constant byte address 0x4 - core index']
  #allocation1 [shape = 'u32[144,128]{1,0:T(1,128)}', space=vmem, size = 0x12000, scoped, tag = 'internal scratch']
  #allocation2 [shape = 'bf16[16,222]{1,0:T(16,128)(2,1)}', space=vmem, size = 0x2000, scoped, tag = 'scratch operand']
  %s0 = inlined_call_operand.vmem [shape: bf16[16,222], index: 0, kind: input, shape index: {}]
  %s1 = inlined_call_operand.vmem [shape: f32[1,222], index: 1, kind: input, shape index: {}]
  %s2 = inlined_call_operand.vmem [shape: bf16[9,4,16], index: 2, kind: input, shape index: {}]
  %s3 = inlined_call_operand.vmem [shape: f32[4,1], index: 3, kind: input, shape index: {}]
  %s4 = inlined_call_operand.vmem [shape: f32[16,1], index: 4, kind: input, shape index: {}]
  %s5 = inlined_call_operand.vmem [shape: f32[16,1], index: 5, kind: input, shape index: {}]
  %s6 = inlined_call_operand.vmem [shape: f32[4,222], index: 6, kind: output, shape index: {}]
  %s7 = sld [smem:[#allocation0]]
  $region34: #{encoder_forward.17} parent=0
    _
  %s9 = ssub.s32 1, %s7
  %s10 = scalar_select 0, %s9, %s7
  // Predicated region
  $region2: #{encoder_forward.17} parent=0 // pred_check
    _
  $region3: #{encoder_forward.17} parent=0 // pred_check_branch
    %12 = sbr.rel (0) target = $region5
  $region4: #{encoder_forward.17} parent=0 // pred_region
    _
  $region5: #{encoder_forward.17} parent=0 // pred_fallthru
    _
  // Predicated region
  $region6: #{encoder_forward.17} parent=0 // pred_check
    _
  $region7: #{encoder_forward.17} parent=0 // pred_check_branch
    %14 = sbr.rel (0) target = $region9
  $region8: #{encoder_forward.17} parent=0 // pred_region
    _
  $region9: #{encoder_forward.17} parent=0 // pred_fallthru
    _
  // Predicated region
  $region10: #{encoder_forward.17} parent=0 // pred_check
    _
  $region11: #{encoder_forward.17} parent=0 // pred_check_branch
    %16 = sbr.rel (0) target = $region13
  $region12: #{encoder_forward.17} parent=0 // pred_region
    _
  $region13: #{encoder_forward.17} parent=0 // pred_fallthru
    _
  // Predicated region
  $region14: #{encoder_forward.17} parent=0 // pred_check
    _
  $region15: #{encoder_forward.17} parent=0 // pred_check_branch
    %18 = sbr.rel (0) target = $region17
  $region16: #{encoder_forward.17} parent=0 // pred_region
    _
  $region17: #{encoder_forward.17} parent=0 // pred_fallthru
    _
  // Predicated region
  $region18: #{encoder_forward.17} parent=0 // pred_check
    _
  $region19: #{encoder_forward.17} parent=0 // pred_check_branch
    %20 = sbr.rel (0) target = $region21
  $region20: #{encoder_forward.17} parent=0 // pred_region
    _
  $region21: #{encoder_forward.17} parent=0 // pred_fallthru
    _
  // Predicated region
  $region22: #{encoder_forward.17} parent=0 // pred_check
    _
  $region23: #{encoder_forward.17} parent=0 // pred_check_branch
    %22 = sbr.rel (0) target = $region25
  $region24: #{encoder_forward.17} parent=0 // pred_region
    _
  $region25: #{encoder_forward.17} parent=0 // pred_fallthru
    _
  %v24 = vld [vmem:[%s1] sm:$0x3]
  %v25 = vld [vmem:[%s0] sm:$0xff]
  %v26 = vld [vmem:[%s0 + $0x8] sm:$0xff]
  %v27 = vunpack.c.l.bf16 %v25
  %v28 = vunpack.c.h.bf16 %v25
  %v29 = vunpack.c.l.bf16 %v26
  %v30 = vunpack.c.h.bf16 %v26
  %v32 = vlaneseq
  %v33 = vshrl.u32 %v32, 7
  %v34 = vsub.s32 0, %v33
  %v35 = vrot.slane %v24, %v34
  %v36 = vlaneseq
  %v37 = vshrl.u32 %v36, 7
  %v38 = vsub.s32 1, %v37
  %v39 = vrot.slane %v24, %v38
  %v42 = vmul.f32 %v27, %v35
  %v43 = vmul.f32 %v28, %v39
  %v44 = vmul.f32 %v29, %v35
  %v45 = vmul.f32 %v30, %v39
  %vm46 = vcmask 769024
  %v47 = vsel %vm46, %v43, 0.0
  %v48 = vadd.f32 %v42, %v47
  %49 = vadd.xlane.f32.xlu0 %v48
  %v50 = vpop.xlane.xlu0 %49
  %v51 = vsel %vm46, %v45, 0.0
  %v52 = vadd.f32 %v44, %v51
  %53 = vadd.xlane.f32.xlu0 %v52
  %v54 = vpop.xlane.xlu0 %53
  %v55 = vmul.f32 %v50, 0.0078125
  %v56 = vmul.f32 %v54, 0.0078125
  %v57 = vsub.f32 %v27, %v55
  %v58 = vsub.f32 %v28, %v55
  %v59 = vsub.f32 %v29, %v56
  %v60 = vsub.f32 %v30, %v56
  %v61 = vmul.f32 %v57, %v35
  %v62 = vmul.f32 %v58, %v39
  %v63 = vmul.f32 %v59, %v35
  %v64 = vmul.f32 %v60, %v39
  %v65 = vmul.f32 %v61, %v61
  %v66 = vmul.f32 %v62, %v62
  %v67 = vmul.f32 %v63, %v63
  %v68 = vmul.f32 %v64, %v64
  %v69 = vsel %vm46, %v66, 0.0
  %v70 = vadd.f32 %v65, %v69
  %71 = vadd.xlane.f32.xlu0 %v70
  %v72 = vpop.xlane.xlu0 %71
  %v73 = vsel %vm46, %v68, 0.0
  %v74 = vadd.f32 %v67, %v73
  %75 = vadd.xlane.f32.xlu0 %v74
  %v76 = vpop.xlane.xlu0 %75
  %v77 = vmul.f32 %v72, 0.0078125
  %v78 = vmul.f32 %v76, 0.0078125
  %v79 = vadd.f32 %v77, 1e-05
  %v80 = vadd.f32 %v78, 1e-05
  %v81 = vrsqrt.pop %v79
  %v82 = vrsqrt.pop %v80
  %v83 = vmul.f32 %v57, %v81
  %v84 = vmul.f32 %v58, %v81
  %v85 = vmul.f32 %v59, %v82
  %v86 = vmul.f32 %v60, %v82
  %v87 = vld [vmem:[%s4] sm:$0xff]
  %v88 = vld [vmem:[%s4 + $0x8] sm:$0xff]
  %90 = vset.pattern.permute.xlu0 0
  %91 = vperm.xlu0 %90, %v87
  %v92 = vpop.permute.xlu0 %91
  %95 = vset.pattern.permute.xlu0 0
  %96 = vperm.xlu0 %95, %v88
  %v97 = vpop.permute.xlu0 %96
  %v99 = vmul.f32 %v83, %v92
  %v100 = vmul.f32 %v84, %v92
  %v101 = vmul.f32 %v85, %v97
  %v102 = vmul.f32 %v86, %v97
  %v103 = vld [vmem:[%s5] sm:$0xff]
  %v104 = vld [vmem:[%s5 + $0x8] sm:$0xff]
  %106 = vset.pattern.permute.xlu0 0
  %107 = vperm.xlu0 %106, %v103
  %v108 = vpop.permute.xlu0 %107
  %111 = vset.pattern.permute.xlu0 0
  %112 = vperm.xlu0 %111, %v104
  %v113 = vpop.permute.xlu0 %112
  %v115 = vadd.f32 %v99, %v108
  %v116 = vadd.f32 %v100, %v108
  %v117 = vadd.f32 %v101, %v113
  %v118 = vadd.f32 %v102, %v113
  %v119 = vmul.f32 %v115, %v35
  %v120 = vmul.f32 %v116, %v39
  %v121 = vmul.f32 %v117, %v35
  %v122 = vmul.f32 %v118, %v39
  %v123 = vpack.c.bf16 %v121, %v119
  %v124 = vpack.c.bf16 %v122, %v120
  %125 = vst [vmem:[#allocation2] sm:$0xff] %v123
  %126 = vst.msk [vmem:[#allocation2 + $0x8] sm:$0xff] %vm46, %v124
  %v127 = vld [vmem:[%s2] sm:$0x3]
  %v128 = vld [vmem:[#allocation2] sm:$0xff]
  %v129 = vld [vmem:[#allocation2 + $0x8] sm:$0xff]
  %s130 = scalar_lea.vmem %s2, 2
  %v131 = vld [vmem:[%s130] sm:$0x3]
  %134 = vrot.lane.b32.xlu0 %v128, 127
  %v135 = vpop.permute.xlu0 %134
  %136 = vrot.lane.b32.xlu0 %v129, 127
  %v137 = vpop.permute.xlu0 %136
  %vm138 = vcmask 1039360
  %v139 = vsel %vm138, %v135, %v137
  %vm142 = vcmask 130048
  %v144 = vsel %vm142, %v131, 0
  %146 = vmatprep.subr.bf16.mxu0 %v137
  %147 = vmatpush1.bf16.msra.mxu0 %v139
  %148 = vmatprep.subr.bf16.mxu0 0
  %149 = vmatpush1.bf16.msra.mxu0 0
  %150 = vmatprep.subr.bf16.mxu0 0
  %151 = vmatpush1.bf16.msra.mxu0 0
  %152 = vmatprep.subr.bf16.mxu0 0
  %153 = vmatpush1.bf16.msra.mxu0 0
  %154 = vmatprep.subr.bf16.mxu0 0
  %155 = vmatpush1.bf16.msra.mxu0 0
  %156 = vmatprep.subr.bf16.mxu0 0
  %157 = vmatpush1.bf16.msra.mxu0 0
  %158 = vmatprep.subr.bf16.mxu0 0
  %159 = vmatpush1.bf16.msra.mxu0 0
  %160 = vmatprep.subr.bf16.mxu0 0
  %161 = vmatpush1.bf16.msra.mxu0 0
  %162 = vmatprep.subr.bf16.mxu0 0
  %163 = vmatpush1.bf16.msra.mxu0 0
  %164 = vmatprep.subr.bf16.mxu0 0
  %165 = vmatpush1.bf16.msra.mxu0 0
  %166 = vmatprep.subr.bf16.mxu0 0
  %167 = vmatpush1.bf16.msra.mxu0 0
  %168 = vmatprep.subr.bf16.mxu0 0
  %169 = vmatpush1.bf16.msra.mxu0 0
  %170 = vmatprep.subr.bf16.mxu0 0
  %171 = vmatpush1.bf16.msra.mxu0 0
  %172 = vmatprep.subr.bf16.mxu0 0
  %173 = vmatpush1.bf16.msra.mxu0 0
  %174 = vmatprep.subr.bf16.mxu0 0
  %175 = vmatpush1.bf16.msra.mxu0 0
  %176 = vmatprep.subr.bf16.mxu0 0
  %177 = vmatpush1.bf16.msra.mxu0 0
  %178 = vmatprep.mubr.bf16.mxu0 0
  %179 = vmatmul.mubr.bf16.gmra.mrb[0].mxu0 %v144
  %v180 = vpop.f32.mrb[0].mxu0
  %v181 = vadd.f32 0.0, %v180
  %v182 = vpop.f32.mrb[0].mxu0
  %v183 = vadd.f32 0.0, %v182
  %v184 = vpop.f32.mrb[0].mxu0
  %v185 = vpop.f32.mrb[0].mxu0
  %186 = vdwg.mxu0
  %v188 = vsel %vm142, %v127, 0
  %190 = vmatprep.subr.bf16.mxu0 %v129
  %191 = vmatpush1.bf16.msra.mxu0 %v128
  %192 = vmatprep.subr.bf16.mxu0 0
  %193 = vmatpush1.bf16.msra.mxu0 0
  %194 = vmatprep.subr.bf16.mxu0 0
  %195 = vmatpush1.bf16.msra.mxu0 0
  %196 = vmatprep.subr.bf16.mxu0 0
  %197 = vmatpush1.bf16.msra.mxu0 0
  %198 = vmatprep.subr.bf16.mxu0 0
  %199 = vmatpush1.bf16.msra.mxu0 0
  %200 = vmatprep.subr.bf16.mxu0 0
  %201 = vmatpush1.bf16.msra.mxu0 0
  %202 = vmatprep.subr.bf16.mxu0 0
  %203 = vmatpush1.bf16.msra.mxu0 0
  %204 = vmatprep.subr.bf16.mxu0 0
  %205 = vmatpush1.bf16.msra.mxu0 0
  %206 = vmatprep.subr.bf16.mxu0 0
  %207 = vmatpush1.bf16.msra.mxu0 0
  %208 = vmatprep.subr.bf16.mxu0 0
  %209 = vmatpush1.bf16.msra.mxu0 0
  %210 = vmatprep.subr.bf16.mxu0 0
  %211 = vmatpush1.bf16.msra.mxu0 0
  %212 = vmatprep.subr.bf16.mxu0 0
  %213 = vmatpush1.bf16.msra.mxu0 0
  %214 = vmatprep.subr.bf16.mxu0 0
  %215 = vmatpush1.bf16.msra.mxu0 0
  %216 = vmatprep.subr.bf16.mxu0 0
  %217 = vmatpush1.bf16.msra.mxu0 0
  %218 = vmatprep.subr.bf16.mxu0 0
  %219 = vmatpush1.bf16.msra.mxu0 0
  %220 = vmatprep.subr.bf16.mxu0 0
  %221 = vmatpush1.bf16.msra.mxu0 0
  %222 = vmatprep.mubr.bf16.mxu0 0
  %223 = vmatmul.mubr.bf16.gmra.mrb[0].mxu0 %v188
  %v224 = vpop.f32.mrb[0].mxu0
  %v225 = vadd.f32 %v181, %v224
  %v226 = vpop.f32.mrb[0].mxu0
  %v227 = vadd.f32 %v183, %v226
  %v228 = vpop.f32.mrb[0].mxu0
  %v229 = vpop.f32.mrb[0].mxu0
  %230 = vdwg.mxu0
  %s231 = scalar_lea.vmem %s2, 4
  %v232 = vld [vmem:[%s231] sm:$0x3]
  %233 = vrot.lane.b32.xlu0 %v128, 126
  %v234 = vpop.permute.xlu0 %233
  %235 = vrot.lane.b32.xlu0 %v129, 126
  %v236 = vpop.permute.xlu0 %235
  %vm237 = vcmask 1031168
  %v238 = vsel %vm237, %v234, %v236
  %v242 = vsel %vm142, %v232, 0
  %244 = vmatprep.subr.bf16.mxu0 %v236
  %245 = vmatpush1.bf16.msra.mxu0 %v238
  %246 = vmatprep.subr.bf16.mxu0 0
  %247 = vmatpush1.bf16.msra.mxu0 0
  %248 = vmatprep.subr.bf16.mxu0 0
  %249 = vmatpush1.bf16.msra.mxu0 0
  %250 = vmatprep.subr.bf16.mxu0 0
  %251 = vmatpush1.bf16.msra.mxu0 0
  %252 = vmatprep.subr.bf16.mxu0 0
  %253 = vmatpush1.bf16.msra.mxu0 0
  %254 = vmatprep.subr.bf16.mxu0 0
  %255 = vmatpush1.bf16.msra.mxu0 0
  %256 = vmatprep.subr.bf16.mxu0 0
  %257 = vmatpush1.bf16.msra.mxu0 0
  %258 = vmatprep.subr.bf16.mxu0 0
  %259 = vmatpush1.bf16.msra.mxu0 0
  %260 = vmatprep.subr.bf16.mxu0 0
  %261 = vmatpush1.bf16.msra.mxu0 0
  %262 = vmatprep.subr.bf16.mxu0 0
  %263 = vmatpush1.bf16.msra.mxu0 0
  %264 = vmatprep.subr.bf16.mxu0 0
  %265 = vmatpush1.bf16.msra.mxu0 0
  %266 = vmatprep.subr.bf16.mxu0 0
  %267 = vmatpush1.bf16.msra.mxu0 0
  %268 = vmatprep.subr.bf16.mxu0 0
  %269 = vmatpush1.bf16.msra.mxu0 0
  %270 = vmatprep.subr.bf16.mxu0 0
  %271 = vmatpush1.bf16.msra.mxu0 0
  %272 = vmatprep.subr.bf16.mxu0 0
  %273 = vmatpush1.bf16.msra.mxu0 0
  %274 = vmatprep.subr.bf16.mxu0 0
  %275 = vmatpush1.bf16.msra.mxu0 0
  %276 = vmatprep.mubr.bf16.mxu0 0
  %277 = vmatmul.mubr.bf16.gmra.mrb[0].mxu0 %v242
  %v278 = vpop.f32.mrb[0].mxu0
  %v279 = vadd.f32 0.0, %v278
  %v280 = vpop.f32.mrb[0].mxu0
  %v281 = vadd.f32 0.0, %v280
  %v282 = vpop.f32.mrb[0].mxu0
  %v283 = vpop.f32.mrb[0].mxu0
  %284 = vdwg.mxu0
  %v285 = vadd.f32 %v225, %v279
  %v286 = vadd.f32 %v227, %v281
  %s287 = scalar_lea.vmem %s2, 6
  %v288 = vld [vmem:[%s287] sm:$0x3]
  %289 = vrot.lane.b32.xlu0 %v128, 118
  %v290 = vpop.permute.xlu0 %289
  %291 = vrot.lane.b32.xlu0 %v129, 118
  %v292 = vpop.permute.xlu0 %291
  %vm293 = vcmask 965632
  %v294 = vsel %vm293, %v290, %v292
  %v298 = vsel %vm142, %v288, 0
  %300 = vmatprep.subr.bf16.mxu0 %v292
  %301 = vmatpush1.bf16.msra.mxu0 %v294
  %302 = vmatprep.subr.bf16.mxu0 0
  %303 = vmatpush1.bf16.msra.mxu0 0
  %304 = vmatprep.subr.bf16.mxu0 0
  %305 = vmatpush1.bf16.msra.mxu0 0
  %306 = vmatprep.subr.bf16.mxu0 0
  %307 = vmatpush1.bf16.msra.mxu0 0
  %308 = vmatprep.subr.bf16.mxu0 0
  %309 = vmatpush1.bf16.msra.mxu0 0
  %310 = vmatprep.subr.bf16.mxu0 0
  %311 = vmatpush1.bf16.msra.mxu0 0
  %312 = vmatprep.subr.bf16.mxu0 0
  %313 = vmatpush1.bf16.msra.mxu0 0
  %314 = vmatprep.subr.bf16.mxu0 0
  %315 = vmatpush1.bf16.msra.mxu0 0
  %316 = vmatprep.subr.bf16.mxu0 0
  %317 = vmatpush1.bf16.msra.mxu0 0
  %318 = vmatprep.subr.bf16.mxu0 0
  %319 = vmatpush1.bf16.msra.mxu0 0
  %320 = vmatprep.subr.bf16.mxu0 0
  %321 = vmatpush1.bf16.msra.mxu0 0
  %322 = vmatprep.subr.bf16.mxu0 0
  %323 = vmatpush1.bf16.msra.mxu0 0
  %324 = vmatprep.subr.bf16.mxu0 0
  %325 = vmatpush1.bf16.msra.mxu0 0
  %326 = vmatprep.subr.bf16.mxu0 0
  %327 = vmatpush1.bf16.msra.mxu0 0
  %328 = vmatprep.subr.bf16.mxu0 0
  %329 = vmatpush1.bf16.msra.mxu0 0
  %330 = vmatprep.subr.bf16.mxu0 0
  %331 = vmatpush1.bf16.msra.mxu0 0
  %332 = vmatprep.mubr.bf16.mxu0 0
  %333 = vmatmul.mubr.bf16.gmra.mrb[0].mxu0 %v298
  %v334 = vpop.f32.mrb[0].mxu0
  %v335 = vadd.f32 0.0, %v334
  %v336 = vpop.f32.mrb[0].mxu0
  %v337 = vadd.f32 0.0, %v336
  %v338 = vpop.f32.mrb[0].mxu0
  %v339 = vpop.f32.mrb[0].mxu0
  %340 = vdwg.mxu0
  %v341 = vadd.f32 %v285, %v335
  %v342 = vadd.f32 %v286, %v337
  %s343 = scalar_lea.vmem %s2, 8
  %v344 = vld [vmem:[%s343] sm:$0x3]
  %345 = vrot.lane.b32.xlu0 %v128, 117
  %v346 = vpop.permute.xlu0 %345
  %347 = vrot.lane.b32.xlu0 %v129, 117
  %v348 = vpop.permute.xlu0 %347
  %vm349 = vcmask 957440
  %v350 = vsel %vm349, %v346, %v348
  %v354 = vsel %vm142, %v344, 0
  %356 = vmatprep.subr.bf16.mxu0 %v348
  %357 = vmatpush1.bf16.msra.mxu0 %v350
  %358 = vmatprep.subr.bf16.mxu0 0
  %359 = vmatpush1.bf16.msra.mxu0 0
  %360 = vmatprep.subr.bf16.mxu0 0
  %361 = vmatpush1.bf16.msra.mxu0 0
  %362 = vmatprep.subr.bf16.mxu0 0
  %363 = vmatpush1.bf16.msra.mxu0 0
  %364 = vmatprep.subr.bf16.mxu0 0
  %365 = vmatpush1.bf16.msra.mxu0 0
  %366 = vmatprep.subr.bf16.mxu0 0
  %367 = vmatpush1.bf16.msra.mxu0 0
  %368 = vmatprep.subr.bf16.mxu0 0
  %369 = vmatpush1.bf16.msra.mxu0 0
  %370 = vmatprep.subr.bf16.mxu0 0
  %371 = vmatpush1.bf16.msra.mxu0 0
  %372 = vmatprep.subr.bf16.mxu0 0
  %373 = vmatpush1.bf16.msra.mxu0 0
  %374 = vmatprep.subr.bf16.mxu0 0
  %375 = vmatpush1.bf16.msra.mxu0 0
  %376 = vmatprep.subr.bf16.mxu0 0
  %377 = vmatpush1.bf16.msra.mxu0 0
  %378 = vmatprep.subr.bf16.mxu0 0
  %379 = vmatpush1.bf16.msra.mxu0 0
  %380 = vmatprep.subr.bf16.mxu0 0
  %381 = vmatpush1.bf16.msra.mxu0 0
  %382 = vmatprep.subr.bf16.mxu0 0
  %383 = vmatpush1.bf16.msra.mxu0 0
  %384 = vmatprep.subr.bf16.mxu0 0
  %385 = vmatpush1.bf16.msra.mxu0 0
  %386 = vmatprep.subr.bf16.mxu0 0
  %387 = vmatpush1.bf16.msra.mxu0 0
  %388 = vmatprep.mubr.bf16.mxu0 0
  %389 = vmatmul.mubr.bf16.gmra.mrb[0].mxu0 %v354
  %v390 = vpop.f32.mrb[0].mxu0
  %v391 = vadd.f32 0.0, %v390
  %v392 = vpop.f32.mrb[0].mxu0
  %v393 = vadd.f32 0.0, %v392
  %v394 = vpop.f32.mrb[0].mxu0
  %v395 = vpop.f32.mrb[0].mxu0
  %396 = vdwg.mxu0
  %v397 = vadd.f32 %v341, %v391
  %v398 = vadd.f32 %v342, %v393
  %s399 = scalar_lea.vmem %s2, 10
  %v400 = vld [vmem:[%s399] sm:$0x3]
  %401 = vrot.lane.b32.xlu0 %v128, 116
  %v402 = vpop.permute.xlu0 %401
  %403 = vrot.lane.b32.xlu0 %v129, 116
  %v404 = vpop.permute.xlu0 %403
  %vm405 = vcmask 949248
  %v406 = vsel %vm405, %v402, %v404
  %v410 = vsel %vm142, %v400, 0
  %412 = vmatprep.subr.bf16.mxu0 %v404
  %413 = vmatpush1.bf16.msra.mxu0 %v406
  %414 = vmatprep.subr.bf16.mxu0 0
  %415 = vmatpush1.bf16.msra.mxu0 0
  %416 = vmatprep.subr.bf16.mxu0 0
  %417 = vmatpush1.bf16.msra.mxu0 0
  %418 = vmatprep.subr.bf16.mxu0 0
  %419 = vmatpush1.bf16.msra.mxu0 0
  %420 = vmatprep.subr.bf16.mxu0 0
  %421 = vmatpush1.bf16.msra.mxu0 0
  %422 = vmatprep.subr.bf16.mxu0 0
  %423 = vmatpush1.bf16.msra.mxu0 0
  %424 = vmatprep.subr.bf16.mxu0 0
  %425 = vmatpush1.bf16.msra.mxu0 0
  %426 = vmatprep.subr.bf16.mxu0 0
  %427 = vmatpush1.bf16.msra.mxu0 0
  %428 = vmatprep.subr.bf16.mxu0 0
  %429 = vmatpush1.bf16.msra.mxu0 0
  %430 = vmatprep.subr.bf16.mxu0 0
  %431 = vmatpush1.bf16.msra.mxu0 0
  %432 = vmatprep.subr.bf16.mxu0 0
  %433 = vmatpush1.bf16.msra.mxu0 0
  %434 = vmatprep.subr.bf16.mxu0 0
  %435 = vmatpush1.bf16.msra.mxu0 0
  %436 = vmatprep.subr.bf16.mxu0 0
  %437 = vmatpush1.bf16.msra.mxu0 0
  %438 = vmatprep.subr.bf16.mxu0 0
  %439 = vmatpush1.bf16.msra.mxu0 0
  %440 = vmatprep.subr.bf16.mxu0 0
  %441 = vmatpush1.bf16.msra.mxu0 0
  %442 = vmatprep.subr.bf16.mxu0 0
  %443 = vmatpush1.bf16.msra.mxu0 0
  %444 = vmatprep.mubr.bf16.mxu0 0
  %445 = vmatmul.mubr.bf16.gmra.mrb[0].mxu0 %v410
  %v446 = vpop.f32.mrb[0].mxu0
  %v447 = vadd.f32 0.0, %v446
  %v448 = vpop.f32.mrb[0].mxu0
  %v449 = vadd.f32 0.0, %v448
  %v450 = vpop.f32.mrb[0].mxu0
  %v451 = vpop.f32.mrb[0].mxu0
  %452 = vdwg.mxu0
  %v453 = vadd.f32 %v397, %v447
  %v454 = vadd.f32 %v398, %v449
  %s455 = scalar_lea.vmem %s2, 12
  %v456 = vld [vmem:[%s455] sm:$0x3]
  %457 = vrot.lane.b32.xlu0 %v128, 108
  %v458 = vpop.permute.xlu0 %457
  %459 = vrot.lane.b32.xlu0 %v129, 108
  %v460 = vpop.permute.xlu0 %459
  %vm461 = vcmask 883712
  %v462 = vsel %vm461, %v458, %v460
  %v466 = vsel %vm142, %v456, 0
  %468 = vmatprep.subr.bf16.mxu0 %v460
  %469 = vmatpush1.bf16.msra.mxu0 %v462
  %470 = vmatprep.subr.bf16.mxu0 0
  %471 = vmatpush1.bf16.msra.mxu0 0
  %472 = vmatprep.subr.bf16.mxu0 0
  %473 = vmatpush1.bf16.msra.mxu0 0
  %474 = vmatprep.subr.bf16.mxu0 0
  %475 = vmatpush1.bf16.msra.mxu0 0
  %476 = vmatprep.subr.bf16.mxu0 0
  %477 = vmatpush1.bf16.msra.mxu0 0
  %478 = vmatprep.subr.bf16.mxu0 0
  %479 = vmatpush1.bf16.msra.mxu0 0
  %480 = vmatprep.subr.bf16.mxu0 0
  %481 = vmatpush1.bf16.msra.mxu0 0
  %482 = vmatprep.subr.bf16.mxu0 0
  %483 = vmatpush1.bf16.msra.mxu0 0
  %484 = vmatprep.subr.bf16.mxu0 0
  %485 = vmatpush1.bf16.msra.mxu0 0
  %486 = vmatprep.subr.bf16.mxu0 0
  %487 = vmatpush1.bf16.msra.mxu0 0
  %488 = vmatprep.subr.bf16.mxu0 0
  %489 = vmatpush1.bf16.msra.mxu0 0
  %490 = vmatprep.subr.bf16.mxu0 0
  %491 = vmatpush1.bf16.msra.mxu0 0
  %492 = vmatprep.subr.bf16.mxu0 0
  %493 = vmatpush1.bf16.msra.mxu0 0
  %494 = vmatprep.subr.bf16.mxu0 0
  %495 = vmatpush1.bf16.msra.mxu0 0
  %496 = vmatprep.subr.bf16.mxu0 0
  %497 = vmatpush1.bf16.msra.mxu0 0
  %498 = vmatprep.subr.bf16.mxu0 0
  %499 = vmatpush1.bf16.msra.mxu0 0
  %500 = vmatprep.mubr.bf16.mxu0 0
  %501 = vmatmul.mubr.bf16.gmra.mrb[0].mxu0 %v466
  %v502 = vpop.f32.mrb[0].mxu0
  %v503 = vadd.f32 0.0, %v502
  %v504 = vpop.f32.mrb[0].mxu0
  %v505 = vadd.f32 0.0, %v504
  %v506 = vpop.f32.mrb[0].mxu0
  %v507 = vpop.f32.mrb[0].mxu0
  %508 = vdwg.mxu0
  %v509 = vadd.f32 %v453, %v503
  %v510 = vadd.f32 %v454, %v505
  %s511 = scalar_lea.vmem %s2, 14
  %v512 = vld [vmem:[%s511] sm:$0x3]
  %513 = vrot.lane.b32.xlu0 %v128, 107
  %v514 = vpop.permute.xlu0 %513
  %515 = vrot.lane.b32.xlu0 %v129, 107
  %v516 = vpop.permute.xlu0 %515
  %vm517 = vcmask 875520
  %v518 = vsel %vm517, %v514, %v516
  %v522 = vsel %vm142, %v512, 0
  %524 = vmatprep.subr.bf16.mxu0 %v516
  %525 = vmatpush1.bf16.msra.mxu0 %v518
  %526 = vmatprep.subr.bf16.mxu0 0
  %527 = vmatpush1.bf16.msra.mxu0 0
  %528 = vmatprep.subr.bf16.mxu0 0
  %529 = vmatpush1.bf16.msra.mxu0 0
  %530 = vmatprep.subr.bf16.mxu0 0
  %531 = vmatpush1.bf16.msra.mxu0 0
  %532 = vmatprep.subr.bf16.mxu0 0
  %533 = vmatpush1.bf16.msra.mxu0 0
  %534 = vmatprep.subr.bf16.mxu0 0
  %535 = vmatpush1.bf16.msra.mxu0 0
  %536 = vmatprep.subr.bf16.mxu0 0
  %537 = vmatpush1.bf16.msra.mxu0 0
  %538 = vmatprep.subr.bf16.mxu0 0
  %539 = vmatpush1.bf16.msra.mxu0 0
  %540 = vmatprep.subr.bf16.mxu0 0
  %541 = vmatpush1.bf16.msra.mxu0 0
  %542 = vmatprep.subr.bf16.mxu0 0
  %543 = vmatpush1.bf16.msra.mxu0 0
  %544 = vmatprep.subr.bf16.mxu0 0
  %545 = vmatpush1.bf16.msra.mxu0 0
  %546 = vmatprep.subr.bf16.mxu0 0
  %547 = vmatpush1.bf16.msra.mxu0 0
  %548 = vmatprep.subr.bf16.mxu0 0
  %549 = vmatpush1.bf16.msra.mxu0 0
  %550 = vmatprep.subr.bf16.mxu0 0
  %551 = vmatpush1.bf16.msra.mxu0 0
  %552 = vmatprep.subr.bf16.mxu0 0
  %553 = vmatpush1.bf16.msra.mxu0 0
  %554 = vmatprep.subr.bf16.mxu0 0
  %555 = vmatpush1.bf16.msra.mxu0 0
  %556 = vmatprep.mubr.bf16.mxu0 0
  %557 = vmatmul.mubr.bf16.gmra.mrb[0].mxu0 %v522
  %v558 = vpop.f32.mrb[0].mxu0
  %v559 = vadd.f32 0.0, %v558
  %v560 = vpop.f32.mrb[0].mxu0
  %v561 = vadd.f32 0.0, %v560
  %v562 = vpop.f32.mrb[0].mxu0
  %v563 = vpop.f32.mrb[0].mxu0
  %564 = vdwg.mxu0
  %v565 = vadd.f32 %v509, %v559
  %v566 = vadd.f32 %v510, %v561
  %s567 = scalar_lea.vmem %s2, 16
  %v568 = vld [vmem:[%s567] sm:$0x3]
  %569 = vrot.lane.b32.xlu0 %v128, 106
  %v570 = vpop.permute.xlu0 %569
  %571 = vrot.lane.b32.xlu0 %v129, 106
  %v572 = vpop.permute.xlu0 %571
  %vm573 = vcmask 867328
  %v574 = vsel %vm573, %v570, %v572
  %v578 = vsel %vm142, %v568, 0
  %580 = vmatprep.subr.bf16.mxu0 %v572
  %581 = vmatpush1.bf16.msra.mxu0 %v574
  %582 = vmatprep.subr.bf16.mxu0 0
  %583 = vmatpush1.bf16.msra.mxu0 0
  %584 = vmatprep.subr.bf16.mxu0 0
  %585 = vmatpush1.bf16.msra.mxu0 0
  %586 = vmatprep.subr.bf16.mxu0 0
  %587 = vmatpush1.bf16.msra.mxu0 0
  %588 = vmatprep.subr.bf16.mxu0 0
  %589 = vmatpush1.bf16.msra.mxu0 0
  %590 = vmatprep.subr.bf16.mxu0 0
  %591 = vmatpush1.bf16.msra.mxu0 0
  %592 = vmatprep.subr.bf16.mxu0 0
  %593 = vmatpush1.bf16.msra.mxu0 0
  %594 = vmatprep.subr.bf16.mxu0 0
  %595 = vmatpush1.bf16.msra.mxu0 0
  %596 = vmatprep.subr.bf16.mxu0 0
  %597 = vmatpush1.bf16.msra.mxu0 0
  %598 = vmatprep.subr.bf16.mxu0 0
  %599 = vmatpush1.bf16.msra.mxu0 0
  %600 = vmatprep.subr.bf16.mxu0 0
  %601 = vmatpush1.bf16.msra.mxu0 0
  %602 = vmatprep.subr.bf16.mxu0 0
  %603 = vmatpush1.bf16.msra.mxu0 0
  %604 = vmatprep.subr.bf16.mxu0 0
  %605 = vmatpush1.bf16.msra.mxu0 0
  %606 = vmatprep.subr.bf16.mxu0 0
  %607 = vmatpush1.bf16.msra.mxu0 0
  %608 = vmatprep.subr.bf16.mxu0 0
  %609 = vmatpush1.bf16.msra.mxu0 0
  %610 = vmatprep.subr.bf16.mxu0 0
  %611 = vmatpush1.bf16.msra.mxu0 0
  %612 = vmatprep.mubr.bf16.mxu0 0
  %613 = vmatmul.mubr.bf16.gmra.mrb[0].mxu0 %v578
  %v614 = vpop.f32.mrb[0].mxu0
  %v615 = vadd.f32 0.0, %v614
  %v616 = vpop.f32.mrb[0].mxu0
  %v617 = vadd.f32 0.0, %v616
  %v618 = vpop.f32.mrb[0].mxu0
  %v619 = vpop.f32.mrb[0].mxu0
  %620 = vdwg.mxu0
  %v621 = vadd.f32 %v565, %v615
  %v622 = vadd.f32 %v566, %v617
  %v623 = vld [vmem:[%s3] sm:$0xf]
  %625 = vset.pattern.permute.xlu0 0
  %626 = vperm.xlu0 %625, %v623
  %v627 = vpop.permute.xlu0 %626
  %v629 = vadd.f32 %v621, %v627
  %v630 = vadd.f32 %v622, %v627
  %631 = vrot.lane.b32.xlu0 %v35, 117
  %v632 = vpop.permute.xlu0 %631
  %633 = vrot.lane.b32.xlu0 %v39, 117
  %v634 = vpop.permute.xlu0 %633
  %vm635 = vcmask 957440
  %v636 = vsel %vm635, %v632, %v634
  %v639 = vmul.f32 %v629, %v636
  %v640 = vmul.f32 %v630, %v634
  %vm641 = vcmask 1043456
  %vm642 = vcmask 769028
  %vm643 = vmor %vm642, %vm641
  %644 = vst.msk [vmem:[%s6] sm:$0xff] %vm643, 0.0
  %v647 = vcombine.low %v639, %v640
  %648 = vrot.lane.b32.xlu0 %v647, 11
  %v649 = vpop.permute.xlu0 %648
  %v650 = vrot.slane %v649, 4
  %vm651 = vcmask 89088
  %v652 = vsel %vm651, %v650, %v649
  %vm654 = vcmask 1043544
  %vm655 = vcmask 678916
  %vm656 = vmor %vm655, %vm654
  %657 = vst.msk [vmem:[%s6] sm:$0xff] %vm656, %v652
  // Predicated region
  $region26: #{encoder_forward.17} parent=0 // pred_check
    _
  $region27: #{encoder_forward.17} parent=0 // pred_check_branch
    %659 = sbr.rel (0) target = $region29
  $region28: #{encoder_forward.17} parent=0 // pred_region
    _
  $region29: #{encoder_forward.17} parent=0 // pred_fallthru
    _
  // Predicated region
  $region30: #{encoder_forward.17} parent=0 // pred_check
    _
  $region31: #{encoder_forward.17} parent=0 // pred_check_branch
    %661 = sbr.rel (0) target = $region33
  $region32: #{encoder_forward.17} parent=0 // pred_region
    _
  $region33: #{encoder_forward.17} parent=0 // pred_fallthru
    _

</llo_original>
